<compile_context>
chip_gen: v5e
topology: v5e:2x2
jax: 0.10.0
libtpu: 0.0.40
codegen_flags: <defaults>
</compile_context>

<pallas_src>
import math

import jax
import jax.numpy as jnp
from jax.experimental import pallas as pl
from jax.experimental.pallas import tpu as pltpu


LAYER_DIMS = [(4000, 2000), (2000, 500), (500, 100), (100, 20), (20, 2)]


def _round_up(x, m):
    return (x + m - 1) // m * m


# --------------------------------------------------------------------------
# Kernel A: layer 1 — streamed bf16 weights, f32 accumulator, fused bias+ReLU
# --------------------------------------------------------------------------
def _linear_relu_kernel(x_ref, w_ref, b_ref, o_ref, acc_ref):
    k = pl.program_id(1)

    @pl.when(k == 0)
    def _():
        acc_ref[...] = jnp.zeros_like(acc_ref)

    acc_ref[...] += jnp.dot(
        x_ref[...], w_ref[...], preferred_element_type=jnp.float32
    )

    @pl.when(k == pl.num_programs(1) - 1)
    def _():
        y = jnp.maximum(acc_ref[...] + b_ref[...], 0.0)
        o_ref[...] = y.astype(o_ref.dtype)


def layer1_linear_relu(x, w, b, *, tn=1024, tk=2048):
    """x: (B, Kp) bf16, w: (Kp, Np) bf16, b: (1, Np) f32. Returns (B, Np) bf16."""
    B, Kp = x.shape
    _, Np = w.shape
    tk = min(tk, Kp)
    tn = min(tn, Np)
    assert Kp % tk == 0 and Np % tn == 0

    return pl.pallas_call(
        _linear_relu_kernel,
        out_shape=jax.ShapeDtypeStruct((B, Np), jnp.bfloat16),
        grid_spec=pltpu.PrefetchScalarGridSpec(
            num_scalar_prefetch=0,
            grid=(Np // tn, Kp // tk),
            in_specs=[
                pl.BlockSpec((B, tk), lambda n, k: (0, k)),
                pl.BlockSpec((tk, tn), lambda n, k: (k, n)),
                pl.BlockSpec((1, tn), lambda n, k: (0, n)),
            ],
            out_specs=pl.BlockSpec((B, tn), lambda n, k: (0, n)),
            scratch_shapes=[pltpu.VMEM((B, tn), jnp.float32)],
        ),
        compiler_params=pltpu.CompilerParams(
            dimension_semantics=("parallel", "arbitrary"),
            # ~8.2 MB actually used; raise v5e's 16 MiB default with headroom
            # under v7x's 64 MiB physical VMEM.
            vmem_limit_bytes=32 * 1024 * 1024,
        ),
    )(x, w, b)


# --------------------------------------------------------------------------
# Kernel B: layers 2..5 fused in one call, all weights resident in VMEM
# --------------------------------------------------------------------------
def _fused_tail_kernel(h_ref, w2_ref, b2_ref, w3_ref, b3_ref,
                       w4_ref, b4_ref, w5_ref, b5_ref, o_ref):
    def lin(h, w_ref, b_ref, relu):
        y = jnp.dot(h, w_ref[...], preferred_element_type=jnp.float32) + b_ref[...]
        if relu:
            y = jnp.maximum(y, 0.0).astype(jnp.bfloat16)
        return y

    h = h_ref[...]                       # (B, 2048) bf16
    h = lin(h, w2_ref, b2_ref, True)     # (B, 512)
    h = lin(h, w3_ref, b3_ref, True)     # (B, 128)
    h = lin(h, w4_ref, b4_ref, True)     # (B, 128)
    o_ref[...] = lin(h, w5_ref, b5_ref, False)   # (B, 128) f32


def fused_tail(h, tail_params):
    """h: (B, 2048) bf16; tail_params: [(w, b)] for layers 2..5 (padded)."""
    B = h.shape[0]
    flat = [h]
    for w, b in tail_params:
        flat.extend((w, b))
    np_last = tail_params[-1][0].shape[1]

    def full_spec(a):
        return pl.BlockSpec(a.shape, lambda i: (0, 0))

    return pl.pallas_call(
        _fused_tail_kernel,
        out_shape=jax.ShapeDtypeStruct((B, np_last), jnp.float32),
        grid_spec=pltpu.PrefetchScalarGridSpec(
            num_scalar_prefetch=0,
            grid=(1,),
            in_specs=[full_spec(a) for a in flat],
            out_specs=pl.BlockSpec((B, np_last), lambda i: (0, 0)),
        ),
        compiler_params=pltpu.CompilerParams(
            dimension_semantics=("arbitrary",),
        ),
    )(*flat)


# --------------------------------------------------------------------------
# Parameter construction / padding
# --------------------------------------------------------------------------
def init_params(key):
    """PyTorch-style default Linear init: U(-1/sqrt(fan_in), 1/sqrt(fan_in))."""
    params = []
    for (fan_in, fan_out) in LAYER_DIMS:
        key, kw, kb = jax.random.split(key, 3)
        bound = 1.0 / math.sqrt(fan_in)
        # weight stored transposed relative to PyTorch: (in, out)
        w = jax.random.uniform(
            kw, (fan_in, fan_out), jnp.float32, minval=-bound, maxval=bound
        )
        b = jax.random.uniform(
            kb, (fan_out,), jnp.float32, minval=-bound, maxval=bound
        )
        params.append((w, b))
    return params


def pad_params(params):
    """Zero-pad to 128-multiples; weights stored bf16, biases kept f32."""
    padded = []
    for w, b in params:
        kin, kout = w.shape
        kin_p, kout_p = _round_up(kin, 128), _round_up(kout, 128)
        wp = (
            jnp.zeros((kin_p, kout_p), jnp.bfloat16)
            .at[:kin, :kout]
            .set(w.astype(jnp.bfloat16))
        )
        bp = jnp.zeros((1, kout_p), jnp.float32).at[0, :kout].set(b)
        padded.append((wp, bp))
    return padded


@jax.jit
def mlp_forward(x, padded_params):
    B, K = x.shape
    Kp = _round_up(K, 128)
    xp = jnp.zeros((B, Kp), jnp.bfloat16).at[:, :K].set(x.astype(jnp.bfloat16))

    w1, b1 = padded_params[0]
    h = layer1_linear_relu(xp, w1, b1)          # (B, 2048) bf16
    out = fused_tail(h, padded_params[1:])      # (B, 128) f32
    return out[:, : LAYER_DIMS[-1][1]]


# --------------------------------------------------------------------------
# References
# --------------------------------------------------------------------------
def mlp_reference_f32(x, params):
    h = x
    for i, (w, b) in enumerate(params):
        h = h @ w + b
        if i < len(params) - 1:
            h = jnp.maximum(h, 0.0)
    return h


def mlp_reference_bf16(x, params):
    """Matches the kernel numerics: bf16 matmul inputs, f32 accumulation/bias."""
    h = x
    for i, (w, b) in enumerate(params):
        h = jnp.dot(
            h.astype(jnp.bfloat16),
            w.astype(jnp.bfloat16),
            preferred_element_type=jnp.float32,
        ) + b
        if i < len(params) - 1:
            h = jnp.maximum(h, 0.0)
    return h


if __name__ == "__main__":
    key = jax.random.PRNGKey(0)
    key, kx = jax.random.split(key)

    batch = 8
    x = jax.random.normal(kx, (batch, 4000), jnp.float32)

    params = init_params(key)
    padded_params = pad_params(params)

    out = mlp_forward(x, padded_params)
    out = jax.block_until_ready(out)
    assert out.shape == (batch, 2), out.shape

    # Tight check against a reference using the same bf16-input / f32-accum math.
    ref_bf16 = mlp_reference_bf16(x, params)
    assert jnp.allclose(out, ref_bf16, atol=5e-3, rtol=5e-3), (
        float(jnp.max(jnp.abs(out - ref_bf16)))
    )
    # Looser sanity check against the full-f32 reference (bf16 quantization error).
    ref_f32 = mlp_reference_f32(x, params)
    assert jnp.allclose(out, ref_f32, atol=5e-2, rtol=5e-2), (
        float(jnp.max(jnp.abs(out - ref_f32)))
    )

    print("KERNEL_OK")
</pallas_src>

<mosaic_0001>
module attributes {stable_mosaic.version = 11 : i64} {
  func.func @_linear_relu_kernel(%arg0: i32, %arg1: i32, %arg2: memref<8x2048xbf16, #tpu.memory_space<vmem>>, %arg3: memref<2048x1024xbf16, #tpu.memory_space<vmem>>, %arg4: memref<1x1024xf32, #tpu.memory_space<vmem>>, %arg5: memref<8x1024xbf16, #tpu.memory_space<vmem>>, %arg6: memref<8x1024xf32, #tpu.memory_space<vmem>>) attributes {dimension_semantics = [#tpu.dimension_semantics<parallel>, #tpu.dimension_semantics<arbitrary>], iteration_bounds = array<i64: 2, 2>, scalar_prefetch = 0 : i64, scratch_operands = 1 : i64, tpu.core_type = #tpu.core_type<tc>, window_params = [{transform_indices = @transform_0, window_bounds = array<i64: 8, 2048>}, {transform_indices = @transform_1, window_bounds = array<i64: 2048, 1024>}, {transform_indices = @transform_2, window_bounds = array<i64: 1, 1024>}, {transform_indices = @transform_3, window_bounds = array<i64: 8, 1024>}]} {
    %c0_i32 = arith.constant 0 : i32
    %0 = arith.cmpi eq, %arg1, %c0_i32 : i32
    %1 = arith.extui %0 : i1 to i32
    %c0_i32_0 = arith.constant 0 : i32
    %2 = arith.cmpi ne, %1, %c0_i32_0 : i32
    scf.if %2 {
      %cst_9 = arith.constant 0.000000e+00 : f32
      %12 = vector.broadcast %cst_9 : f32 to vector<8x1024xf32>
      %c0_10 = arith.constant 0 : index
      %c0_11 = arith.constant 0 : index
      %13 = vector.load %arg6[%c0_10, %c0_11] : memref<8x1024xf32, #tpu.memory_space<vmem>>, vector<8x1024xf32>
      tpu.vector_store %arg6[%c0_10, %c0_11], %12 {strides = array<i32>} : memref<8x1024xf32, #tpu.memory_space<vmem>>, vector<8x1024xf32>,
    } else {
    }
    %c0 = arith.constant 0 : index
    %c0_1 = arith.constant 0 : index
    %3 = vector.load %arg6[%c0, %c0_1] : memref<8x1024xf32, #tpu.memory_space<vmem>>, vector<8x1024xf32>
    %c0_2 = arith.constant 0 : index
    %c0_3 = arith.constant 0 : index
    %4 = vector.load %arg2[%c0_2, %c0_3] : memref<8x2048xbf16, #tpu.memory_space<vmem>>, vector<8x2048xbf16>
    %c0_4 = arith.constant 0 : index
    %c0_5 = arith.constant 0 : index
    %5 = vector.load %arg3[%c0_4, %c0_5] : memref<2048x1024xbf16, #tpu.memory_space<vmem>>, vector<2048x1024xbf16>
    %cst = arith.constant dense<0.000000e+00> : vector<8x1024xf32>
    %6 = tpu.matmul %4, %5, %cst {dimension_numbers = #tpu.dot_dimension_numbers<[1], [0], [0], [1], [0, 0, 1, 1], [], []>} : vector<8x2048xbf16>, vector<2048x1024xbf16>, vector<8x1024xf32> -> vector<8x1024xf32>
    %7 = arith.addf %3, %6 : vector<8x1024xf32>
    %c0_6 = arith.constant 0 : index
    %c0_7 = arith.constant 0 : index
    %8 = vector.load %arg6[%c0_6, %c0_7] : memref<8x1024xf32, #tpu.memory_space<vmem>>, vector<8x1024xf32>
    tpu.vector_store %arg6[%c0_6, %c0_7], %7 {strides = array<i32>} : memref<8x1024xf32, #tpu.memory_space<vmem>>, vector<8x1024xf32>,
    %c1_i32 = arith.constant 1 : i32
    %9 = arith.cmpi eq, %arg1, %c1_i32 : i32
    %10 = arith.extui %9 : i1 to i32
    %c0_i32_8 = arith.constant 0 : i32
    %11 = arith.cmpi ne, %10, %c0_i32_8 : i32
    scf.if %11 {
      %c0_9 = arith.constant 0 : index
      %c0_10 = arith.constant 0 : index
      %12 = vector.load %arg6[%c0_9, %c0_10] : memref<8x1024xf32, #tpu.memory_space<vmem>>, vector<8x1024xf32>
      %c0_11 = arith.constant 0 : index
      %c0_12 = arith.constant 0 : index
      %13 = vector.load %arg4[%c0_11, %c0_12] : memref<1x1024xf32, #tpu.memory_space<vmem>>, vector<1x1024xf32>
      %14 = vector.broadcast %13 : vector<1x1024xf32> to vector<8x1024xf32>
      %15 = arith.addf %12, %14 : vector<8x1024xf32>
      %cst_13 = arith.constant 0.000000e+00 : f32
      %16 = vector.broadcast %cst_13 : f32 to vector<8x1024xf32>
      %17 = arith.maximumf %15, %16 : vector<8x1024xf32>
      %18 = arith.truncf %17 : vector<8x1024xf32> to vector<8x1024xbf16>
      %c0_14 = arith.constant 0 : index
      %c0_15 = arith.constant 0 : index
      %19 = vector.load %arg5[%c0_14, %c0_15] : memref<8x1024xbf16, #tpu.memory_space<vmem>>, vector<8x1024xbf16>
      tpu.vector_store %arg5[%c0_14, %c0_15], %18 {strides = array<i32>} : memref<8x1024xbf16, #tpu.memory_space<vmem>>, vector<8x1024xbf16>,
    } else {
    }
    return
  }
  func.func @transform_0(%arg0: i32, %arg1: i32) -> (i32, i32) {
    %c0_i32 = arith.constant 0 : i32
    %c0_i32_0 = arith.constant 0 : i32
    return %c0_i32, %arg1 : i32, i32
  }
  func.func @transform_1(%arg0: i32, %arg1: i32) -> (i32, i32) {
    %c0_i32 = arith.constant 0 : i32
    return %arg1, %arg0 : i32, i32
  }
  func.func @transform_2(%arg0: i32, %arg1: i32) -> (i32, i32) {
    %c0_i32 = arith.constant 0 : i32
    %c0_i32_0 = arith.constant 0 : i32
    return %c0_i32, %arg0 : i32, i32
  }
  func.func @transform_3(%arg0: i32, %arg1: i32) -> (i32, i32) {
    %c0_i32 = arith.constant 0 : i32
    %c0_i32_0 = arith.constant 0 : i32
    return %c0_i32, %arg0 : i32, i32
  }
}

module attributes {stable_mosaic.version = 11 : i64} {
  func.func @_fused_tail_kernel(%arg0: i32, %arg1: memref<8x2048xbf16, #tpu.memory_space<vmem>>, %arg2: memref<2048x512xbf16, #tpu.memory_space<vmem>>, %arg3: memref<1x512xf32, #tpu.memory_space<vmem>>, %arg4: memref<512x128xbf16, #tpu.memory_space<vmem>>, %arg5: memref<1x128xf32, #tpu.memory_space<vmem>>, %arg6: memref<128x128xbf16, #tpu.memory_space<vmem>>, %arg7: memref<1x128xf32, #tpu.memory_space<vmem>>, %arg8: memref<128x128xbf16, #tpu.memory_space<vmem>>, %arg9: memref<1x128xf32, #tpu.memory_space<vmem>>, %arg10: memref<8x128xf32, #tpu.memory_space<vmem>>) attributes {dimension_semantics = [#tpu.dimension_semantics<arbitrary>], iteration_bounds = array<i64: 1>, scalar_prefetch = 0 : i64, scratch_operands = 0 : i64, tpu.core_type = #tpu.core_type<tc>, window_params = [{pipeline_mode = #tpu.pipeline_mode<synchronous>, transform_indices = @transform_0, window_bounds = array<i64: 8, 2048>}, {pipeline_mode = #tpu.pipeline_mode<synchronous>, transform_indices = @transform_1, window_bounds = array<i64: 2048, 512>}, {pipeline_mode = #tpu.pipeline_mode<synchronous>, transform_indices = @transform_2, window_bounds = array<i64: 1, 512>}, {pipeline_mode = #tpu.pipeline_mode<synchronous>, transform_indices = @transform_3, window_bounds = array<i64: 512, 128>}, {pipeline_mode = #tpu.pipeline_mode<synchronous>, transform_indices = @transform_4, window_bounds = array<i64: 1, 128>}, {pipeline_mode = #tpu.pipeline_mode<synchronous>, transform_indices = @transform_5, window_bounds = array<i64: 128, 128>}, {pipeline_mode = #tpu.pipeline_mode<synchronous>, transform_indices = @transform_6, window_bounds = array<i64: 1, 128>}, {pipeline_mode = #tpu.pipeline_mode<synchronous>, transform_indices = @transform_7, window_bounds = array<i64: 128, 128>}, {pipeline_mode = #tpu.pipeline_mode<synchronous>, transform_indices = @transform_8, window_bounds = array<i64: 1, 128>}, {pipeline_mode = #tpu.pipeline_mode<synchronous>, transform_indices = @transform_9, window_bounds = array<i64: 8, 128>}]} {
    %c0 = arith.constant 0 : index
    %c0_0 = arith.constant 0 : index
    %0 = vector.load %arg1[%c0, %c0_0] : memref<8x2048xbf16, #tpu.memory_space<vmem>>, vector<8x2048xbf16>
    %c0_1 = arith.constant 0 : index
    %c0_2 = arith.constant 0 : index
    %1 = vector.load %arg2[%c0_1, %c0_2] : memref<2048x512xbf16, #tpu.memory_space<vmem>>, vector<2048x512xbf16>
    %cst = arith.constant dense<0.000000e+00> : vector<8x512xf32>
    %2 = tpu.matmul %0, %1, %cst {dimension_numbers = #tpu.dot_dimension_numbers<[1], [0], [0], [1], [0, 0, 1, 1], [], []>} : vector<8x2048xbf16>, vector<2048x512xbf16>, vector<8x512xf32> -> vector<8x512xf32>
    %c0_3 = arith.constant 0 : index
    %c0_4 = arith.constant 0 : index
    %3 = vector.load %arg3[%c0_3, %c0_4] : memref<1x512xf32, #tpu.memory_space<vmem>>, vector<1x512xf32>
    %4 = vector.broadcast %3 : vector<1x512xf32> to vector<8x512xf32>
    %5 = arith.addf %2, %4 : vector<8x512xf32>
    %cst_5 = arith.constant 0.000000e+00 : f32
    %6 = vector.broadcast %cst_5 : f32 to vector<8x512xf32>
    %7 = arith.maximumf %5, %6 : vector<8x512xf32>
    %8 = arith.truncf %7 : vector<8x512xf32> to vector<8x512xbf16>
    %c0_6 = arith.constant 0 : index
    %c0_7 = arith.constant 0 : index
    %9 = vector.load %arg4[%c0_6, %c0_7] : memref<512x128xbf16, #tpu.memory_space<vmem>>, vector<512x128xbf16>
    %cst_8 = arith.constant dense<0.000000e+00> : vector<8x128xf32>
    %10 = tpu.matmul %8, %9, %cst_8 {dimension_numbers = #tpu.dot_dimension_numbers<[1], [0], [0], [1], [0, 0, 1, 1], [], []>} : vector<8x512xbf16>, vector<512x128xbf16>, vector<8x128xf32> -> vector<8x128xf32>
    %c0_9 = arith.constant 0 : index
    %c0_10 = arith.constant 0 : index
    %11 = vector.load %arg5[%c0_9, %c0_10] : memref<1x128xf32, #tpu.memory_space<vmem>>, vector<1x128xf32>
    %12 = vector.broadcast %11 : vector<1x128xf32> to vector<8x128xf32>
    %13 = arith.addf %10, %12 : vector<8x128xf32>
    %cst_11 = arith.constant 0.000000e+00 : f32
    %14 = vector.broadcast %cst_11 : f32 to vector<8x128xf32>
    %15 = arith.maximumf %13, %14 : vector<8x128xf32>
    %16 = arith.truncf %15 : vector<8x128xf32> to vector<8x128xbf16>
    %c0_12 = arith.constant 0 : index
    %c0_13 = arith.constant 0 : index
    %17 = vector.load %arg6[%c0_12, %c0_13] : memref<128x128xbf16, #tpu.memory_space<vmem>>, vector<128x128xbf16>
    %cst_14 = arith.constant dense<0.000000e+00> : vector<8x128xf32>
    %18 = tpu.matmul %16, %17, %cst_14 {dimension_numbers = #tpu.dot_dimension_numbers<[1], [0], [0], [1], [0, 0, 1, 1], [], []>} : vector<8x128xbf16>, vector<128x128xbf16>, vector<8x128xf32> -> vector<8x128xf32>
    %c0_15 = arith.constant 0 : index
    %c0_16 = arith.constant 0 : index
    %19 = vector.load %arg7[%c0_15, %c0_16] : memref<1x128xf32, #tpu.memory_space<vmem>>, vector<1x128xf32>
    %20 = vector.broadcast %19 : vector<1x128xf32> to vector<8x128xf32>
    %21 = arith.addf %18, %20 : vector<8x128xf32>
    %cst_17 = arith.constant 0.000000e+00 : f32
    %22 = vector.broadcast %cst_17 : f32 to vector<8x128xf32>
    %23 = arith.maximumf %21, %22 : vector<8x128xf32>
    %24 = arith.truncf %23 : vector<8x128xf32> to vector<8x128xbf16>
    %c0_18 = arith.constant 0 : index
    %c0_19 = arith.constant 0 : index
    %25 = vector.load %arg8[%c0_18, %c0_19] : memref<128x128xbf16, #tpu.memory_space<vmem>>, vector<128x128xbf16>
    %cst_20 = arith.constant dense<0.000000e+00> : vector<8x128xf32>
    %26 = tpu.matmul %24, %25, %cst_20 {dimension_numbers = #tpu.dot_dimension_numbers<[1], [0], [0], [1], [0, 0, 1, 1], [], []>} : vector<8x128xbf16>, vector<128x128xbf16>, vector<8x128xf32> -> vector<8x128xf32>
    %c0_21 = arith.constant 0 : index
    %c0_22 = arith.constant 0 : index
    %27 = vector.load %arg9[%c0_21, %c0_22] : memref<1x128xf32, #tpu.memory_space<vmem>>, vector<1x128xf32>
    %28 = vector.broadcast %27 : vector<1x128xf32> to vector<8x128xf32>
    %29 = arith.addf %26, %28 : vector<8x128xf32>
    %c0_23 = arith.constant 0 : index
    %c0_24 = arith.constant 0 : index
    %30 = vector.load %arg10[%c0_23, %c0_24] : memref<8x128xf32, #tpu.memory_space<vmem>>, vector<8x128xf32>
    tpu.vector_store %arg10[%c0_23, %c0_24], %29 {strides = array<i32>} : memref<8x128xf32, #tpu.memory_space<vmem>>, vector<8x128xf32>,
    return
  }
  func.func @transform_0(%arg0: i32) -> (i32, i32) {
    %c0_i32 = arith.constant 0 : i32
    %c0_i32_0 = arith.constant 0 : i32
    %c0_i32_1 = arith.constant 0 : i32
    return %c0_i32, %c0_i32_0 : i32, i32
  }
  func.func @transform_1(%arg0: i32) -> (i32, i32) {
    %c0_i32 = arith.constant 0 : i32
    %c0_i32_0 = arith.constant 0 : i32
    %c0_i32_1 = arith.constant 0 : i32
    return %c0_i32, %c0_i32_0 : i32, i32
  }
  func.func @transform_2(%arg0: i32) -> (i32, i32) {
    %c0_i32 = arith.constant 0 : i32
    %c0_i32_0 = arith.constant 0 : i32
    %c0_i32_1 = arith.constant 0 : i32
    return %c0_i32, %c0_i32_0 : i32, i32
  }
  func.func @transform_3(%arg0: i32) -> (i32, i32) {
    %c0_i32 = arith.constant 0 : i32
    %c0_i32_0 = arith.constant 0 : i32
    %c0_i32_1 = arith.constant 0 : i32
    return %c0_i32, %c0_i32_0 : i32, i32
  }
  func.func @transform_4(%arg0: i32) -> (i32, i32) {
    %c0_i32 = arith.constant 0 : i32
    %c0_i32_0 = arith.constant 0 : i32
    %c0_i32_1 = arith.constant 0 : i32
    return %c0_i32, %c0_i32_0 : i32, i32
  }
  func.func @transform_5(%arg0: i32) -> (i32, i32) {
    %c0_i32 = arith.constant 0 : i32
    %c0_i32_0 = arith.constant 0 : i32
    %c0_i32_1 = arith.constant 0 : i32
    return %c0_i32, %c0_i32_0 : i32, i32
  }
  func.func @transform_6(%arg0: i32) -> (i32, i32) {
    %c0_i32 = arith.constant 0 : i32
    %c0_i32_0 = arith.constant 0 : i32
    %c0_i32_1 = arith.constant 0 : i32
    return %c0_i32, %c0_i32_0 : i32, i32
  }
  func.func @transform_7(%arg0: i32) -> (i32, i32) {
    %c0_i32 = arith.constant 0 : i32
    %c0_i32_0 = arith.constant 0 : i32
    %c0_i32_1 = arith.constant 0 : i32
    return %c0_i32, %c0_i32_0 : i32, i32
  }
  func.func @transform_8(%arg0: i32) -> (i32, i32) {
    %c0_i32 = arith.constant 0 : i32
    %c0_i32_0 = arith.constant 0 : i32
    %c0_i32_1 = arith.constant 0 : i32
    return %c0_i32, %c0_i32_0 : i32, i32
  }
  func.func @transform_9(%arg0: i32) -> (i32, i32) {
    %c0_i32 = arith.constant 0 : i32
    %c0_i32_0 = arith.constant 0 : i32
    %c0_i32_1 = arith.constant 0 : i32
    return %c0_i32, %c0_i32_0 : i32, i32
  }
}

</mosaic_0001>

<llo_original>
// kernel: mlp_forward.3
$region0: #{mlp_forward.3}
  #allocation0 [shape = 'u32[]', space=smem, size = 0x4, offset = 0x4, fixed_abs, tag = 'smem constant byte address 0x4 - core index']
  #allocation1 [shape = 'u32[72,128]{1,0:T(1,128)}', space=vmem, size = 0x9000, scoped, tag = 'internal scratch']
  %s0 = inlined_call_operand.vmem [shape: bf16[8,2048], index: 0, kind: input, shape index: {}]
  %s1 = inlined_call_operand.hbm [shape: bf16[2048,512], index: 1, kind: input, shape index: {}]
  %s2 = inlined_call_operand.hbm [shape: f32[1,512], index: 2, kind: input, shape index: {}]
  %s3 = inlined_call_operand.hbm [shape: bf16[512,128], index: 3, kind: input, shape index: {}]
  %s4 = inlined_call_operand.hbm [shape: f32[1,128], index: 4, kind: input, shape index: {}]
  %s5 = inlined_call_operand.hbm [shape: bf16[128,128], index: 5, kind: input, shape index: {}]
  %s6 = inlined_call_operand.hbm [shape: f32[1,128], index: 6, kind: input, shape index: {}]
  %s7 = inlined_call_operand.hbm [shape: bf16[128,128], index: 7, kind: input, shape index: {}]
  %s8 = inlined_call_operand.hbm [shape: f32[1,128], index: 8, kind: input, shape index: {}]
  %s9 = inlined_call_operand.vmem [shape: f32[8,128], index: 9, kind: output, shape index: {}]
  %s10 = sld [smem:[#allocation0]]
  $region78: #{mlp_forward.3} parent=0
    _
  %s12 = ssub.s32 1, %s10
  %s13 = scalar_select 0, %s12, %s10
  $region1: #{mlp_forward.3} parent=0
    #allocation2 [shape = 'u8[2097152]{0}', space=vmem, size = 0x200000, scoped, tag = 'input window, operand 1, single buffered']
    #allocation3 [shape = 's32[1]{0}', space=sflag, size = 0x4, scoped, tag = 'scoped memory for mlp_forward.3']
    #allocation4 [shape = 'u8[2048]{0}', space=vmem, size = 0x800, scoped, tag = 'input window, operand 2, single buffered']
    #allocation5 [shape = 's32[1]{0}', space=sflag, size = 0x4, scoped, tag = 'scoped memory for mlp_forward.3']
    #allocation6 [shape = 'u8[131072]{0}', space=vmem, size = 0x20000, scoped, tag = 'input window, operand 3, single buffered']
    #allocation7 [shape = 'u8[512]{0}', space=vmem, size = 0x400, scoped, tag = 'input window, operand 4, single buffered']
    #allocation8 [shape = 's32[1]{0}', space=sflag, size = 0x4, scoped, tag = 'scoped memory for mlp_forward.3']
    #allocation9 [shape = 'u8[32768]{0}', space=vmem, size = 0x8000, scoped, tag = 'input window, operand 5, single buffered']
    #allocation10 [shape = 'u8[512]{0}', space=vmem, size = 0x400, scoped, tag = 'input window, operand 6, single buffered']
    #allocation11 [shape = 's32[1]{0}', space=sflag, size = 0x4, scoped, tag = 'scoped memory for mlp_forward.3']
    #allocation12 [shape = 'u8[32768]{0}', space=vmem, size = 0x8000, scoped, tag = 'input window, operand 7, single buffered']
    #allocation13 [shape = 'u8[512]{0}', space=vmem, size = 0x400, scoped, tag = 'input window, operand 8, single buffered']
    #allocation14 [shape = 's32[1]{0}', space=sflag, size = 0x4, scoped, tag = 'scoped memory for mlp_forward.3']
    %14 = vsyncpa [#allocation3], 0
    %15 = vsyncpa [#allocation5], 0
    %16 = vsyncpa [#allocation8], 0
    %17 = vsyncpa [#allocation11], 0
    %18 = vsyncpa [#allocation14], 0
    // Predicated region
    $region2: #{mlp_forward.3} parent=1 // pred_check
      _
    $region3: #{mlp_forward.3} parent=1 // pred_check_branch
      %20 = sbr.rel (0) target = $region5
    $region4: #{mlp_forward.3} parent=1 // pred_region
      _
    $region5: #{mlp_forward.3} parent=1 // pred_fallthru
      _
    // Predicated region
    $region6: #{mlp_forward.3} parent=1 // pred_check
      _
    $region7: #{mlp_forward.3} parent=1 // pred_check_branch
      %22 = sbr.rel (0) target = $region9
    $region8: #{mlp_forward.3} parent=1 // pred_region
      %24 = vsyncadd [#allocation3], 0
      %s25 = sshll.u32 %s1, 4
      %s26 = int_to_ptr.hbm [resolvable:$true] %s25
      %s27 = sshll.u32 [#allocation2], 4
      %s28 = int_to_ptr.vmem [resolvable:$true] %s27
      %33 = dma.hbm_to_vmem [thread:$0]  %s26, 65536, %s28, [#allocation3], 256, 256, 16
    $region9: #{mlp_forward.3} parent=1 // pred_fallthru
      _
    // Predicated region
    $region10: #{mlp_forward.3} parent=1 // pred_check
      _
    $region11: #{mlp_forward.3} parent=1 // pred_check_branch
      %35 = sbr.rel (0) target = $region13
    $region12: #{mlp_forward.3} parent=1 // pred_region
      %37 = vsyncadd [#allocation5], 0
      %s39 = sshll.u32 %s2, 4
      %s40 = int_to_ptr.hbm [resolvable:$true] %s39
      %s41 = sshll.u32 [#allocation4], 4
      %s42 = int_to_ptr.vmem [resolvable:$true] %s41
      %44 = dma.hbm_to_vmem [thread:$0]  %s40, 64, %s42, [#allocation5]
    $region13: #{mlp_forward.3} parent=1 // pred_fallthru
      _
    // Predicated region
    $region14: #{mlp_forward.3} parent=1 // pred_check
      _
    $region15: #{mlp_forward.3} parent=1 // pred_check_branch
      %46 = sbr.rel (0) target = $region17
    $region16: #{mlp_forward.3} parent=1 // pred_region
      %48 = vsyncadd [#allocation5], 0
      %s49 = sshll.u32 %s3, 4
      %s50 = int_to_ptr.hbm [resolvable:$true] %s49
      %s51 = sshll.u32 [#allocation6], 4
      %s52 = int_to_ptr.vmem [resolvable:$true] %s51
      %57 = dma.hbm_to_vmem [thread:$0]  %s50, 4096, %s52, [#allocation5], 64, 64, 4
    $region17: #{mlp_forward.3} parent=1 // pred_fallthru
      _
    // Predicated region
    $region18: #{mlp_forward.3} parent=1 // pred_check
      _
    $region19: #{mlp_forward.3} parent=1 // pred_check_branch
      %59 = sbr.rel (0) target = $region21
    $region20: #{mlp_forward.3} parent=1 // pred_region
      %61 = vsyncadd [#allocation8], 0
      %s63 = sshll.u32 %s4, 4
      %s64 = int_to_ptr.hbm [resolvable:$true] %s63
      %s65 = sshll.u32 [#allocation7], 4
      %s66 = int_to_ptr.vmem [resolvable:$true] %s65
      %68 = dma.hbm_to_vmem [thread:$0]  %s64, 16, %s66, [#allocation8]
    $region21: #{mlp_forward.3} parent=1 // pred_fallthru
      _
    // Predicated region
    $region22: #{mlp_forward.3} parent=1 // pred_check
      _
    $region23: #{mlp_forward.3} parent=1 // pred_check_branch
      %70 = sbr.rel (0) target = $region25
    $region24: #{mlp_forward.3} parent=1 // pred_region
      %72 = vsyncadd [#allocation8], 0
      %s73 = sshll.u32 %s5, 4
      %s74 = int_to_ptr.hbm [resolvable:$true] %s73
      %s75 = sshll.u32 [#allocation9], 4
      %s76 = int_to_ptr.vmem [resolvable:$true] %s75
      %81 = dma.hbm_to_vmem [thread:$0]  %s74, 1024, %s76, [#allocation8], 64, 64, 4
    $region25: #{mlp_forward.3} parent=1 // pred_fallthru
      _
    // Predicated region
    $region26: #{mlp_forward.3} parent=1 // pred_check
      _
    $region27: #{mlp_forward.3} parent=1 // pred_check_branch
      %83 = sbr.rel (0) target = $region29
    $region28: #{mlp_forward.3} parent=1 // pred_region
      %85 = vsyncadd [#allocation11], 0
      %s87 = sshll.u32 %s6, 4
      %s88 = int_to_ptr.hbm [resolvable:$true] %s87
      %s89 = sshll.u32 [#allocation10], 4
      %s90 = int_to_ptr.vmem [resolvable:$true] %s89
      %92 = dma.hbm_to_vmem [thread:$0]  %s88, 16, %s90, [#allocation11]
    $region29: #{mlp_forward.3} parent=1 // pred_fallthru
      _
    // Predicated region
    $region30: #{mlp_forward.3} parent=1 // pred_check
      _
    $region31: #{mlp_forward.3} parent=1 // pred_check_branch
      %94 = sbr.rel (0) target = $region33
    $region32: #{mlp_forward.3} parent=1 // pred_region
      %96 = vsyncadd [#allocation11], 0
      %s97 = sshll.u32 %s7, 4
      %s98 = int_to_ptr.hbm [resolvable:$true] %s97
      %s99 = sshll.u32 [#allocation12], 4
      %s100 = int_to_ptr.vmem [resolvable:$true] %s99
      %105 = dma.hbm_to_vmem [thread:$0]  %s98, 1024, %s100, [#allocation11], 64, 64, 4
    $region33: #{mlp_forward.3} parent=1 // pred_fallthru
      _
    // Predicated region
    $region34: #{mlp_forward.3} parent=1 // pred_check
      _
    $region35: #{mlp_forward.3} parent=1 // pred_check_branch
      %107 = sbr.rel (0) target = $region37
    $region36: #{mlp_forward.3} parent=1 // pred_region
      %109 = vsyncadd [#allocation14], 0
      %s111 = sshll.u32 %s8, 4
      %s112 = int_to_ptr.hbm [resolvable:$true] %s111
      %s113 = sshll.u32 [#allocation13], 4
      %s114 = int_to_ptr.vmem [resolvable:$true] %s113
      %116 = dma.hbm_to_vmem [thread:$0]  %s112, 16, %s114, [#allocation14]
    $region37: #{mlp_forward.3} parent=1 // pred_fallthru
      _
    // Predicated region
    $region38: #{mlp_forward.3} parent=1 // pred_check
      _
    $region39: #{mlp_forward.3} parent=1 // pred_check_branch
      %118 = sbr.rel (0) target = $region41
    $region40: #{mlp_forward.3} parent=1 // pred_region
      %120 = dma.done [#allocation3], 65536
    $region41: #{mlp_forward.3} parent=1 // pred_fallthru
      _
    // Predicated region
    $region42: #{mlp_forward.3} parent=1 // pred_check
      _
    $region43: #{mlp_forward.3} parent=1 // pred_check_branch
      %122 = sbr.rel (0) target = $region45
    $region44: #{mlp_forward.3} parent=1 // pred_region
      %124 = dma.done [#allocation5], 64
    $region45: #{mlp_forward.3} parent=1 // pred_fallthru
      _
    // Predicated region
    $region46: #{mlp_forward.3} parent=1 // pred_check
      _
    $region47: #{mlp_forward.3} parent=1 // pred_check_branch
      %126 = sbr.rel (0) target = $region49
    $region48: #{mlp_forward.3} parent=1 // pred_region
      %128 = dma.done [#allocation5], 4096
    $region49: #{mlp_forward.3} parent=1 // pred_fallthru
      _
    // Predicated region
    $region50: #{mlp_forward.3} parent=1 // pred_check
      _
    $region51: #{mlp_forward.3} parent=1 // pred_check_branch
      %130 = sbr.rel (0) target = $region53
    $region52: #{mlp_forward.3} parent=1 // pred_region
      %132 = dma.done [#allocation8], 16
    $region53: #{mlp_forward.3} parent=1 // pred_fallthru
      _
    // Predicated region
    $region54: #{mlp_forward.3} parent=1 // pred_check
      _
    $region55: #{mlp_forward.3} parent=1 // pred_check_branch
      %134 = sbr.rel (0) target = $region57
    $region56: #{mlp_forward.3} parent=1 // pred_region
      %136 = dma.done [#allocation8], 1024
    $region57: #{mlp_forward.3} parent=1 // pred_fallthru
      _
    // Predicated region
    $region58: #{mlp_forward.3} parent=1 // pred_check
      _
    $region59: #{mlp_forward.3} parent=1 // pred_check_branch
      %138 = sbr.rel (0) target = $region61
    $region60: #{mlp_forward.3} parent=1 // pred_region
      %140 = dma.done [#allocation11], 16
    $region61: #{mlp_forward.3} parent=1 // pred_fallthru
      _
    // Predicated region
    $region62: #{mlp_forward.3} parent=1 // pred_check
      _
    $region63: #{mlp_forward.3} parent=1 // pred_check_branch
      %142 = sbr.rel (0) target = $region65
    $region64: #{mlp_forward.3} parent=1 // pred_region
      %144 = dma.done [#allocation11], 1024
    $region65: #{mlp_forward.3} parent=1 // pred_fallthru
      _
    // Predicated region
    $region66: #{mlp_forward.3} parent=1 // pred_check
      _
    $region67: #{mlp_forward.3} parent=1 // pred_check_branch
      %146 = sbr.rel (0) target = $region69
    $region68: #{mlp_forward.3} parent=1 // pred_region
      %148 = dma.done [#allocation14], 16
    $region69: #{mlp_forward.3} parent=1 // pred_fallthru
      _
    %v149 = vld [vmem:[%s0] sm:$0xff]
    %v150 = vld [vmem:[%s0 + $0x8] sm:$0xff]
    %v151 = vld [vmem:[%s0 + $0x10] sm:$0xff]
    %v152 = vld [vmem:[%s0 + $0x18] sm:$0xff]
    %v153 = vld [vmem:[%s0 + $0x20] sm:$0xff]
    %v154 = vld [vmem:[%s0 + $0x28] sm:$0xff]
    %v155 = vld [vmem:[%s0 + $0x30] sm:$0xff]
    %v156 = vld [vmem:[%s0 + $0x38] sm:$0xff]
    %v157 = vld [vmem:[#allocation2] sm:$0xff]
    %v158 = vld [vmem:[#allocation2 + $0x8] sm:$0xff]
    %v159 = vld [vmem:[#allocation2 + $0x10] sm:$0xff]
    %v160 = vld [vmem:[#allocation2 + $0x18] sm:$0xff]
    %v161 = vld [vmem:[#allocation2 + $0x20] sm:$0xff]
    %v162 = vld [vmem:[#allocation2 + $0x28] sm:$0xff]
    %v163 = vld [vmem:[#allocation2 + $0x30] sm:$0xff]
    %v164 = vld [vmem:[#allocation2 + $0x38] sm:$0xff]
    %v165 = vld [vmem:[#allocation2 + $0x40] sm:$0xff]
    %v166 = vld [vmem:[#allocation2 + $0x48] sm:$0xff]
    %v167 = vld [vmem:[#allocation2 + $0x50] sm:$0xff]
    %v168 = vld [vmem:[#allocation2 + $0x58] sm:$0xff]
    %v169 = vld [vmem:[#allocation2 + $0x60] sm:$0xff]
    %v170 = vld [vmem:[#allocation2 + $0x68] sm:$0xff]
    %v171 = vld [vmem:[#allocation2 + $0x70] sm:$0xff]
    %v172 = vld [vmem:[#allocation2 + $0x78] sm:$0xff]
    %v173 = vld [vmem:[#allocation2 + $0x80] sm:$0xff]
    %v174 = vld [vmem:[#allocation2 + $0x88] sm:$0xff]
    %v175 = vld [vmem:[#allocation2 + $0x90] sm:$0xff]
    %v176 = vld [vmem:[#allocation2 + $0x98] sm:$0xff]
    %v177 = vld [vmem:[#allocation2 + $0xa0] sm:$0xff]
    %v178 = vld [vmem:[#allocation2 + $0xa8] sm:$0xff]
    %v179 = vld [vmem:[#allocation2 + $0xb0] sm:$0xff]
    %v180 = vld [vmem:[#allocation2 + $0xb8] sm:$0xff]
    %v181 = vld [vmem:[#allocation2 + $0xc0] sm:$0xff]
    %v182 = vld [vmem:[#allocation2 + $0xc8] sm:$0xff]
    %v183 = vld [vmem:[#allocation2 + $0xd0] sm:$0xff]
    %v184 = vld [vmem:[#allocation2 + $0xd8] sm:$0xff]
    %v185 = vld [vmem:[#allocation2 + $0xe0] sm:$0xff]
    %v186 = vld [vmem:[#allocation2 + $0xe8] sm:$0xff]
    %v187 = vld [vmem:[#allocation2 + $0xf0] sm:$0xff]
    %v188 = vld [vmem:[#allocation2 + $0xf8] sm:$0xff]
    %v189 = vld [vmem:[#allocation2 + $0x100] sm:$0xff]
    %v190 = vld [vmem:[#allocation2 + $0x108] sm:$0xff]
    %v191 = vld [vmem:[#allocation2 + $0x110] sm:$0xff]
    %v192 = vld [vmem:[#allocation2 + $0x118] sm:$0xff]
    %v193 = vld [vmem:[#allocation2 + $0x120] sm:$0xff]
    %v194 = vld [vmem:[#allocation2 + $0x128] sm:$0xff]
    %v195 = vld [vmem:[#allocation2 + $0x130] sm:$0xff]
    %v196 = vld [vmem:[#allocation2 + $0x138] sm:$0xff]
    %v197 = vld [vmem:[#allocation2 + $0x140] sm:$0xff]
    %v198 = vld [vmem:[#allocation2 + $0x148] sm:$0xff]
    %v199 = vld [vmem:[#allocation2 + $0x150] sm:$0xff]
    %v200 = vld [vmem:[#allocation2 + $0x158] sm:$0xff]
    %v201 = vld [vmem:[#allocation2 + $0x160] sm:$0xff]
    %v202 = vld [vmem:[#allocation2 + $0x168] sm:$0xff]
    %v203 = vld [vmem:[#allocation2 + $0x170] sm:$0xff]
    %v204 = vld [vmem:[#allocation2 + $0x178] sm:$0xff]
    %v205 = vld [vmem:[#allocation2 + $0x180] sm:$0xff]
    %v206 = vld [vmem:[#allocation2 + $0x188] sm:$0xff]
    %v207 = vld [vmem:[#allocation2 + $0x190] sm:$0xff]
    %v208 = vld [vmem:[#allocation2 + $0x198] sm:$0xff]
    %v209 = vld [vmem:[#allocation2 + $0x1a0] sm:$0xff]
    %v210 = vld [vmem:[#allocation2 + $0x1a8] sm:$0xff]
    %v211 = vld [vmem:[#allocation2 + $0x1b0] sm:$0xff]
    %v212 = vld [vmem:[#allocation2 + $0x1b8] sm:$0xff]
    %v213 = vld [vmem:[#allocation2 + $0x1c0] sm:$0xff]
    %v214 = vld [vmem:[#allocation2 + $0x1c8] sm:$0xff]
    %v215 = vld [vmem:[#allocation2 + $0x1d0] sm:$0xff]
    %v216 = vld [vmem:[#allocation2 + $0x1d8] sm:$0xff]
    %v217 = vld [vmem:[#allocation2 + $0x1e0] sm:$0xff]
    %v218 = vld [vmem:[#allocation2 + $0x1e8] sm:$0xff]
    %v219 = vld [vmem:[#allocation2 + $0x1f0] sm:$0xff]
    %v220 = vld [vmem:[#allocation2 + $0x1f8] sm:$0xff]
    %v221 = vld [vmem:[#allocation2 + $0x200] sm:$0xff]
    %v222 = vld [vmem:[#allocation2 + $0x208] sm:$0xff]
    %v223 = vld [vmem:[#allocation2 + $0x210] sm:$0xff]
    %v224 = vld [vmem:[#allocation2 + $0x218] sm:$0xff]
    %v225 = vld [vmem:[#allocation2 + $0x220] sm:$0xff]
    %v226 = vld [vmem:[#allocation2 + $0x228] sm:$0xff]
    %v227 = vld [vmem:[#allocation2 + $0x230] sm:$0xff]
    %v228 = vld [vmem:[#allocation2 + $0x238] sm:$0xff]
    %v229 = vld [vmem:[#allocation2 + $0x240] sm:$0xff]
    %v230 = vld [vmem:[#allocation2 + $0x248] sm:$0xff]
    %v231 = vld [vmem:[#allocation2 + $0x250] sm:$0xff]
    %v232 = vld [vmem:[#allocation2 + $0x258] sm:$0xff]
    %v233 = vld [vmem:[#allocation2 + $0x260] sm:$0xff]
    %v234 = vld [vmem:[#allocation2 + $0x268] sm:$0xff]
    %v235 = vld [vmem:[#allocation2 + $0x270] sm:$0xff]
    %v236 = vld [vmem:[#allocation2 + $0x278] sm:$0xff]
    %v237 = vld [vmem:[#allocation2 + $0x280] sm:$0xff]
    %v238 = vld [vmem:[#allocation2 + $0x288] sm:$0xff]
    %v239 = vld [vmem:[#allocation2 + $0x290] sm:$0xff]
    %v240 = vld [vmem:[#allocation2 + $0x298] sm:$0xff]
    %v241 = vld [vmem:[#allocation2 + $0x2a0] sm:$0xff]
    %v242 = vld [vmem:[#allocation2 + $0x2a8] sm:$0xff]
    %v243 = vld [vmem:[#allocation2 + $0x2b0] sm:$0xff]
    %v244 = vld [vmem:[#allocation2 + $0x2b8] sm:$0xff]
    %v245 = vld [vmem:[#allocation2 + $0x2c0] sm:$0xff]
    %v246 = vld [vmem:[#allocation2 + $0x2c8] sm:$0xff]
    %v247 = vld [vmem:[#allocation2 + $0x2d0] sm:$0xff]
    %v248 = vld [vmem:[#allocation2 + $0x2d8] sm:$0xff]
    %v249 = vld [vmem:[#allocation2 + $0x2e0] sm:$0xff]
    %v250 = vld [vmem:[#allocation2 + $0x2e8] sm:$0xff]
    %v251 = vld [vmem:[#allocation2 + $0x2f0] sm:$0xff]
    %v252 = vld [vmem:[#allocation2 + $0x2f8] sm:$0xff]
    %v253 = vld [vmem:[#allocation2 + $0x300] sm:$0xff]
    %v254 = vld [vmem:[#allocation2 + $0x308] sm:$0xff]
    %v255 = vld [vmem:[#allocation2 + $0x310] sm:$0xff]
    %v256 = vld [vmem:[#allocation2 + $0x318] sm:$0xff]
    %v257 = vld [vmem:[#allocation2 + $0x320] sm:$0xff]
    %v258 = vld [vmem:[#allocation2 + $0x328] sm:$0xff]
    %v259 = vld [vmem:[#allocation2 + $0x330] sm:$0xff]
    %v260 = vld [vmem:[#allocation2 + $0x338] sm:$0xff]
    %v261 = vld [vmem:[#allocation2 + $0x340] sm:$0xff]
    %v262 = vld [vmem:[#allocation2 + $0x348] sm:$0xff]
    %v263 = vld [vmem:[#allocation2 + $0x350] sm:$0xff]
    %v264 = vld [vmem:[#allocation2 + $0x358] sm:$0xff]
    %v265 = vld [vmem:[#allocation2 + $0x360] sm:$0xff]
    %v266 = vld [vmem:[#allocation2 + $0x368] sm:$0xff]
    %v267 = vld [vmem:[#allocation2 + $0x370] sm:$0xff]
    %v268 = vld [vmem:[#allocation2 + $0x378] sm:$0xff]
    %v269 = vld [vmem:[#allocation2 + $0x380] sm:$0xff]
    %v270 = vld [vmem:[#allocation2 + $0x388] sm:$0xff]
    %v271 = vld [vmem:[#allocation2 + $0x390] sm:$0xff]
    %v272 = vld [vmem:[#allocation2 + $0x398] sm:$0xff]
    %v273 = vld [vmem:[#allocation2 + $0x3a0] sm:$0xff]
    %v274 = vld [vmem:[#allocation2 + $0x3a8] sm:$0xff]
    %v275 = vld [vmem:[#allocation2 + $0x3b0] sm:$0xff]
    %v276 = vld [vmem:[#allocation2 + $0x3b8] sm:$0xff]
    %v277 = vld [vmem:[#allocation2 + $0x3c0] sm:$0xff]
    %v278 = vld [vmem:[#allocation2 + $0x3c8] sm:$0xff]
    %v279 = vld [vmem:[#allocation2 + $0x3d0] sm:$0xff]
    %v280 = vld [vmem:[#allocation2 + $0x3d8] sm:$0xff]
    %v281 = vld [vmem:[#allocation2 + $0x3e0] sm:$0xff]
    %v282 = vld [vmem:[#allocation2 + $0x3e8] sm:$0xff]
    %v283 = vld [vmem:[#allocation2 + $0x3f0] sm:$0xff]
    %v284 = vld [vmem:[#allocation2 + $0x3f8] sm:$0xff]
    %v285 = vld [vmem:[#allocation2 + $0x400] sm:$0xff]
    %v286 = vld [vmem:[#allocation2 + $0x408] sm:$0xff]
    %v287 = vld [vmem:[#allocation2 + $0x410] sm:$0xff]
    %v288 = vld [vmem:[#allocation2 + $0x418] sm:$0xff]
    %v289 = vld [vmem:[#allocation2 + $0x420] sm:$0xff]
    %v290 = vld [vmem:[#allocation2 + $0x428] sm:$0xff]
    %v291 = vld [vmem:[#allocation2 + $0x430] sm:$0xff]
    %v292 = vld [vmem:[#allocation2 + $0x438] sm:$0xff]
    %v293 = vld [vmem:[#allocation2 + $0x440] sm:$0xff]
    %v294 = vld [vmem:[#allocation2 + $0x448] sm:$0xff]
    %v295 = vld [vmem:[#allocation2 + $0x450] sm:$0xff]
    %v296 = vld [vmem:[#allocation2 + $0x458] sm:$0xff]
    %v297 = vld [vmem:[#allocation2 + $0x460] sm:$0xff]
    %v298 = vld [vmem:[#allocation2 + $0x468] sm:$0xff]
    %v299 = vld [vmem:[#allocation2 + $0x470] sm:$0xff]
    %v300 = vld [vmem:[#allocation2 + $0x478] sm:$0xff]
    %v301 = vld [vmem:[#allocation2 + $0x480] sm:$0xff]
    %v302 = vld [vmem:[#allocation2 + $0x488] sm:$0xff]
    %v303 = vld [vmem:[#allocation2 + $0x490] sm:$0xff]
    %v304 = vld [vmem:[#allocation2 + $0x498] sm:$0xff]
    %v305 = vld [vmem:[#allocation2 + $0x4a0] sm:$0xff]
    %v306 = vld [vmem:[#allocation2 + $0x4a8] sm:$0xff]
    %v307 = vld [vmem:[#allocation2 + $0x4b0] sm:$0xff]
    %v308 = vld [vmem:[#allocation2 + $0x4b8] sm:$0xff]
    %v309 = vld [vmem:[#allocation2 + $0x4c0] sm:$0xff]
    %v310 = vld [vmem:[#allocation2 + $0x4c8] sm:$0xff]
    %v311 = vld [vmem:[#allocation2 + $0x4d0] sm:$0xff]
    %v312 = vld [vmem:[#allocation2 + $0x4d8] sm:$0xff]
    %v313 = vld [vmem:[#allocation2 + $0x4e0] sm:$0xff]
    %v314 = vld [vmem:[#allocation2 + $0x4e8] sm:$0xff]
    %v315 = vld [vmem:[#allocation2 + $0x4f0] sm:$0xff]
    %v316 = vld [vmem:[#allocation2 + $0x4f8] sm:$0xff]
    %v317 = vld [vmem:[#allocation2 + $0x500] sm:$0xff]
    %v318 = vld [vmem:[#allocation2 + $0x508] sm:$0xff]
    %v319 = vld [vmem:[#allocation2 + $0x510] sm:$0xff]
    %v320 = vld [vmem:[#allocation2 + $0x518] sm:$0xff]
    %v321 = vld [vmem:[#allocation2 + $0x520] sm:$0xff]
    %v322 = vld [vmem:[#allocation2 + $0x528] sm:$0xff]
    %v323 = vld [vmem:[#allocation2 + $0x530] sm:$0xff]
    %v324 = vld [vmem:[#allocation2 + $0x538] sm:$0xff]
    %v325 = vld [vmem:[#allocation2 + $0x540] sm:$0xff]
    %v326 = vld [vmem:[#allocation2 + $0x548] sm:$0xff]
    %v327 = vld [vmem:[#allocation2 + $0x550] sm:$0xff]
    %v328 = vld [vmem:[#allocation2 + $0x558] sm:$0xff]
    %v329 = vld [vmem:[#allocation2 + $0x560] sm:$0xff]
    %v330 = vld [vmem:[#allocation2 + $0x568] sm:$0xff]
    %v331 = vld [vmem:[#allocation2 + $0x570] sm:$0xff]
    %v332 = vld [vmem:[#allocation2 + $0x578] sm:$0xff]
    %v333 = vld [vmem:[#allocation2 + $0x580] sm:$0xff]
    %v334 = vld [vmem:[#allocation2 + $0x588] sm:$0xff]
    %v335 = vld [vmem:[#allocation2 + $0x590] sm:$0xff]
    %v336 = vld [vmem:[#allocation2 + $0x598] sm:$0xff]
    %v337 = vld [vmem:[#allocation2 + $0x5a0] sm:$0xff]
    %v338 = vld [vmem:[#allocation2 + $0x5a8] sm:$0xff]
    %v339 = vld [vmem:[#allocation2 + $0x5b0] sm:$0xff]
    %v340 = vld [vmem:[#allocation2 + $0x5b8] sm:$0xff]
    %v341 = vld [vmem:[#allocation2 + $0x5c0] sm:$0xff]
    %v342 = vld [vmem:[#allocation2 + $0x5c8] sm:$0xff]
    %v343 = vld [vmem:[#allocation2 + $0x5d0] sm:$0xff]
    %v344 = vld [vmem:[#allocation2 + $0x5d8] sm:$0xff]
    %v345 = vld [vmem:[#allocation2 + $0x5e0] sm:$0xff]
    %v346 = vld [vmem:[#allocation2 + $0x5e8] sm:$0xff]
    %v347 = vld [vmem:[#allocation2 + $0x5f0] sm:$0xff]
    %v348 = vld [vmem:[#allocation2 + $0x5f8] sm:$0xff]
    %v349 = vld [vmem:[#allocation2 + $0x600] sm:$0xff]
    %v350 = vld [vmem:[#allocation2 + $0x608] sm:$0xff]
    %v351 = vld [vmem:[#allocation2 + $0x610] sm:$0xff]
    %v352 = vld [vmem:[#allocation2 + $0x618] sm:$0xff]
    %v353 = vld [vmem:[#allocation2 + $0x620] sm:$0xff]
    %v354 = vld [vmem:[#allocation2 + $0x628] sm:$0xff]
    %v355 = vld [vmem:[#allocation2 + $0x630] sm:$0xff]
    %v356 = vld [vmem:[#allocation2 + $0x638] sm:$0xff]
    %v357 = vld [vmem:[#allocation2 + $0x640] sm:$0xff]
    %v358 = vld [vmem:[#allocation2 + $0x648] sm:$0xff]
    %v359 = vld [vmem:[#allocation2 + $0x650] sm:$0xff]
    %v360 = vld [vmem:[#allocation2 + $0x658] sm:$0xff]
    %v361 = vld [vmem:[#allocation2 + $0x660] sm:$0xff]
    %v362 = vld [vmem:[#allocation2 + $0x668] sm:$0xff]
    %v363 = vld [vmem:[#allocation2 + $0x670] sm:$0xff]
    %v364 = vld [vmem:[#allocation2 + $0x678] sm:$0xff]
    %v365 = vld [vmem:[#allocation2 + $0x680] sm:$0xff]
    %v366 = vld [vmem:[#allocation2 + $0x688] sm:$0xff]
    %v367 = vld [vmem:[#allocation2 + $0x690] sm:$0xff]
    %v368 = vld [vmem:[#allocation2 + $0x698] sm:$0xff]
    %v369 = vld [vmem:[#allocation2 + $0x6a0] sm:$0xff]
    %v370 = vld [vmem:[#allocation2 + $0x6a8] sm:$0xff]
    %v371 = vld [vmem:[#allocation2 + $0x6b0] sm:$0xff]
    %v372 = vld [vmem:[#allocation2 + $0x6b8] sm:$0xff]
    %v373 = vld [vmem:[#allocation2 + $0x6c0] sm:$0xff]
    %v374 = vld [vmem:[#allocation2 + $0x6c8] sm:$0xff]
    %v375 = vld [vmem:[#allocation2 + $0x6d0] sm:$0xff]
    %v376 = vld [vmem:[#allocation2 + $0x6d8] sm:$0xff]
    %v377 = vld [vmem:[#allocation2 + $0x6e0] sm:$0xff]
    %v378 = vld [vmem:[#allocation2 + $0x6e8] sm:$0xff]
    %v379 = vld [vmem:[#allocation2 + $0x6f0] sm:$0xff]
    %v380 = vld [vmem:[#allocation2 + $0x6f8] sm:$0xff]
    %v381 = vld [vmem:[#allocation2 + $0x700] sm:$0xff]
    %v382 = vld [vmem:[#allocation2 + $0x708] sm:$0xff]
    %v383 = vld [vmem:[#allocation2 + $0x710] sm:$0xff]
    %v384 = vld [vmem:[#allocation2 + $0x718] sm:$0xff]
    %v385 = vld [vmem:[#allocation2 + $0x720] sm:$0xff]
    %v386 = vld [vmem:[#allocation2 + $0x728] sm:$0xff]
    %v387 = vld [vmem:[#allocation2 + $0x730] sm:$0xff]
    %v388 = vld [vmem:[#allocation2 + $0x738] sm:$0xff]
    %v389 = vld [vmem:[#allocation2 + $0x740] sm:$0xff]
    %v390 = vld [vmem:[#allocation2 + $0x748] sm:$0xff]
    %v391 = vld [vmem:[#allocation2 + $0x750] sm:$0xff]
    %v392 = vld [vmem:[#allocation2 + $0x758] sm:$0xff]
    %v393 = vld [vmem:[#allocation2 + $0x760] sm:$0xff]
    %v394 = vld [vmem:[#allocation2 + $0x768] sm:$0xff]
    %v395 = vld [vmem:[#allocation2 + $0x770] sm:$0xff]
    %v396 = vld [vmem:[#allocation2 + $0x778] sm:$0xff]
    %v397 = vld [vmem:[#allocation2 + $0x780] sm:$0xff]
    %v398 = vld [vmem:[#allocation2 + $0x788] sm:$0xff]
    %v399 = vld [vmem:[#allocation2 + $0x790] sm:$0xff]
    %v400 = vld [vmem:[#allocation2 + $0x798] sm:$0xff]
    %v401 = vld [vmem:[#allocation2 + $0x7a0] sm:$0xff]
    %v402 = vld [vmem:[#allocation2 + $0x7a8] sm:$0xff]
    %v403 = vld [vmem:[#allocation2 + $0x7b0] sm:$0xff]
    %v404 = vld [vmem:[#allocation2 + $0x7b8] sm:$0xff]
    %v405 = vld [vmem:[#allocation2 + $0x7c0] sm:$0xff]
    %v406 = vld [vmem:[#allocation2 + $0x7c8] sm:$0xff]
    %v407 = vld [vmem:[#allocation2 + $0x7d0] sm:$0xff]
    %v408 = vld [vmem:[#allocation2 + $0x7d8] sm:$0xff]
    %v409 = vld [vmem:[#allocation2 + $0x7e0] sm:$0xff]
    %v410 = vld [vmem:[#allocation2 + $0x7e8] sm:$0xff]
    %v411 = vld [vmem:[#allocation2 + $0x7f0] sm:$0xff]
    %v412 = vld [vmem:[#allocation2 + $0x7f8] sm:$0xff]
    %v413 = vld [vmem:[#allocation2 + $0x800] sm:$0xff]
    %v414 = vld [vmem:[#allocation2 + $0x808] sm:$0xff]
    %v415 = vld [vmem:[#allocation2 + $0x810] sm:$0xff]
    %v416 = vld [vmem:[#allocation2 + $0x818] sm:$0xff]
    %v417 = vld [vmem:[#allocation2 + $0x820] sm:$0xff]
    %v418 = vld [vmem:[#allocation2 + $0x828] sm:$0xff]
    %v419 = vld [vmem:[#allocation2 + $0x830] sm:$0xff]
    %v420 = vld [vmem:[#allocation2 + $0x838] sm:$0xff]
    %v421 = vld [vmem:[#allocation2 + $0x840] sm:$0xff]
    %v422 = vld [vmem:[#allocation2 + $0x848] sm:$0xff]
    %v423 = vld [vmem:[#allocation2 + $0x850] sm:$0xff]
    %v424 = vld [vmem:[#allocation2 + $0x858] sm:$0xff]
    %v425 = vld [vmem:[#allocation2 + $0x860] sm:$0xff]
    %v426 = vld [vmem:[#allocation2 + $0x868] sm:$0xff]
    %v427 = vld [vmem:[#allocation2 + $0x870] sm:$0xff]
    %v428 = vld [vmem:[#allocation2 + $0x878] sm:$0xff]
    %v429 = vld [vmem:[#allocation2 + $0x880] sm:$0xff]
    %v430 = vld [vmem:[#allocation2 + $0x888] sm:$0xff]
    %v431 = vld [vmem:[#allocation2 + $0x890] sm:$0xff]
    %v432 = vld [vmem:[#allocation2 + $0x898] sm:$0xff]
    %v433 = vld [vmem:[#allocation2 + $0x8a0] sm:$0xff]
    %v434 = vld [vmem:[#allocation2 + $0x8a8] sm:$0xff]
    %v435 = vld [vmem:[#allocation2 + $0x8b0] sm:$0xff]
    %v436 = vld [vmem:[#allocation2 + $0x8b8] sm:$0xff]
    %v437 = vld [vmem:[#allocation2 + $0x8c0] sm:$0xff]
    %v438 = vld [vmem:[#allocation2 + $0x8c8] sm:$0xff]
    %v439 = vld [vmem:[#allocation2 + $0x8d0] sm:$0xff]
    %v440 = vld [vmem:[#allocation2 + $0x8d8] sm:$0xff]
    %v441 = vld [vmem:[#allocation2 + $0x8e0] sm:$0xff]
    %v442 = vld [vmem:[#allocation2 + $0x8e8] sm:$0xff]
    %v443 = vld [vmem:[#allocation2 + $0x8f0] sm:$0xff]
    %v444 = vld [vmem:[#allocation2 + $0x8f8] sm:$0xff]
    %v445 = vld [vmem:[#allocation2 + $0x900] sm:$0xff]
    %v446 = vld [vmem:[#allocation2 + $0x908] sm:$0xff]
    %v447 = vld [vmem:[#allocation2 + $0x910] sm:$0xff]
    %v448 = vld [vmem:[#allocation2 + $0x918] sm:$0xff]
    %v449 = vld [vmem:[#allocation2 + $0x920] sm:$0xff]
    %v450 = vld [vmem:[#allocation2 + $0x928] sm:$0xff]
    %v451 = vld [vmem:[#allocation2 + $0x930] sm:$0xff]
    %v452 = vld [vmem:[#allocation2 + $0x938] sm:$0xff]
    %v453 = vld [vmem:[#allocation2 + $0x940] sm:$0xff]
    %v454 = vld [vmem:[#allocation2 + $0x948] sm:$0xff]
    %v455 = vld [vmem:[#allocation2 + $0x950] sm:$0xff]
    %v456 = vld [vmem:[#allocation2 + $0x958] sm:$0xff]
    %v457 = vld [vmem:[#allocation2 + $0x960] sm:$0xff]
    %v458 = vld [vmem:[#allocation2 + $0x968] sm:$0xff]
    %v459 = vld [vmem:[#allocation2 + $0x970] sm:$0xff]
    %v460 = vld [vmem:[#allocation2 + $0x978] sm:$0xff]
    %v461 = vld [vmem:[#allocation2 + $0x980] sm:$0xff]
    %v462 = vld [vmem:[#allocation2 + $0x988] sm:$0xff]
    %v463 = vld [vmem:[#allocation2 + $0x990] sm:$0xff]
    %v464 = vld [vmem:[#allocation2 + $0x998] sm:$0xff]
    %v465 = vld [vmem:[#allocation2 + $0x9a0] sm:$0xff]
    %v466 = vld [vmem:[#allocation2 + $0x9a8] sm:$0xff]
    %v467 = vld [vmem:[#allocation2 + $0x9b0] sm:$0xff]
    %v468 = vld [vmem:[#allocation2 + $0x9b8] sm:$0xff]
    %v469 = vld [vmem:[#allocation2 + $0x9c0] sm:$0xff]
    %v470 = vld [vmem:[#allocation2 + $0x9c8] sm:$0xff]
    %v471 = vld [vmem:[#allocation2 + $0x9d0] sm:$0xff]
    %v472 = vld [vmem:[#allocation2 + $0x9d8] sm:$0xff]
    %v473 = vld [vmem:[#allocation2 + $0x9e0] sm:$0xff]
    %v474 = vld [vmem:[#allocation2 + $0x9e8] sm:$0xff]
    %v475 = vld [vmem:[#allocation2 + $0x9f0] sm:$0xff]
    %v476 = vld [vmem:[#allocation2 + $0x9f8] sm:$0xff]
    %v477 = vld [vmem:[#allocation2 + $0xa00] sm:$0xff]
    %v478 = vld [vmem:[#allocation2 + $0xa08] sm:$0xff]
    %v479 = vld [vmem:[#allocation2 + $0xa10] sm:$0xff]
    %v480 = vld [vmem:[#allocation2 + $0xa18] sm:$0xff]
    %v481 = vld [vmem:[#allocation2 + $0xa20] sm:$0xff]
    %v482 = vld [vmem:[#allocation2 + $0xa28] sm:$0xff]
    %v483 = vld [vmem:[#allocation2 + $0xa30] sm:$0xff]
    %v484 = vld [vmem:[#allocation2 + $0xa38] sm:$0xff]
    %v485 = vld [vmem:[#allocation2 + $0xa40] sm:$0xff]
    %v486 = vld [vmem:[#allocation2 + $0xa48] sm:$0xff]
    %v487 = vld [vmem:[#allocation2 + $0xa50] sm:$0xff]
    %v488 = vld [vmem:[#allocation2 + $0xa58] sm:$0xff]
    %v489 = vld [vmem:[#allocation2 + $0xa60] sm:$0xff]
    %v490 = vld [vmem:[#allocation2 + $0xa68] sm:$0xff]
    %v491 = vld [vmem:[#allocation2 + $0xa70] sm:$0xff]
    %v492 = vld [vmem:[#allocation2 + $0xa78] sm:$0xff]
    %v493 = vld [vmem:[#allocation2 + $0xa80] sm:$0xff]
    %v494 = vld [vmem:[#allocation2 + $0xa88] sm:$0xff]
    %v495 = vld [vmem:[#allocation2 + $0xa90] sm:$0xff]
    %v496 = vld [vmem:[#allocation2 + $0xa98] sm:$0xff]
    %v497 = vld [vmem:[#allocation2 + $0xaa0] sm:$0xff]
    %v498 = vld [vmem:[#allocation2 + $0xaa8] sm:$0xff]
    %v499 = vld [vmem:[#allocation2 + $0xab0] sm:$0xff]
    %v500 = vld [vmem:[#allocation2 + $0xab8] sm:$0xff]
    %v501 = vld [vmem:[#allocation2 + $0xac0] sm:$0xff]
    %v502 = vld [vmem:[#allocation2 + $0xac8] sm:$0xff]
    %v503 = vld [vmem:[#allocation2 + $0xad0] sm:$0xff]
    %v504 = vld [vmem:[#allocation2 + $0xad8] sm:$0xff]
    %v505 = vld [vmem:[#allocation2 + $0xae0] sm:$0xff]
    %v506 = vld [vmem:[#allocation2 + $0xae8] sm:$0xff]
    %v507 = vld [vmem:[#allocation2 + $0xaf0] sm:$0xff]
    %v508 = vld [vmem:[#allocation2 + $0xaf8] sm:$0xff]
    %v509 = vld [vmem:[#allocation2 + $0xb00] sm:$0xff]
    %v510 = vld [vmem:[#allocation2 + $0xb08] sm:$0xff]
    %v511 = vld [vmem:[#allocation2 + $0xb10] sm:$0xff]
    %v512 = vld [vmem:[#allocation2 + $0xb18] sm:$0xff]
    %v513 = vld [vmem:[#allocation2 + $0xb20] sm:$0xff]
    %v514 = vld [vmem:[#allocation2 + $0xb28] sm:$0xff]
    %v515 = vld [vmem:[#allocation2 + $0xb30] sm:$0xff]
    %v516 = vld [vmem:[#allocation2 + $0xb38] sm:$0xff]
    %v517 = vld [vmem:[#allocation2 + $0xb40] sm:$0xff]
    %v518 = vld [vmem:[#allocation2 + $0xb48] sm:$0xff]
    %v519 = vld [vmem:[#allocation2 + $0xb50] sm:$0xff]
    %v520 = vld [vmem:[#allocation2 + $0xb58] sm:$0xff]
    %v521 = vld [vmem:[#allocation2 + $0xb60] sm:$0xff]
    %v522 = vld [vmem:[#allocation2 + $0xb68] sm:$0xff]
    %v523 = vld [vmem:[#allocation2 + $0xb70] sm:$0xff]
    %v524 = vld [vmem:[#allocation2 + $0xb78] sm:$0xff]
    %v525 = vld [vmem:[#allocation2 + $0xb80] sm:$0xff]
    %v526 = vld [vmem:[#allocation2 + $0xb88] sm:$0xff]
    %v527 = vld [vmem:[#allocation2 + $0xb90] sm:$0xff]
    %v528 = vld [vmem:[#allocation2 + $0xb98] sm:$0xff]
    %v529 = vld [vmem:[#allocation2 + $0xba0] sm:$0xff]
    %v530 = vld [vmem:[#allocation2 + $0xba8] sm:$0xff]
    %v531 = vld [vmem:[#allocation2 + $0xbb0] sm:$0xff]
    %v532 = vld [vmem:[#allocation2 + $0xbb8] sm:$0xff]
    %v533 = vld [vmem:[#allocation2 + $0xbc0] sm:$0xff]
    %v534 = vld [vmem:[#allocation2 + $0xbc8] sm:$0xff]
    %v535 = vld [vmem:[#allocation2 + $0xbd0] sm:$0xff]
    %v536 = vld [vmem:[#allocation2 + $0xbd8] sm:$0xff]
    %v537 = vld [vmem:[#allocation2 + $0xbe0] sm:$0xff]
    %v538 = vld [vmem:[#allocation2 + $0xbe8] sm:$0xff]
    %v539 = vld [vmem:[#allocation2 + $0xbf0] sm:$0xff]
    %v540 = vld [vmem:[#allocation2 + $0xbf8] sm:$0xff]
    %v541 = vld [vmem:[#allocation2 + $0xc00] sm:$0xff]
    %v542 = vld [vmem:[#allocation2 + $0xc08] sm:$0xff]
    %v543 = vld [vmem:[#allocation2 + $0xc10] sm:$0xff]
    %v544 = vld [vmem:[#allocation2 + $0xc18] sm:$0xff]
    %v545 = vld [vmem:[#allocation2 + $0xc20] sm:$0xff]
    %v546 = vld [vmem:[#allocation2 + $0xc28] sm:$0xff]
    %v547 = vld [vmem:[#allocation2 + $0xc30] sm:$0xff]
    %v548 = vld [vmem:[#allocation2 + $0xc38] sm:$0xff]
    %v549 = vld [vmem:[#allocation2 + $0xc40] sm:$0xff]
    %v550 = vld [vmem:[#allocation2 + $0xc48] sm:$0xff]
    %v551 = vld [vmem:[#allocation2 + $0xc50] sm:$0xff]
    %v552 = vld [vmem:[#allocation2 + $0xc58] sm:$0xff]
    %v553 = vld [vmem:[#allocation2 + $0xc60] sm:$0xff]
    %v554 = vld [vmem:[#allocation2 + $0xc68] sm:$0xff]
    %v555 = vld [vmem:[#allocation2 + $0xc70] sm:$0xff]
    %v556 = vld [vmem:[#allocation2 + $0xc78] sm:$0xff]
    %v557 = vld [vmem:[#allocation2 + $0xc80] sm:$0xff]
    %v558 = vld [vmem:[#allocation2 + $0xc88] sm:$0xff]
    %v559 = vld [vmem:[#allocation2 + $0xc90] sm:$0xff]
    %v560 = vld [vmem:[#allocation2 + $0xc98] sm:$0xff]
    %v561 = vld [vmem:[#allocation2 + $0xca0] sm:$0xff]
    %v562 = vld [vmem:[#allocation2 + $0xca8] sm:$0xff]
    %v563 = vld [vmem:[#allocation2 + $0xcb0] sm:$0xff]
    %v564 = vld [vmem:[#allocation2 + $0xcb8] sm:$0xff]
    %v565 = vld [vmem:[#allocation2 + $0xcc0] sm:$0xff]
    %v566 = vld [vmem:[#allocation2 + $0xcc8] sm:$0xff]
    %v567 = vld [vmem:[#allocation2 + $0xcd0] sm:$0xff]
    %v568 = vld [vmem:[#allocation2 + $0xcd8] sm:$0xff]
    %v569 = vld [vmem:[#allocation2 + $0xce0] sm:$0xff]
    %v570 = vld [vmem:[#allocation2 + $0xce8] sm:$0xff]
    %v571 = vld [vmem:[#allocation2 + $0xcf0] sm:$0xff]
    %v572 = vld [vmem:[#allocation2 + $0xcf8] sm:$0xff]
    %v573 = vld [vmem:[#allocation2 + $0xd00] sm:$0xff]
    %v574 = vld [vmem:[#allocation2 + $0xd08] sm:$0xff]
    %v575 = vld [vmem:[#allocation2 + $0xd10] sm:$0xff]
    %v576 = vld [vmem:[#allocation2 + $0xd18] sm:$0xff]
    %v577 = vld [vmem:[#allocation2 + $0xd20] sm:$0xff]
    %v578 = vld [vmem:[#allocation2 + $0xd28] sm:$0xff]
    %v579 = vld [vmem:[#allocation2 + $0xd30] sm:$0xff]
    %v580 = vld [vmem:[#allocation2 + $0xd38] sm:$0xff]
    %v581 = vld [vmem:[#allocation2 + $0xd40] sm:$0xff]
    %v582 = vld [vmem:[#allocation2 + $0xd48] sm:$0xff]
    %v583 = vld [vmem:[#allocation2 + $0xd50] sm:$0xff]
    %v584 = vld [vmem:[#allocation2 + $0xd58] sm:$0xff]
    %v585 = vld [vmem:[#allocation2 + $0xd60] sm:$0xff]
    %v586 = vld [vmem:[#allocation2 + $0xd68] sm:$0xff]
    %v587 = vld [vmem:[#allocation2 + $0xd70] sm:$0xff]
    %v588 = vld [vmem:[#allocation2 + $0xd78] sm:$0xff]
    %v589 = vld [vmem:[#allocation2 + $0xd80] sm:$0xff]
    %v590 = vld [vmem:[#allocation2 + $0xd88] sm:$0xff]
    %v591 = vld [vmem:[#allocation2 + $0xd90] sm:$0xff]
    %v592 = vld [vmem:[#allocation2 + $0xd98] sm:$0xff]
    %v593 = vld [vmem:[#allocation2 + $0xda0] sm:$0xff]
    %v594 = vld [vmem:[#allocation2 + $0xda8] sm:$0xff]
    %v595 = vld [vmem:[#allocation2 + $0xdb0] sm:$0xff]
    %v596 = vld [vmem:[#allocation2 + $0xdb8] sm:$0xff]
    %v597 = vld [vmem:[#allocation2 + $0xdc0] sm:$0xff]
    %v598 = vld [vmem:[#allocation2 + $0xdc8] sm:$0xff]
    %v599 = vld [vmem:[#allocation2 + $0xdd0] sm:$0xff]
    %v600 = vld [vmem:[#allocation2 + $0xdd8] sm:$0xff]
    %v601 = vld [vmem:[#allocation2 + $0xde0] sm:$0xff]
    %v602 = vld [vmem:[#allocation2 + $0xde8] sm:$0xff]
    %v603 = vld [vmem:[#allocation2 + $0xdf0] sm:$0xff]
    %v604 = vld [vmem:[#allocation2 + $0xdf8] sm:$0xff]
    %v605 = vld [vmem:[#allocation2 + $0xe00] sm:$0xff]
    %v606 = vld [vmem:[#allocation2 + $0xe08] sm:$0xff]
    %v607 = vld [vmem:[#allocation2 + $0xe10] sm:$0xff]
    %v608 = vld [vmem:[#allocation2 + $0xe18] sm:$0xff]
    %v609 = vld [vmem:[#allocation2 + $0xe20] sm:$0xff]
    %v610 = vld [vmem:[#allocation2 + $0xe28] sm:$0xff]
    %v611 = vld [vmem:[#allocation2 + $0xe30] sm:$0xff]
    %v612 = vld [vmem:[#allocation2 + $0xe38] sm:$0xff]
    %v613 = vld [vmem:[#allocation2 + $0xe40] sm:$0xff]
    %v614 = vld [vmem:[#allocation2 + $0xe48] sm:$0xff]
    %v615 = vld [vmem:[#allocation2 + $0xe50] sm:$0xff]
    %v616 = vld [vmem:[#allocation2 + $0xe58] sm:$0xff]
    %v617 = vld [vmem:[#allocation2 + $0xe60] sm:$0xff]
    %v618 = vld [vmem:[#allocation2 + $0xe68] sm:$0xff]
    %v619 = vld [vmem:[#allocation2 + $0xe70] sm:$0xff]
    %v620 = vld [vmem:[#allocation2 + $0xe78] sm:$0xff]
    %v621 = vld [vmem:[#allocation2 + $0xe80] sm:$0xff]
    %v622 = vld [vmem:[#allocation2 + $0xe88] sm:$0xff]
    %v623 = vld [vmem:[#allocation2 + $0xe90] sm:$0xff]
    %v624 = vld [vmem:[#allocation2 + $0xe98] sm:$0xff]
    %v625 = vld [vmem:[#allocation2 + $0xea0] sm:$0xff]
    %v626 = vld [vmem:[#allocation2 + $0xea8] sm:$0xff]
    %v627 = vld [vmem:[#allocation2 + $0xeb0] sm:$0xff]
    %v628 = vld [vmem:[#allocation2 + $0xeb8] sm:$0xff]
    %v629 = vld [vmem:[#allocation2 + $0xec0] sm:$0xff]
    %v630 = vld [vmem:[#allocation2 + $0xec8] sm:$0xff]
    %v631 = vld [vmem:[#allocation2 + $0xed0] sm:$0xff]
    %v632 = vld [vmem:[#allocation2 + $0xed8] sm:$0xff]
    %v633 = vld [vmem:[#allocation2 + $0xee0] sm:$0xff]
    %v634 = vld [vmem:[#allocation2 + $0xee8] sm:$0xff]
    %v635 = vld [vmem:[#allocation2 + $0xef0] sm:$0xff]
    %v636 = vld [vmem:[#allocation2 + $0xef8] sm:$0xff]
    %v637 = vld [vmem:[#allocation2 + $0xf00] sm:$0xff]
    %v638 = vld [vmem:[#allocation2 + $0xf08] sm:$0xff]
    %v639 = vld [vmem:[#allocation2 + $0xf10] sm:$0xff]
    %v640 = vld [vmem:[#allocation2 + $0xf18] sm:$0xff]
    %v641 = vld [vmem:[#allocation2 + $0xf20] sm:$0xff]
    %v642 = vld [vmem:[#allocation2 + $0xf28] sm:$0xff]
    %v643 = vld [vmem:[#allocation2 + $0xf30] sm:$0xff]
    %v644 = vld [vmem:[#allocation2 + $0xf38] sm:$0xff]
    %v645 = vld [vmem:[#allocation2 + $0xf40] sm:$0xff]
    %v646 = vld [vmem:[#allocation2 + $0xf48] sm:$0xff]
    %v647 = vld [vmem:[#allocation2 + $0xf50] sm:$0xff]
    %v648 = vld [vmem:[#allocation2 + $0xf58] sm:$0xff]
    %v649 = vld [vmem:[#allocation2 + $0xf60] sm:$0xff]
    %v650 = vld [vmem:[#allocation2 + $0xf68] sm:$0xff]
    %v651 = vld [vmem:[#allocation2 + $0xf70] sm:$0xff]
    %v652 = vld [vmem:[#allocation2 + $0xf78] sm:$0xff]
    %v653 = vld [vmem:[#allocation2 + $0xf80] sm:$0xff]
    %v654 = vld [vmem:[#allocation2 + $0xf88] sm:$0xff]
    %v655 = vld [vmem:[#allocation2 + $0xf90] sm:$0xff]
    %v656 = vld [vmem:[#allocation2 + $0xf98] sm:$0xff]
    %v657 = vld [vmem:[#allocation2 + $0xfa0] sm:$0xff]
    %v658 = vld [vmem:[#allocation2 + $0xfa8] sm:$0xff]
    %v659 = vld [vmem:[#allocation2 + $0xfb0] sm:$0xff]
    %v660 = vld [vmem:[#allocation2 + $0xfb8] sm:$0xff]
    %v661 = vld [vmem:[#allocation2 + $0xfc0] sm:$0xff]
    %v662 = vld [vmem:[#allocation2 + $0xfc8] sm:$0xff]
    %v663 = vld [vmem:[#allocation2 + $0xfd0] sm:$0xff]
    %v664 = vld [vmem:[#allocation2 + $0xfd8] sm:$0xff]
    %v665 = vld [vmem:[#allocation2 + $0xfe0] sm:$0xff]
    %v666 = vld [vmem:[#allocation2 + $0xfe8] sm:$0xff]
    %v667 = vld [vmem:[#allocation2 + $0xff0] sm:$0xff]
    %v668 = vld [vmem:[#allocation2 + $0xff8] sm:$0xff]
    %v669 = vld [vmem:[#allocation4] sm:$0xf]
    %v671 = vperm.slane %v669, 0
    %v672 = vperm.slane %v669, 1
    %v673 = vperm.slane %v669, 2
    %v674 = vperm.slane %v669, 3
    %v687 = vunpack.c.l.b16 %v149
    %v688 = vunpack.c.h.b16 %v149
    %v689 = vunpack.c.l.b16 %v150
    %v690 = vunpack.c.h.b16 %v150
    %v691 = vunpack.c.l.b16 %v151
    %v692 = vunpack.c.h.b16 %v151
    %v693 = vunpack.c.l.b16 %v152
    %v694 = vunpack.c.h.b16 %v152
    %v695 = vunpack.c.l.b16 %v153
    %v696 = vunpack.c.h.b16 %v153
    %v697 = vunpack.c.l.b16 %v154
    %v698 = vunpack.c.h.b16 %v154
    %v699 = vunpack.c.l.b16 %v155
    %v700 = vunpack.c.h.b16 %v155
    %v701 = vunpack.c.l.b16 %v156
    %v702 = vunpack.c.h.b16 %v156
    %v703 = vpack.c.b16 %v687, %v687
    %v704 = vpack.c.b16 %v688, %v688
    %v705 = vpack.c.b16 %v689, %v689
    %v706 = vpack.c.b16 %v690, %v690
    %v707 = vpack.c.b16 %v691, %v691
    %v708 = vpack.c.b16 %v692, %v692
    %v709 = vpack.c.b16 %v693, %v693
    %v710 = vpack.c.b16 %v694, %v694
    %v711 = vpack.c.b16 %v695, %v695
    %v712 = vpack.c.b16 %v696, %v696
    %v713 = vpack.c.b16 %v697, %v697
    %v714 = vpack.c.b16 %v698, %v698
    %v715 = vpack.c.b16 %v699, %v699
    %v716 = vpack.c.b16 %v700, %v700
    %v717 = vpack.c.b16 %v701, %v701
    %v718 = vpack.c.b16 %v702, %v702
    %v1247 = vunpack.c.l.b16 %v157
    %v1248 = vunpack.c.h.b16 %v157
    %v1249 = vunpack.c.l.b16 %v158
    %v1250 = vunpack.c.h.b16 %v158
    %v1251 = vunpack.c.l.b16 %v159
    %v1252 = vunpack.c.h.b16 %v159
    %v1253 = vunpack.c.l.b16 %v160
    %v1254 = vunpack.c.h.b16 %v160
    %v1255 = vunpack.c.l.b16 %v161
    %v1256 = vunpack.c.h.b16 %v161
    %v1257 = vunpack.c.l.b16 %v162
    %v1258 = vunpack.c.h.b16 %v162
    %v1259 = vunpack.c.l.b16 %v163
    %v1260 = vunpack.c.h.b16 %v163
    %v1261 = vunpack.c.l.b16 %v164
    %v1262 = vunpack.c.h.b16 %v164
    %v1263 = vunpack.c.l.b16 %v165
    %v1264 = vunpack.c.h.b16 %v165
    %v1265 = vunpack.c.l.b16 %v166
    %v1266 = vunpack.c.h.b16 %v166
    %v1267 = vunpack.c.l.b16 %v167
    %v1268 = vunpack.c.h.b16 %v167
    %v1269 = vunpack.c.l.b16 %v168
    %v1270 = vunpack.c.h.b16 %v168
    %v1271 = vunpack.c.l.b16 %v169
    %v1272 = vunpack.c.h.b16 %v169
    %v1273 = vunpack.c.l.b16 %v170
    %v1274 = vunpack.c.h.b16 %v170
    %v1275 = vunpack.c.l.b16 %v171
    %v1276 = vunpack.c.h.b16 %v171
    %v1277 = vunpack.c.l.b16 %v172
    %v1278 = vunpack.c.h.b16 %v172
    %v1279 = vunpack.c.l.b16 %v173
    %v1280 = vunpack.c.h.b16 %v173
    %v1281 = vunpack.c.l.b16 %v174
    %v1282 = vunpack.c.h.b16 %v174
    %v1283 = vunpack.c.l.b16 %v175
    %v1284 = vunpack.c.h.b16 %v175
    %v1285 = vunpack.c.l.b16 %v176
    %v1286 = vunpack.c.h.b16 %v176
    %v1287 = vunpack.c.l.b16 %v177
    %v1288 = vunpack.c.h.b16 %v177
    %v1289 = vunpack.c.l.b16 %v178
    %v1290 = vunpack.c.h.b16 %v178
    %v1291 = vunpack.c.l.b16 %v179
    %v1292 = vunpack.c.h.b16 %v179
    %v1293 = vunpack.c.l.b16 %v180
    %v1294 = vunpack.c.h.b16 %v180
    %v1295 = vunpack.c.l.b16 %v181
    %v1296 = vunpack.c.h.b16 %v181
    %v1297 = vunpack.c.l.b16 %v182
    %v1298 = vunpack.c.h.b16 %v182
    %v1299 = vunpack.c.l.b16 %v183
    %v1300 = vunpack.c.h.b16 %v183
    %v1301 = vunpack.c.l.b16 %v184
    %v1302 = vunpack.c.h.b16 %v184
    %v1303 = vunpack.c.l.b16 %v185
    %v1304 = vunpack.c.h.b16 %v185
    %v1305 = vunpack.c.l.b16 %v186
    %v1306 = vunpack.c.h.b16 %v186
    %v1307 = vunpack.c.l.b16 %v187
    %v1308 = vunpack.c.h.b16 %v187
    %v1309 = vunpack.c.l.b16 %v188
    %v1310 = vunpack.c.h.b16 %v188
    %v1311 = vunpack.c.l.b16 %v189
    %v1312 = vunpack.c.h.b16 %v189
    %v1313 = vunpack.c.l.b16 %v190
    %v1314 = vunpack.c.h.b16 %v190
    %v1315 = vunpack.c.l.b16 %v191
    %v1316 = vunpack.c.h.b16 %v191
    %v1317 = vunpack.c.l.b16 %v192
    %v1318 = vunpack.c.h.b16 %v192
    %v1319 = vunpack.c.l.b16 %v193
    %v1320 = vunpack.c.h.b16 %v193
    %v1321 = vunpack.c.l.b16 %v194
    %v1322 = vunpack.c.h.b16 %v194
    %v1323 = vunpack.c.l.b16 %v195
    %v1324 = vunpack.c.h.b16 %v195
    %v1325 = vunpack.c.l.b16 %v196
    %v1326 = vunpack.c.h.b16 %v196
    %v1327 = vunpack.c.l.b16 %v197
    %v1328 = vunpack.c.h.b16 %v197
    %v1329 = vunpack.c.l.b16 %v198
    %v1330 = vunpack.c.h.b16 %v198
    %v1331 = vunpack.c.l.b16 %v199
    %v1332 = vunpack.c.h.b16 %v199
    %v1333 = vunpack.c.l.b16 %v200
    %v1334 = vunpack.c.h.b16 %v200
    %v1335 = vunpack.c.l.b16 %v201
    %v1336 = vunpack.c.h.b16 %v201
    %v1337 = vunpack.c.l.b16 %v202
    %v1338 = vunpack.c.h.b16 %v202
    %v1339 = vunpack.c.l.b16 %v203
    %v1340 = vunpack.c.h.b16 %v203
    %v1341 = vunpack.c.l.b16 %v204
    %v1342 = vunpack.c.h.b16 %v204
    %v1343 = vunpack.c.l.b16 %v205
    %v1344 = vunpack.c.h.b16 %v205
    %v1345 = vunpack.c.l.b16 %v206
    %v1346 = vunpack.c.h.b16 %v206
    %v1347 = vunpack.c.l.b16 %v207
    %v1348 = vunpack.c.h.b16 %v207
    %v1349 = vunpack.c.l.b16 %v208
    %v1350 = vunpack.c.h.b16 %v208
    %v1351 = vunpack.c.l.b16 %v209
    %v1352 = vunpack.c.h.b16 %v209
    %v1353 = vunpack.c.l.b16 %v210
    %v1354 = vunpack.c.h.b16 %v210
    %v1355 = vunpack.c.l.b16 %v211
    %v1356 = vunpack.c.h.b16 %v211
    %v1357 = vunpack.c.l.b16 %v212
    %v1358 = vunpack.c.h.b16 %v212
    %v1359 = vunpack.c.l.b16 %v213
    %v1360 = vunpack.c.h.b16 %v213
    %v1361 = vunpack.c.l.b16 %v214
    %v1362 = vunpack.c.h.b16 %v214
    %v1363 = vunpack.c.l.b16 %v215
    %v1364 = vunpack.c.h.b16 %v215
    %v1365 = vunpack.c.l.b16 %v216
    %v1366 = vunpack.c.h.b16 %v216
    %v1367 = vunpack.c.l.b16 %v217
    %v1368 = vunpack.c.h.b16 %v217
    %v1369 = vunpack.c.l.b16 %v218
    %v1370 = vunpack.c.h.b16 %v218
    %v1371 = vunpack.c.l.b16 %v219
    %v1372 = vunpack.c.h.b16 %v219
    %v1373 = vunpack.c.l.b16 %v220
    %v1374 = vunpack.c.h.b16 %v220
    %v1375 = vunpack.c.l.b16 %v221
    %v1376 = vunpack.c.h.b16 %v221
    %v1377 = vunpack.c.l.b16 %v222
    %v1378 = vunpack.c.h.b16 %v222
    %v1379 = vunpack.c.l.b16 %v223
    %v1380 = vunpack.c.h.b16 %v223
    %v1381 = vunpack.c.l.b16 %v224
    %v1382 = vunpack.c.h.b16 %v224
    %v1383 = vunpack.c.l.b16 %v225
    %v1384 = vunpack.c.h.b16 %v225
    %v1385 = vunpack.c.l.b16 %v226
    %v1386 = vunpack.c.h.b16 %v226
    %v1387 = vunpack.c.l.b16 %v227
    %v1388 = vunpack.c.h.b16 %v227
    %v1389 = vunpack.c.l.b16 %v228
    %v1390 = vunpack.c.h.b16 %v228
    %v1391 = vunpack.c.l.b16 %v229
    %v1392 = vunpack.c.h.b16 %v229
    %v1393 = vunpack.c.l.b16 %v230
    %v1394 = vunpack.c.h.b16 %v230
    %v1395 = vunpack.c.l.b16 %v231
    %v1396 = vunpack.c.h.b16 %v231
    %v1397 = vunpack.c.l.b16 %v232
    %v1398 = vunpack.c.h.b16 %v232
    %v1399 = vunpack.c.l.b16 %v233
    %v1400 = vunpack.c.h.b16 %v233
    %v1401 = vunpack.c.l.b16 %v234
    %v1402 = vunpack.c.h.b16 %v234
    %v1403 = vunpack.c.l.b16 %v235
    %v1404 = vunpack.c.h.b16 %v235
    %v1405 = vunpack.c.l.b16 %v236
    %v1406 = vunpack.c.h.b16 %v236
    %v1407 = vunpack.c.l.b16 %v237
    %v1408 = vunpack.c.h.b16 %v237
    %v1409 = vunpack.c.l.b16 %v238
    %v1410 = vunpack.c.h.b16 %v238
    %v1411 = vunpack.c.l.b16 %v239
    %v1412 = vunpack.c.h.b16 %v239
    %v1413 = vunpack.c.l.b16 %v240
    %v1414 = vunpack.c.h.b16 %v240
    %v1415 = vunpack.c.l.b16 %v241
    %v1416 = vunpack.c.h.b16 %v241
    %v1417 = vunpack.c.l.b16 %v242
    %v1418 = vunpack.c.h.b16 %v242
    %v1419 = vunpack.c.l.b16 %v243
    %v1420 = vunpack.c.h.b16 %v243
    %v1421 = vunpack.c.l.b16 %v244
    %v1422 = vunpack.c.h.b16 %v244
    %v1423 = vunpack.c.l.b16 %v245
    %v1424 = vunpack.c.h.b16 %v245
    %v1425 = vunpack.c.l.b16 %v246
    %v1426 = vunpack.c.h.b16 %v246
    %v1427 = vunpack.c.l.b16 %v247
    %v1428 = vunpack.c.h.b16 %v247
    %v1429 = vunpack.c.l.b16 %v248
    %v1430 = vunpack.c.h.b16 %v248
    %v1431 = vunpack.c.l.b16 %v249
    %v1432 = vunpack.c.h.b16 %v249
    %v1433 = vunpack.c.l.b16 %v250
    %v1434 = vunpack.c.h.b16 %v250
    %v1435 = vunpack.c.l.b16 %v251
    %v1436 = vunpack.c.h.b16 %v251
    %v1437 = vunpack.c.l.b16 %v252
    %v1438 = vunpack.c.h.b16 %v252
    %v1439 = vunpack.c.l.b16 %v253
    %v1440 = vunpack.c.h.b16 %v253
    %v1441 = vunpack.c.l.b16 %v254
    %v1442 = vunpack.c.h.b16 %v254
    %v1443 = vunpack.c.l.b16 %v255
    %v1444 = vunpack.c.h.b16 %v255
    %v1445 = vunpack.c.l.b16 %v256
    %v1446 = vunpack.c.h.b16 %v256
    %v1447 = vunpack.c.l.b16 %v257
    %v1448 = vunpack.c.h.b16 %v257
    %v1449 = vunpack.c.l.b16 %v258
    %v1450 = vunpack.c.h.b16 %v258
    %v1451 = vunpack.c.l.b16 %v259
    %v1452 = vunpack.c.h.b16 %v259
    %v1453 = vunpack.c.l.b16 %v260
    %v1454 = vunpack.c.h.b16 %v260
    %v1455 = vunpack.c.l.b16 %v261
    %v1456 = vunpack.c.h.b16 %v261
    %v1457 = vunpack.c.l.b16 %v262
    %v1458 = vunpack.c.h.b16 %v262
    %v1459 = vunpack.c.l.b16 %v263
    %v1460 = vunpack.c.h.b16 %v263
    %v1461 = vunpack.c.l.b16 %v264
    %v1462 = vunpack.c.h.b16 %v264
    %v1463 = vunpack.c.l.b16 %v265
    %v1464 = vunpack.c.h.b16 %v265
    %v1465 = vunpack.c.l.b16 %v266
    %v1466 = vunpack.c.h.b16 %v266
    %v1467 = vunpack.c.l.b16 %v267
    %v1468 = vunpack.c.h.b16 %v267
    %v1469 = vunpack.c.l.b16 %v268
    %v1470 = vunpack.c.h.b16 %v268
    %v1471 = vunpack.c.l.b16 %v269
    %v1472 = vunpack.c.h.b16 %v269
    %v1473 = vunpack.c.l.b16 %v270
    %v1474 = vunpack.c.h.b16 %v270
    %v1475 = vunpack.c.l.b16 %v271
    %v1476 = vunpack.c.h.b16 %v271
    %v1477 = vunpack.c.l.b16 %v272
    %v1478 = vunpack.c.h.b16 %v272
    %v1479 = vunpack.c.l.b16 %v273
    %v1480 = vunpack.c.h.b16 %v273
    %v1481 = vunpack.c.l.b16 %v274
    %v1482 = vunpack.c.h.b16 %v274
    %v1483 = vunpack.c.l.b16 %v275
    %v1484 = vunpack.c.h.b16 %v275
    %v1485 = vunpack.c.l.b16 %v276
    %v1486 = vunpack.c.h.b16 %v276
    %v1487 = vunpack.c.l.b16 %v277
    %v1488 = vunpack.c.h.b16 %v277
    %v1489 = vunpack.c.l.b16 %v278
    %v1490 = vunpack.c.h.b16 %v278
    %v1491 = vunpack.c.l.b16 %v279
    %v1492 = vunpack.c.h.b16 %v279
    %v1493 = vunpack.c.l.b16 %v280
    %v1494 = vunpack.c.h.b16 %v280
    %v1495 = vunpack.c.l.b16 %v281
    %v1496 = vunpack.c.h.b16 %v281
    %v1497 = vunpack.c.l.b16 %v282
    %v1498 = vunpack.c.h.b16 %v282
    %v1499 = vunpack.c.l.b16 %v283
    %v1500 = vunpack.c.h.b16 %v283
    %v1501 = vunpack.c.l.b16 %v284
    %v1502 = vunpack.c.h.b16 %v284
    %v1503 = vunpack.c.l.b16 %v285
    %v1504 = vunpack.c.h.b16 %v285
    %v1505 = vunpack.c.l.b16 %v286
    %v1506 = vunpack.c.h.b16 %v286
    %v1507 = vunpack.c.l.b16 %v287
    %v1508 = vunpack.c.h.b16 %v287
    %v1509 = vunpack.c.l.b16 %v288
    %v1510 = vunpack.c.h.b16 %v288
    %v1511 = vunpack.c.l.b16 %v289
    %v1512 = vunpack.c.h.b16 %v289
    %v1513 = vunpack.c.l.b16 %v290
    %v1514 = vunpack.c.h.b16 %v290
    %v1515 = vunpack.c.l.b16 %v291
    %v1516 = vunpack.c.h.b16 %v291
    %v1517 = vunpack.c.l.b16 %v292
    %v1518 = vunpack.c.h.b16 %v292
    %v1519 = vunpack.c.l.b16 %v293
    %v1520 = vunpack.c.h.b16 %v293
    %v1521 = vunpack.c.l.b16 %v294
    %v1522 = vunpack.c.h.b16 %v294
    %v1523 = vunpack.c.l.b16 %v295
    %v1524 = vunpack.c.h.b16 %v295
    %v1525 = vunpack.c.l.b16 %v296
    %v1526 = vunpack.c.h.b16 %v296
    %v1527 = vunpack.c.l.b16 %v297
    %v1528 = vunpack.c.h.b16 %v297
    %v1529 = vunpack.c.l.b16 %v298
    %v1530 = vunpack.c.h.b16 %v298
    %v1531 = vunpack.c.l.b16 %v299
    %v1532 = vunpack.c.h.b16 %v299
    %v1533 = vunpack.c.l.b16 %v300
    %v1534 = vunpack.c.h.b16 %v300
    %v1535 = vunpack.c.l.b16 %v301
    %v1536 = vunpack.c.h.b16 %v301
    %v1537 = vunpack.c.l.b16 %v302
    %v1538 = vunpack.c.h.b16 %v302
    %v1539 = vunpack.c.l.b16 %v303
    %v1540 = vunpack.c.h.b16 %v303
    %v1541 = vunpack.c.l.b16 %v304
    %v1542 = vunpack.c.h.b16 %v304
    %v1543 = vunpack.c.l.b16 %v305
    %v1544 = vunpack.c.h.b16 %v305
    %v1545 = vunpack.c.l.b16 %v306
    %v1546 = vunpack.c.h.b16 %v306
    %v1547 = vunpack.c.l.b16 %v307
    %v1548 = vunpack.c.h.b16 %v307
    %v1549 = vunpack.c.l.b16 %v308
    %v1550 = vunpack.c.h.b16 %v308
    %v1551 = vunpack.c.l.b16 %v309
    %v1552 = vunpack.c.h.b16 %v309
    %v1553 = vunpack.c.l.b16 %v310
    %v1554 = vunpack.c.h.b16 %v310
    %v1555 = vunpack.c.l.b16 %v311
    %v1556 = vunpack.c.h.b16 %v311
    %v1557 = vunpack.c.l.b16 %v312
    %v1558 = vunpack.c.h.b16 %v312
    %v1559 = vunpack.c.l.b16 %v313
    %v1560 = vunpack.c.h.b16 %v313
    %v1561 = vunpack.c.l.b16 %v314
    %v1562 = vunpack.c.h.b16 %v314
    %v1563 = vunpack.c.l.b16 %v315
    %v1564 = vunpack.c.h.b16 %v315
    %v1565 = vunpack.c.l.b16 %v316
    %v1566 = vunpack.c.h.b16 %v316
    %v1567 = vunpack.c.l.b16 %v317
    %v1568 = vunpack.c.h.b16 %v317
    %v1569 = vunpack.c.l.b16 %v318
    %v1570 = vunpack.c.h.b16 %v318
    %v1571 = vunpack.c.l.b16 %v319
    %v1572 = vunpack.c.h.b16 %v319
    %v1573 = vunpack.c.l.b16 %v320
    %v1574 = vunpack.c.h.b16 %v320
    %v1575 = vunpack.c.l.b16 %v321
    %v1576 = vunpack.c.h.b16 %v321
    %v1577 = vunpack.c.l.b16 %v322
    %v1578 = vunpack.c.h.b16 %v322
    %v1579 = vunpack.c.l.b16 %v323
    %v1580 = vunpack.c.h.b16 %v323
    %v1581 = vunpack.c.l.b16 %v324
    %v1582 = vunpack.c.h.b16 %v324
    %v1583 = vunpack.c.l.b16 %v325
    %v1584 = vunpack.c.h.b16 %v325
    %v1585 = vunpack.c.l.b16 %v326
    %v1586 = vunpack.c.h.b16 %v326
    %v1587 = vunpack.c.l.b16 %v327
    %v1588 = vunpack.c.h.b16 %v327
    %v1589 = vunpack.c.l.b16 %v328
    %v1590 = vunpack.c.h.b16 %v328
    %v1591 = vunpack.c.l.b16 %v329
    %v1592 = vunpack.c.h.b16 %v329
    %v1593 = vunpack.c.l.b16 %v330
    %v1594 = vunpack.c.h.b16 %v330
    %v1595 = vunpack.c.l.b16 %v331
    %v1596 = vunpack.c.h.b16 %v331
    %v1597 = vunpack.c.l.b16 %v332
    %v1598 = vunpack.c.h.b16 %v332
    %v1599 = vunpack.c.l.b16 %v333
    %v1600 = vunpack.c.h.b16 %v333
    %v1601 = vunpack.c.l.b16 %v334
    %v1602 = vunpack.c.h.b16 %v334
    %v1603 = vunpack.c.l.b16 %v335
    %v1604 = vunpack.c.h.b16 %v335
    %v1605 = vunpack.c.l.b16 %v336
    %v1606 = vunpack.c.h.b16 %v336
    %v1607 = vunpack.c.l.b16 %v337
    %v1608 = vunpack.c.h.b16 %v337
    %v1609 = vunpack.c.l.b16 %v338
    %v1610 = vunpack.c.h.b16 %v338
    %v1611 = vunpack.c.l.b16 %v339
    %v1612 = vunpack.c.h.b16 %v339
    %v1613 = vunpack.c.l.b16 %v340
    %v1614 = vunpack.c.h.b16 %v340
    %v1615 = vunpack.c.l.b16 %v341
    %v1616 = vunpack.c.h.b16 %v341
    %v1617 = vunpack.c.l.b16 %v342
    %v1618 = vunpack.c.h.b16 %v342
    %v1619 = vunpack.c.l.b16 %v343
    %v1620 = vunpack.c.h.b16 %v343
    %v1621 = vunpack.c.l.b16 %v344
    %v1622 = vunpack.c.h.b16 %v344
    %v1623 = vunpack.c.l.b16 %v345
    %v1624 = vunpack.c.h.b16 %v345
    %v1625 = vunpack.c.l.b16 %v346
    %v1626 = vunpack.c.h.b16 %v346
    %v1627 = vunpack.c.l.b16 %v347
    %v1628 = vunpack.c.h.b16 %v347
    %v1629 = vunpack.c.l.b16 %v348
    %v1630 = vunpack.c.h.b16 %v348
    %v1631 = vunpack.c.l.b16 %v349
    %v1632 = vunpack.c.h.b16 %v349
    %v1633 = vunpack.c.l.b16 %v350
    %v1634 = vunpack.c.h.b16 %v350
    %v1635 = vunpack.c.l.b16 %v351
    %v1636 = vunpack.c.h.b16 %v351
    %v1637 = vunpack.c.l.b16 %v352
    %v1638 = vunpack.c.h.b16 %v352
    %v1639 = vunpack.c.l.b16 %v353
    %v1640 = vunpack.c.h.b16 %v353
    %v1641 = vunpack.c.l.b16 %v354
    %v1642 = vunpack.c.h.b16 %v354
    %v1643 = vunpack.c.l.b16 %v355
    %v1644 = vunpack.c.h.b16 %v355
    %v1645 = vunpack.c.l.b16 %v356
    %v1646 = vunpack.c.h.b16 %v356
    %v1647 = vunpack.c.l.b16 %v357
    %v1648 = vunpack.c.h.b16 %v357
    %v1649 = vunpack.c.l.b16 %v358
    %v1650 = vunpack.c.h.b16 %v358
    %v1651 = vunpack.c.l.b16 %v359
    %v1652 = vunpack.c.h.b16 %v359
    %v1653 = vunpack.c.l.b16 %v360
    %v1654 = vunpack.c.h.b16 %v360
    %v1655 = vunpack.c.l.b16 %v361
    %v1656 = vunpack.c.h.b16 %v361
    %v1657 = vunpack.c.l.b16 %v362
    %v1658 = vunpack.c.h.b16 %v362
    %v1659 = vunpack.c.l.b16 %v363
    %v1660 = vunpack.c.h.b16 %v363
    %v1661 = vunpack.c.l.b16 %v364
    %v1662 = vunpack.c.h.b16 %v364
    %v1663 = vunpack.c.l.b16 %v365
    %v1664 = vunpack.c.h.b16 %v365
    %v1665 = vunpack.c.l.b16 %v366
    %v1666 = vunpack.c.h.b16 %v366
    %v1667 = vunpack.c.l.b16 %v367
    %v1668 = vunpack.c.h.b16 %v367
    %v1669 = vunpack.c.l.b16 %v368
    %v1670 = vunpack.c.h.b16 %v368
    %v1671 = vunpack.c.l.b16 %v369
    %v1672 = vunpack.c.h.b16 %v369
    %v1673 = vunpack.c.l.b16 %v370
    %v1674 = vunpack.c.h.b16 %v370
    %v1675 = vunpack.c.l.b16 %v371
    %v1676 = vunpack.c.h.b16 %v371
    %v1677 = vunpack.c.l.b16 %v372
    %v1678 = vunpack.c.h.b16 %v372
    %v1679 = vunpack.c.l.b16 %v373
    %v1680 = vunpack.c.h.b16 %v373
    %v1681 = vunpack.c.l.b16 %v374
    %v1682 = vunpack.c.h.b16 %v374
    %v1683 = vunpack.c.l.b16 %v375
    %v1684 = vunpack.c.h.b16 %v375
    %v1685 = vunpack.c.l.b16 %v376
    %v1686 = vunpack.c.h.b16 %v376
    %v1687 = vunpack.c.l.b16 %v377
    %v1688 = vunpack.c.h.b16 %v377
    %v1689 = vunpack.c.l.b16 %v378
    %v1690 = vunpack.c.h.b16 %v378
    %v1691 = vunpack.c.l.b16 %v379
    %v1692 = vunpack.c.h.b16 %v379
    %v1693 = vunpack.c.l.b16 %v380
    %v1694 = vunpack.c.h.b16 %v380
    %v1695 = vunpack.c.l.b16 %v381
    %v1696 = vunpack.c.h.b16 %v381
    %v1697 = vunpack.c.l.b16 %v382
    %v1698 = vunpack.c.h.b16 %v382
    %v1699 = vunpack.c.l.b16 %v383
    %v1700 = vunpack.c.h.b16 %v383
    %v1701 = vunpack.c.l.b16 %v384
    %v1702 = vunpack.c.h.b16 %v384
    %v1703 = vunpack.c.l.b16 %v385
    %v1704 = vunpack.c.h.b16 %v385
    %v1705 = vunpack.c.l.b16 %v386
    %v1706 = vunpack.c.h.b16 %v386
    %v1707 = vunpack.c.l.b16 %v387
    %v1708 = vunpack.c.h.b16 %v387
    %v1709 = vunpack.c.l.b16 %v388
    %v1710 = vunpack.c.h.b16 %v388
    %v1711 = vunpack.c.l.b16 %v389
    %v1712 = vunpack.c.h.b16 %v389
    %v1713 = vunpack.c.l.b16 %v390
    %v1714 = vunpack.c.h.b16 %v390
    %v1715 = vunpack.c.l.b16 %v391
    %v1716 = vunpack.c.h.b16 %v391
    %v1717 = vunpack.c.l.b16 %v392
    %v1718 = vunpack.c.h.b16 %v392
    %v1719 = vunpack.c.l.b16 %v393
    %v1720 = vunpack.c.h.b16 %v393
    %v1721 = vunpack.c.l.b16 %v394
    %v1722 = vunpack.c.h.b16 %v394
    %v1723 = vunpack.c.l.b16 %v395
    %v1724 = vunpack.c.h.b16 %v395
    %v1725 = vunpack.c.l.b16 %v396
    %v1726 = vunpack.c.h.b16 %v396
    %v1727 = vunpack.c.l.b16 %v397
    %v1728 = vunpack.c.h.b16 %v397
    %v1729 = vunpack.c.l.b16 %v398
    %v1730 = vunpack.c.h.b16 %v398
    %v1731 = vunpack.c.l.b16 %v399
    %v1732 = vunpack.c.h.b16 %v399
    %v1733 = vunpack.c.l.b16 %v400
    %v1734 = vunpack.c.h.b16 %v400
    %v1735 = vunpack.c.l.b16 %v401
    %v1736 = vunpack.c.h.b16 %v401
    %v1737 = vunpack.c.l.b16 %v402
    %v1738 = vunpack.c.h.b16 %v402
    %v1739 = vunpack.c.l.b16 %v403
    %v1740 = vunpack.c.h.b16 %v403
    %v1741 = vunpack.c.l.b16 %v404
    %v1742 = vunpack.c.h.b16 %v404
    %v1743 = vunpack.c.l.b16 %v405
    %v1744 = vunpack.c.h.b16 %v405
    %v1745 = vunpack.c.l.b16 %v406
    %v1746 = vunpack.c.h.b16 %v406
    %v1747 = vunpack.c.l.b16 %v407
    %v1748 = vunpack.c.h.b16 %v407
    %v1749 = vunpack.c.l.b16 %v408
    %v1750 = vunpack.c.h.b16 %v408
    %v1751 = vunpack.c.l.b16 %v409
    %v1752 = vunpack.c.h.b16 %v409
    %v1753 = vunpack.c.l.b16 %v410
    %v1754 = vunpack.c.h.b16 %v410
    %v1755 = vunpack.c.l.b16 %v411
    %v1756 = vunpack.c.h.b16 %v411
    %v1757 = vunpack.c.l.b16 %v412
    %v1758 = vunpack.c.h.b16 %v412
    %v1759 = vunpack.c.l.b16 %v413
    %v1760 = vunpack.c.h.b16 %v413
    %v1761 = vunpack.c.l.b16 %v414
    %v1762 = vunpack.c.h.b16 %v414
    %v1763 = vunpack.c.l.b16 %v415
    %v1764 = vunpack.c.h.b16 %v415
    %v1765 = vunpack.c.l.b16 %v416
    %v1766 = vunpack.c.h.b16 %v416
    %v1767 = vunpack.c.l.b16 %v417
    %v1768 = vunpack.c.h.b16 %v417
    %v1769 = vunpack.c.l.b16 %v418
    %v1770 = vunpack.c.h.b16 %v418
    %v1771 = vunpack.c.l.b16 %v419
    %v1772 = vunpack.c.h.b16 %v419
    %v1773 = vunpack.c.l.b16 %v420
    %v1774 = vunpack.c.h.b16 %v420
    %v1775 = vunpack.c.l.b16 %v421
    %v1776 = vunpack.c.h.b16 %v421
    %v1777 = vunpack.c.l.b16 %v422
    %v1778 = vunpack.c.h.b16 %v422
    %v1779 = vunpack.c.l.b16 %v423
    %v1780 = vunpack.c.h.b16 %v423
    %v1781 = vunpack.c.l.b16 %v424
    %v1782 = vunpack.c.h.b16 %v424
    %v1783 = vunpack.c.l.b16 %v425
    %v1784 = vunpack.c.h.b16 %v425
    %v1785 = vunpack.c.l.b16 %v426
    %v1786 = vunpack.c.h.b16 %v426
    %v1787 = vunpack.c.l.b16 %v427
    %v1788 = vunpack.c.h.b16 %v427
    %v1789 = vunpack.c.l.b16 %v428
    %v1790 = vunpack.c.h.b16 %v428
    %v1791 = vunpack.c.l.b16 %v429
    %v1792 = vunpack.c.h.b16 %v429
    %v1793 = vunpack.c.l.b16 %v430
    %v1794 = vunpack.c.h.b16 %v430
    %v1795 = vunpack.c.l.b16 %v431
    %v1796 = vunpack.c.h.b16 %v431
    %v1797 = vunpack.c.l.b16 %v432
    %v1798 = vunpack.c.h.b16 %v432
    %v1799 = vunpack.c.l.b16 %v433
    %v1800 = vunpack.c.h.b16 %v433
    %v1801 = vunpack.c.l.b16 %v434
    %v1802 = vunpack.c.h.b16 %v434
    %v1803 = vunpack.c.l.b16 %v435
    %v1804 = vunpack.c.h.b16 %v435
    %v1805 = vunpack.c.l.b16 %v436
    %v1806 = vunpack.c.h.b16 %v436
    %v1807 = vunpack.c.l.b16 %v437
    %v1808 = vunpack.c.h.b16 %v437
    %v1809 = vunpack.c.l.b16 %v438
    %v1810 = vunpack.c.h.b16 %v438
    %v1811 = vunpack.c.l.b16 %v439
    %v1812 = vunpack.c.h.b16 %v439
    %v1813 = vunpack.c.l.b16 %v440
    %v1814 = vunpack.c.h.b16 %v440
    %v1815 = vunpack.c.l.b16 %v441
    %v1816 = vunpack.c.h.b16 %v441
    %v1817 = vunpack.c.l.b16 %v442
    %v1818 = vunpack.c.h.b16 %v442
    %v1819 = vunpack.c.l.b16 %v443
    %v1820 = vunpack.c.h.b16 %v443
    %v1821 = vunpack.c.l.b16 %v444
    %v1822 = vunpack.c.h.b16 %v444
    %v1823 = vunpack.c.l.b16 %v445
    %v1824 = vunpack.c.h.b16 %v445
    %v1825 = vunpack.c.l.b16 %v446
    %v1826 = vunpack.c.h.b16 %v446
    %v1827 = vunpack.c.l.b16 %v447
    %v1828 = vunpack.c.h.b16 %v447
    %v1829 = vunpack.c.l.b16 %v448
    %v1830 = vunpack.c.h.b16 %v448
    %v1831 = vunpack.c.l.b16 %v449
    %v1832 = vunpack.c.h.b16 %v449
    %v1833 = vunpack.c.l.b16 %v450
    %v1834 = vunpack.c.h.b16 %v450
    %v1835 = vunpack.c.l.b16 %v451
    %v1836 = vunpack.c.h.b16 %v451
    %v1837 = vunpack.c.l.b16 %v452
    %v1838 = vunpack.c.h.b16 %v452
    %v1839 = vunpack.c.l.b16 %v453
    %v1840 = vunpack.c.h.b16 %v453
    %v1841 = vunpack.c.l.b16 %v454
    %v1842 = vunpack.c.h.b16 %v454
    %v1843 = vunpack.c.l.b16 %v455
    %v1844 = vunpack.c.h.b16 %v455
    %v1845 = vunpack.c.l.b16 %v456
    %v1846 = vunpack.c.h.b16 %v456
    %v1847 = vunpack.c.l.b16 %v457
    %v1848 = vunpack.c.h.b16 %v457
    %v1849 = vunpack.c.l.b16 %v458
    %v1850 = vunpack.c.h.b16 %v458
    %v1851 = vunpack.c.l.b16 %v459
    %v1852 = vunpack.c.h.b16 %v459
    %v1853 = vunpack.c.l.b16 %v460
    %v1854 = vunpack.c.h.b16 %v460
    %v1855 = vunpack.c.l.b16 %v461
    %v1856 = vunpack.c.h.b16 %v461
    %v1857 = vunpack.c.l.b16 %v462
    %v1858 = vunpack.c.h.b16 %v462
    %v1859 = vunpack.c.l.b16 %v463
    %v1860 = vunpack.c.h.b16 %v463
    %v1861 = vunpack.c.l.b16 %v464
    %v1862 = vunpack.c.h.b16 %v464
    %v1863 = vunpack.c.l.b16 %v465
    %v1864 = vunpack.c.h.b16 %v465
    %v1865 = vunpack.c.l.b16 %v466
    %v1866 = vunpack.c.h.b16 %v466
    %v1867 = vunpack.c.l.b16 %v467
    %v1868 = vunpack.c.h.b16 %v467
    %v1869 = vunpack.c.l.b16 %v468
    %v1870 = vunpack.c.h.b16 %v468
    %v1871 = vunpack.c.l.b16 %v469
    %v1872 = vunpack.c.h.b16 %v469
    %v1873 = vunpack.c.l.b16 %v470
    %v1874 = vunpack.c.h.b16 %v470
    %v1875 = vunpack.c.l.b16 %v471
    %v1876 = vunpack.c.h.b16 %v471
    %v1877 = vunpack.c.l.b16 %v472
    %v1878 = vunpack.c.h.b16 %v472
    %v1879 = vunpack.c.l.b16 %v473
    %v1880 = vunpack.c.h.b16 %v473
    %v1881 = vunpack.c.l.b16 %v474
    %v1882 = vunpack.c.h.b16 %v474
    %v1883 = vunpack.c.l.b16 %v475
    %v1884 = vunpack.c.h.b16 %v475
    %v1885 = vunpack.c.l.b16 %v476
    %v1886 = vunpack.c.h.b16 %v476
    %v1887 = vunpack.c.l.b16 %v477
    %v1888 = vunpack.c.h.b16 %v477
    %v1889 = vunpack.c.l.b16 %v478
    %v1890 = vunpack.c.h.b16 %v478
    %v1891 = vunpack.c.l.b16 %v479
    %v1892 = vunpack.c.h.b16 %v479
    %v1893 = vunpack.c.l.b16 %v480
    %v1894 = vunpack.c.h.b16 %v480
    %v1895 = vunpack.c.l.b16 %v481
    %v1896 = vunpack.c.h.b16 %v481
    %v1897 = vunpack.c.l.b16 %v482
    %v1898 = vunpack.c.h.b16 %v482
    %v1899 = vunpack.c.l.b16 %v483
    %v1900 = vunpack.c.h.b16 %v483
    %v1901 = vunpack.c.l.b16 %v484
    %v1902 = vunpack.c.h.b16 %v484
    %v1903 = vunpack.c.l.b16 %v485
    %v1904 = vunpack.c.h.b16 %v485
    %v1905 = vunpack.c.l.b16 %v486
    %v1906 = vunpack.c.h.b16 %v486
    %v1907 = vunpack.c.l.b16 %v487
    %v1908 = vunpack.c.h.b16 %v487
    %v1909 = vunpack.c.l.b16 %v488
    %v1910 = vunpack.c.h.b16 %v488
    %v1911 = vunpack.c.l.b16 %v489
    %v1912 = vunpack.c.h.b16 %v489
    %v1913 = vunpack.c.l.b16 %v490
    %v1914 = vunpack.c.h.b16 %v490
    %v1915 = vunpack.c.l.b16 %v491
    %v1916 = vunpack.c.h.b16 %v491
    %v1917 = vunpack.c.l.b16 %v492
    %v1918 = vunpack.c.h.b16 %v492
    %v1919 = vunpack.c.l.b16 %v493
    %v1920 = vunpack.c.h.b16 %v493
    %v1921 = vunpack.c.l.b16 %v494
    %v1922 = vunpack.c.h.b16 %v494
    %v1923 = vunpack.c.l.b16 %v495
    %v1924 = vunpack.c.h.b16 %v495
    %v1925 = vunpack.c.l.b16 %v496
    %v1926 = vunpack.c.h.b16 %v496
    %v1927 = vunpack.c.l.b16 %v497
    %v1928 = vunpack.c.h.b16 %v497
    %v1929 = vunpack.c.l.b16 %v498
    %v1930 = vunpack.c.h.b16 %v498
    %v1931 = vunpack.c.l.b16 %v499
    %v1932 = vunpack.c.h.b16 %v499
    %v1933 = vunpack.c.l.b16 %v500
    %v1934 = vunpack.c.h.b16 %v500
    %v1935 = vunpack.c.l.b16 %v501
    %v1936 = vunpack.c.h.b16 %v501
    %v1937 = vunpack.c.l.b16 %v502
    %v1938 = vunpack.c.h.b16 %v502
    %v1939 = vunpack.c.l.b16 %v503
    %v1940 = vunpack.c.h.b16 %v503
    %v1941 = vunpack.c.l.b16 %v504
    %v1942 = vunpack.c.h.b16 %v504
    %v1943 = vunpack.c.l.b16 %v505
    %v1944 = vunpack.c.h.b16 %v505
    %v1945 = vunpack.c.l.b16 %v506
    %v1946 = vunpack.c.h.b16 %v506
    %v1947 = vunpack.c.l.b16 %v507
    %v1948 = vunpack.c.h.b16 %v507
    %v1949 = vunpack.c.l.b16 %v508
    %v1950 = vunpack.c.h.b16 %v508
    %v1951 = vunpack.c.l.b16 %v509
    %v1952 = vunpack.c.h.b16 %v509
    %v1953 = vunpack.c.l.b16 %v510
    %v1954 = vunpack.c.h.b16 %v510
    %v1955 = vunpack.c.l.b16 %v511
    %v1956 = vunpack.c.h.b16 %v511
    %v1957 = vunpack.c.l.b16 %v512
    %v1958 = vunpack.c.h.b16 %v512
    %v1959 = vunpack.c.l.b16 %v513
    %v1960 = vunpack.c.h.b16 %v513
    %v1961 = vunpack.c.l.b16 %v514
    %v1962 = vunpack.c.h.b16 %v514
    %v1963 = vunpack.c.l.b16 %v515
    %v1964 = vunpack.c.h.b16 %v515
    %v1965 = vunpack.c.l.b16 %v516
    %v1966 = vunpack.c.h.b16 %v516
    %v1967 = vunpack.c.l.b16 %v517
    %v1968 = vunpack.c.h.b16 %v517
    %v1969 = vunpack.c.l.b16 %v518
    %v1970 = vunpack.c.h.b16 %v518
    %v1971 = vunpack.c.l.b16 %v519
    %v1972 = vunpack.c.h.b16 %v519
    %v1973 = vunpack.c.l.b16 %v520
    %v1974 = vunpack.c.h.b16 %v520
    %v1975 = vunpack.c.l.b16 %v521
    %v1976 = vunpack.c.h.b16 %v521
    %v1977 = vunpack.c.l.b16 %v522
    %v1978 = vunpack.c.h.b16 %v522
    %v1979 = vunpack.c.l.b16 %v523
    %v1980 = vunpack.c.h.b16 %v523
    %v1981 = vunpack.c.l.b16 %v524
    %v1982 = vunpack.c.h.b16 %v524
    %v1983 = vunpack.c.l.b16 %v525
    %v1984 = vunpack.c.h.b16 %v525
    %v1985 = vunpack.c.l.b16 %v526
    %v1986 = vunpack.c.h.b16 %v526
    %v1987 = vunpack.c.l.b16 %v527
    %v1988 = vunpack.c.h.b16 %v527
    %v1989 = vunpack.c.l.b16 %v528
    %v1990 = vunpack.c.h.b16 %v528
    %v1991 = vunpack.c.l.b16 %v529
    %v1992 = vunpack.c.h.b16 %v529
    %v1993 = vunpack.c.l.b16 %v530
    %v1994 = vunpack.c.h.b16 %v530
    %v1995 = vunpack.c.l.b16 %v531
    %v1996 = vunpack.c.h.b16 %v531
    %v1997 = vunpack.c.l.b16 %v532
    %v1998 = vunpack.c.h.b16 %v532
    %v1999 = vunpack.c.l.b16 %v533
    %v2000 = vunpack.c.h.b16 %v533
    %v2001 = vunpack.c.l.b16 %v534
    %v2002 = vunpack.c.h.b16 %v534
    %v2003 = vunpack.c.l.b16 %v535
    %v2004 = vunpack.c.h.b16 %v535
    %v2005 = vunpack.c.l.b16 %v536
    %v2006 = vunpack.c.h.b16 %v536
    %v2007 = vunpack.c.l.b16 %v537
    %v2008 = vunpack.c.h.b16 %v537
    %v2009 = vunpack.c.l.b16 %v538
    %v2010 = vunpack.c.h.b16 %v538
    %v2011 = vunpack.c.l.b16 %v539
    %v2012 = vunpack.c.h.b16 %v539
    %v2013 = vunpack.c.l.b16 %v540
    %v2014 = vunpack.c.h.b16 %v540
    %v2015 = vunpack.c.l.b16 %v541
    %v2016 = vunpack.c.h.b16 %v541
    %v2017 = vunpack.c.l.b16 %v542
    %v2018 = vunpack.c.h.b16 %v542
    %v2019 = vunpack.c.l.b16 %v543
    %v2020 = vunpack.c.h.b16 %v543
    %v2021 = vunpack.c.l.b16 %v544
    %v2022 = vunpack.c.h.b16 %v544
    %v2023 = vunpack.c.l.b16 %v545
    %v2024 = vunpack.c.h.b16 %v545
    %v2025 = vunpack.c.l.b16 %v546
    %v2026 = vunpack.c.h.b16 %v546
    %v2027 = vunpack.c.l.b16 %v547
    %v2028 = vunpack.c.h.b16 %v547
    %v2029 = vunpack.c.l.b16 %v548
    %v2030 = vunpack.c.h.b16 %v548
    %v2031 = vunpack.c.l.b16 %v549
    %v2032 = vunpack.c.h.b16 %v549
    %v2033 = vunpack.c.l.b16 %v550
    %v2034 = vunpack.c.h.b16 %v550
    %v2035 = vunpack.c.l.b16 %v551
    %v2036 = vunpack.c.h.b16 %v551
    %v2037 = vunpack.c.l.b16 %v552
    %v2038 = vunpack.c.h.b16 %v552
    %v2039 = vunpack.c.l.b16 %v553
    %v2040 = vunpack.c.h.b16 %v553
    %v2041 = vunpack.c.l.b16 %v554
    %v2042 = vunpack.c.h.b16 %v554
    %v2043 = vunpack.c.l.b16 %v555
    %v2044 = vunpack.c.h.b16 %v555
    %v2045 = vunpack.c.l.b16 %v556
    %v2046 = vunpack.c.h.b16 %v556
    %v2047 = vunpack.c.l.b16 %v557
    %v2048 = vunpack.c.h.b16 %v557
    %v2049 = vunpack.c.l.b16 %v558
    %v2050 = vunpack.c.h.b16 %v558
    %v2051 = vunpack.c.l.b16 %v559
    %v2052 = vunpack.c.h.b16 %v559
    %v2053 = vunpack.c.l.b16 %v560
    %v2054 = vunpack.c.h.b16 %v560
    %v2055 = vunpack.c.l.b16 %v561
    %v2056 = vunpack.c.h.b16 %v561
    %v2057 = vunpack.c.l.b16 %v562
    %v2058 = vunpack.c.h.b16 %v562
    %v2059 = vunpack.c.l.b16 %v563
    %v2060 = vunpack.c.h.b16 %v563
    %v2061 = vunpack.c.l.b16 %v564
    %v2062 = vunpack.c.h.b16 %v564
    %v2063 = vunpack.c.l.b16 %v565
    %v2064 = vunpack.c.h.b16 %v565
    %v2065 = vunpack.c.l.b16 %v566
    %v2066 = vunpack.c.h.b16 %v566
    %v2067 = vunpack.c.l.b16 %v567
    %v2068 = vunpack.c.h.b16 %v567
    %v2069 = vunpack.c.l.b16 %v568
    %v2070 = vunpack.c.h.b16 %v568
    %v2071 = vunpack.c.l.b16 %v569
    %v2072 = vunpack.c.h.b16 %v569
    %v2073 = vunpack.c.l.b16 %v570
    %v2074 = vunpack.c.h.b16 %v570
    %v2075 = vunpack.c.l.b16 %v571
    %v2076 = vunpack.c.h.b16 %v571
    %v2077 = vunpack.c.l.b16 %v572
    %v2078 = vunpack.c.h.b16 %v572
    %v2079 = vunpack.c.l.b16 %v573
    %v2080 = vunpack.c.h.b16 %v573
    %v2081 = vunpack.c.l.b16 %v574
    %v2082 = vunpack.c.h.b16 %v574
    %v2083 = vunpack.c.l.b16 %v575
    %v2084 = vunpack.c.h.b16 %v575
    %v2085 = vunpack.c.l.b16 %v576
    %v2086 = vunpack.c.h.b16 %v576
    %v2087 = vunpack.c.l.b16 %v577
    %v2088 = vunpack.c.h.b16 %v577
    %v2089 = vunpack.c.l.b16 %v578
    %v2090 = vunpack.c.h.b16 %v578
    %v2091 = vunpack.c.l.b16 %v579
    %v2092 = vunpack.c.h.b16 %v579
    %v2093 = vunpack.c.l.b16 %v580
    %v2094 = vunpack.c.h.b16 %v580
    %v2095 = vunpack.c.l.b16 %v581
    %v2096 = vunpack.c.h.b16 %v581
    %v2097 = vunpack.c.l.b16 %v582
    %v2098 = vunpack.c.h.b16 %v582
    %v2099 = vunpack.c.l.b16 %v583
    %v2100 = vunpack.c.h.b16 %v583
    %v2101 = vunpack.c.l.b16 %v584
    %v2102 = vunpack.c.h.b16 %v584
    %v2103 = vunpack.c.l.b16 %v585
    %v2104 = vunpack.c.h.b16 %v585
    %v2105 = vunpack.c.l.b16 %v586
    %v2106 = vunpack.c.h.b16 %v586
    %v2107 = vunpack.c.l.b16 %v587
    %v2108 = vunpack.c.h.b16 %v587
    %v2109 = vunpack.c.l.b16 %v588
    %v2110 = vunpack.c.h.b16 %v588
    %v2111 = vunpack.c.l.b16 %v589
    %v2112 = vunpack.c.h.b16 %v589
    %v2113 = vunpack.c.l.b16 %v590
    %v2114 = vunpack.c.h.b16 %v590
    %v2115 = vunpack.c.l.b16 %v591
    %v2116 = vunpack.c.h.b16 %v591
    %v2117 = vunpack.c.l.b16 %v592
    %v2118 = vunpack.c.h.b16 %v592
    %v2119 = vunpack.c.l.b16 %v593
    %v2120 = vunpack.c.h.b16 %v593
    %v2121 = vunpack.c.l.b16 %v594
    %v2122 = vunpack.c.h.b16 %v594
    %v2123 = vunpack.c.l.b16 %v595
    %v2124 = vunpack.c.h.b16 %v595
    %v2125 = vunpack.c.l.b16 %v596
    %v2126 = vunpack.c.h.b16 %v596
    %v2127 = vunpack.c.l.b16 %v597
    %v2128 = vunpack.c.h.b16 %v597
    %v2129 = vunpack.c.l.b16 %v598
    %v2130 = vunpack.c.h.b16 %v598
    %v2131 = vunpack.c.l.b16 %v599
    %v2132 = vunpack.c.h.b16 %v599
    %v2133 = vunpack.c.l.b16 %v600
    %v2134 = vunpack.c.h.b16 %v600
    %v2135 = vunpack.c.l.b16 %v601
    %v2136 = vunpack.c.h.b16 %v601
    %v2137 = vunpack.c.l.b16 %v602
    %v2138 = vunpack.c.h.b16 %v602
    %v2139 = vunpack.c.l.b16 %v603
    %v2140 = vunpack.c.h.b16 %v603
    %v2141 = vunpack.c.l.b16 %v604
    %v2142 = vunpack.c.h.b16 %v604
    %v2143 = vunpack.c.l.b16 %v605
    %v2144 = vunpack.c.h.b16 %v605
    %v2145 = vunpack.c.l.b16 %v606
    %v2146 = vunpack.c.h.b16 %v606
    %v2147 = vunpack.c.l.b16 %v607
    %v2148 = vunpack.c.h.b16 %v607
    %v2149 = vunpack.c.l.b16 %v608
    %v2150 = vunpack.c.h.b16 %v608
    %v2151 = vunpack.c.l.b16 %v609
    %v2152 = vunpack.c.h.b16 %v609
    %v2153 = vunpack.c.l.b16 %v610
    %v2154 = vunpack.c.h.b16 %v610
    %v2155 = vunpack.c.l.b16 %v611
    %v2156 = vunpack.c.h.b16 %v611
    %v2157 = vunpack.c.l.b16 %v612
    %v2158 = vunpack.c.h.b16 %v612
    %v2159 = vunpack.c.l.b16 %v613
    %v2160 = vunpack.c.h.b16 %v613
    %v2161 = vunpack.c.l.b16 %v614
    %v2162 = vunpack.c.h.b16 %v614
    %v2163 = vunpack.c.l.b16 %v615
    %v2164 = vunpack.c.h.b16 %v615
    %v2165 = vunpack.c.l.b16 %v616
    %v2166 = vunpack.c.h.b16 %v616
    %v2167 = vunpack.c.l.b16 %v617
    %v2168 = vunpack.c.h.b16 %v617
    %v2169 = vunpack.c.l.b16 %v618
    %v2170 = vunpack.c.h.b16 %v618
    %v2171 = vunpack.c.l.b16 %v619
    %v2172 = vunpack.c.h.b16 %v619
    %v2173 = vunpack.c.l.b16 %v620
    %v2174 = vunpack.c.h.b16 %v620
    %v2175 = vunpack.c.l.b16 %v621
    %v2176 = vunpack.c.h.b16 %v621
    %v2177 = vunpack.c.l.b16 %v622
    %v2178 = vunpack.c.h.b16 %v622
    %v2179 = vunpack.c.l.b16 %v623
    %v2180 = vunpack.c.h.b16 %v623
    %v2181 = vunpack.c.l.b16 %v624
    %v2182 = vunpack.c.h.b16 %v624
    %v2183 = vunpack.c.l.b16 %v625
    %v2184 = vunpack.c.h.b16 %v625
    %v2185 = vunpack.c.l.b16 %v626
    %v2186 = vunpack.c.h.b16 %v626
    %v2187 = vunpack.c.l.b16 %v627
    %v2188 = vunpack.c.h.b16 %v627
    %v2189 = vunpack.c.l.b16 %v628
    %v2190 = vunpack.c.h.b16 %v628
    %v2191 = vunpack.c.l.b16 %v629
    %v2192 = vunpack.c.h.b16 %v629
    %v2193 = vunpack.c.l.b16 %v630
    %v2194 = vunpack.c.h.b16 %v630
    %v2195 = vunpack.c.l.b16 %v631
    %v2196 = vunpack.c.h.b16 %v631
    %v2197 = vunpack.c.l.b16 %v632
    %v2198 = vunpack.c.h.b16 %v632
    %v2199 = vunpack.c.l.b16 %v633
    %v2200 = vunpack.c.h.b16 %v633
    %v2201 = vunpack.c.l.b16 %v634
    %v2202 = vunpack.c.h.b16 %v634
    %v2203 = vunpack.c.l.b16 %v635
    %v2204 = vunpack.c.h.b16 %v635
    %v2205 = vunpack.c.l.b16 %v636
    %v2206 = vunpack.c.h.b16 %v636
    %v2207 = vunpack.c.l.b16 %v637
    %v2208 = vunpack.c.h.b16 %v637
    %v2209 = vunpack.c.l.b16 %v638
    %v2210 = vunpack.c.h.b16 %v638
    %v2211 = vunpack.c.l.b16 %v639
    %v2212 = vunpack.c.h.b16 %v639
    %v2213 = vunpack.c.l.b16 %v640
    %v2214 = vunpack.c.h.b16 %v640
    %v2215 = vunpack.c.l.b16 %v641
    %v2216 = vunpack.c.h.b16 %v641
    %v2217 = vunpack.c.l.b16 %v642
    %v2218 = vunpack.c.h.b16 %v642
    %v2219 = vunpack.c.l.b16 %v643
    %v2220 = vunpack.c.h.b16 %v643
    %v2221 = vunpack.c.l.b16 %v644
    %v2222 = vunpack.c.h.b16 %v644
    %v2223 = vunpack.c.l.b16 %v645
    %v2224 = vunpack.c.h.b16 %v645
    %v2225 = vunpack.c.l.b16 %v646
    %v2226 = vunpack.c.h.b16 %v646
    %v2227 = vunpack.c.l.b16 %v647
    %v2228 = vunpack.c.h.b16 %v647
    %v2229 = vunpack.c.l.b16 %v648
    %v2230 = vunpack.c.h.b16 %v648
    %v2231 = vunpack.c.l.b16 %v649
    %v2232 = vunpack.c.h.b16 %v649
    %v2233 = vunpack.c.l.b16 %v650
    %v2234 = vunpack.c.h.b16 %v650
    %v2235 = vunpack.c.l.b16 %v651
    %v2236 = vunpack.c.h.b16 %v651
    %v2237 = vunpack.c.l.b16 %v652
    %v2238 = vunpack.c.h.b16 %v652
    %v2239 = vunpack.c.l.b16 %v653
    %v2240 = vunpack.c.h.b16 %v653
    %v2241 = vunpack.c.l.b16 %v654
    %v2242 = vunpack.c.h.b16 %v654
    %v2243 = vunpack.c.l.b16 %v655
    %v2244 = vunpack.c.h.b16 %v655
    %v2245 = vunpack.c.l.b16 %v656
    %v2246 = vunpack.c.h.b16 %v656
    %v2247 = vunpack.c.l.b16 %v657
    %v2248 = vunpack.c.h.b16 %v657
    %v2249 = vunpack.c.l.b16 %v658
    %v2250 = vunpack.c.h.b16 %v658
    %v2251 = vunpack.c.l.b16 %v659
    %v2252 = vunpack.c.h.b16 %v659
    %v2253 = vunpack.c.l.b16 %v660
    %v2254 = vunpack.c.h.b16 %v660
    %v2255 = vunpack.c.l.b16 %v661
    %v2256 = vunpack.c.h.b16 %v661
    %v2257 = vunpack.c.l.b16 %v662
    %v2258 = vunpack.c.h.b16 %v662
    %v2259 = vunpack.c.l.b16 %v663
    %v2260 = vunpack.c.h.b16 %v663
    %v2261 = vunpack.c.l.b16 %v664
    %v2262 = vunpack.c.h.b16 %v664
    %v2263 = vunpack.c.l.b16 %v665
    %v2264 = vunpack.c.h.b16 %v665
    %v2265 = vunpack.c.l.b16 %v666
    %v2266 = vunpack.c.h.b16 %v666
    %v2267 = vunpack.c.l.b16 %v667
    %v2268 = vunpack.c.h.b16 %v667
    %v2269 = vunpack.c.l.b16 %v668
    %v2270 = vunpack.c.h.b16 %v668
    %v2271 = vpack.c.b16 %v1251, %v1247
    %v2272 = vpack.c.b16 %v1252, %v1248
    %v2273 = vpack.c.b16 %v1253, %v1249
    %v2274 = vpack.c.b16 %v1254, %v1250
    %v2275 = vpack.c.b16 %v1259, %v1255
    %v2276 = vpack.c.b16 %v1260, %v1256
    %v2277 = vpack.c.b16 %v1261, %v1257
    %v2278 = vpack.c.b16 %v1262, %v1258
    %v2279 = vpack.c.b16 %v1267, %v1263
    %v2280 = vpack.c.b16 %v1268, %v1264
    %v2281 = vpack.c.b16 %v1269, %v1265
    %v2282 = vpack.c.b16 %v1270, %v1266
    %v2283 = vpack.c.b16 %v1275, %v1271
    %v2284 = vpack.c.b16 %v1276, %v1272
    %v2285 = vpack.c.b16 %v1277, %v1273
    %v2286 = vpack.c.b16 %v1278, %v1274
    %v2287 = vpack.c.b16 %v1283, %v1279
    %v2288 = vpack.c.b16 %v1284, %v1280
    %v2289 = vpack.c.b16 %v1285, %v1281
    %v2290 = vpack.c.b16 %v1286, %v1282
    %v2291 = vpack.c.b16 %v1291, %v1287
    %v2292 = vpack.c.b16 %v1292, %v1288
    %v2293 = vpack.c.b16 %v1293, %v1289
    %v2294 = vpack.c.b16 %v1294, %v1290
    %v2295 = vpack.c.b16 %v1299, %v1295
    %v2296 = vpack.c.b16 %v1300, %v1296
    %v2297 = vpack.c.b16 %v1301, %v1297
    %v2298 = vpack.c.b16 %v1302, %v1298
    %v2299 = vpack.c.b16 %v1307, %v1303
    %v2300 = vpack.c.b16 %v1308, %v1304
    %v2301 = vpack.c.b16 %v1309, %v1305
    %v2302 = vpack.c.b16 %v1310, %v1306
    %v2303 = vpack.c.b16 %v1315, %v1311
    %v2304 = vpack.c.b16 %v1316, %v1312
    %v2305 = vpack.c.b16 %v1317, %v1313
    %v2306 = vpack.c.b16 %v1318, %v1314
    %v2307 = vpack.c.b16 %v1323, %v1319
    %v2308 = vpack.c.b16 %v1324, %v1320
    %v2309 = vpack.c.b16 %v1325, %v1321
    %v2310 = vpack.c.b16 %v1326, %v1322
    %v2311 = vpack.c.b16 %v1331, %v1327
    %v2312 = vpack.c.b16 %v1332, %v1328
    %v2313 = vpack.c.b16 %v1333, %v1329
    %v2314 = vpack.c.b16 %v1334, %v1330
    %v2315 = vpack.c.b16 %v1339, %v1335
    %v2316 = vpack.c.b16 %v1340, %v1336
    %v2317 = vpack.c.b16 %v1341, %v1337
    %v2318 = vpack.c.b16 %v1342, %v1338
    %v2319 = vpack.c.b16 %v1347, %v1343
    %v2320 = vpack.c.b16 %v1348, %v1344
    %v2321 = vpack.c.b16 %v1349, %v1345
    %v2322 = vpack.c.b16 %v1350, %v1346
    %v2323 = vpack.c.b16 %v1355, %v1351
    %v2324 = vpack.c.b16 %v1356, %v1352
    %v2325 = vpack.c.b16 %v1357, %v1353
    %v2326 = vpack.c.b16 %v1358, %v1354
    %v2327 = vpack.c.b16 %v1363, %v1359
    %v2328 = vpack.c.b16 %v1364, %v1360
    %v2329 = vpack.c.b16 %v1365, %v1361
    %v2330 = vpack.c.b16 %v1366, %v1362
    %v2331 = vpack.c.b16 %v1371, %v1367
    %v2332 = vpack.c.b16 %v1372, %v1368
    %v2333 = vpack.c.b16 %v1373, %v1369
    %v2334 = vpack.c.b16 %v1374, %v1370
    %v2335 = vpack.c.b16 %v1379, %v1375
    %v2336 = vpack.c.b16 %v1380, %v1376
    %v2337 = vpack.c.b16 %v1381, %v1377
    %v2338 = vpack.c.b16 %v1382, %v1378
    %v2339 = vpack.c.b16 %v1387, %v1383
    %v2340 = vpack.c.b16 %v1388, %v1384
    %v2341 = vpack.c.b16 %v1389, %v1385
    %v2342 = vpack.c.b16 %v1390, %v1386
    %v2343 = vpack.c.b16 %v1395, %v1391
    %v2344 = vpack.c.b16 %v1396, %v1392
    %v2345 = vpack.c.b16 %v1397, %v1393
    %v2346 = vpack.c.b16 %v1398, %v1394
    %v2347 = vpack.c.b16 %v1403, %v1399
    %v2348 = vpack.c.b16 %v1404, %v1400
    %v2349 = vpack.c.b16 %v1405, %v1401
    %v2350 = vpack.c.b16 %v1406, %v1402
    %v2351 = vpack.c.b16 %v1411, %v1407
    %v2352 = vpack.c.b16 %v1412, %v1408
    %v2353 = vpack.c.b16 %v1413, %v1409
    %v2354 = vpack.c.b16 %v1414, %v1410
    %v2355 = vpack.c.b16 %v1419, %v1415
    %v2356 = vpack.c.b16 %v1420, %v1416
    %v2357 = vpack.c.b16 %v1421, %v1417
    %v2358 = vpack.c.b16 %v1422, %v1418
    %v2359 = vpack.c.b16 %v1427, %v1423
    %v2360 = vpack.c.b16 %v1428, %v1424
    %v2361 = vpack.c.b16 %v1429, %v1425
    %v2362 = vpack.c.b16 %v1430, %v1426
    %v2363 = vpack.c.b16 %v1435, %v1431
    %v2364 = vpack.c.b16 %v1436, %v1432
    %v2365 = vpack.c.b16 %v1437, %v1433
    %v2366 = vpack.c.b16 %v1438, %v1434
    %v2367 = vpack.c.b16 %v1443, %v1439
    %v2368 = vpack.c.b16 %v1444, %v1440
    %v2369 = vpack.c.b16 %v1445, %v1441
    %v2370 = vpack.c.b16 %v1446, %v1442
    %v2371 = vpack.c.b16 %v1451, %v1447
    %v2372 = vpack.c.b16 %v1452, %v1448
    %v2373 = vpack.c.b16 %v1453, %v1449
    %v2374 = vpack.c.b16 %v1454, %v1450
    %v2375 = vpack.c.b16 %v1459, %v1455
    %v2376 = vpack.c.b16 %v1460, %v1456
    %v2377 = vpack.c.b16 %v1461, %v1457
    %v2378 = vpack.c.b16 %v1462, %v1458
    %v2379 = vpack.c.b16 %v1467, %v1463
    %v2380 = vpack.c.b16 %v1468, %v1464
    %v2381 = vpack.c.b16 %v1469, %v1465
    %v2382 = vpack.c.b16 %v1470, %v1466
    %v2383 = vpack.c.b16 %v1475, %v1471
    %v2384 = vpack.c.b16 %v1476, %v1472
    %v2385 = vpack.c.b16 %v1477, %v1473
    %v2386 = vpack.c.b16 %v1478, %v1474
    %v2387 = vpack.c.b16 %v1483, %v1479
    %v2388 = vpack.c.b16 %v1484, %v1480
    %v2389 = vpack.c.b16 %v1485, %v1481
    %v2390 = vpack.c.b16 %v1486, %v1482
    %v2391 = vpack.c.b16 %v1491, %v1487
    %v2392 = vpack.c.b16 %v1492, %v1488
    %v2393 = vpack.c.b16 %v1493, %v1489
    %v2394 = vpack.c.b16 %v1494, %v1490
    %v2395 = vpack.c.b16 %v1499, %v1495
    %v2396 = vpack.c.b16 %v1500, %v1496
    %v2397 = vpack.c.b16 %v1501, %v1497
    %v2398 = vpack.c.b16 %v1502, %v1498
    %v2399 = vpack.c.b16 %v1507, %v1503
    %v2400 = vpack.c.b16 %v1508, %v1504
    %v2401 = vpack.c.b16 %v1509, %v1505
    %v2402 = vpack.c.b16 %v1510, %v1506
    %v2403 = vpack.c.b16 %v1515, %v1511
    %v2404 = vpack.c.b16 %v1516, %v1512
    %v2405 = vpack.c.b16 %v1517, %v1513
    %v2406 = vpack.c.b16 %v1518, %v1514
    %v2407 = vpack.c.b16 %v1523, %v1519
    %v2408 = vpack.c.b16 %v1524, %v1520
    %v2409 = vpack.c.b16 %v1525, %v1521
    %v2410 = vpack.c.b16 %v1526, %v1522
    %v2411 = vpack.c.b16 %v1531, %v1527
    %v2412 = vpack.c.b16 %v1532, %v1528
    %v2413 = vpack.c.b16 %v1533, %v1529
    %v2414 = vpack.c.b16 %v1534, %v1530
    %v2415 = vpack.c.b16 %v1539, %v1535
    %v2416 = vpack.c.b16 %v1540, %v1536
    %v2417 = vpack.c.b16 %v1541, %v1537
    %v2418 = vpack.c.b16 %v1542, %v1538
    %v2419 = vpack.c.b16 %v1547, %v1543
    %v2420 = vpack.c.b16 %v1548, %v1544
    %v2421 = vpack.c.b16 %v1549, %v1545
    %v2422 = vpack.c.b16 %v1550, %v1546
    %v2423 = vpack.c.b16 %v1555, %v1551
    %v2424 = vpack.c.b16 %v1556, %v1552
    %v2425 = vpack.c.b16 %v1557, %v1553
    %v2426 = vpack.c.b16 %v1558, %v1554
    %v2427 = vpack.c.b16 %v1563, %v1559
    %v2428 = vpack.c.b16 %v1564, %v1560
    %v2429 = vpack.c.b16 %v1565, %v1561
    %v2430 = vpack.c.b16 %v1566, %v1562
    %v2431 = vpack.c.b16 %v1571, %v1567
    %v2432 = vpack.c.b16 %v1572, %v1568
    %v2433 = vpack.c.b16 %v1573, %v1569
    %v2434 = vpack.c.b16 %v1574, %v1570
    %v2435 = vpack.c.b16 %v1579, %v1575
    %v2436 = vpack.c.b16 %v1580, %v1576
    %v2437 = vpack.c.b16 %v1581, %v1577
    %v2438 = vpack.c.b16 %v1582, %v1578
    %v2439 = vpack.c.b16 %v1587, %v1583
    %v2440 = vpack.c.b16 %v1588, %v1584
    %v2441 = vpack.c.b16 %v1589, %v1585
    %v2442 = vpack.c.b16 %v1590, %v1586
    %v2443 = vpack.c.b16 %v1595, %v1591
    %v2444 = vpack.c.b16 %v1596, %v1592
    %v2445 = vpack.c.b16 %v1597, %v1593
    %v2446 = vpack.c.b16 %v1598, %v1594
    %v2447 = vpack.c.b16 %v1603, %v1599
    %v2448 = vpack.c.b16 %v1604, %v1600
    %v2449 = vpack.c.b16 %v1605, %v1601
    %v2450 = vpack.c.b16 %v1606, %v1602
    %v2451 = vpack.c.b16 %v1611, %v1607
    %v2452 = vpack.c.b16 %v1612, %v1608
    %v2453 = vpack.c.b16 %v1613, %v1609
    %v2454 = vpack.c.b16 %v1614, %v1610
    %v2455 = vpack.c.b16 %v1619, %v1615
    %v2456 = vpack.c.b16 %v1620, %v1616
    %v2457 = vpack.c.b16 %v1621, %v1617
    %v2458 = vpack.c.b16 %v1622, %v1618
    %v2459 = vpack.c.b16 %v1627, %v1623
    %v2460 = vpack.c.b16 %v1628, %v1624
    %v2461 = vpack.c.b16 %v1629, %v1625
    %v2462 = vpack.c.b16 %v1630, %v1626
    %v2463 = vpack.c.b16 %v1635, %v1631
    %v2464 = vpack.c.b16 %v1636, %v1632
    %v2465 = vpack.c.b16 %v1637, %v1633
    %v2466 = vpack.c.b16 %v1638, %v1634
    %v2467 = vpack.c.b16 %v1643, %v1639
    %v2468 = vpack.c.b16 %v1644, %v1640
    %v2469 = vpack.c.b16 %v1645, %v1641
    %v2470 = vpack.c.b16 %v1646, %v1642
    %v2471 = vpack.c.b16 %v1651, %v1647
    %v2472 = vpack.c.b16 %v1652, %v1648
    %v2473 = vpack.c.b16 %v1653, %v1649
    %v2474 = vpack.c.b16 %v1654, %v1650
    %v2475 = vpack.c.b16 %v1659, %v1655
    %v2476 = vpack.c.b16 %v1660, %v1656
    %v2477 = vpack.c.b16 %v1661, %v1657
    %v2478 = vpack.c.b16 %v1662, %v1658
    %v2479 = vpack.c.b16 %v1667, %v1663
    %v2480 = vpack.c.b16 %v1668, %v1664
    %v2481 = vpack.c.b16 %v1669, %v1665
    %v2482 = vpack.c.b16 %v1670, %v1666
    %v2483 = vpack.c.b16 %v1675, %v1671
    %v2484 = vpack.c.b16 %v1676, %v1672
    %v2485 = vpack.c.b16 %v1677, %v1673
    %v2486 = vpack.c.b16 %v1678, %v1674
    %v2487 = vpack.c.b16 %v1683, %v1679
    %v2488 = vpack.c.b16 %v1684, %v1680
    %v2489 = vpack.c.b16 %v1685, %v1681
    %v2490 = vpack.c.b16 %v1686, %v1682
    %v2491 = vpack.c.b16 %v1691, %v1687
    %v2492 = vpack.c.b16 %v1692, %v1688
    %v2493 = vpack.c.b16 %v1693, %v1689
    %v2494 = vpack.c.b16 %v1694, %v1690
    %v2495 = vpack.c.b16 %v1699, %v1695
    %v2496 = vpack.c.b16 %v1700, %v1696
    %v2497 = vpack.c.b16 %v1701, %v1697
    %v2498 = vpack.c.b16 %v1702, %v1698
    %v2499 = vpack.c.b16 %v1707, %v1703
    %v2500 = vpack.c.b16 %v1708, %v1704
    %v2501 = vpack.c.b16 %v1709, %v1705
    %v2502 = vpack.c.b16 %v1710, %v1706
    %v2503 = vpack.c.b16 %v1715, %v1711
    %v2504 = vpack.c.b16 %v1716, %v1712
    %v2505 = vpack.c.b16 %v1717, %v1713
    %v2506 = vpack.c.b16 %v1718, %v1714
    %v2507 = vpack.c.b16 %v1723, %v1719
    %v2508 = vpack.c.b16 %v1724, %v1720
    %v2509 = vpack.c.b16 %v1725, %v1721
    %v2510 = vpack.c.b16 %v1726, %v1722
    %v2511 = vpack.c.b16 %v1731, %v1727
    %v2512 = vpack.c.b16 %v1732, %v1728
    %v2513 = vpack.c.b16 %v1733, %v1729
    %v2514 = vpack.c.b16 %v1734, %v1730
    %v2515 = vpack.c.b16 %v1739, %v1735
    %v2516 = vpack.c.b16 %v1740, %v1736
    %v2517 = vpack.c.b16 %v1741, %v1737
    %v2518 = vpack.c.b16 %v1742, %v1738
    %v2519 = vpack.c.b16 %v1747, %v1743
    %v2520 = vpack.c.b16 %v1748, %v1744
    %v2521 = vpack.c.b16 %v1749, %v1745
    %v2522 = vpack.c.b16 %v1750, %v1746
    %v2523 = vpack.c.b16 %v1755, %v1751
    %v2524 = vpack.c.b16 %v1756, %v1752
    %v2525 = vpack.c.b16 %v1757, %v1753
    %v2526 = vpack.c.b16 %v1758, %v1754
    %v2527 = vpack.c.b16 %v1763, %v1759
    %v2528 = vpack.c.b16 %v1764, %v1760
    %v2529 = vpack.c.b16 %v1765, %v1761
    %v2530 = vpack.c.b16 %v1766, %v1762
    %v2531 = vpack.c.b16 %v1771, %v1767
    %v2532 = vpack.c.b16 %v1772, %v1768
    %v2533 = vpack.c.b16 %v1773, %v1769
    %v2534 = vpack.c.b16 %v1774, %v1770
    %v2535 = vpack.c.b16 %v1779, %v1775
    %v2536 = vpack.c.b16 %v1780, %v1776
    %v2537 = vpack.c.b16 %v1781, %v1777
    %v2538 = vpack.c.b16 %v1782, %v1778
    %v2539 = vpack.c.b16 %v1787, %v1783
    %v2540 = vpack.c.b16 %v1788, %v1784
    %v2541 = vpack.c.b16 %v1789, %v1785
    %v2542 = vpack.c.b16 %v1790, %v1786
    %v2543 = vpack.c.b16 %v1795, %v1791
    %v2544 = vpack.c.b16 %v1796, %v1792
    %v2545 = vpack.c.b16 %v1797, %v1793
    %v2546 = vpack.c.b16 %v1798, %v1794
    %v2547 = vpack.c.b16 %v1803, %v1799
    %v2548 = vpack.c.b16 %v1804, %v1800
    %v2549 = vpack.c.b16 %v1805, %v1801
    %v2550 = vpack.c.b16 %v1806, %v1802
    %v2551 = vpack.c.b16 %v1811, %v1807
    %v2552 = vpack.c.b16 %v1812, %v1808
    %v2553 = vpack.c.b16 %v1813, %v1809
    %v2554 = vpack.c.b16 %v1814, %v1810
    %v2555 = vpack.c.b16 %v1819, %v1815
    %v2556 = vpack.c.b16 %v1820, %v1816
    %v2557 = vpack.c.b16 %v1821, %v1817
    %v2558 = vpack.c.b16 %v1822, %v1818
    %v2559 = vpack.c.b16 %v1827, %v1823
    %v2560 = vpack.c.b16 %v1828, %v1824
    %v2561 = vpack.c.b16 %v1829, %v1825
    %v2562 = vpack.c.b16 %v1830, %v1826
    %v2563 = vpack.c.b16 %v1835, %v1831
    %v2564 = vpack.c.b16 %v1836, %v1832
    %v2565 = vpack.c.b16 %v1837, %v1833
    %v2566 = vpack.c.b16 %v1838, %v1834
    %v2567 = vpack.c.b16 %v1843, %v1839
    %v2568 = vpack.c.b16 %v1844, %v1840
    %v2569 = vpack.c.b16 %v1845, %v1841
    %v2570 = vpack.c.b16 %v1846, %v1842
    %v2571 = vpack.c.b16 %v1851, %v1847
    %v2572 = vpack.c.b16 %v1852, %v1848
    %v2573 = vpack.c.b16 %v1853, %v1849
    %v2574 = vpack.c.b16 %v1854, %v1850
    %v2575 = vpack.c.b16 %v1859, %v1855
    %v2576 = vpack.c.b16 %v1860, %v1856
    %v2577 = vpack.c.b16 %v1861, %v1857
    %v2578 = vpack.c.b16 %v1862, %v1858
    %v2579 = vpack.c.b16 %v1867, %v1863
    %v2580 = vpack.c.b16 %v1868, %v1864
    %v2581 = vpack.c.b16 %v1869, %v1865
    %v2582 = vpack.c.b16 %v1870, %v1866
    %v2583 = vpack.c.b16 %v1875, %v1871
    %v2584 = vpack.c.b16 %v1876, %v1872
    %v2585 = vpack.c.b16 %v1877, %v1873
    %v2586 = vpack.c.b16 %v1878, %v1874
    %v2587 = vpack.c.b16 %v1883, %v1879
    %v2588 = vpack.c.b16 %v1884, %v1880
    %v2589 = vpack.c.b16 %v1885, %v1881
    %v2590 = vpack.c.b16 %v1886, %v1882
    %v2591 = vpack.c.b16 %v1891, %v1887
    %v2592 = vpack.c.b16 %v1892, %v1888
    %v2593 = vpack.c.b16 %v1893, %v1889
    %v2594 = vpack.c.b16 %v1894, %v1890
    %v2595 = vpack.c.b16 %v1899, %v1895
    %v2596 = vpack.c.b16 %v1900, %v1896
    %v2597 = vpack.c.b16 %v1901, %v1897
    %v2598 = vpack.c.b16 %v1902, %v1898
    %v2599 = vpack.c.b16 %v1907, %v1903
    %v2600 = vpack.c.b16 %v1908, %v1904
    %v2601 = vpack.c.b16 %v1909, %v1905
    %v2602 = vpack.c.b16 %v1910, %v1906
    %v2603 = vpack.c.b16 %v1915, %v1911
    %v2604 = vpack.c.b16 %v1916, %v1912
    %v2605 = vpack.c.b16 %v1917, %v1913
    %v2606 = vpack.c.b16 %v1918, %v1914
    %v2607 = vpack.c.b16 %v1923, %v1919
    %v2608 = vpack.c.b16 %v1924, %v1920
    %v2609 = vpack.c.b16 %v1925, %v1921
    %v2610 = vpack.c.b16 %v1926, %v1922
    %v2611 = vpack.c.b16 %v1931, %v1927
    %v2612 = vpack.c.b16 %v1932, %v1928
    %v2613 = vpack.c.b16 %v1933, %v1929
    %v2614 = vpack.c.b16 %v1934, %v1930
    %v2615 = vpack.c.b16 %v1939, %v1935
    %v2616 = vpack.c.b16 %v1940, %v1936
    %v2617 = vpack.c.b16 %v1941, %v1937
    %v2618 = vpack.c.b16 %v1942, %v1938
    %v2619 = vpack.c.b16 %v1947, %v1943
    %v2620 = vpack.c.b16 %v1948, %v1944
    %v2621 = vpack.c.b16 %v1949, %v1945
    %v2622 = vpack.c.b16 %v1950, %v1946
    %v2623 = vpack.c.b16 %v1955, %v1951
    %v2624 = vpack.c.b16 %v1956, %v1952
    %v2625 = vpack.c.b16 %v1957, %v1953
    %v2626 = vpack.c.b16 %v1958, %v1954
    %v2627 = vpack.c.b16 %v1963, %v1959
    %v2628 = vpack.c.b16 %v1964, %v1960
    %v2629 = vpack.c.b16 %v1965, %v1961
    %v2630 = vpack.c.b16 %v1966, %v1962
    %v2631 = vpack.c.b16 %v1971, %v1967
    %v2632 = vpack.c.b16 %v1972, %v1968
    %v2633 = vpack.c.b16 %v1973, %v1969
    %v2634 = vpack.c.b16 %v1974, %v1970
    %v2635 = vpack.c.b16 %v1979, %v1975
    %v2636 = vpack.c.b16 %v1980, %v1976
    %v2637 = vpack.c.b16 %v1981, %v1977
    %v2638 = vpack.c.b16 %v1982, %v1978
    %v2639 = vpack.c.b16 %v1987, %v1983
    %v2640 = vpack.c.b16 %v1988, %v1984
    %v2641 = vpack.c.b16 %v1989, %v1985
    %v2642 = vpack.c.b16 %v1990, %v1986
    %v2643 = vpack.c.b16 %v1995, %v1991
    %v2644 = vpack.c.b16 %v1996, %v1992
    %v2645 = vpack.c.b16 %v1997, %v1993
    %v2646 = vpack.c.b16 %v1998, %v1994
    %v2647 = vpack.c.b16 %v2003, %v1999
    %v2648 = vpack.c.b16 %v2004, %v2000
    %v2649 = vpack.c.b16 %v2005, %v2001
    %v2650 = vpack.c.b16 %v2006, %v2002
    %v2651 = vpack.c.b16 %v2011, %v2007
    %v2652 = vpack.c.b16 %v2012, %v2008
    %v2653 = vpack.c.b16 %v2013, %v2009
    %v2654 = vpack.c.b16 %v2014, %v2010
    %v2655 = vpack.c.b16 %v2019, %v2015
    %v2656 = vpack.c.b16 %v2020, %v2016
    %v2657 = vpack.c.b16 %v2021, %v2017
    %v2658 = vpack.c.b16 %v2022, %v2018
    %v2659 = vpack.c.b16 %v2027, %v2023
    %v2660 = vpack.c.b16 %v2028, %v2024
    %v2661 = vpack.c.b16 %v2029, %v2025
    %v2662 = vpack.c.b16 %v2030, %v2026
    %v2663 = vpack.c.b16 %v2035, %v2031
    %v2664 = vpack.c.b16 %v2036, %v2032
    %v2665 = vpack.c.b16 %v2037, %v2033
    %v2666 = vpack.c.b16 %v2038, %v2034
    %v2667 = vpack.c.b16 %v2043, %v2039
    %v2668 = vpack.c.b16 %v2044, %v2040
    %v2669 = vpack.c.b16 %v2045, %v2041
    %v2670 = vpack.c.b16 %v2046, %v2042
    %v2671 = vpack.c.b16 %v2051, %v2047
    %v2672 = vpack.c.b16 %v2052, %v2048
    %v2673 = vpack.c.b16 %v2053, %v2049
    %v2674 = vpack.c.b16 %v2054, %v2050
    %v2675 = vpack.c.b16 %v2059, %v2055
    %v2676 = vpack.c.b16 %v2060, %v2056
    %v2677 = vpack.c.b16 %v2061, %v2057
    %v2678 = vpack.c.b16 %v2062, %v2058
    %v2679 = vpack.c.b16 %v2067, %v2063
    %v2680 = vpack.c.b16 %v2068, %v2064
    %v2681 = vpack.c.b16 %v2069, %v2065
    %v2682 = vpack.c.b16 %v2070, %v2066
    %v2683 = vpack.c.b16 %v2075, %v2071
    %v2684 = vpack.c.b16 %v2076, %v2072
    %v2685 = vpack.c.b16 %v2077, %v2073
    %v2686 = vpack.c.b16 %v2078, %v2074
    %v2687 = vpack.c.b16 %v2083, %v2079
    %v2688 = vpack.c.b16 %v2084, %v2080
    %v2689 = vpack.c.b16 %v2085, %v2081
    %v2690 = vpack.c.b16 %v2086, %v2082
    %v2691 = vpack.c.b16 %v2091, %v2087
    %v2692 = vpack.c.b16 %v2092, %v2088
    %v2693 = vpack.c.b16 %v2093, %v2089
    %v2694 = vpack.c.b16 %v2094, %v2090
    %v2695 = vpack.c.b16 %v2099, %v2095
    %v2696 = vpack.c.b16 %v2100, %v2096
    %v2697 = vpack.c.b16 %v2101, %v2097
    %v2698 = vpack.c.b16 %v2102, %v2098
    %v2699 = vpack.c.b16 %v2107, %v2103
    %v2700 = vpack.c.b16 %v2108, %v2104
    %v2701 = vpack.c.b16 %v2109, %v2105
    %v2702 = vpack.c.b16 %v2110, %v2106
    %v2703 = vpack.c.b16 %v2115, %v2111
    %v2704 = vpack.c.b16 %v2116, %v2112
    %v2705 = vpack.c.b16 %v2117, %v2113
    %v2706 = vpack.c.b16 %v2118, %v2114
    %v2707 = vpack.c.b16 %v2123, %v2119
    %v2708 = vpack.c.b16 %v2124, %v2120
    %v2709 = vpack.c.b16 %v2125, %v2121
    %v2710 = vpack.c.b16 %v2126, %v2122
    %v2711 = vpack.c.b16 %v2131, %v2127
    %v2712 = vpack.c.b16 %v2132, %v2128
    %v2713 = vpack.c.b16 %v2133, %v2129
    %v2714 = vpack.c.b16 %v2134, %v2130
    %v2715 = vpack.c.b16 %v2139, %v2135
    %v2716 = vpack.c.b16 %v2140, %v2136
    %v2717 = vpack.c.b16 %v2141, %v2137
    %v2718 = vpack.c.b16 %v2142, %v2138
    %v2719 = vpack.c.b16 %v2147, %v2143
    %v2720 = vpack.c.b16 %v2148, %v2144
    %v2721 = vpack.c.b16 %v2149, %v2145
    %v2722 = vpack.c.b16 %v2150, %v2146
    %v2723 = vpack.c.b16 %v2155, %v2151
    %v2724 = vpack.c.b16 %v2156, %v2152
    %v2725 = vpack.c.b16 %v2157, %v2153
    %v2726 = vpack.c.b16 %v2158, %v2154
    %v2727 = vpack.c.b16 %v2163, %v2159
    %v2728 = vpack.c.b16 %v2164, %v2160
    %v2729 = vpack.c.b16 %v2165, %v2161
    %v2730 = vpack.c.b16 %v2166, %v2162
    %v2731 = vpack.c.b16 %v2171, %v2167
    %v2732 = vpack.c.b16 %v2172, %v2168
    %v2733 = vpack.c.b16 %v2173, %v2169
    %v2734 = vpack.c.b16 %v2174, %v2170
    %v2735 = vpack.c.b16 %v2179, %v2175
    %v2736 = vpack.c.b16 %v2180, %v2176
    %v2737 = vpack.c.b16 %v2181, %v2177
    %v2738 = vpack.c.b16 %v2182, %v2178
    %v2739 = vpack.c.b16 %v2187, %v2183
    %v2740 = vpack.c.b16 %v2188, %v2184
    %v2741 = vpack.c.b16 %v2189, %v2185
    %v2742 = vpack.c.b16 %v2190, %v2186
    %v2743 = vpack.c.b16 %v2195, %v2191
    %v2744 = vpack.c.b16 %v2196, %v2192
    %v2745 = vpack.c.b16 %v2197, %v2193
    %v2746 = vpack.c.b16 %v2198, %v2194
    %v2747 = vpack.c.b16 %v2203, %v2199
    %v2748 = vpack.c.b16 %v2204, %v2200
    %v2749 = vpack.c.b16 %v2205, %v2201
    %v2750 = vpack.c.b16 %v2206, %v2202
    %v2751 = vpack.c.b16 %v2211, %v2207
    %v2752 = vpack.c.b16 %v2212, %v2208
    %v2753 = vpack.c.b16 %v2213, %v2209
    %v2754 = vpack.c.b16 %v2214, %v2210
    %v2755 = vpack.c.b16 %v2219, %v2215
    %v2756 = vpack.c.b16 %v2220, %v2216
    %v2757 = vpack.c.b16 %v2221, %v2217
    %v2758 = vpack.c.b16 %v2222, %v2218
    %v2759 = vpack.c.b16 %v2227, %v2223
    %v2760 = vpack.c.b16 %v2228, %v2224
    %v2761 = vpack.c.b16 %v2229, %v2225
    %v2762 = vpack.c.b16 %v2230, %v2226
    %v2763 = vpack.c.b16 %v2235, %v2231
    %v2764 = vpack.c.b16 %v2236, %v2232
    %v2765 = vpack.c.b16 %v2237, %v2233
    %v2766 = vpack.c.b16 %v2238, %v2234
    %v2767 = vpack.c.b16 %v2243, %v2239
    %v2768 = vpack.c.b16 %v2244, %v2240
    %v2769 = vpack.c.b16 %v2245, %v2241
    %v2770 = vpack.c.b16 %v2246, %v2242
    %v2771 = vpack.c.b16 %v2251, %v2247
    %v2772 = vpack.c.b16 %v2252, %v2248
    %v2773 = vpack.c.b16 %v2253, %v2249
    %v2774 = vpack.c.b16 %v2254, %v2250
    %v2775 = vpack.c.b16 %v2259, %v2255
    %v2776 = vpack.c.b16 %v2260, %v2256
    %v2777 = vpack.c.b16 %v2261, %v2257
    %v2778 = vpack.c.b16 %v2262, %v2258
    %v2779 = vpack.c.b16 %v2267, %v2263
    %v2780 = vpack.c.b16 %v2268, %v2264
    %v2781 = vpack.c.b16 %v2269, %v2265
    %v2782 = vpack.c.b16 %v2270, %v2266
    %3295 = vmatpush.bf16.msra.mxu0 %v2299
    %3296 = vmatpush.bf16.msra.mxu0 %v2295
    %3297 = vmatpush.bf16.msra.mxu0 %v2291
    %3298 = vmatpush.bf16.msra.mxu0 %v2287
    %3299 = vmatpush.bf16.msra.mxu0 %v2283
    %3300 = vmatpush.bf16.msra.mxu0 %v2279
    %3301 = vmatpush.bf16.msra.mxu0 %v2275
    %3302 = vmatpush.bf16.msra.mxu0 %v2271
    %3303 = vmatmul.bf16.gmra.mxu0 %v703
    %v3304 = vpop.f32.mrf.mxu0
    %v3305 = vadd.f32 %v671, %v3304
    %v3306 = vpop.f32.mrf.mxu0
    %3307 = vdwg.mxu0
    %3308 = vmatpush.bf16.msra.mxu0 %v2331
    %3309 = vmatpush.bf16.msra.mxu0 %v2327
    %3310 = vmatpush.bf16.msra.mxu0 %v2323
    %3311 = vmatpush.bf16.msra.mxu0 %v2319
    %3312 = vmatpush.bf16.msra.mxu0 %v2315
    %3313 = vmatpush.bf16.msra.mxu0 %v2311
    %3314 = vmatpush.bf16.msra.mxu0 %v2307
    %3315 = vmatpush.bf16.msra.mxu0 %v2303
    %3316 = vmatmul.bf16.gmra.mxu0 %v704
    %v3317 = vpop.f32.mrf.mxu0
    %v3318 = vadd.f32 %v3305, %v3317
    %v3319 = vpop.f32.mrf.mxu0
    %3320 = vdwg.mxu0
    %3321 = vmatpush.bf16.msra.mxu0 %v2363
    %3322 = vmatpush.bf16.msra.mxu0 %v2359
    %3323 = vmatpush.bf16.msra.mxu0 %v2355
    %3324 = vmatpush.bf16.msra.mxu0 %v2351
    %3325 = vmatpush.bf16.msra.mxu0 %v2347
    %3326 = vmatpush.bf16.msra.mxu0 %v2343
    %3327 = vmatpush.bf16.msra.mxu0 %v2339
    %3328 = vmatpush.bf16.msra.mxu0 %v2335
    %3329 = vmatmul.bf16.gmra.mxu0 %v705
    %v3330 = vpop.f32.mrf.mxu0
    %v3331 = vadd.f32 %v3318, %v3330
    %v3332 = vpop.f32.mrf.mxu0
    %3333 = vdwg.mxu0
    %3334 = vmatpush.bf16.msra.mxu0 %v2395
    %3335 = vmatpush.bf16.msra.mxu0 %v2391
    %3336 = vmatpush.bf16.msra.mxu0 %v2387
    %3337 = vmatpush.bf16.msra.mxu0 %v2383
    %3338 = vmatpush.bf16.msra.mxu0 %v2379
    %3339 = vmatpush.bf16.msra.mxu0 %v2375
    %3340 = vmatpush.bf16.msra.mxu0 %v2371
    %3341 = vmatpush.bf16.msra.mxu0 %v2367
    %3342 = vmatmul.bf16.gmra.mxu0 %v706
    %v3343 = vpop.f32.mrf.mxu0
    %v3344 = vadd.f32 %v3331, %v3343
    %v3345 = vpop.f32.mrf.mxu0
    %3346 = vdwg.mxu0
    %3347 = vmatpush.bf16.msra.mxu0 %v2427
    %3348 = vmatpush.bf16.msra.mxu0 %v2423
    %3349 = vmatpush.bf16.msra.mxu0 %v2419
    %3350 = vmatpush.bf16.msra.mxu0 %v2415
    %3351 = vmatpush.bf16.msra.mxu0 %v2411
    %3352 = vmatpush.bf16.msra.mxu0 %v2407
    %3353 = vmatpush.bf16.msra.mxu0 %v2403
    %3354 = vmatpush.bf16.msra.mxu0 %v2399
    %3355 = vmatmul.bf16.gmra.mxu0 %v707
    %v3356 = vpop.f32.mrf.mxu0
    %v3357 = vadd.f32 %v3344, %v3356
    %v3358 = vpop.f32.mrf.mxu0
    %3359 = vdwg.mxu0
    %3360 = vmatpush.bf16.msra.mxu0 %v2459
    %3361 = vmatpush.bf16.msra.mxu0 %v2455
    %3362 = vmatpush.bf16.msra.mxu0 %v2451
    %3363 = vmatpush.bf16.msra.mxu0 %v2447
    %3364 = vmatpush.bf16.msra.mxu0 %v2443
    %3365 = vmatpush.bf16.msra.mxu0 %v2439
    %3366 = vmatpush.bf16.msra.mxu0 %v2435
    %3367 = vmatpush.bf16.msra.mxu0 %v2431
    %3368 = vmatmul.bf16.gmra.mxu0 %v708
    %v3369 = vpop.f32.mrf.mxu0
    %v3370 = vadd.f32 %v3357, %v3369
    %v3371 = vpop.f32.mrf.mxu0
    %3372 = vdwg.mxu0
    %3373 = vmatpush.bf16.msra.mxu0 %v2491
    %3374 = vmatpush.bf16.msra.mxu0 %v2487
    %3375 = vmatpush.bf16.msra.mxu0 %v2483
    %3376 = vmatpush.bf16.msra.mxu0 %v2479
    %3377 = vmatpush.bf16.msra.mxu0 %v2475
    %3378 = vmatpush.bf16.msra.mxu0 %v2471
    %3379 = vmatpush.bf16.msra.mxu0 %v2467
    %3380 = vmatpush.bf16.msra.mxu0 %v2463
    %3381 = vmatmul.bf16.gmra.mxu0 %v709
    %v3382 = vpop.f32.mrf.mxu0
    %v3383 = vadd.f32 %v3370, %v3382
    %v3384 = vpop.f32.mrf.mxu0
    %3385 = vdwg.mxu0
    %3386 = vmatpush.bf16.msra.mxu0 %v2523
    %3387 = vmatpush.bf16.msra.mxu0 %v2519
    %3388 = vmatpush.bf16.msra.mxu0 %v2515
    %3389 = vmatpush.bf16.msra.mxu0 %v2511
    %3390 = vmatpush.bf16.msra.mxu0 %v2507
    %3391 = vmatpush.bf16.msra.mxu0 %v2503
    %3392 = vmatpush.bf16.msra.mxu0 %v2499
    %3393 = vmatpush.bf16.msra.mxu0 %v2495
    %3394 = vmatmul.bf16.gmra.mxu0 %v710
    %v3395 = vpop.f32.mrf.mxu0
    %v3396 = vadd.f32 %v3383, %v3395
    %v3397 = vpop.f32.mrf.mxu0
    %3398 = vdwg.mxu0
    %3399 = vmatpush.bf16.msra.mxu0 %v2555
    %3400 = vmatpush.bf16.msra.mxu0 %v2551
    %3401 = vmatpush.bf16.msra.mxu0 %v2547
    %3402 = vmatpush.bf16.msra.mxu0 %v2543
    %3403 = vmatpush.bf16.msra.mxu0 %v2539
    %3404 = vmatpush.bf16.msra.mxu0 %v2535
    %3405 = vmatpush.bf16.msra.mxu0 %v2531
    %3406 = vmatpush.bf16.msra.mxu0 %v2527
    %3407 = vmatmul.bf16.gmra.mxu0 %v711
    %v3408 = vpop.f32.mrf.mxu0
    %v3409 = vadd.f32 %v3396, %v3408
    %v3410 = vpop.f32.mrf.mxu0
    %3411 = vdwg.mxu0
    %3412 = vmatpush.bf16.msra.mxu0 %v2587
    %3413 = vmatpush.bf16.msra.mxu0 %v2583
    %3414 = vmatpush.bf16.msra.mxu0 %v2579
    %3415 = vmatpush.bf16.msra.mxu0 %v2575
    %3416 = vmatpush.bf16.msra.mxu0 %v2571
    %3417 = vmatpush.bf16.msra.mxu0 %v2567
    %3418 = vmatpush.bf16.msra.mxu0 %v2563
    %3419 = vmatpush.bf16.msra.mxu0 %v2559
    %3420 = vmatmul.bf16.gmra.mxu0 %v712
    %v3421 = vpop.f32.mrf.mxu0
    %v3422 = vadd.f32 %v3409, %v3421
    %v3423 = vpop.f32.mrf.mxu0
    %3424 = vdwg.mxu0
    %3425 = vmatpush.bf16.msra.mxu0 %v2619
    %3426 = vmatpush.bf16.msra.mxu0 %v2615
    %3427 = vmatpush.bf16.msra.mxu0 %v2611
    %3428 = vmatpush.bf16.msra.mxu0 %v2607
    %3429 = vmatpush.bf16.msra.mxu0 %v2603
    %3430 = vmatpush.bf16.msra.mxu0 %v2599
    %3431 = vmatpush.bf16.msra.mxu0 %v2595
    %3432 = vmatpush.bf16.msra.mxu0 %v2591
    %3433 = vmatmul.bf16.gmra.mxu0 %v713
    %v3434 = vpop.f32.mrf.mxu0
    %v3435 = vadd.f32 %v3422, %v3434
    %v3436 = vpop.f32.mrf.mxu0
    %3437 = vdwg.mxu0
    %3438 = vmatpush.bf16.msra.mxu0 %v2651
    %3439 = vmatpush.bf16.msra.mxu0 %v2647
    %3440 = vmatpush.bf16.msra.mxu0 %v2643
    %3441 = vmatpush.bf16.msra.mxu0 %v2639
    %3442 = vmatpush.bf16.msra.mxu0 %v2635
    %3443 = vmatpush.bf16.msra.mxu0 %v2631
    %3444 = vmatpush.bf16.msra.mxu0 %v2627
    %3445 = vmatpush.bf16.msra.mxu0 %v2623
    %3446 = vmatmul.bf16.gmra.mxu0 %v714
    %v3447 = vpop.f32.mrf.mxu0
    %v3448 = vadd.f32 %v3435, %v3447
    %v3449 = vpop.f32.mrf.mxu0
    %3450 = vdwg.mxu0
    %3451 = vmatpush.bf16.msra.mxu0 %v2683
    %3452 = vmatpush.bf16.msra.mxu0 %v2679
    %3453 = vmatpush.bf16.msra.mxu0 %v2675
    %3454 = vmatpush.bf16.msra.mxu0 %v2671
    %3455 = vmatpush.bf16.msra.mxu0 %v2667
    %3456 = vmatpush.bf16.msra.mxu0 %v2663
    %3457 = vmatpush.bf16.msra.mxu0 %v2659
    %3458 = vmatpush.bf16.msra.mxu0 %v2655
    %3459 = vmatmul.bf16.gmra.mxu0 %v715
    %v3460 = vpop.f32.mrf.mxu0
    %v3461 = vadd.f32 %v3448, %v3460
    %v3462 = vpop.f32.mrf.mxu0
    %3463 = vdwg.mxu0
    %3464 = vmatpush.bf16.msra.mxu0 %v2715
    %3465 = vmatpush.bf16.msra.mxu0 %v2711
    %3466 = vmatpush.bf16.msra.mxu0 %v2707
    %3467 = vmatpush.bf16.msra.mxu0 %v2703
    %3468 = vmatpush.bf16.msra.mxu0 %v2699
    %3469 = vmatpush.bf16.msra.mxu0 %v2695
    %3470 = vmatpush.bf16.msra.mxu0 %v2691
    %3471 = vmatpush.bf16.msra.mxu0 %v2687
    %3472 = vmatmul.bf16.gmra.mxu0 %v716
    %v3473 = vpop.f32.mrf.mxu0
    %v3474 = vadd.f32 %v3461, %v3473
    %v3475 = vpop.f32.mrf.mxu0
    %3476 = vdwg.mxu0
    %3477 = vmatpush.bf16.msra.mxu0 %v2747
    %3478 = vmatpush.bf16.msra.mxu0 %v2743
    %3479 = vmatpush.bf16.msra.mxu0 %v2739
    %3480 = vmatpush.bf16.msra.mxu0 %v2735
    %3481 = vmatpush.bf16.msra.mxu0 %v2731
    %3482 = vmatpush.bf16.msra.mxu0 %v2727
    %3483 = vmatpush.bf16.msra.mxu0 %v2723
    %3484 = vmatpush.bf16.msra.mxu0 %v2719
    %3485 = vmatmul.bf16.gmra.mxu0 %v717
    %v3486 = vpop.f32.mrf.mxu0
    %v3487 = vadd.f32 %v3474, %v3486
    %v3488 = vpop.f32.mrf.mxu0
    %3489 = vdwg.mxu0
    %3490 = vmatpush.bf16.msra.mxu0 %v2779
    %3491 = vmatpush.bf16.msra.mxu0 %v2775
    %3492 = vmatpush.bf16.msra.mxu0 %v2771
    %3493 = vmatpush.bf16.msra.mxu0 %v2767
    %3494 = vmatpush.bf16.msra.mxu0 %v2763
    %3495 = vmatpush.bf16.msra.mxu0 %v2759
    %3496 = vmatpush.bf16.msra.mxu0 %v2755
    %3497 = vmatpush.bf16.msra.mxu0 %v2751
    %3498 = vmatmul.bf16.gmra.mxu0 %v718
    %v3499 = vpop.f32.mrf.mxu0
    %v3500 = vadd.f32 %v3487, %v3499
    %v3501 = vpop.f32.mrf.mxu0
    %3502 = vdwg.mxu0
    %3503 = vmatpush.bf16.msra.mxu0 %v2300
    %3504 = vmatpush.bf16.msra.mxu0 %v2296
    %3505 = vmatpush.bf16.msra.mxu0 %v2292
    %3506 = vmatpush.bf16.msra.mxu0 %v2288
    %3507 = vmatpush.bf16.msra.mxu0 %v2284
    %3508 = vmatpush.bf16.msra.mxu0 %v2280
    %3509 = vmatpush.bf16.msra.mxu0 %v2276
    %3510 = vmatpush.bf16.msra.mxu0 %v2272
    %3511 = vmatmul.bf16.gmra.mxu0 %v703
    %v3512 = vpop.f32.mrf.mxu0
    %v3513 = vadd.f32 %v672, %v3512
    %v3514 = vpop.f32.mrf.mxu0
    %3515 = vdwg.mxu0
    %3516 = vmatpush.bf16.msra.mxu0 %v2332
    %3517 = vmatpush.bf16.msra.mxu0 %v2328
    %3518 = vmatpush.bf16.msra.mxu0 %v2324
    %3519 = vmatpush.bf16.msra.mxu0 %v2320
    %3520 = vmatpush.bf16.msra.mxu0 %v2316
    %3521 = vmatpush.bf16.msra.mxu0 %v2312
    %3522 = vmatpush.bf16.msra.mxu0 %v2308
    %3523 = vmatpush.bf16.msra.mxu0 %v2304
    %3524 = vmatmul.bf16.gmra.mxu0 %v704
    %v3525 = vpop.f32.mrf.mxu0
    %v3526 = vadd.f32 %v3513, %v3525
    %v3527 = vpop.f32.mrf.mxu0
    %3528 = vdwg.mxu0
    %3529 = vmatpush.bf16.msra.mxu0 %v2364
    %3530 = vmatpush.bf16.msra.mxu0 %v2360
    %3531 = vmatpush.bf16.msra.mxu0 %v2356
    %3532 = vmatpush.bf16.msra.mxu0 %v2352
    %3533 = vmatpush.bf16.msra.mxu0 %v2348
    %3534 = vmatpush.bf16.msra.mxu0 %v2344
    %3535 = vmatpush.bf16.msra.mxu0 %v2340
    %3536 = vmatpush.bf16.msra.mxu0 %v2336
    %3537 = vmatmul.bf16.gmra.mxu0 %v705
    %v3538 = vpop.f32.mrf.mxu0
    %v3539 = vadd.f32 %v3526, %v3538
    %v3540 = vpop.f32.mrf.mxu0
    %3541 = vdwg.mxu0
    %3542 = vmatpush.bf16.msra.mxu0 %v2396
    %3543 = vmatpush.bf16.msra.mxu0 %v2392
    %3544 = vmatpush.bf16.msra.mxu0 %v2388
    %3545 = vmatpush.bf16.msra.mxu0 %v2384
    %3546 = vmatpush.bf16.msra.mxu0 %v2380
    %3547 = vmatpush.bf16.msra.mxu0 %v2376
    %3548 = vmatpush.bf16.msra.mxu0 %v2372
    %3549 = vmatpush.bf16.msra.mxu0 %v2368
    %3550 = vmatmul.bf16.gmra.mxu0 %v706
    %v3551 = vpop.f32.mrf.mxu0
    %v3552 = vadd.f32 %v3539, %v3551
    %v3553 = vpop.f32.mrf.mxu0
    %3554 = vdwg.mxu0
    %3555 = vmatpush.bf16.msra.mxu0 %v2428
    %3556 = vmatpush.bf16.msra.mxu0 %v2424
    %3557 = vmatpush.bf16.msra.mxu0 %v2420
    %3558 = vmatpush.bf16.msra.mxu0 %v2416
    %3559 = vmatpush.bf16.msra.mxu0 %v2412
    %3560 = vmatpush.bf16.msra.mxu0 %v2408
    %3561 = vmatpush.bf16.msra.mxu0 %v2404
    %3562 = vmatpush.bf16.msra.mxu0 %v2400
    %3563 = vmatmul.bf16.gmra.mxu0 %v707
    %v3564 = vpop.f32.mrf.mxu0
    %v3565 = vadd.f32 %v3552, %v3564
    %v3566 = vpop.f32.mrf.mxu0
    %3567 = vdwg.mxu0
    %3568 = vmatpush.bf16.msra.mxu0 %v2460
    %3569 = vmatpush.bf16.msra.mxu0 %v2456
    %3570 = vmatpush.bf16.msra.mxu0 %v2452
    %3571 = vmatpush.bf16.msra.mxu0 %v2448
    %3572 = vmatpush.bf16.msra.mxu0 %v2444
    %3573 = vmatpush.bf16.msra.mxu0 %v2440
    %3574 = vmatpush.bf16.msra.mxu0 %v2436
    %3575 = vmatpush.bf16.msra.mxu0 %v2432
    %3576 = vmatmul.bf16.gmra.mxu0 %v708
    %v3577 = vpop.f32.mrf.mxu0
    %v3578 = vadd.f32 %v3565, %v3577
    %v3579 = vpop.f32.mrf.mxu0
    %3580 = vdwg.mxu0
    %3581 = vmatpush.bf16.msra.mxu0 %v2492
    %3582 = vmatpush.bf16.msra.mxu0 %v2488
    %3583 = vmatpush.bf16.msra.mxu0 %v2484
    %3584 = vmatpush.bf16.msra.mxu0 %v2480
    %3585 = vmatpush.bf16.msra.mxu0 %v2476
    %3586 = vmatpush.bf16.msra.mxu0 %v2472
    %3587 = vmatpush.bf16.msra.mxu0 %v2468
    %3588 = vmatpush.bf16.msra.mxu0 %v2464
    %3589 = vmatmul.bf16.gmra.mxu0 %v709
    %v3590 = vpop.f32.mrf.mxu0
    %v3591 = vadd.f32 %v3578, %v3590
    %v3592 = vpop.f32.mrf.mxu0
    %3593 = vdwg.mxu0
    %3594 = vmatpush.bf16.msra.mxu0 %v2524
    %3595 = vmatpush.bf16.msra.mxu0 %v2520
    %3596 = vmatpush.bf16.msra.mxu0 %v2516
    %3597 = vmatpush.bf16.msra.mxu0 %v2512
    %3598 = vmatpush.bf16.msra.mxu0 %v2508
    %3599 = vmatpush.bf16.msra.mxu0 %v2504
    %3600 = vmatpush.bf16.msra.mxu0 %v2500
    %3601 = vmatpush.bf16.msra.mxu0 %v2496
    %3602 = vmatmul.bf16.gmra.mxu0 %v710
    %v3603 = vpop.f32.mrf.mxu0
    %v3604 = vadd.f32 %v3591, %v3603
    %v3605 = vpop.f32.mrf.mxu0
    %3606 = vdwg.mxu0
    %3607 = vmatpush.bf16.msra.mxu0 %v2556
    %3608 = vmatpush.bf16.msra.mxu0 %v2552
    %3609 = vmatpush.bf16.msra.mxu0 %v2548
    %3610 = vmatpush.bf16.msra.mxu0 %v2544
    %3611 = vmatpush.bf16.msra.mxu0 %v2540
    %3612 = vmatpush.bf16.msra.mxu0 %v2536
    %3613 = vmatpush.bf16.msra.mxu0 %v2532
    %3614 = vmatpush.bf16.msra.mxu0 %v2528
    %3615 = vmatmul.bf16.gmra.mxu0 %v711
    %v3616 = vpop.f32.mrf.mxu0
    %v3617 = vadd.f32 %v3604, %v3616
    %v3618 = vpop.f32.mrf.mxu0
    %3619 = vdwg.mxu0
    %3620 = vmatpush.bf16.msra.mxu0 %v2588
    %3621 = vmatpush.bf16.msra.mxu0 %v2584
    %3622 = vmatpush.bf16.msra.mxu0 %v2580
    %3623 = vmatpush.bf16.msra.mxu0 %v2576
    %3624 = vmatpush.bf16.msra.mxu0 %v2572
    %3625 = vmatpush.bf16.msra.mxu0 %v2568
    %3626 = vmatpush.bf16.msra.mxu0 %v2564
    %3627 = vmatpush.bf16.msra.mxu0 %v2560
    %3628 = vmatmul.bf16.gmra.mxu0 %v712
    %v3629 = vpop.f32.mrf.mxu0
    %v3630 = vadd.f32 %v3617, %v3629
    %v3631 = vpop.f32.mrf.mxu0
    %3632 = vdwg.mxu0
    %3633 = vmatpush.bf16.msra.mxu0 %v2620
    %3634 = vmatpush.bf16.msra.mxu0 %v2616
    %3635 = vmatpush.bf16.msra.mxu0 %v2612
    %3636 = vmatpush.bf16.msra.mxu0 %v2608
    %3637 = vmatpush.bf16.msra.mxu0 %v2604
    %3638 = vmatpush.bf16.msra.mxu0 %v2600
    %3639 = vmatpush.bf16.msra.mxu0 %v2596
    %3640 = vmatpush.bf16.msra.mxu0 %v2592
    %3641 = vmatmul.bf16.gmra.mxu0 %v713
    %v3642 = vpop.f32.mrf.mxu0
    %v3643 = vadd.f32 %v3630, %v3642
    %v3644 = vpop.f32.mrf.mxu0
    %3645 = vdwg.mxu0
    %3646 = vmatpush.bf16.msra.mxu0 %v2652
    %3647 = vmatpush.bf16.msra.mxu0 %v2648
    %3648 = vmatpush.bf16.msra.mxu0 %v2644
    %3649 = vmatpush.bf16.msra.mxu0 %v2640
    %3650 = vmatpush.bf16.msra.mxu0 %v2636
    %3651 = vmatpush.bf16.msra.mxu0 %v2632
    %3652 = vmatpush.bf16.msra.mxu0 %v2628
    %3653 = vmatpush.bf16.msra.mxu0 %v2624
    %3654 = vmatmul.bf16.gmra.mxu0 %v714
    %v3655 = vpop.f32.mrf.mxu0
    %v3656 = vadd.f32 %v3643, %v3655
    %v3657 = vpop.f32.mrf.mxu0
    %3658 = vdwg.mxu0
    %3659 = vmatpush.bf16.msra.mxu0 %v2684
    %3660 = vmatpush.bf16.msra.mxu0 %v2680
    %3661 = vmatpush.bf16.msra.mxu0 %v2676
    %3662 = vmatpush.bf16.msra.mxu0 %v2672
    %3663 = vmatpush.bf16.msra.mxu0 %v2668
    %3664 = vmatpush.bf16.msra.mxu0 %v2664
    %3665 = vmatpush.bf16.msra.mxu0 %v2660
    %3666 = vmatpush.bf16.msra.mxu0 %v2656
    %3667 = vmatmul.bf16.gmra.mxu0 %v715
    %v3668 = vpop.f32.mrf.mxu0
    %v3669 = vadd.f32 %v3656, %v3668
    %v3670 = vpop.f32.mrf.mxu0
    %3671 = vdwg.mxu0
    %3672 = vmatpush.bf16.msra.mxu0 %v2716
    %3673 = vmatpush.bf16.msra.mxu0 %v2712
    %3674 = vmatpush.bf16.msra.mxu0 %v2708
    %3675 = vmatpush.bf16.msra.mxu0 %v2704
    %3676 = vmatpush.bf16.msra.mxu0 %v2700
    %3677 = vmatpush.bf16.msra.mxu0 %v2696
    %3678 = vmatpush.bf16.msra.mxu0 %v2692
    %3679 = vmatpush.bf16.msra.mxu0 %v2688
    %3680 = vmatmul.bf16.gmra.mxu0 %v716
    %v3681 = vpop.f32.mrf.mxu0
    %v3682 = vadd.f32 %v3669, %v3681
    %v3683 = vpop.f32.mrf.mxu0
    %3684 = vdwg.mxu0
    %3685 = vmatpush.bf16.msra.mxu0 %v2748
    %3686 = vmatpush.bf16.msra.mxu0 %v2744
    %3687 = vmatpush.bf16.msra.mxu0 %v2740
    %3688 = vmatpush.bf16.msra.mxu0 %v2736
    %3689 = vmatpush.bf16.msra.mxu0 %v2732
    %3690 = vmatpush.bf16.msra.mxu0 %v2728
    %3691 = vmatpush.bf16.msra.mxu0 %v2724
    %3692 = vmatpush.bf16.msra.mxu0 %v2720
    %3693 = vmatmul.bf16.gmra.mxu0 %v717
    %v3694 = vpop.f32.mrf.mxu0
    %v3695 = vadd.f32 %v3682, %v3694
    %v3696 = vpop.f32.mrf.mxu0
    %3697 = vdwg.mxu0
    %3698 = vmatpush.bf16.msra.mxu0 %v2780
    %3699 = vmatpush.bf16.msra.mxu0 %v2776
    %3700 = vmatpush.bf16.msra.mxu0 %v2772
    %3701 = vmatpush.bf16.msra.mxu0 %v2768
    %3702 = vmatpush.bf16.msra.mxu0 %v2764
    %3703 = vmatpush.bf16.msra.mxu0 %v2760
    %3704 = vmatpush.bf16.msra.mxu0 %v2756
    %3705 = vmatpush.bf16.msra.mxu0 %v2752
    %3706 = vmatmul.bf16.gmra.mxu0 %v718
    %v3707 = vpop.f32.mrf.mxu0
    %v3708 = vadd.f32 %v3695, %v3707
    %v3709 = vpop.f32.mrf.mxu0
    %3710 = vdwg.mxu0
    %3711 = vmatpush.bf16.msra.mxu0 %v2301
    %3712 = vmatpush.bf16.msra.mxu0 %v2297
    %3713 = vmatpush.bf16.msra.mxu0 %v2293
    %3714 = vmatpush.bf16.msra.mxu0 %v2289
    %3715 = vmatpush.bf16.msra.mxu0 %v2285
    %3716 = vmatpush.bf16.msra.mxu0 %v2281
    %3717 = vmatpush.bf16.msra.mxu0 %v2277
    %3718 = vmatpush.bf16.msra.mxu0 %v2273
    %3719 = vmatmul.bf16.gmra.mxu0 %v703
    %v3720 = vpop.f32.mrf.mxu0
    %v3721 = vadd.f32 %v673, %v3720
    %v3722 = vpop.f32.mrf.mxu0
    %3723 = vdwg.mxu0
    %3724 = vmatpush.bf16.msra.mxu0 %v2333
    %3725 = vmatpush.bf16.msra.mxu0 %v2329
    %3726 = vmatpush.bf16.msra.mxu0 %v2325
    %3727 = vmatpush.bf16.msra.mxu0 %v2321
    %3728 = vmatpush.bf16.msra.mxu0 %v2317
    %3729 = vmatpush.bf16.msra.mxu0 %v2313
    %3730 = vmatpush.bf16.msra.mxu0 %v2309
    %3731 = vmatpush.bf16.msra.mxu0 %v2305
    %3732 = vmatmul.bf16.gmra.mxu0 %v704
    %v3733 = vpop.f32.mrf.mxu0
    %v3734 = vadd.f32 %v3721, %v3733
    %v3735 = vpop.f32.mrf.mxu0
    %3736 = vdwg.mxu0
    %3737 = vmatpush.bf16.msra.mxu0 %v2365
    %3738 = vmatpush.bf16.msra.mxu0 %v2361
    %3739 = vmatpush.bf16.msra.mxu0 %v2357
    %3740 = vmatpush.bf16.msra.mxu0 %v2353
    %3741 = vmatpush.bf16.msra.mxu0 %v2349
    %3742 = vmatpush.bf16.msra.mxu0 %v2345
    %3743 = vmatpush.bf16.msra.mxu0 %v2341
    %3744 = vmatpush.bf16.msra.mxu0 %v2337
    %3745 = vmatmul.bf16.gmra.mxu0 %v705
    %v3746 = vpop.f32.mrf.mxu0
    %v3747 = vadd.f32 %v3734, %v3746
    %v3748 = vpop.f32.mrf.mxu0
    %3749 = vdwg.mxu0
    %3750 = vmatpush.bf16.msra.mxu0 %v2397
    %3751 = vmatpush.bf16.msra.mxu0 %v2393
    %3752 = vmatpush.bf16.msra.mxu0 %v2389
    %3753 = vmatpush.bf16.msra.mxu0 %v2385
    %3754 = vmatpush.bf16.msra.mxu0 %v2381
    %3755 = vmatpush.bf16.msra.mxu0 %v2377
    %3756 = vmatpush.bf16.msra.mxu0 %v2373
    %3757 = vmatpush.bf16.msra.mxu0 %v2369
    %3758 = vmatmul.bf16.gmra.mxu0 %v706
    %v3759 = vpop.f32.mrf.mxu0
    %v3760 = vadd.f32 %v3747, %v3759
    %v3761 = vpop.f32.mrf.mxu0
    %3762 = vdwg.mxu0
    %3763 = vmatpush.bf16.msra.mxu0 %v2429
    %3764 = vmatpush.bf16.msra.mxu0 %v2425
    %3765 = vmatpush.bf16.msra.mxu0 %v2421
    %3766 = vmatpush.bf16.msra.mxu0 %v2417
    %3767 = vmatpush.bf16.msra.mxu0 %v2413
    %3768 = vmatpush.bf16.msra.mxu0 %v2409
    %3769 = vmatpush.bf16.msra.mxu0 %v2405
    %3770 = vmatpush.bf16.msra.mxu0 %v2401
    %3771 = vmatmul.bf16.gmra.mxu0 %v707
    %v3772 = vpop.f32.mrf.mxu0
    %v3773 = vadd.f32 %v3760, %v3772
    %v3774 = vpop.f32.mrf.mxu0
    %3775 = vdwg.mxu0
    %3776 = vmatpush.bf16.msra.mxu0 %v2461
    %3777 = vmatpush.bf16.msra.mxu0 %v2457
    %3778 = vmatpush.bf16.msra.mxu0 %v2453
    %3779 = vmatpush.bf16.msra.mxu0 %v2449
    %3780 = vmatpush.bf16.msra.mxu0 %v2445
    %3781 = vmatpush.bf16.msra.mxu0 %v2441
    %3782 = vmatpush.bf16.msra.mxu0 %v2437
    %3783 = vmatpush.bf16.msra.mxu0 %v2433
    %3784 = vmatmul.bf16.gmra.mxu0 %v708
    %v3785 = vpop.f32.mrf.mxu0
    %v3786 = vadd.f32 %v3773, %v3785
    %v3787 = vpop.f32.mrf.mxu0
    %3788 = vdwg.mxu0
    %3789 = vmatpush.bf16.msra.mxu0 %v2493
    %3790 = vmatpush.bf16.msra.mxu0 %v2489
    %3791 = vmatpush.bf16.msra.mxu0 %v2485
    %3792 = vmatpush.bf16.msra.mxu0 %v2481
    %3793 = vmatpush.bf16.msra.mxu0 %v2477
    %3794 = vmatpush.bf16.msra.mxu0 %v2473
    %3795 = vmatpush.bf16.msra.mxu0 %v2469
    %3796 = vmatpush.bf16.msra.mxu0 %v2465
    %3797 = vmatmul.bf16.gmra.mxu0 %v709
    %v3798 = vpop.f32.mrf.mxu0
    %v3799 = vadd.f32 %v3786, %v3798
    %v3800 = vpop.f32.mrf.mxu0
    %3801 = vdwg.mxu0
    %3802 = vmatpush.bf16.msra.mxu0 %v2525
    %3803 = vmatpush.bf16.msra.mxu0 %v2521
    %3804 = vmatpush.bf16.msra.mxu0 %v2517
    %3805 = vmatpush.bf16.msra.mxu0 %v2513
    %3806 = vmatpush.bf16.msra.mxu0 %v2509
    %3807 = vmatpush.bf16.msra.mxu0 %v2505
    %3808 = vmatpush.bf16.msra.mxu0 %v2501
    %3809 = vmatpush.bf16.msra.mxu0 %v2497
    %3810 = vmatmul.bf16.gmra.mxu0 %v710
    %v3811 = vpop.f32.mrf.mxu0
    %v3812 = vadd.f32 %v3799, %v3811
    %v3813 = vpop.f32.mrf.mxu0
    %3814 = vdwg.mxu0
    %3815 = vmatpush.bf16.msra.mxu0 %v2557
    %3816 = vmatpush.bf16.msra.mxu0 %v2553
    %3817 = vmatpush.bf16.msra.mxu0 %v2549
    %3818 = vmatpush.bf16.msra.mxu0 %v2545
    %3819 = vmatpush.bf16.msra.mxu0 %v2541
    %3820 = vmatpush.bf16.msra.mxu0 %v2537
    %3821 = vmatpush.bf16.msra.mxu0 %v2533
    %3822 = vmatpush.bf16.msra.mxu0 %v2529
    %3823 = vmatmul.bf16.gmra.mxu0 %v711
    %v3824 = vpop.f32.mrf.mxu0
    %v3825 = vadd.f32 %v3812, %v3824
    %v3826 = vpop.f32.mrf.mxu0
    %3827 = vdwg.mxu0
    %3828 = vmatpush.bf16.msra.mxu0 %v2589
    %3829 = vmatpush.bf16.msra.mxu0 %v2585
    %3830 = vmatpush.bf16.msra.mxu0 %v2581
    %3831 = vmatpush.bf16.msra.mxu0 %v2577
    %3832 = vmatpush.bf16.msra.mxu0 %v2573
    %3833 = vmatpush.bf16.msra.mxu0 %v2569
    %3834 = vmatpush.bf16.msra.mxu0 %v2565
    %3835 = vmatpush.bf16.msra.mxu0 %v2561
    %3836 = vmatmul.bf16.gmra.mxu0 %v712
    %v3837 = vpop.f32.mrf.mxu0
    %v3838 = vadd.f32 %v3825, %v3837
    %v3839 = vpop.f32.mrf.mxu0
    %3840 = vdwg.mxu0
    %3841 = vmatpush.bf16.msra.mxu0 %v2621
    %3842 = vmatpush.bf16.msra.mxu0 %v2617
    %3843 = vmatpush.bf16.msra.mxu0 %v2613
    %3844 = vmatpush.bf16.msra.mxu0 %v2609
    %3845 = vmatpush.bf16.msra.mxu0 %v2605
    %3846 = vmatpush.bf16.msra.mxu0 %v2601
    %3847 = vmatpush.bf16.msra.mxu0 %v2597
    %3848 = vmatpush.bf16.msra.mxu0 %v2593
    %3849 = vmatmul.bf16.gmra.mxu0 %v713
    %v3850 = vpop.f32.mrf.mxu0
    %v3851 = vadd.f32 %v3838, %v3850
    %v3852 = vpop.f32.mrf.mxu0
    %3853 = vdwg.mxu0
    %3854 = vmatpush.bf16.msra.mxu0 %v2653
    %3855 = vmatpush.bf16.msra.mxu0 %v2649
    %3856 = vmatpush.bf16.msra.mxu0 %v2645
    %3857 = vmatpush.bf16.msra.mxu0 %v2641
    %3858 = vmatpush.bf16.msra.mxu0 %v2637
    %3859 = vmatpush.bf16.msra.mxu0 %v2633
    %3860 = vmatpush.bf16.msra.mxu0 %v2629
    %3861 = vmatpush.bf16.msra.mxu0 %v2625
    %3862 = vmatmul.bf16.gmra.mxu0 %v714
    %v3863 = vpop.f32.mrf.mxu0
    %v3864 = vadd.f32 %v3851, %v3863
    %v3865 = vpop.f32.mrf.mxu0
    %3866 = vdwg.mxu0
    %3867 = vmatpush.bf16.msra.mxu0 %v2685
    %3868 = vmatpush.bf16.msra.mxu0 %v2681
    %3869 = vmatpush.bf16.msra.mxu0 %v2677
    %3870 = vmatpush.bf16.msra.mxu0 %v2673
    %3871 = vmatpush.bf16.msra.mxu0 %v2669
    %3872 = vmatpush.bf16.msra.mxu0 %v2665
    %3873 = vmatpush.bf16.msra.mxu0 %v2661
    %3874 = vmatpush.bf16.msra.mxu0 %v2657
    %3875 = vmatmul.bf16.gmra.mxu0 %v715
    %v3876 = vpop.f32.mrf.mxu0
    %v3877 = vadd.f32 %v3864, %v3876
    %v3878 = vpop.f32.mrf.mxu0
    %3879 = vdwg.mxu0
    %3880 = vmatpush.bf16.msra.mxu0 %v2717
    %3881 = vmatpush.bf16.msra.mxu0 %v2713
    %3882 = vmatpush.bf16.msra.mxu0 %v2709
    %3883 = vmatpush.bf16.msra.mxu0 %v2705
    %3884 = vmatpush.bf16.msra.mxu0 %v2701
    %3885 = vmatpush.bf16.msra.mxu0 %v2697
    %3886 = vmatpush.bf16.msra.mxu0 %v2693
    %3887 = vmatpush.bf16.msra.mxu0 %v2689
    %3888 = vmatmul.bf16.gmra.mxu0 %v716
    %v3889 = vpop.f32.mrf.mxu0
    %v3890 = vadd.f32 %v3877, %v3889
    %v3891 = vpop.f32.mrf.mxu0
    %3892 = vdwg.mxu0
    %3893 = vmatpush.bf16.msra.mxu0 %v2749
    %3894 = vmatpush.bf16.msra.mxu0 %v2745
    %3895 = vmatpush.bf16.msra.mxu0 %v2741
    %3896 = vmatpush.bf16.msra.mxu0 %v2737
    %3897 = vmatpush.bf16.msra.mxu0 %v2733
    %3898 = vmatpush.bf16.msra.mxu0 %v2729
    %3899 = vmatpush.bf16.msra.mxu0 %v2725
    %3900 = vmatpush.bf16.msra.mxu0 %v2721
    %3901 = vmatmul.bf16.gmra.mxu0 %v717
    %v3902 = vpop.f32.mrf.mxu0
    %v3903 = vadd.f32 %v3890, %v3902
    %v3904 = vpop.f32.mrf.mxu0
    %3905 = vdwg.mxu0
    %3906 = vmatpush.bf16.msra.mxu0 %v2781
    %3907 = vmatpush.bf16.msra.mxu0 %v2777
    %3908 = vmatpush.bf16.msra.mxu0 %v2773
    %3909 = vmatpush.bf16.msra.mxu0 %v2769
    %3910 = vmatpush.bf16.msra.mxu0 %v2765
    %3911 = vmatpush.bf16.msra.mxu0 %v2761
    %3912 = vmatpush.bf16.msra.mxu0 %v2757
    %3913 = vmatpush.bf16.msra.mxu0 %v2753
    %3914 = vmatmul.bf16.gmra.mxu0 %v718
    %v3915 = vpop.f32.mrf.mxu0
    %v3916 = vadd.f32 %v3903, %v3915
    %v3917 = vpop.f32.mrf.mxu0
    %3918 = vdwg.mxu0
    %3919 = vmatpush.bf16.msra.mxu0 %v2302
    %3920 = vmatpush.bf16.msra.mxu0 %v2298
    %3921 = vmatpush.bf16.msra.mxu0 %v2294
    %3922 = vmatpush.bf16.msra.mxu0 %v2290
    %3923 = vmatpush.bf16.msra.mxu0 %v2286
    %3924 = vmatpush.bf16.msra.mxu0 %v2282
    %3925 = vmatpush.bf16.msra.mxu0 %v2278
    %3926 = vmatpush.bf16.msra.mxu0 %v2274
    %3927 = vmatmul.bf16.gmra.mxu0 %v703
    %v3928 = vpop.f32.mrf.mxu0
    %v3929 = vadd.f32 %v674, %v3928
    %v3930 = vpop.f32.mrf.mxu0
    %3931 = vdwg.mxu0
    %3932 = vmatpush.bf16.msra.mxu0 %v2334
    %3933 = vmatpush.bf16.msra.mxu0 %v2330
    %3934 = vmatpush.bf16.msra.mxu0 %v2326
    %3935 = vmatpush.bf16.msra.mxu0 %v2322
    %3936 = vmatpush.bf16.msra.mxu0 %v2318
    %3937 = vmatpush.bf16.msra.mxu0 %v2314
    %3938 = vmatpush.bf16.msra.mxu0 %v2310
    %3939 = vmatpush.bf16.msra.mxu0 %v2306
    %3940 = vmatmul.bf16.gmra.mxu0 %v704
    %v3941 = vpop.f32.mrf.mxu0
    %v3942 = vadd.f32 %v3929, %v3941
    %v3943 = vpop.f32.mrf.mxu0
    %3944 = vdwg.mxu0
    %3945 = vmatpush.bf16.msra.mxu0 %v2366
    %3946 = vmatpush.bf16.msra.mxu0 %v2362
    %3947 = vmatpush.bf16.msra.mxu0 %v2358
    %3948 = vmatpush.bf16.msra.mxu0 %v2354
    %3949 = vmatpush.bf16.msra.mxu0 %v2350
    %3950 = vmatpush.bf16.msra.mxu0 %v2346
    %3951 = vmatpush.bf16.msra.mxu0 %v2342
    %3952 = vmatpush.bf16.msra.mxu0 %v2338
    %3953 = vmatmul.bf16.gmra.mxu0 %v705
    %v3954 = vpop.f32.mrf.mxu0
    %v3955 = vadd.f32 %v3942, %v3954
    %v3956 = vpop.f32.mrf.mxu0
    %3957 = vdwg.mxu0
    %3958 = vmatpush.bf16.msra.mxu0 %v2398
    %3959 = vmatpush.bf16.msra.mxu0 %v2394
    %3960 = vmatpush.bf16.msra.mxu0 %v2390
    %3961 = vmatpush.bf16.msra.mxu0 %v2386
    %3962 = vmatpush.bf16.msra.mxu0 %v2382
    %3963 = vmatpush.bf16.msra.mxu0 %v2378
    %3964 = vmatpush.bf16.msra.mxu0 %v2374
    %3965 = vmatpush.bf16.msra.mxu0 %v2370
    %3966 = vmatmul.bf16.gmra.mxu0 %v706
    %v3967 = vpop.f32.mrf.mxu0
    %v3968 = vadd.f32 %v3955, %v3967
    %v3969 = vpop.f32.mrf.mxu0
    %3970 = vdwg.mxu0
    %3971 = vmatpush.bf16.msra.mxu0 %v2430
    %3972 = vmatpush.bf16.msra.mxu0 %v2426
    %3973 = vmatpush.bf16.msra.mxu0 %v2422
    %3974 = vmatpush.bf16.msra.mxu0 %v2418
    %3975 = vmatpush.bf16.msra.mxu0 %v2414
    %3976 = vmatpush.bf16.msra.mxu0 %v2410
    %3977 = vmatpush.bf16.msra.mxu0 %v2406
    %3978 = vmatpush.bf16.msra.mxu0 %v2402
    %3979 = vmatmul.bf16.gmra.mxu0 %v707
    %v3980 = vpop.f32.mrf.mxu0
    %v3981 = vadd.f32 %v3968, %v3980
    %v3982 = vpop.f32.mrf.mxu0
    %3983 = vdwg.mxu0
    %3984 = vmatpush.bf16.msra.mxu0 %v2462
    %3985 = vmatpush.bf16.msra.mxu0 %v2458
    %3986 = vmatpush.bf16.msra.mxu0 %v2454
    %3987 = vmatpush.bf16.msra.mxu0 %v2450
    %3988 = vmatpush.bf16.msra.mxu0 %v2446
    %3989 = vmatpush.bf16.msra.mxu0 %v2442
    %3990 = vmatpush.bf16.msra.mxu0 %v2438
    %3991 = vmatpush.bf16.msra.mxu0 %v2434
    %3992 = vmatmul.bf16.gmra.mxu0 %v708
    %v3993 = vpop.f32.mrf.mxu0
    %v3994 = vadd.f32 %v3981, %v3993
    %v3995 = vpop.f32.mrf.mxu0
    %3996 = vdwg.mxu0
    %3997 = vmatpush.bf16.msra.mxu0 %v2494
    %3998 = vmatpush.bf16.msra.mxu0 %v2490
    %3999 = vmatpush.bf16.msra.mxu0 %v2486
    %4000 = vmatpush.bf16.msra.mxu0 %v2482
    %4001 = vmatpush.bf16.msra.mxu0 %v2478
    %4002 = vmatpush.bf16.msra.mxu0 %v2474
    %4003 = vmatpush.bf16.msra.mxu0 %v2470
    %4004 = vmatpush.bf16.msra.mxu0 %v2466
    %4005 = vmatmul.bf16.gmra.mxu0 %v709
    %v4006 = vpop.f32.mrf.mxu0
    %v4007 = vadd.f32 %v3994, %v4006
    %v4008 = vpop.f32.mrf.mxu0
    %4009 = vdwg.mxu0
    %4010 = vmatpush.bf16.msra.mxu0 %v2526
    %4011 = vmatpush.bf16.msra.mxu0 %v2522
    %4012 = vmatpush.bf16.msra.mxu0 %v2518
    %4013 = vmatpush.bf16.msra.mxu0 %v2514
    %4014 = vmatpush.bf16.msra.mxu0 %v2510
    %4015 = vmatpush.bf16.msra.mxu0 %v2506
    %4016 = vmatpush.bf16.msra.mxu0 %v2502
    %4017 = vmatpush.bf16.msra.mxu0 %v2498
    %4018 = vmatmul.bf16.gmra.mxu0 %v710
    %v4019 = vpop.f32.mrf.mxu0
    %v4020 = vadd.f32 %v4007, %v4019
    %v4021 = vpop.f32.mrf.mxu0
    %4022 = vdwg.mxu0
    %4023 = vmatpush.bf16.msra.mxu0 %v2558
    %4024 = vmatpush.bf16.msra.mxu0 %v2554
    %4025 = vmatpush.bf16.msra.mxu0 %v2550
    %4026 = vmatpush.bf16.msra.mxu0 %v2546
    %4027 = vmatpush.bf16.msra.mxu0 %v2542
    %4028 = vmatpush.bf16.msra.mxu0 %v2538
    %4029 = vmatpush.bf16.msra.mxu0 %v2534
    %4030 = vmatpush.bf16.msra.mxu0 %v2530
    %4031 = vmatmul.bf16.gmra.mxu0 %v711
    %v4032 = vpop.f32.mrf.mxu0
    %v4033 = vadd.f32 %v4020, %v4032
    %v4034 = vpop.f32.mrf.mxu0
    %4035 = vdwg.mxu0
    %4036 = vmatpush.bf16.msra.mxu0 %v2590
    %4037 = vmatpush.bf16.msra.mxu0 %v2586
    %4038 = vmatpush.bf16.msra.mxu0 %v2582
    %4039 = vmatpush.bf16.msra.mxu0 %v2578
    %4040 = vmatpush.bf16.msra.mxu0 %v2574
    %4041 = vmatpush.bf16.msra.mxu0 %v2570
    %4042 = vmatpush.bf16.msra.mxu0 %v2566
    %4043 = vmatpush.bf16.msra.mxu0 %v2562
    %4044 = vmatmul.bf16.gmra.mxu0 %v712
    %v4045 = vpop.f32.mrf.mxu0
    %v4046 = vadd.f32 %v4033, %v4045
    %v4047 = vpop.f32.mrf.mxu0
    %4048 = vdwg.mxu0
    %4049 = vmatpush.bf16.msra.mxu0 %v2622
    %4050 = vmatpush.bf16.msra.mxu0 %v2618
    %4051 = vmatpush.bf16.msra.mxu0 %v2614
    %4052 = vmatpush.bf16.msra.mxu0 %v2610
    %4053 = vmatpush.bf16.msra.mxu0 %v2606
    %4054 = vmatpush.bf16.msra.mxu0 %v2602
    %4055 = vmatpush.bf16.msra.mxu0 %v2598
    %4056 = vmatpush.bf16.msra.mxu0 %v2594
    %4057 = vmatmul.bf16.gmra.mxu0 %v713
    %v4058 = vpop.f32.mrf.mxu0
    %v4059 = vadd.f32 %v4046, %v4058
    %v4060 = vpop.f32.mrf.mxu0
    %4061 = vdwg.mxu0
    %4062 = vmatpush.bf16.msra.mxu0 %v2654
    %4063 = vmatpush.bf16.msra.mxu0 %v2650
    %4064 = vmatpush.bf16.msra.mxu0 %v2646
    %4065 = vmatpush.bf16.msra.mxu0 %v2642
    %4066 = vmatpush.bf16.msra.mxu0 %v2638
    %4067 = vmatpush.bf16.msra.mxu0 %v2634
    %4068 = vmatpush.bf16.msra.mxu0 %v2630
    %4069 = vmatpush.bf16.msra.mxu0 %v2626
    %4070 = vmatmul.bf16.gmra.mxu0 %v714
    %v4071 = vpop.f32.mrf.mxu0
    %v4072 = vadd.f32 %v4059, %v4071
    %v4073 = vpop.f32.mrf.mxu0
    %4074 = vdwg.mxu0
    %4075 = vmatpush.bf16.msra.mxu0 %v2686
    %4076 = vmatpush.bf16.msra.mxu0 %v2682
    %4077 = vmatpush.bf16.msra.mxu0 %v2678
    %4078 = vmatpush.bf16.msra.mxu0 %v2674
    %4079 = vmatpush.bf16.msra.mxu0 %v2670
    %4080 = vmatpush.bf16.msra.mxu0 %v2666
    %4081 = vmatpush.bf16.msra.mxu0 %v2662
    %4082 = vmatpush.bf16.msra.mxu0 %v2658
    %4083 = vmatmul.bf16.gmra.mxu0 %v715
    %v4084 = vpop.f32.mrf.mxu0
    %v4085 = vadd.f32 %v4072, %v4084
    %v4086 = vpop.f32.mrf.mxu0
    %4087 = vdwg.mxu0
    %4088 = vmatpush.bf16.msra.mxu0 %v2718
    %4089 = vmatpush.bf16.msra.mxu0 %v2714
    %4090 = vmatpush.bf16.msra.mxu0 %v2710
    %4091 = vmatpush.bf16.msra.mxu0 %v2706
    %4092 = vmatpush.bf16.msra.mxu0 %v2702
    %4093 = vmatpush.bf16.msra.mxu0 %v2698
    %4094 = vmatpush.bf16.msra.mxu0 %v2694
    %4095 = vmatpush.bf16.msra.mxu0 %v2690
    %4096 = vmatmul.bf16.gmra.mxu0 %v716
    %v4097 = vpop.f32.mrf.mxu0
    %v4098 = vadd.f32 %v4085, %v4097
    %v4099 = vpop.f32.mrf.mxu0
    %4100 = vdwg.mxu0
    %4101 = vmatpush.bf16.msra.mxu0 %v2750
    %4102 = vmatpush.bf16.msra.mxu0 %v2746
    %4103 = vmatpush.bf16.msra.mxu0 %v2742
    %4104 = vmatpush.bf16.msra.mxu0 %v2738
    %4105 = vmatpush.bf16.msra.mxu0 %v2734
    %4106 = vmatpush.bf16.msra.mxu0 %v2730
    %4107 = vmatpush.bf16.msra.mxu0 %v2726
    %4108 = vmatpush.bf16.msra.mxu0 %v2722
    %4109 = vmatmul.bf16.gmra.mxu0 %v717
    %v4110 = vpop.f32.mrf.mxu0
    %v4111 = vadd.f32 %v4098, %v4110
    %v4112 = vpop.f32.mrf.mxu0
    %4113 = vdwg.mxu0
    %4114 = vmatpush.bf16.msra.mxu0 %v2782
    %4115 = vmatpush.bf16.msra.mxu0 %v2778
    %4116 = vmatpush.bf16.msra.mxu0 %v2774
    %4117 = vmatpush.bf16.msra.mxu0 %v2770
    %4118 = vmatpush.bf16.msra.mxu0 %v2766
    %4119 = vmatpush.bf16.msra.mxu0 %v2762
    %4120 = vmatpush.bf16.msra.mxu0 %v2758
    %4121 = vmatpush.bf16.msra.mxu0 %v2754
    %4122 = vmatmul.bf16.gmra.mxu0 %v718
    %v4123 = vpop.f32.mrf.mxu0
    %v4124 = vadd.f32 %v4111, %v4123
    %v4125 = vpop.f32.mrf.mxu0
    %4126 = vdwg.mxu0
    %v4127 = vmax.f32 %v3500, 0.0
    %v4128 = vmax.f32 %v3708, 0.0
    %v4129 = vmax.f32 %v3916, 0.0
    %v4130 = vmax.f32 %v4124, 0.0
    %v4131 = vpack.c.bf16 %v4127, %v4127
    %v4132 = vpack.c.bf16 %v4128, %v4128
    %v4133 = vpack.c.bf16 %v4129, %v4129
    %v4134 = vpack.c.bf16 %v4130, %v4130
    %v4135 = vld [vmem:[#allocation6] sm:$0xf]
    %v4136 = vld [vmem:[#allocation6 + $0x4] sm:$0xf]
    %v4137 = vld [vmem:[#allocation6 + $0x8] sm:$0xf]
    %v4138 = vld [vmem:[#allocation6 + $0xc] sm:$0xf]
    %v4139 = vld [vmem:[#allocation6 + $0x10] sm:$0xf]
    %v4140 = vld [vmem:[#allocation6 + $0x14] sm:$0xf]
    %v4141 = vld [vmem:[#allocation6 + $0x18] sm:$0xf]
    %v4142 = vld [vmem:[#allocation6 + $0x1c] sm:$0xf]
    %v4143 = vld [vmem:[#allocation6 + $0x20] sm:$0xf]
    %v4144 = vld [vmem:[#allocation6 + $0x24] sm:$0xf]
    %v4145 = vld [vmem:[#allocation6 + $0x28] sm:$0xf]
    %v4146 = vld [vmem:[#allocation6 + $0x2c] sm:$0xf]
    %v4147 = vld [vmem:[#allocation6 + $0x30] sm:$0xf]
    %v4148 = vld [vmem:[#allocation6 + $0x34] sm:$0xf]
    %v4149 = vld [vmem:[#allocation6 + $0x38] sm:$0xf]
    %v4150 = vld [vmem:[#allocation6 + $0x3c] sm:$0xf]
    %v4151 = vld [vmem:[#allocation6 + $0x40] sm:$0xf]
    %v4152 = vld [vmem:[#allocation6 + $0x44] sm:$0xf]
    %v4153 = vld [vmem:[#allocation6 + $0x48] sm:$0xf]
    %v4154 = vld [vmem:[#allocation6 + $0x4c] sm:$0xf]
    %v4155 = vld [vmem:[#allocation6 + $0x50] sm:$0xf]
    %v4156 = vld [vmem:[#allocation6 + $0x54] sm:$0xf]
    %v4157 = vld [vmem:[#allocation6 + $0x58] sm:$0xf]
    %v4158 = vld [vmem:[#allocation6 + $0x5c] sm:$0xf]
    %v4159 = vld [vmem:[#allocation6 + $0x60] sm:$0xf]
    %v4160 = vld [vmem:[#allocation6 + $0x64] sm:$0xf]
    %v4161 = vld [vmem:[#allocation6 + $0x68] sm:$0xf]
    %v4162 = vld [vmem:[#allocation6 + $0x6c] sm:$0xf]
    %v4163 = vld [vmem:[#allocation6 + $0x70] sm:$0xf]
    %v4164 = vld [vmem:[#allocation6 + $0x74] sm:$0xf]
    %v4165 = vld [vmem:[#allocation6 + $0x78] sm:$0xf]
    %v4166 = vld [vmem:[#allocation6 + $0x7c] sm:$0xf]
    %v4167 = vld [vmem:[#allocation6 + $0x80] sm:$0xf]
    %v4168 = vld [vmem:[#allocation6 + $0x84] sm:$0xf]
    %v4169 = vld [vmem:[#allocation6 + $0x88] sm:$0xf]
    %v4170 = vld [vmem:[#allocation6 + $0x8c] sm:$0xf]
    %v4171 = vld [vmem:[#allocation6 + $0x90] sm:$0xf]
    %v4172 = vld [vmem:[#allocation6 + $0x94] sm:$0xf]
    %v4173 = vld [vmem:[#allocation6 + $0x98] sm:$0xf]
    %v4174 = vld [vmem:[#allocation6 + $0x9c] sm:$0xf]
    %v4175 = vld [vmem:[#allocation6 + $0xa0] sm:$0xf]
    %v4176 = vld [vmem:[#allocation6 + $0xa4] sm:$0xf]
    %v4177 = vld [vmem:[#allocation6 + $0xa8] sm:$0xf]
    %v4178 = vld [vmem:[#allocation6 + $0xac] sm:$0xf]
    %v4179 = vld [vmem:[#allocation6 + $0xb0] sm:$0xf]
    %v4180 = vld [vmem:[#allocation6 + $0xb4] sm:$0xf]
    %v4181 = vld [vmem:[#allocation6 + $0xb8] sm:$0xf]
    %v4182 = vld [vmem:[#allocation6 + $0xbc] sm:$0xf]
    %v4183 = vld [vmem:[#allocation6 + $0xc0] sm:$0xf]
    %v4184 = vld [vmem:[#allocation6 + $0xc4] sm:$0xf]
    %v4185 = vld [vmem:[#allocation6 + $0xc8] sm:$0xf]
    %v4186 = vld [vmem:[#allocation6 + $0xcc] sm:$0xf]
    %v4187 = vld [vmem:[#allocation6 + $0xd0] sm:$0xf]
    %v4188 = vld [vmem:[#allocation6 + $0xd4] sm:$0xf]
    %v4189 = vld [vmem:[#allocation6 + $0xd8] sm:$0xf]
    %v4190 = vld [vmem:[#allocation6 + $0xdc] sm:$0xf]
    %v4191 = vld [vmem:[#allocation6 + $0xe0] sm:$0xf]
    %v4192 = vld [vmem:[#allocation6 + $0xe4] sm:$0xf]
    %v4193 = vld [vmem:[#allocation6 + $0xe8] sm:$0xf]
    %v4194 = vld [vmem:[#allocation6 + $0xec] sm:$0xf]
    %v4195 = vld [vmem:[#allocation6 + $0xf0] sm:$0xf]
    %v4196 = vld [vmem:[#allocation6 + $0xf4] sm:$0xf]
    %v4197 = vld [vmem:[#allocation6 + $0xf8] sm:$0xf]
    %v4198 = vld [vmem:[#allocation6 + $0xfc] sm:$0xf]
    %v4199 = vld [vmem:[#allocation7] sm:$0x1]
    %v4201 = vperm.slane %v4199, 0
    %v4267 = vunpack.c.l.b16 %v4135
    %v4268 = vunpack.c.l.b16 %v4136
    %v4269 = vunpack.c.l.b16 %v4137
    %v4270 = vunpack.c.l.b16 %v4138
    %v4271 = vunpack.c.l.b16 %v4139
    %v4272 = vunpack.c.l.b16 %v4140
    %v4273 = vunpack.c.l.b16 %v4141
    %v4274 = vunpack.c.l.b16 %v4142
    %v4275 = vunpack.c.l.b16 %v4143
    %v4276 = vunpack.c.l.b16 %v4144
    %v4277 = vunpack.c.l.b16 %v4145
    %v4278 = vunpack.c.l.b16 %v4146
    %v4279 = vunpack.c.l.b16 %v4147
    %v4280 = vunpack.c.l.b16 %v4148
    %v4281 = vunpack.c.l.b16 %v4149
    %v4282 = vunpack.c.l.b16 %v4150
    %v4283 = vunpack.c.l.b16 %v4151
    %v4284 = vunpack.c.l.b16 %v4152
    %v4285 = vunpack.c.l.b16 %v4153
    %v4286 = vunpack.c.l.b16 %v4154
    %v4287 = vunpack.c.l.b16 %v4155
    %v4288 = vunpack.c.l.b16 %v4156
    %v4289 = vunpack.c.l.b16 %v4157
    %v4290 = vunpack.c.l.b16 %v4158
    %v4291 = vunpack.c.l.b16 %v4159
    %v4292 = vunpack.c.l.b16 %v4160
    %v4293 = vunpack.c.l.b16 %v4161
    %v4294 = vunpack.c.l.b16 %v4162
    %v4295 = vunpack.c.l.b16 %v4163
    %v4296 = vunpack.c.l.b16 %v4164
    %v4297 = vunpack.c.l.b16 %v4165
    %v4298 = vunpack.c.l.b16 %v4166
    %v4299 = vunpack.c.l.b16 %v4167
    %v4300 = vunpack.c.l.b16 %v4168
    %v4301 = vunpack.c.l.b16 %v4169
    %v4302 = vunpack.c.l.b16 %v4170
    %v4303 = vunpack.c.l.b16 %v4171
    %v4304 = vunpack.c.l.b16 %v4172
    %v4305 = vunpack.c.l.b16 %v4173
    %v4306 = vunpack.c.l.b16 %v4174
    %v4307 = vunpack.c.l.b16 %v4175
    %v4308 = vunpack.c.l.b16 %v4176
    %v4309 = vunpack.c.l.b16 %v4177
    %v4310 = vunpack.c.l.b16 %v4178
    %v4311 = vunpack.c.l.b16 %v4179
    %v4312 = vunpack.c.l.b16 %v4180
    %v4313 = vunpack.c.l.b16 %v4181
    %v4314 = vunpack.c.l.b16 %v4182
    %v4315 = vunpack.c.l.b16 %v4183
    %v4316 = vunpack.c.l.b16 %v4184
    %v4317 = vunpack.c.l.b16 %v4185
    %v4318 = vunpack.c.l.b16 %v4186
    %v4319 = vunpack.c.l.b16 %v4187
    %v4320 = vunpack.c.l.b16 %v4188
    %v4321 = vunpack.c.l.b16 %v4189
    %v4322 = vunpack.c.l.b16 %v4190
    %v4323 = vunpack.c.l.b16 %v4191
    %v4324 = vunpack.c.l.b16 %v4192
    %v4325 = vunpack.c.l.b16 %v4193
    %v4326 = vunpack.c.l.b16 %v4194
    %v4327 = vunpack.c.l.b16 %v4195
    %v4328 = vunpack.c.l.b16 %v4196
    %v4329 = vunpack.c.l.b16 %v4197
    %v4330 = vunpack.c.l.b16 %v4198
    %v4331 = vpack.c.b16 %v4268, %v4267
    %v4332 = vpack.c.b16 %v4270, %v4269
    %v4333 = vpack.c.b16 %v4272, %v4271
    %v4334 = vpack.c.b16 %v4274, %v4273
    %v4335 = vpack.c.b16 %v4276, %v4275
    %v4336 = vpack.c.b16 %v4278, %v4277
    %v4337 = vpack.c.b16 %v4280, %v4279
    %v4338 = vpack.c.b16 %v4282, %v4281
    %v4339 = vpack.c.b16 %v4284, %v4283
    %v4340 = vpack.c.b16 %v4286, %v4285
    %v4341 = vpack.c.b16 %v4288, %v4287
    %v4342 = vpack.c.b16 %v4290, %v4289
    %v4343 = vpack.c.b16 %v4292, %v4291
    %v4344 = vpack.c.b16 %v4294, %v4293
    %v4345 = vpack.c.b16 %v4296, %v4295
    %v4346 = vpack.c.b16 %v4298, %v4297
    %v4347 = vpack.c.b16 %v4300, %v4299
    %v4348 = vpack.c.b16 %v4302, %v4301
    %v4349 = vpack.c.b16 %v4304, %v4303
    %v4350 = vpack.c.b16 %v4306, %v4305
    %v4351 = vpack.c.b16 %v4308, %v4307
    %v4352 = vpack.c.b16 %v4310, %v4309
    %v4353 = vpack.c.b16 %v4312, %v4311
    %v4354 = vpack.c.b16 %v4314, %v4313
    %v4355 = vpack.c.b16 %v4316, %v4315
    %v4356 = vpack.c.b16 %v4318, %v4317
    %v4357 = vpack.c.b16 %v4320, %v4319
    %v4358 = vpack.c.b16 %v4322, %v4321
    %v4359 = vpack.c.b16 %v4324, %v4323
    %v4360 = vpack.c.b16 %v4326, %v4325
    %v4361 = vpack.c.b16 %v4328, %v4327
    %v4362 = vpack.c.b16 %v4330, %v4329
    %4395 = vmatpush.bf16.msra.mxu0 %v4338
    %4396 = vmatpush.bf16.msra.mxu0 %v4337
    %4397 = vmatpush.bf16.msra.mxu0 %v4336
    %4398 = vmatpush.bf16.msra.mxu0 %v4335
    %4399 = vmatpush.bf16.msra.mxu0 %v4334
    %4400 = vmatpush.bf16.msra.mxu0 %v4333
    %4401 = vmatpush.bf16.msra.mxu0 %v4332
    %4402 = vmatpush.bf16.msra.mxu0 %v4331
    %4403 = vmatmul.bf16.gmra.mxu0 %v4131
    %v4404 = vpop.f32.mrf.mxu0
    %v4405 = vadd.f32 %v4201, %v4404
    %v4406 = vpop.f32.mrf.mxu0
    %4407 = vdwg.mxu0
    %4408 = vmatpush.bf16.msra.mxu0 %v4346
    %4409 = vmatpush.bf16.msra.mxu0 %v4345
    %4410 = vmatpush.bf16.msra.mxu0 %v4344
    %4411 = vmatpush.bf16.msra.mxu0 %v4343
    %4412 = vmatpush.bf16.msra.mxu0 %v4342
    %4413 = vmatpush.bf16.msra.mxu0 %v4341
    %4414 = vmatpush.bf16.msra.mxu0 %v4340
    %4415 = vmatpush.bf16.msra.mxu0 %v4339
    %4416 = vmatmul.bf16.gmra.mxu0 %v4132
    %v4417 = vpop.f32.mrf.mxu0
    %v4418 = vadd.f32 %v4405, %v4417
    %v4419 = vpop.f32.mrf.mxu0
    %4420 = vdwg.mxu0
    %4421 = vmatpush.bf16.msra.mxu0 %v4354
    %4422 = vmatpush.bf16.msra.mxu0 %v4353
    %4423 = vmatpush.bf16.msra.mxu0 %v4352
    %4424 = vmatpush.bf16.msra.mxu0 %v4351
    %4425 = vmatpush.bf16.msra.mxu0 %v4350
    %4426 = vmatpush.bf16.msra.mxu0 %v4349
    %4427 = vmatpush.bf16.msra.mxu0 %v4348
    %4428 = vmatpush.bf16.msra.mxu0 %v4347
    %4429 = vmatmul.bf16.gmra.mxu0 %v4133
    %v4430 = vpop.f32.mrf.mxu0
    %v4431 = vadd.f32 %v4418, %v4430
    %v4432 = vpop.f32.mrf.mxu0
    %4433 = vdwg.mxu0
    %4434 = vmatpush.bf16.msra.mxu0 %v4362
    %4435 = vmatpush.bf16.msra.mxu0 %v4361
    %4436 = vmatpush.bf16.msra.mxu0 %v4360
    %4437 = vmatpush.bf16.msra.mxu0 %v4359
    %4438 = vmatpush.bf16.msra.mxu0 %v4358
    %4439 = vmatpush.bf16.msra.mxu0 %v4357
    %4440 = vmatpush.bf16.msra.mxu0 %v4356
    %4441 = vmatpush.bf16.msra.mxu0 %v4355
    %4442 = vmatmul.bf16.gmra.mxu0 %v4134
    %v4443 = vpop.f32.mrf.mxu0
    %v4444 = vadd.f32 %v4431, %v4443
    %v4445 = vpop.f32.mrf.mxu0
    %4446 = vdwg.mxu0
    %v4447 = vmax.f32 %v4444, 0.0
    %v4448 = vpack.c.bf16 %v4447, %v4447
    %v4449 = vld [vmem:[#allocation9] sm:$0xf]
    %v4450 = vld [vmem:[#allocation9 + $0x4] sm:$0xf]
    %v4451 = vld [vmem:[#allocation9 + $0x8] sm:$0xf]
    %v4452 = vld [vmem:[#allocation9 + $0xc] sm:$0xf]
    %v4453 = vld [vmem:[#allocation9 + $0x10] sm:$0xf]
    %v4454 = vld [vmem:[#allocation9 + $0x14] sm:$0xf]
    %v4455 = vld [vmem:[#allocation9 + $0x18] sm:$0xf]
    %v4456 = vld [vmem:[#allocation9 + $0x1c] sm:$0xf]
    %v4457 = vld [vmem:[#allocation9 + $0x20] sm:$0xf]
    %v4458 = vld [vmem:[#allocation9 + $0x24] sm:$0xf]
    %v4459 = vld [vmem:[#allocation9 + $0x28] sm:$0xf]
    %v4460 = vld [vmem:[#allocation9 + $0x2c] sm:$0xf]
    %v4461 = vld [vmem:[#allocation9 + $0x30] sm:$0xf]
    %v4462 = vld [vmem:[#allocation9 + $0x34] sm:$0xf]
    %v4463 = vld [vmem:[#allocation9 + $0x38] sm:$0xf]
    %v4464 = vld [vmem:[#allocation9 + $0x3c] sm:$0xf]
    %v4465 = vld [vmem:[#allocation10] sm:$0x1]
    %v4467 = vperm.slane %v4465, 0
    %v4485 = vunpack.c.l.b16 %v4449
    %v4486 = vunpack.c.l.b16 %v4450
    %v4487 = vunpack.c.l.b16 %v4451
    %v4488 = vunpack.c.l.b16 %v4452
    %v4489 = vunpack.c.l.b16 %v4453
    %v4490 = vunpack.c.l.b16 %v4454
    %v4491 = vunpack.c.l.b16 %v4455
    %v4492 = vunpack.c.l.b16 %v4456
    %v4493 = vunpack.c.l.b16 %v4457
    %v4494 = vunpack.c.l.b16 %v4458
    %v4495 = vunpack.c.l.b16 %v4459
    %v4496 = vunpack.c.l.b16 %v4460
    %v4497 = vunpack.c.l.b16 %v4461
    %v4498 = vunpack.c.l.b16 %v4462
    %v4499 = vunpack.c.l.b16 %v4463
    %v4500 = vunpack.c.l.b16 %v4464
    %v4501 = vpack.c.b16 %v4486, %v4485
    %v4502 = vpack.c.b16 %v4488, %v4487
    %v4503 = vpack.c.b16 %v4490, %v4489
    %v4504 = vpack.c.b16 %v4492, %v4491
    %v4505 = vpack.c.b16 %v4494, %v4493
    %v4506 = vpack.c.b16 %v4496, %v4495
    %v4507 = vpack.c.b16 %v4498, %v4497
    %v4508 = vpack.c.b16 %v4500, %v4499
    %4517 = vmatpush.bf16.msra.mxu0 %v4508
    %4518 = vmatpush.bf16.msra.mxu0 %v4507
    %4519 = vmatpush.bf16.msra.mxu0 %v4506
    %4520 = vmatpush.bf16.msra.mxu0 %v4505
    %4521 = vmatpush.bf16.msra.mxu0 %v4504
    %4522 = vmatpush.bf16.msra.mxu0 %v4503
    %4523 = vmatpush.bf16.msra.mxu0 %v4502
    %4524 = vmatpush.bf16.msra.mxu0 %v4501
    %4525 = vmatmul.bf16.gmra.mxu0 %v4448
    %v4526 = vpop.f32.mrf.mxu0
    %v4527 = vadd.f32 %v4467, %v4526
    %v4528 = vpop.f32.mrf.mxu0
    %4529 = vdwg.mxu0
    %v4530 = vmax.f32 %v4527, 0.0
    %v4531 = vpack.c.bf16 %v4530, %v4530
    %v4532 = vld [vmem:[#allocation12] sm:$0xf]
    %v4533 = vld [vmem:[#allocation12 + $0x4] sm:$0xf]
    %v4534 = vld [vmem:[#allocation12 + $0x8] sm:$0xf]
    %v4535 = vld [vmem:[#allocation12 + $0xc] sm:$0xf]
    %v4536 = vld [vmem:[#allocation12 + $0x10] sm:$0xf]
    %v4537 = vld [vmem:[#allocation12 + $0x14] sm:$0xf]
    %v4538 = vld [vmem:[#allocation12 + $0x18] sm:$0xf]
    %v4539 = vld [vmem:[#allocation12 + $0x1c] sm:$0xf]
    %v4540 = vld [vmem:[#allocation12 + $0x20] sm:$0xf]
    %v4541 = vld [vmem:[#allocation12 + $0x24] sm:$0xf]
    %v4542 = vld [vmem:[#allocation12 + $0x28] sm:$0xf]
    %v4543 = vld [vmem:[#allocation12 + $0x2c] sm:$0xf]
    %v4544 = vld [vmem:[#allocation12 + $0x30] sm:$0xf]
    %v4545 = vld [vmem:[#allocation12 + $0x34] sm:$0xf]
    %v4546 = vld [vmem:[#allocation12 + $0x38] sm:$0xf]
    %v4547 = vld [vmem:[#allocation12 + $0x3c] sm:$0xf]
    %v4548 = vld [vmem:[#allocation13] sm:$0x1]
    %v4550 = vperm.slane %v4548, 0
    %v4568 = vunpack.c.l.b16 %v4532
    %v4569 = vunpack.c.l.b16 %v4533
    %v4570 = vunpack.c.l.b16 %v4534
    %v4571 = vunpack.c.l.b16 %v4535
    %v4572 = vunpack.c.l.b16 %v4536
    %v4573 = vunpack.c.l.b16 %v4537
    %v4574 = vunpack.c.l.b16 %v4538
    %v4575 = vunpack.c.l.b16 %v4539
    %v4576 = vunpack.c.l.b16 %v4540
    %v4577 = vunpack.c.l.b16 %v4541
    %v4578 = vunpack.c.l.b16 %v4542
    %v4579 = vunpack.c.l.b16 %v4543
    %v4580 = vunpack.c.l.b16 %v4544
    %v4581 = vunpack.c.l.b16 %v4545
    %v4582 = vunpack.c.l.b16 %v4546
    %v4583 = vunpack.c.l.b16 %v4547
    %v4584 = vpack.c.b16 %v4569, %v4568
    %v4585 = vpack.c.b16 %v4571, %v4570
    %v4586 = vpack.c.b16 %v4573, %v4572
    %v4587 = vpack.c.b16 %v4575, %v4574
    %v4588 = vpack.c.b16 %v4577, %v4576
    %v4589 = vpack.c.b16 %v4579, %v4578
    %v4590 = vpack.c.b16 %v4581, %v4580
    %v4591 = vpack.c.b16 %v4583, %v4582
    %4600 = vmatpush.bf16.msra.mxu0 %v4591
    %4601 = vmatpush.bf16.msra.mxu0 %v4590
    %4602 = vmatpush.bf16.msra.mxu0 %v4589
    %4603 = vmatpush.bf16.msra.mxu0 %v4588
    %4604 = vmatpush.bf16.msra.mxu0 %v4587
    %4605 = vmatpush.bf16.msra.mxu0 %v4586
    %4606 = vmatpush.bf16.msra.mxu0 %v4585
    %4607 = vmatpush.bf16.msra.mxu0 %v4584
    %4608 = vmatmul.bf16.gmra.mxu0 %v4531
    %v4609 = vpop.f32.mrf.mxu0
    %v4610 = vadd.f32 %v4550, %v4609
    %v4611 = vpop.f32.mrf.mxu0
    %4612 = vdwg.mxu0
    %4613 = vst [vmem:[%s9] sm:$0xff] %v4610
    // Predicated region
    $region70: #{mlp_forward.3} parent=1 // pred_check
      _
    $region71: #{mlp_forward.3} parent=1 // pred_check_branch
      %4615 = sbr.rel (0) target = $region73
    $region72: #{mlp_forward.3} parent=1 // pred_region
      _
    $region73: #{mlp_forward.3} parent=1 // pred_fallthru
      _
    // Predicated region
    $region74: #{mlp_forward.3} parent=1 // pred_check
      _
    $region75: #{mlp_forward.3} parent=1 // pred_check_branch
      %4617 = sbr.rel (0) target = $region77
    $region76: #{mlp_forward.3} parent=1 // pred_region
      _
    $region77: #{mlp_forward.3} parent=1 // pred_fallthru
      _
    %4618 = vsyncpa [#allocation3], 1
    %4619 = vsyncpa [#allocation5], 1
    %4620 = vsyncpa [#allocation8], 1
    %4621 = vsyncpa [#allocation11], 1
    %4622 = vsyncpa [#allocation14], 1

// kernel: mlp_forward.2
$region0: #{mlp_forward.2}
  #allocation0 [shape = 'u32[]', space=smem, size = 0x4, offset = 0x4, fixed_abs, tag = 'smem constant byte address 0x4 - core index']
  #allocation1 [shape = 'u32[72,128]{1,0:T(1,128)}', space=vmem, size = 0x9000, scoped, tag = 'internal scratch']
  #allocation2 [shape = 'f32[8,1024]{1,0:T(8,128)}', space=vmem, size = 0x8000, scoped, tag = 'scratch operand']
  %s0 = inlined_call_operand.vmem [shape: bf16[8,4096], index: 0, kind: input, shape index: {}]
  %s1 = inlined_call_operand.hbm [shape: bf16[4096,2048], index: 1, kind: input, shape index: {}]
  %s2 = inlined_call_operand.hbm [shape: f32[1,2048], index: 2, kind: input, shape index: {}]
  %s3 = inlined_call_operand.vmem [shape: bf16[8,2048], index: 3, kind: output, shape index: {}]
  %s4 = sld [smem:[#allocation0]]
  $region61: #{mlp_forward.2} parent=0
    _
  %s6 = ssub.s32 1, %s4
  %s7 = scalar_select 0, %s6, %s4
  $region1: #{mlp_forward.2} parent=0
    #allocation3 [shape = 'u8[8388608]{0}', space=vmem, size = 0x800000, scoped, tag = 'input window, operand 1']
    #allocation4 [shape = 's32[2]{0}', space=sflag, size = 0x8, scoped, tag = 'scoped memory for mlp_forward.2']
    #allocation5 [shape = 'u8[8192]{0}', space=vmem, size = 0x2000, scoped, tag = 'input window, operand 2']
    #allocation6 [shape = 's32[2]{0}', space=sflag, size = 0x8, scoped, tag = 'scoped memory for mlp_forward.2']
    %8 = vsyncpa [#allocation4], 0
    %s9 = scalar_lea.sflag [#allocation4], 1
    %10 = vsyncpa %s9, 0
    %11 = vsyncpa [#allocation6], 0
    %s12 = scalar_lea.sflag [#allocation6], 1
    %13 = vsyncpa %s12, 0
    loop: start=0, step=1, limit=6
    $region2: #{mlp_forward.2} parent=1 // loop_pre_header
      _
    $region3: #{mlp_forward.2} parent=1 // loop_header
      %s15 = sphi 0, %s19
      %p16 = scmp.ge.s32.totalorder %s15, 6
      %s22 = sphi 0, %s34
      %s23 = sphi 0, %s30
      %s24 = sphi 0, %s22
      %s25 = sphi 0, %s23
      %s26 = sphi 0, %s24
      %s27 = sphi 0, %s25
      %s37 = sphi 0, %s39
      %s40 = sphi 0, %s37
      %s41 = sphi 0, %s40
      %s57 = sphi 0, %s41
      %s65 = sphi 0, %s67
      %s68 = sphi 0, %s65
      %s69 = sphi 0, %s68
      %s85 = sphi 0, %s69
      %s91 = sphi 0, %s93
      %s94 = sphi 0, %s91
      %s95 = sphi 0, %s94
      %s111 = sphi 0, %s95
      %s117 = sphi 0, %s119
      %s120 = sphi 0, %s117
      %s121 = sphi 0, %s120
      %s137 = sphi 0, %s121
    $region4: #{mlp_forward.2} parent=1 // loop_header_branch
      %18 = sbr.rel (%p16) target = $region8
    $region5: #{mlp_forward.2} parent=1 // loop_body
      %s20 = ssub.s32 %s15, 1
      %s21 = ssub.s32 %s15, 2
      %s28 = sadd.s32 1, %s23
      %p29 = scmp.ge.s32.totalorder %s28, 2
      %s30 = scalar_select %p29, 0, %s28
      %s31 = sadd.s32 1, %s22
      %s32 = scalar_select %p29, %s31, %s22
      %p33 = scmp.ge.s32.totalorder %s32, 2
      %s34 = scalar_select %p33, 0, %s32
      %s35 = ssub.s32 %s23, %s30
      %p36 = scmp.eq.s32.totalorder %s35, 0
      %s38 = sadd.s32 %s37, 1
      %s39 = scalar_select %p36, %s37, %s38
      %p42 = pneg %p36
      %p43 = scmp.eq.s32.totalorder %s15, 3
      %p44 = por %p42, %p43
      %p45 = scmp.ne.s32.totalorder %s37, %s40
      %p46 = scmp.eq.s32.totalorder %s15, 0
      %p47 = por %p45, %p46
      %p48 = scmp.ne.s32.totalorder %s37, %s40
      %p49 = scmp.eq.s32.totalorder %s20, 3
      %p50 = por %p48, %p49
      %p51 = scmp.ne.s32.totalorder %s40, %s41
      %p52 = scmp.eq.s32.totalorder %s20, 0
      %p53 = por %p51, %p52
      %p54 = scmp.ne.s32.totalorder %s40, %s41
      %p55 = scmp.eq.s32.totalorder %s21, 3
      %p56 = por %p54, %p55
      %p58 = scmp.ne.s32.totalorder %s41, %s57
      %p59 = scmp.eq.s32.totalorder %s21, 0
      %p60 = por %p58, %p59
      %s61 = ssub.s32 %s23, %s30
      %s62 = ssub.s32 %s22, %s34
      %s63 = sor.u32 %s61, %s62
      %p64 = scmp.eq.s32.totalorder %s63, 0
      %s66 = sadd.s32 %s65, 1
      %s67 = scalar_select %p64, %s65, %s66
      %p70 = pneg %p64
      %p71 = scmp.eq.s32.totalorder %s15, 3
      %p72 = por %p70, %p71
      %p73 = scmp.ne.s32.totalorder %s65, %s68
      %p74 = scmp.eq.s32.totalorder %s15, 0
      %p75 = por %p73, %p74
      %p76 = scmp.ne.s32.totalorder %s65, %s68
      %p77 = scmp.eq.s32.totalorder %s20, 3
      %p78 = por %p76, %p77
      %p79 = scmp.ne.s32.totalorder %s68, %s69
      %p80 = scmp.eq.s32.totalorder %s20, 0
      %p81 = por %p79, %p80
      %p82 = scmp.ne.s32.totalorder %s68, %s69
      %p83 = scmp.eq.s32.totalorder %s21, 3
      %p84 = por %p82, %p83
      %p86 = scmp.ne.s32.totalorder %s69, %s85
      %p87 = scmp.eq.s32.totalorder %s21, 0
      %p88 = por %p86, %p87
      %s89 = ssub.s32 %s22, %s34
      %p90 = scmp.eq.s32.totalorder %s89, 0
      %s92 = sadd.s32 %s91, 1
      %s93 = scalar_select %p90, %s91, %s92
      %p96 = pneg %p90
      %p97 = scmp.eq.s32.totalorder %s15, 3
      %p98 = por %p96, %p97
      %p99 = scmp.ne.s32.totalorder %s91, %s94
      %p100 = scmp.eq.s32.totalorder %s15, 0
      %p101 = por %p99, %p100
      %p102 = scmp.ne.s32.totalorder %s91, %s94
      %p103 = scmp.eq.s32.totalorder %s20, 3
      %p104 = por %p102, %p103
      %p105 = scmp.ne.s32.totalorder %s94, %s95
      %p106 = scmp.eq.s32.totalorder %s20, 0
      %p107 = por %p105, %p106
      %p108 = scmp.ne.s32.totalorder %s94, %s95
      %p109 = scmp.eq.s32.totalorder %s21, 3
      %p110 = por %p108, %p109
      %p112 = scmp.ne.s32.totalorder %s95, %s111
      %p113 = scmp.eq.s32.totalorder %s21, 0
      %p114 = por %p112, %p113
      %s115 = ssub.s32 %s22, %s34
      %p116 = scmp.eq.s32.totalorder %s115, 0
      %s118 = sadd.s32 %s117, 1
      %s119 = scalar_select %p116, %s117, %s118
      %p122 = pneg %p116
      %p123 = scmp.eq.s32.totalorder %s15, 3
      %p124 = por %p122, %p123
      %p125 = scmp.ne.s32.totalorder %s117, %s120
      %p126 = scmp.eq.s32.totalorder %s15, 0
      %p127 = por %p125, %p126
      %p128 = scmp.ne.s32.totalorder %s117, %s120
      %p129 = scmp.eq.s32.totalorder %s20, 3
      %p130 = por %p128, %p129
      %p131 = scmp.ne.s32.totalorder %s120, %s121
      %p132 = scmp.eq.s32.totalorder %s20, 0
      %p133 = por %p131, %p132
      %p134 = scmp.ne.s32.totalorder %s120, %s121
      %p135 = scmp.eq.s32.totalorder %s21, 3
      %p136 = por %p134, %p135
      %p138 = scmp.ne.s32.totalorder %s121, %s137
      %p139 = scmp.eq.s32.totalorder %s21, 0
      %p140 = por %p138, %p139
      %p141 = scmp.le.s32.totalorder 1, %s15
      %p142 = scmp.lt.s32.totalorder %s15, 5
      %p143 = pnand %p141, %p142
      %p144 = pneg %p143
      // Predicated region
      $region9: #{mlp_forward.2} parent=5 // pred_check
        _
      $region10: #{mlp_forward.2} parent=5 // pred_check_branch
        %146 = sbr.rel (%p143) target = $region12
      $region11: #{mlp_forward.2} parent=5 // pred_region
        %s147 = ssub.s32 %s15, 1
      $region12: #{mlp_forward.2} parent=5 // pred_fallthru
        _
      %p148 = scmp.lt.s32.totalorder %s15, 4
      // Predicated region
      $region13: #{mlp_forward.2} parent=5 // pred_check
        %p149 = pneg %p148
      $region14: #{mlp_forward.2} parent=5 // pred_check_branch
        %151 = sbr.rel (%p149) target = $region16
      $region15: #{mlp_forward.2} parent=5 // pred_region
        // Predicated region
        $region17: #{mlp_forward.2} parent=15 // pred_check
          %p152 = pneg %p47
        $region18: #{mlp_forward.2} parent=15 // pred_check_branch
          %154 = sbr.rel (%p152) target = $region20
        $region19: #{mlp_forward.2} parent=15 // pred_region
          %s155 = smul.u32 16, %s23
          %p156 = scmp.lt.s32.totalorder %s155, 31
          %s157 = scalar_select %p156, %s155, 31
          %s158 = smul.addr %s157, 4
          %s159 = scalar_lea.vmem %s0, %s158
          %s160 = smul.u32 16, %s23
        $region20: #{mlp_forward.2} parent=15 // pred_fallthru
          _
        // Predicated region
        $region21: #{mlp_forward.2} parent=15 // pred_check
          %p161 = pneg %p75
        $region22: #{mlp_forward.2} parent=15 // pred_check_branch
          %163 = sbr.rel (%p161) target = $region24
        $region23: #{mlp_forward.2} parent=15 // pred_region
          %s164 = sand.u32 %s65, 1
          %s165 = scalar_lea.sflag [#allocation4], %s164
          %s166 = sand.u32 %s65, 1
          %s167 = smul.addr %s166, 8192
          %s168 = scalar_lea.vmem [#allocation3], %s167
          %s169 = smul.u32 256, %s23
          %s170 = smul.u32 8, %s22
          %172 = vsyncadd %s165, 0
          %s173 = smul.addr %s169, 16
          %s174 = sadd.s32 %s170, %s173
          %s175 = smul.addr %s174, 4
          %s176 = scalar_lea.hbm %s1, %s175
          %s177 = sshll.u32 %s176, 4
          %s178 = int_to_ptr.hbm [resolvable:$true] %s177
          %s179 = sshll.u32 %s168, 4
          %s180 = int_to_ptr.vmem [resolvable:$true] %s179
          %185 = dma.hbm_to_vmem [thread:$0]  %s178, 131072, %s180, %s165, 1024, 512, 32
        $region24: #{mlp_forward.2} parent=15 // pred_fallthru
          _
        // Predicated region
        $region25: #{mlp_forward.2} parent=15 // pred_check
          %p186 = pneg %p101
        $region26: #{mlp_forward.2} parent=15 // pred_check_branch
          %188 = sbr.rel (%p186) target = $region28
        $region27: #{mlp_forward.2} parent=15 // pred_region
          %s189 = sand.u32 %s91, 1
          %s190 = scalar_lea.sflag [#allocation6], %s189
          %s191 = sand.u32 %s91, 1
          %s192 = smul.addr %s191, 8
          %s193 = scalar_lea.vmem [#allocation5], %s192
          %s194 = smul.u32 8, %s22
          %196 = vsyncadd %s190, 0
          %s197 = scalar_lea.hbm %s2, %s194
          %s199 = sshll.u32 %s197, 4
          %s200 = int_to_ptr.hbm [resolvable:$true] %s199
          %s201 = sshll.u32 %s193, 4
          %s202 = int_to_ptr.vmem [resolvable:$true] %s201
          %204 = dma.hbm_to_vmem [thread:$0]  %s200, 128, %s202, %s190
        $region28: #{mlp_forward.2} parent=15 // pred_fallthru
          _
      $region16: #{mlp_forward.2} parent=5 // pred_fallthru
        _
      %p205 = scmp.le.s32.totalorder 1, %s15
      %p206 = scmp.lt.s32.totalorder %s15, 5
      %p207 = pnand %p205, %p206
      %p208 = pneg %p207
      // Predicated region
      $region29: #{mlp_forward.2} parent=5 // pred_check
        _
      $region30: #{mlp_forward.2} parent=5 // pred_check_branch
        %210 = sbr.rel (%p207) target = $region32
      $region31: #{mlp_forward.2} parent=5 // pred_region
        %s211 = ssub.s32 %s15, 1
        %s212 = sand.u32 %s68, 1
        %s213 = scalar_lea.sflag [#allocation4], %s212
        %s214 = sand.u32 %s68, 1
        %s215 = smul.addr %s214, 8192
        %s216 = scalar_lea.vmem [#allocation3], %s215
        // Predicated region
        $region33: #{mlp_forward.2} parent=31 // pred_check
          %p217 = pneg %p81
        $region34: #{mlp_forward.2} parent=31 // pred_check_branch
          %219 = sbr.rel (%p217) target = $region36
        $region35: #{mlp_forward.2} parent=31 // pred_region
          %221 = dma.done %s213, 131072
        $region36: #{mlp_forward.2} parent=31 // pred_fallthru
          _
        %s222 = sand.u32 %s94, 1
        %s223 = scalar_lea.sflag [#allocation6], %s222
        %s224 = sand.u32 %s94, 1
        %s225 = smul.addr %s224, 8
        %s226 = scalar_lea.vmem [#allocation5], %s225
        // Predicated region
        $region37: #{mlp_forward.2} parent=31 // pred_check
          %p227 = pneg %p107
        $region38: #{mlp_forward.2} parent=31 // pred_check_branch
          %229 = sbr.rel (%p227) target = $region40
        $region39: #{mlp_forward.2} parent=31 // pred_region
          %231 = dma.done %s223, 128
        $region40: #{mlp_forward.2} parent=31 // pred_fallthru
          _
        %s232 = smul.u32 16, %s25
        %p233 = scmp.lt.s32.totalorder %s232, 31
        %s234 = scalar_select %p233, %s232, 31
        %s235 = smul.addr %s234, 4
        %s236 = scalar_lea.vmem %s0, %s235
        %p237 = pneg %p53
        %p238 = pneg %p50
        %s239 = sand.u32 %s68, 1
        %s240 = scalar_lea.sflag [#allocation4], %s239
        %s241 = sand.u32 %s68, 1
        %s242 = smul.addr %s241, 8192
        %s243 = scalar_lea.vmem [#allocation3], %s242
        %p244 = pneg %p81
        %p245 = pneg %p78
        %s246 = sand.u32 %s94, 1
        %s247 = scalar_lea.sflag [#allocation6], %s246
        %s248 = sand.u32 %s94, 1
        %s249 = smul.addr %s248, 8
        %s250 = scalar_lea.vmem [#allocation5], %s249
        %p251 = pneg %p107
        %p252 = pneg %p104
        %p253 = pneg %p133
        %p254 = pneg %p130
        %s255 = smul.u32 8, %s24
        %p256 = scmp.lt.s32.totalorder %s255, 15
        %s257 = scalar_select %p256, %s255, 15
        %s258 = smul.addr %s257, 4
        %s259 = scalar_lea.vmem %s3, %s258
        %s260 = smul.u32 16, %s25
        %p261 = scmp.lt.s32.totalorder %s260, 31
        %s262 = scalar_select %p261, %s260, 31
        %s263 = smul.addr %s262, 4
        %s264 = scalar_lea.vmem %s0, %s263
        %s265 = smul.u32 16, %s25
        %s266 = smul.u32 256, %s25
        %s267 = smul.u32 8, %s24
        %s268 = smul.u32 8, %s24
        %s269 = smul.u32 8, %s24
        %p270 = scmp.lt.s32.totalorder %s269, 15
        %s271 = scalar_select %p270, %s269, 15
        %s272 = smul.addr %s271, 4
        %s273 = scalar_lea.vmem %s3, %s272
        %s274 = smul.u32 8, %s24
        %p275 = scmp.eq.s32.totalorder %s25, 0
        // Predicated region
        $region41: #{mlp_forward.2} parent=31 // pred_check
          %p276 = pneg %p275
        $region42: #{mlp_forward.2} parent=31 // pred_check_branch
          %278 = sbr.rel (%p276) target = $region44
        $region43: #{mlp_forward.2} parent=31 // pred_region
          %279 = vst [vmem:[#allocation2] sm:$0xff] 0.0
          %280 = vst [vmem:[#allocation2 + $0x8] sm:$0xff] 0.0
          %281 = vst [vmem:[#allocation2 + $0x10] sm:$0xff] 0.0
          %282 = vst [vmem:[#allocation2 + $0x18] sm:$0xff] 0.0
          %283 = vst [vmem:[#allocation2 + $0x20] sm:$0xff] 0.0
          %284 = vst [vmem:[#allocation2 + $0x28] sm:$0xff] 0.0
          %285 = vst [vmem:[#allocation2 + $0x30] sm:$0xff] 0.0
          %286 = vst [vmem:[#allocation2 + $0x38] sm:$0xff] 0.0
        $region44: #{mlp_forward.2} parent=31 // pred_fallthru
          _
        %v287 = vld [vmem:[#allocation2] sm:$0xff]
        %v288 = vld [vmem:[#allocation2 + $0x8] sm:$0xff]
        %v289 = vld [vmem:[#allocation2 + $0x10] sm:$0xff]
        %v290 = vld [vmem:[#allocation2 + $0x18] sm:$0xff]
        %v291 = vld [vmem:[#allocation2 + $0x20] sm:$0xff]
        %v292 = vld [vmem:[#allocation2 + $0x28] sm:$0xff]
        %v293 = vld [vmem:[#allocation2 + $0x30] sm:$0xff]
        %v294 = vld [vmem:[#allocation2 + $0x38] sm:$0xff]
        %v295 = vld [vmem:[%s264] sm:$0xff]
        %v296 = vld [vmem:[%s264 + $0x8] sm:$0xff]
        %v297 = vld [vmem:[%s264 + $0x10] sm:$0xff]
        %v298 = vld [vmem:[%s264 + $0x18] sm:$0xff]
        %v299 = vld [vmem:[%s264 + $0x20] sm:$0xff]
        %v300 = vld [vmem:[%s264 + $0x28] sm:$0xff]
        %v301 = vld [vmem:[%s264 + $0x30] sm:$0xff]
        %v302 = vld [vmem:[%s264 + $0x38] sm:$0xff]
        %v303 = vld [vmem:[%s216] sm:$0xff]
        %v304 = vld [vmem:[%s216 + $0x8] sm:$0xff]
        %v305 = vld [vmem:[%s216 + $0x10] sm:$0xff]
        %v306 = vld [vmem:[%s216 + $0x18] sm:$0xff]
        %v307 = vld [vmem:[%s216 + $0x20] sm:$0xff]
        %v308 = vld [vmem:[%s216 + $0x28] sm:$0xff]
        %v309 = vld [vmem:[%s216 + $0x30] sm:$0xff]
        %v310 = vld [vmem:[%s216 + $0x38] sm:$0xff]
        %v311 = vld [vmem:[%s216 + $0x40] sm:$0xff]
        %v312 = vld [vmem:[%s216 + $0x48] sm:$0xff]
        %v313 = vld [vmem:[%s216 + $0x50] sm:$0xff]
        %v314 = vld [vmem:[%s216 + $0x58] sm:$0xff]
        %v315 = vld [vmem:[%s216 + $0x60] sm:$0xff]
        %v316 = vld [vmem:[%s216 + $0x68] sm:$0xff]
        %v317 = vld [vmem:[%s216 + $0x70] sm:$0xff]
        %v318 = vld [vmem:[%s216 + $0x78] sm:$0xff]
        %v319 = vld [vmem:[%s216 + $0x80] sm:$0xff]
        %v320 = vld [vmem:[%s216 + $0x88] sm:$0xff]
        %v321 = vld [vmem:[%s216 + $0x90] sm:$0xff]
        %v322 = vld [vmem:[%s216 + $0x98] sm:$0xff]
        %v323 = vld [vmem:[%s216 + $0xa0] sm:$0xff]
        %v324 = vld [vmem:[%s216 + $0xa8] sm:$0xff]
        %v325 = vld [vmem:[%s216 + $0xb0] sm:$0xff]
        %v326 = vld [vmem:[%s216 + $0xb8] sm:$0xff]
        %v327 = vld [vmem:[%s216 + $0xc0] sm:$0xff]
        %v328 = vld [vmem:[%s216 + $0xc8] sm:$0xff]
        %v329 = vld [vmem:[%s216 + $0xd0] sm:$0xff]
        %v330 = vld [vmem:[%s216 + $0xd8] sm:$0xff]
        %v331 = vld [vmem:[%s216 + $0xe0] sm:$0xff]
        %v332 = vld [vmem:[%s216 + $0xe8] sm:$0xff]
        %v333 = vld [vmem:[%s216 + $0xf0] sm:$0xff]
        %v334 = vld [vmem:[%s216 + $0xf8] sm:$0xff]
        %v335 = vld [vmem:[%s216 + $0x100] sm:$0xff]
        %v336 = vld [vmem:[%s216 + $0x108] sm:$0xff]
        %v337 = vld [vmem:[%s216 + $0x110] sm:$0xff]
        %v338 = vld [vmem:[%s216 + $0x118] sm:$0xff]
        %v339 = vld [vmem:[%s216 + $0x120] sm:$0xff]
        %v340 = vld [vmem:[%s216 + $0x128] sm:$0xff]
        %v341 = vld [vmem:[%s216 + $0x130] sm:$0xff]
        %v342 = vld [vmem:[%s216 + $0x138] sm:$0xff]
        %v343 = vld [vmem:[%s216 + $0x140] sm:$0xff]
        %v344 = vld [vmem:[%s216 + $0x148] sm:$0xff]
        %v345 = vld [vmem:[%s216 + $0x150] sm:$0xff]
        %v346 = vld [vmem:[%s216 + $0x158] sm:$0xff]
        %v347 = vld [vmem:[%s216 + $0x160] sm:$0xff]
        %v348 = vld [vmem:[%s216 + $0x168] sm:$0xff]
        %v349 = vld [vmem:[%s216 + $0x170] sm:$0xff]
        %v350 = vld [vmem:[%s216 + $0x178] sm:$0xff]
        %v351 = vld [vmem:[%s216 + $0x180] sm:$0xff]
        %v352 = vld [vmem:[%s216 + $0x188] sm:$0xff]
        %v353 = vld [vmem:[%s216 + $0x190] sm:$0xff]
        %v354 = vld [vmem:[%s216 + $0x198] sm:$0xff]
        %v355 = vld [vmem:[%s216 + $0x1a0] sm:$0xff]
        %v356 = vld [vmem:[%s216 + $0x1a8] sm:$0xff]
        %v357 = vld [vmem:[%s216 + $0x1b0] sm:$0xff]
        %v358 = vld [vmem:[%s216 + $0x1b8] sm:$0xff]
        %v359 = vld [vmem:[%s216 + $0x1c0] sm:$0xff]
        %v360 = vld [vmem:[%s216 + $0x1c8] sm:$0xff]
        %v361 = vld [vmem:[%s216 + $0x1d0] sm:$0xff]
        %v362 = vld [vmem:[%s216 + $0x1d8] sm:$0xff]
        %v363 = vld [vmem:[%s216 + $0x1e0] sm:$0xff]
        %v364 = vld [vmem:[%s216 + $0x1e8] sm:$0xff]
        %v365 = vld [vmem:[%s216 + $0x1f0] sm:$0xff]
        %v366 = vld [vmem:[%s216 + $0x1f8] sm:$0xff]
        %v367 = vld [vmem:[%s216 + $0x200] sm:$0xff]
        %v368 = vld [vmem:[%s216 + $0x208] sm:$0xff]
        %v369 = vld [vmem:[%s216 + $0x210] sm:$0xff]
        %v370 = vld [vmem:[%s216 + $0x218] sm:$0xff]
        %v371 = vld [vmem:[%s216 + $0x220] sm:$0xff]
        %v372 = vld [vmem:[%s216 + $0x228] sm:$0xff]
        %v373 = vld [vmem:[%s216 + $0x230] sm:$0xff]
        %v374 = vld [vmem:[%s216 + $0x238] sm:$0xff]
        %v375 = vld [vmem:[%s216 + $0x240] sm:$0xff]
        %v376 = vld [vmem:[%s216 + $0x248] sm:$0xff]
        %v377 = vld [vmem:[%s216 + $0x250] sm:$0xff]
        %v378 = vld [vmem:[%s216 + $0x258] sm:$0xff]
        %v379 = vld [vmem:[%s216 + $0x260] sm:$0xff]
        %v380 = vld [vmem:[%s216 + $0x268] sm:$0xff]
        %v381 = vld [vmem:[%s216 + $0x270] sm:$0xff]
        %v382 = vld [vmem:[%s216 + $0x278] sm:$0xff]
        %v383 = vld [vmem:[%s216 + $0x280] sm:$0xff]
        %v384 = vld [vmem:[%s216 + $0x288] sm:$0xff]
        %v385 = vld [vmem:[%s216 + $0x290] sm:$0xff]
        %v386 = vld [vmem:[%s216 + $0x298] sm:$0xff]
        %v387 = vld [vmem:[%s216 + $0x2a0] sm:$0xff]
        %v388 = vld [vmem:[%s216 + $0x2a8] sm:$0xff]
        %v389 = vld [vmem:[%s216 + $0x2b0] sm:$0xff]
        %v390 = vld [vmem:[%s216 + $0x2b8] sm:$0xff]
        %v391 = vld [vmem:[%s216 + $0x2c0] sm:$0xff]
        %v392 = vld [vmem:[%s216 + $0x2c8] sm:$0xff]
        %v393 = vld [vmem:[%s216 + $0x2d0] sm:$0xff]
        %v394 = vld [vmem:[%s216 + $0x2d8] sm:$0xff]
        %v395 = vld [vmem:[%s216 + $0x2e0] sm:$0xff]
        %v396 = vld [vmem:[%s216 + $0x2e8] sm:$0xff]
        %v397 = vld [vmem:[%s216 + $0x2f0] sm:$0xff]
        %v398 = vld [vmem:[%s216 + $0x2f8] sm:$0xff]
        %v399 = vld [vmem:[%s216 + $0x300] sm:$0xff]
        %v400 = vld [vmem:[%s216 + $0x308] sm:$0xff]
        %v401 = vld [vmem:[%s216 + $0x310] sm:$0xff]
        %v402 = vld [vmem:[%s216 + $0x318] sm:$0xff]
        %v403 = vld [vmem:[%s216 + $0x320] sm:$0xff]
        %v404 = vld [vmem:[%s216 + $0x328] sm:$0xff]
        %v405 = vld [vmem:[%s216 + $0x330] sm:$0xff]
        %v406 = vld [vmem:[%s216 + $0x338] sm:$0xff]
        %v407 = vld [vmem:[%s216 + $0x340] sm:$0xff]
        %v408 = vld [vmem:[%s216 + $0x348] sm:$0xff]
        %v409 = vld [vmem:[%s216 + $0x350] sm:$0xff]
        %v410 = vld [vmem:[%s216 + $0x358] sm:$0xff]
        %v411 = vld [vmem:[%s216 + $0x360] sm:$0xff]
        %v412 = vld [vmem:[%s216 + $0x368] sm:$0xff]
        %v413 = vld [vmem:[%s216 + $0x370] sm:$0xff]
        %v414 = vld [vmem:[%s216 + $0x378] sm:$0xff]
        %v415 = vld [vmem:[%s216 + $0x380] sm:$0xff]
        %v416 = vld [vmem:[%s216 + $0x388] sm:$0xff]
        %v417 = vld [vmem:[%s216 + $0x390] sm:$0xff]
        %v418 = vld [vmem:[%s216 + $0x398] sm:$0xff]
        %v419 = vld [vmem:[%s216 + $0x3a0] sm:$0xff]
        %v420 = vld [vmem:[%s216 + $0x3a8] sm:$0xff]
        %v421 = vld [vmem:[%s216 + $0x3b0] sm:$0xff]
        %v422 = vld [vmem:[%s216 + $0x3b8] sm:$0xff]
        %v423 = vld [vmem:[%s216 + $0x3c0] sm:$0xff]
        %v424 = vld [vmem:[%s216 + $0x3c8] sm:$0xff]
        %v425 = vld [vmem:[%s216 + $0x3d0] sm:$0xff]
        %v426 = vld [vmem:[%s216 + $0x3d8] sm:$0xff]
        %v427 = vld [vmem:[%s216 + $0x3e0] sm:$0xff]
        %v428 = vld [vmem:[%s216 + $0x3e8] sm:$0xff]
        %v429 = vld [vmem:[%s216 + $0x3f0] sm:$0xff]
        %v430 = vld [vmem:[%s216 + $0x3f8] sm:$0xff]
        %v431 = vld [vmem:[%s216 + $0x400] sm:$0xff]
        %v432 = vld [vmem:[%s216 + $0x408] sm:$0xff]
        %v433 = vld [vmem:[%s216 + $0x410] sm:$0xff]
        %v434 = vld [vmem:[%s216 + $0x418] sm:$0xff]
        %v435 = vld [vmem:[%s216 + $0x420] sm:$0xff]
        %v436 = vld [vmem:[%s216 + $0x428] sm:$0xff]
        %v437 = vld [vmem:[%s216 + $0x430] sm:$0xff]
        %v438 = vld [vmem:[%s216 + $0x438] sm:$0xff]
        %v439 = vld [vmem:[%s216 + $0x440] sm:$0xff]
        %v440 = vld [vmem:[%s216 + $0x448] sm:$0xff]
        %v441 = vld [vmem:[%s216 + $0x450] sm:$0xff]
        %v442 = vld [vmem:[%s216 + $0x458] sm:$0xff]
        %v443 = vld [vmem:[%s216 + $0x460] sm:$0xff]
        %v444 = vld [vmem:[%s216 + $0x468] sm:$0xff]
        %v445 = vld [vmem:[%s216 + $0x470] sm:$0xff]
        %v446 = vld [vmem:[%s216 + $0x478] sm:$0xff]
        %v447 = vld [vmem:[%s216 + $0x480] sm:$0xff]
        %v448 = vld [vmem:[%s216 + $0x488] sm:$0xff]
        %v449 = vld [vmem:[%s216 + $0x490] sm:$0xff]
        %v450 = vld [vmem:[%s216 + $0x498] sm:$0xff]
        %v451 = vld [vmem:[%s216 + $0x4a0] sm:$0xff]
        %v452 = vld [vmem:[%s216 + $0x4a8] sm:$0xff]
        %v453 = vld [vmem:[%s216 + $0x4b0] sm:$0xff]
        %v454 = vld [vmem:[%s216 + $0x4b8] sm:$0xff]
        %v455 = vld [vmem:[%s216 + $0x4c0] sm:$0xff]
        %v456 = vld [vmem:[%s216 + $0x4c8] sm:$0xff]
        %v457 = vld [vmem:[%s216 + $0x4d0] sm:$0xff]
        %v458 = vld [vmem:[%s216 + $0x4d8] sm:$0xff]
        %v459 = vld [vmem:[%s216 + $0x4e0] sm:$0xff]
        %v460 = vld [vmem:[%s216 + $0x4e8] sm:$0xff]
        %v461 = vld [vmem:[%s216 + $0x4f0] sm:$0xff]
        %v462 = vld [vmem:[%s216 + $0x4f8] sm:$0xff]
        %v463 = vld [vmem:[%s216 + $0x500] sm:$0xff]
        %v464 = vld [vmem:[%s216 + $0x508] sm:$0xff]
        %v465 = vld [vmem:[%s216 + $0x510] sm:$0xff]
        %v466 = vld [vmem:[%s216 + $0x518] sm:$0xff]
        %v467 = vld [vmem:[%s216 + $0x520] sm:$0xff]
        %v468 = vld [vmem:[%s216 + $0x528] sm:$0xff]
        %v469 = vld [vmem:[%s216 + $0x530] sm:$0xff]
        %v470 = vld [vmem:[%s216 + $0x538] sm:$0xff]
        %v471 = vld [vmem:[%s216 + $0x540] sm:$0xff]
        %v472 = vld [vmem:[%s216 + $0x548] sm:$0xff]
        %v473 = vld [vmem:[%s216 + $0x550] sm:$0xff]
        %v474 = vld [vmem:[%s216 + $0x558] sm:$0xff]
        %v475 = vld [vmem:[%s216 + $0x560] sm:$0xff]
        %v476 = vld [vmem:[%s216 + $0x568] sm:$0xff]
        %v477 = vld [vmem:[%s216 + $0x570] sm:$0xff]
        %v478 = vld [vmem:[%s216 + $0x578] sm:$0xff]
        %v479 = vld [vmem:[%s216 + $0x580] sm:$0xff]
        %v480 = vld [vmem:[%s216 + $0x588] sm:$0xff]
        %v481 = vld [vmem:[%s216 + $0x590] sm:$0xff]
        %v482 = vld [vmem:[%s216 + $0x598] sm:$0xff]
        %v483 = vld [vmem:[%s216 + $0x5a0] sm:$0xff]
        %v484 = vld [vmem:[%s216 + $0x5a8] sm:$0xff]
        %v485 = vld [vmem:[%s216 + $0x5b0] sm:$0xff]
        %v486 = vld [vmem:[%s216 + $0x5b8] sm:$0xff]
        %v487 = vld [vmem:[%s216 + $0x5c0] sm:$0xff]
        %v488 = vld [vmem:[%s216 + $0x5c8] sm:$0xff]
        %v489 = vld [vmem:[%s216 + $0x5d0] sm:$0xff]
        %v490 = vld [vmem:[%s216 + $0x5d8] sm:$0xff]
        %v491 = vld [vmem:[%s216 + $0x5e0] sm:$0xff]
        %v492 = vld [vmem:[%s216 + $0x5e8] sm:$0xff]
        %v493 = vld [vmem:[%s216 + $0x5f0] sm:$0xff]
        %v494 = vld [vmem:[%s216 + $0x5f8] sm:$0xff]
        %v495 = vld [vmem:[%s216 + $0x600] sm:$0xff]
        %v496 = vld [vmem:[%s216 + $0x608] sm:$0xff]
        %v497 = vld [vmem:[%s216 + $0x610] sm:$0xff]
        %v498 = vld [vmem:[%s216 + $0x618] sm:$0xff]
        %v499 = vld [vmem:[%s216 + $0x620] sm:$0xff]
        %v500 = vld [vmem:[%s216 + $0x628] sm:$0xff]
        %v501 = vld [vmem:[%s216 + $0x630] sm:$0xff]
        %v502 = vld [vmem:[%s216 + $0x638] sm:$0xff]
        %v503 = vld [vmem:[%s216 + $0x640] sm:$0xff]
        %v504 = vld [vmem:[%s216 + $0x648] sm:$0xff]
        %v505 = vld [vmem:[%s216 + $0x650] sm:$0xff]
        %v506 = vld [vmem:[%s216 + $0x658] sm:$0xff]
        %v507 = vld [vmem:[%s216 + $0x660] sm:$0xff]
        %v508 = vld [vmem:[%s216 + $0x668] sm:$0xff]
        %v509 = vld [vmem:[%s216 + $0x670] sm:$0xff]
        %v510 = vld [vmem:[%s216 + $0x678] sm:$0xff]
        %v511 = vld [vmem:[%s216 + $0x680] sm:$0xff]
        %v512 = vld [vmem:[%s216 + $0x688] sm:$0xff]
        %v513 = vld [vmem:[%s216 + $0x690] sm:$0xff]
        %v514 = vld [vmem:[%s216 + $0x698] sm:$0xff]
        %v515 = vld [vmem:[%s216 + $0x6a0] sm:$0xff]
        %v516 = vld [vmem:[%s216 + $0x6a8] sm:$0xff]
        %v517 = vld [vmem:[%s216 + $0x6b0] sm:$0xff]
        %v518 = vld [vmem:[%s216 + $0x6b8] sm:$0xff]
        %v519 = vld [vmem:[%s216 + $0x6c0] sm:$0xff]
        %v520 = vld [vmem:[%s216 + $0x6c8] sm:$0xff]
        %v521 = vld [vmem:[%s216 + $0x6d0] sm:$0xff]
        %v522 = vld [vmem:[%s216 + $0x6d8] sm:$0xff]
        %v523 = vld [vmem:[%s216 + $0x6e0] sm:$0xff]
        %v524 = vld [vmem:[%s216 + $0x6e8] sm:$0xff]
        %v525 = vld [vmem:[%s216 + $0x6f0] sm:$0xff]
        %v526 = vld [vmem:[%s216 + $0x6f8] sm:$0xff]
        %v527 = vld [vmem:[%s216 + $0x700] sm:$0xff]
        %v528 = vld [vmem:[%s216 + $0x708] sm:$0xff]
        %v529 = vld [vmem:[%s216 + $0x710] sm:$0xff]
        %v530 = vld [vmem:[%s216 + $0x718] sm:$0xff]
        %v531 = vld [vmem:[%s216 + $0x720] sm:$0xff]
        %v532 = vld [vmem:[%s216 + $0x728] sm:$0xff]
        %v533 = vld [vmem:[%s216 + $0x730] sm:$0xff]
        %v534 = vld [vmem:[%s216 + $0x738] sm:$0xff]
        %v535 = vld [vmem:[%s216 + $0x740] sm:$0xff]
        %v536 = vld [vmem:[%s216 + $0x748] sm:$0xff]
        %v537 = vld [vmem:[%s216 + $0x750] sm:$0xff]
        %v538 = vld [vmem:[%s216 + $0x758] sm:$0xff]
        %v539 = vld [vmem:[%s216 + $0x760] sm:$0xff]
        %v540 = vld [vmem:[%s216 + $0x768] sm:$0xff]
        %v541 = vld [vmem:[%s216 + $0x770] sm:$0xff]
        %v542 = vld [vmem:[%s216 + $0x778] sm:$0xff]
        %v543 = vld [vmem:[%s216 + $0x780] sm:$0xff]
        %v544 = vld [vmem:[%s216 + $0x788] sm:$0xff]
        %v545 = vld [vmem:[%s216 + $0x790] sm:$0xff]
        %v546 = vld [vmem:[%s216 + $0x798] sm:$0xff]
        %v547 = vld [vmem:[%s216 + $0x7a0] sm:$0xff]
        %v548 = vld [vmem:[%s216 + $0x7a8] sm:$0xff]
        %v549 = vld [vmem:[%s216 + $0x7b0] sm:$0xff]
        %v550 = vld [vmem:[%s216 + $0x7b8] sm:$0xff]
        %v551 = vld [vmem:[%s216 + $0x7c0] sm:$0xff]
        %v552 = vld [vmem:[%s216 + $0x7c8] sm:$0xff]
        %v553 = vld [vmem:[%s216 + $0x7d0] sm:$0xff]
        %v554 = vld [vmem:[%s216 + $0x7d8] sm:$0xff]
        %v555 = vld [vmem:[%s216 + $0x7e0] sm:$0xff]
        %v556 = vld [vmem:[%s216 + $0x7e8] sm:$0xff]
        %v557 = vld [vmem:[%s216 + $0x7f0] sm:$0xff]
        %v558 = vld [vmem:[%s216 + $0x7f8] sm:$0xff]
        %v559 = vld [vmem:[%s216 + $0x800] sm:$0xff]
        %v560 = vld [vmem:[%s216 + $0x808] sm:$0xff]
        %v561 = vld [vmem:[%s216 + $0x810] sm:$0xff]
        %v562 = vld [vmem:[%s216 + $0x818] sm:$0xff]
        %v563 = vld [vmem:[%s216 + $0x820] sm:$0xff]
        %v564 = vld [vmem:[%s216 + $0x828] sm:$0xff]
        %v565 = vld [vmem:[%s216 + $0x830] sm:$0xff]
        %v566 = vld [vmem:[%s216 + $0x838] sm:$0xff]
        %v567 = vld [vmem:[%s216 + $0x840] sm:$0xff]
        %v568 = vld [vmem:[%s216 + $0x848] sm:$0xff]
        %v569 = vld [vmem:[%s216 + $0x850] sm:$0xff]
        %v570 = vld [vmem:[%s216 + $0x858] sm:$0xff]
        %v571 = vld [vmem:[%s216 + $0x860] sm:$0xff]
        %v572 = vld [vmem:[%s216 + $0x868] sm:$0xff]
        %v573 = vld [vmem:[%s216 + $0x870] sm:$0xff]
        %v574 = vld [vmem:[%s216 + $0x878] sm:$0xff]
        %v575 = vld [vmem:[%s216 + $0x880] sm:$0xff]
        %v576 = vld [vmem:[%s216 + $0x888] sm:$0xff]
        %v577 = vld [vmem:[%s216 + $0x890] sm:$0xff]
        %v578 = vld [vmem:[%s216 + $0x898] sm:$0xff]
        %v579 = vld [vmem:[%s216 + $0x8a0] sm:$0xff]
        %v580 = vld [vmem:[%s216 + $0x8a8] sm:$0xff]
        %v581 = vld [vmem:[%s216 + $0x8b0] sm:$0xff]
        %v582 = vld [vmem:[%s216 + $0x8b8] sm:$0xff]
        %v583 = vld [vmem:[%s216 + $0x8c0] sm:$0xff]
        %v584 = vld [vmem:[%s216 + $0x8c8] sm:$0xff]
        %v585 = vld [vmem:[%s216 + $0x8d0] sm:$0xff]
        %v586 = vld [vmem:[%s216 + $0x8d8] sm:$0xff]
        %v587 = vld [vmem:[%s216 + $0x8e0] sm:$0xff]
        %v588 = vld [vmem:[%s216 + $0x8e8] sm:$0xff]
        %v589 = vld [vmem:[%s216 + $0x8f0] sm:$0xff]
        %v590 = vld [vmem:[%s216 + $0x8f8] sm:$0xff]
        %v591 = vld [vmem:[%s216 + $0x900] sm:$0xff]
        %v592 = vld [vmem:[%s216 + $0x908] sm:$0xff]
        %v593 = vld [vmem:[%s216 + $0x910] sm:$0xff]
        %v594 = vld [vmem:[%s216 + $0x918] sm:$0xff]
        %v595 = vld [vmem:[%s216 + $0x920] sm:$0xff]
        %v596 = vld [vmem:[%s216 + $0x928] sm:$0xff]
        %v597 = vld [vmem:[%s216 + $0x930] sm:$0xff]
        %v598 = vld [vmem:[%s216 + $0x938] sm:$0xff]
        %v599 = vld [vmem:[%s216 + $0x940] sm:$0xff]
        %v600 = vld [vmem:[%s216 + $0x948] sm:$0xff]
        %v601 = vld [vmem:[%s216 + $0x950] sm:$0xff]
        %v602 = vld [vmem:[%s216 + $0x958] sm:$0xff]
        %v603 = vld [vmem:[%s216 + $0x960] sm:$0xff]
        %v604 = vld [vmem:[%s216 + $0x968] sm:$0xff]
        %v605 = vld [vmem:[%s216 + $0x970] sm:$0xff]
        %v606 = vld [vmem:[%s216 + $0x978] sm:$0xff]
        %v607 = vld [vmem:[%s216 + $0x980] sm:$0xff]
        %v608 = vld [vmem:[%s216 + $0x988] sm:$0xff]
        %v609 = vld [vmem:[%s216 + $0x990] sm:$0xff]
        %v610 = vld [vmem:[%s216 + $0x998] sm:$0xff]
        %v611 = vld [vmem:[%s216 + $0x9a0] sm:$0xff]
        %v612 = vld [vmem:[%s216 + $0x9a8] sm:$0xff]
        %v613 = vld [vmem:[%s216 + $0x9b0] sm:$0xff]
        %v614 = vld [vmem:[%s216 + $0x9b8] sm:$0xff]
        %v615 = vld [vmem:[%s216 + $0x9c0] sm:$0xff]
        %v616 = vld [vmem:[%s216 + $0x9c8] sm:$0xff]
        %v617 = vld [vmem:[%s216 + $0x9d0] sm:$0xff]
        %v618 = vld [vmem:[%s216 + $0x9d8] sm:$0xff]
        %v619 = vld [vmem:[%s216 + $0x9e0] sm:$0xff]
        %v620 = vld [vmem:[%s216 + $0x9e8] sm:$0xff]
        %v621 = vld [vmem:[%s216 + $0x9f0] sm:$0xff]
        %v622 = vld [vmem:[%s216 + $0x9f8] sm:$0xff]
        %v623 = vld [vmem:[%s216 + $0xa00] sm:$0xff]
        %v624 = vld [vmem:[%s216 + $0xa08] sm:$0xff]
        %v625 = vld [vmem:[%s216 + $0xa10] sm:$0xff]
        %v626 = vld [vmem:[%s216 + $0xa18] sm:$0xff]
        %v627 = vld [vmem:[%s216 + $0xa20] sm:$0xff]
        %v628 = vld [vmem:[%s216 + $0xa28] sm:$0xff]
        %v629 = vld [vmem:[%s216 + $0xa30] sm:$0xff]
        %v630 = vld [vmem:[%s216 + $0xa38] sm:$0xff]
        %v631 = vld [vmem:[%s216 + $0xa40] sm:$0xff]
        %v632 = vld [vmem:[%s216 + $0xa48] sm:$0xff]
        %v633 = vld [vmem:[%s216 + $0xa50] sm:$0xff]
        %v634 = vld [vmem:[%s216 + $0xa58] sm:$0xff]
        %v635 = vld [vmem:[%s216 + $0xa60] sm:$0xff]
        %v636 = vld [vmem:[%s216 + $0xa68] sm:$0xff]
        %v637 = vld [vmem:[%s216 + $0xa70] sm:$0xff]
        %v638 = vld [vmem:[%s216 + $0xa78] sm:$0xff]
        %v639 = vld [vmem:[%s216 + $0xa80] sm:$0xff]
        %v640 = vld [vmem:[%s216 + $0xa88] sm:$0xff]
        %v641 = vld [vmem:[%s216 + $0xa90] sm:$0xff]
        %v642 = vld [vmem:[%s216 + $0xa98] sm:$0xff]
        %v643 = vld [vmem:[%s216 + $0xaa0] sm:$0xff]
        %v644 = vld [vmem:[%s216 + $0xaa8] sm:$0xff]
        %v645 = vld [vmem:[%s216 + $0xab0] sm:$0xff]
        %v646 = vld [vmem:[%s216 + $0xab8] sm:$0xff]
        %v647 = vld [vmem:[%s216 + $0xac0] sm:$0xff]
        %v648 = vld [vmem:[%s216 + $0xac8] sm:$0xff]
        %v649 = vld [vmem:[%s216 + $0xad0] sm:$0xff]
        %v650 = vld [vmem:[%s216 + $0xad8] sm:$0xff]
        %v651 = vld [vmem:[%s216 + $0xae0] sm:$0xff]
        %v652 = vld [vmem:[%s216 + $0xae8] sm:$0xff]
        %v653 = vld [vmem:[%s216 + $0xaf0] sm:$0xff]
        %v654 = vld [vmem:[%s216 + $0xaf8] sm:$0xff]
        %v655 = vld [vmem:[%s216 + $0xb00] sm:$0xff]
        %v656 = vld [vmem:[%s216 + $0xb08] sm:$0xff]
        %v657 = vld [vmem:[%s216 + $0xb10] sm:$0xff]
        %v658 = vld [vmem:[%s216 + $0xb18] sm:$0xff]
        %v659 = vld [vmem:[%s216 + $0xb20] sm:$0xff]
        %v660 = vld [vmem:[%s216 + $0xb28] sm:$0xff]
        %v661 = vld [vmem:[%s216 + $0xb30] sm:$0xff]
        %v662 = vld [vmem:[%s216 + $0xb38] sm:$0xff]
        %v663 = vld [vmem:[%s216 + $0xb40] sm:$0xff]
        %v664 = vld [vmem:[%s216 + $0xb48] sm:$0xff]
        %v665 = vld [vmem:[%s216 + $0xb50] sm:$0xff]
        %v666 = vld [vmem:[%s216 + $0xb58] sm:$0xff]
        %v667 = vld [vmem:[%s216 + $0xb60] sm:$0xff]
        %v668 = vld [vmem:[%s216 + $0xb68] sm:$0xff]
        %v669 = vld [vmem:[%s216 + $0xb70] sm:$0xff]
        %v670 = vld [vmem:[%s216 + $0xb78] sm:$0xff]
        %v671 = vld [vmem:[%s216 + $0xb80] sm:$0xff]
        %v672 = vld [vmem:[%s216 + $0xb88] sm:$0xff]
        %v673 = vld [vmem:[%s216 + $0xb90] sm:$0xff]
        %v674 = vld [vmem:[%s216 + $0xb98] sm:$0xff]
        %v675 = vld [vmem:[%s216 + $0xba0] sm:$0xff]
        %v676 = vld [vmem:[%s216 + $0xba8] sm:$0xff]
        %v677 = vld [vmem:[%s216 + $0xbb0] sm:$0xff]
        %v678 = vld [vmem:[%s216 + $0xbb8] sm:$0xff]
        %v679 = vld [vmem:[%s216 + $0xbc0] sm:$0xff]
        %v680 = vld [vmem:[%s216 + $0xbc8] sm:$0xff]
        %v681 = vld [vmem:[%s216 + $0xbd0] sm:$0xff]
        %v682 = vld [vmem:[%s216 + $0xbd8] sm:$0xff]
        %v683 = vld [vmem:[%s216 + $0xbe0] sm:$0xff]
        %v684 = vld [vmem:[%s216 + $0xbe8] sm:$0xff]
        %v685 = vld [vmem:[%s216 + $0xbf0] sm:$0xff]
        %v686 = vld [vmem:[%s216 + $0xbf8] sm:$0xff]
        %v687 = vld [vmem:[%s216 + $0xc00] sm:$0xff]
        %v688 = vld [vmem:[%s216 + $0xc08] sm:$0xff]
        %v689 = vld [vmem:[%s216 + $0xc10] sm:$0xff]
        %v690 = vld [vmem:[%s216 + $0xc18] sm:$0xff]
        %v691 = vld [vmem:[%s216 + $0xc20] sm:$0xff]
        %v692 = vld [vmem:[%s216 + $0xc28] sm:$0xff]
        %v693 = vld [vmem:[%s216 + $0xc30] sm:$0xff]
        %v694 = vld [vmem:[%s216 + $0xc38] sm:$0xff]
        %v695 = vld [vmem:[%s216 + $0xc40] sm:$0xff]
        %v696 = vld [vmem:[%s216 + $0xc48] sm:$0xff]
        %v697 = vld [vmem:[%s216 + $0xc50] sm:$0xff]
        %v698 = vld [vmem:[%s216 + $0xc58] sm:$0xff]
        %v699 = vld [vmem:[%s216 + $0xc60] sm:$0xff]
        %v700 = vld [vmem:[%s216 + $0xc68] sm:$0xff]
        %v701 = vld [vmem:[%s216 + $0xc70] sm:$0xff]
        %v702 = vld [vmem:[%s216 + $0xc78] sm:$0xff]
        %v703 = vld [vmem:[%s216 + $0xc80] sm:$0xff]
        %v704 = vld [vmem:[%s216 + $0xc88] sm:$0xff]
        %v705 = vld [vmem:[%s216 + $0xc90] sm:$0xff]
        %v706 = vld [vmem:[%s216 + $0xc98] sm:$0xff]
        %v707 = vld [vmem:[%s216 + $0xca0] sm:$0xff]
        %v708 = vld [vmem:[%s216 + $0xca8] sm:$0xff]
        %v709 = vld [vmem:[%s216 + $0xcb0] sm:$0xff]
        %v710 = vld [vmem:[%s216 + $0xcb8] sm:$0xff]
        %v711 = vld [vmem:[%s216 + $0xcc0] sm:$0xff]
        %v712 = vld [vmem:[%s216 + $0xcc8] sm:$0xff]
        %v713 = vld [vmem:[%s216 + $0xcd0] sm:$0xff]
        %v714 = vld [vmem:[%s216 + $0xcd8] sm:$0xff]
        %v715 = vld [vmem:[%s216 + $0xce0] sm:$0xff]
        %v716 = vld [vmem:[%s216 + $0xce8] sm:$0xff]
        %v717 = vld [vmem:[%s216 + $0xcf0] sm:$0xff]
        %v718 = vld [vmem:[%s216 + $0xcf8] sm:$0xff]
        %v719 = vld [vmem:[%s216 + $0xd00] sm:$0xff]
        %v720 = vld [vmem:[%s216 + $0xd08] sm:$0xff]
        %v721 = vld [vmem:[%s216 + $0xd10] sm:$0xff]
        %v722 = vld [vmem:[%s216 + $0xd18] sm:$0xff]
        %v723 = vld [vmem:[%s216 + $0xd20] sm:$0xff]
        %v724 = vld [vmem:[%s216 + $0xd28] sm:$0xff]
        %v725 = vld [vmem:[%s216 + $0xd30] sm:$0xff]
        %v726 = vld [vmem:[%s216 + $0xd38] sm:$0xff]
        %v727 = vld [vmem:[%s216 + $0xd40] sm:$0xff]
        %v728 = vld [vmem:[%s216 + $0xd48] sm:$0xff]
        %v729 = vld [vmem:[%s216 + $0xd50] sm:$0xff]
        %v730 = vld [vmem:[%s216 + $0xd58] sm:$0xff]
        %v731 = vld [vmem:[%s216 + $0xd60] sm:$0xff]
        %v732 = vld [vmem:[%s216 + $0xd68] sm:$0xff]
        %v733 = vld [vmem:[%s216 + $0xd70] sm:$0xff]
        %v734 = vld [vmem:[%s216 + $0xd78] sm:$0xff]
        %v735 = vld [vmem:[%s216 + $0xd80] sm:$0xff]
        %v736 = vld [vmem:[%s216 + $0xd88] sm:$0xff]
        %v737 = vld [vmem:[%s216 + $0xd90] sm:$0xff]
        %v738 = vld [vmem:[%s216 + $0xd98] sm:$0xff]
        %v739 = vld [vmem:[%s216 + $0xda0] sm:$0xff]
        %v740 = vld [vmem:[%s216 + $0xda8] sm:$0xff]
        %v741 = vld [vmem:[%s216 + $0xdb0] sm:$0xff]
        %v742 = vld [vmem:[%s216 + $0xdb8] sm:$0xff]
        %v743 = vld [vmem:[%s216 + $0xdc0] sm:$0xff]
        %v744 = vld [vmem:[%s216 + $0xdc8] sm:$0xff]
        %v745 = vld [vmem:[%s216 + $0xdd0] sm:$0xff]
        %v746 = vld [vmem:[%s216 + $0xdd8] sm:$0xff]
        %v747 = vld [vmem:[%s216 + $0xde0] sm:$0xff]
        %v748 = vld [vmem:[%s216 + $0xde8] sm:$0xff]
        %v749 = vld [vmem:[%s216 + $0xdf0] sm:$0xff]
        %v750 = vld [vmem:[%s216 + $0xdf8] sm:$0xff]
        %v751 = vld [vmem:[%s216 + $0xe00] sm:$0xff]
        %v752 = vld [vmem:[%s216 + $0xe08] sm:$0xff]
        %v753 = vld [vmem:[%s216 + $0xe10] sm:$0xff]
        %v754 = vld [vmem:[%s216 + $0xe18] sm:$0xff]
        %v755 = vld [vmem:[%s216 + $0xe20] sm:$0xff]
        %v756 = vld [vmem:[%s216 + $0xe28] sm:$0xff]
        %v757 = vld [vmem:[%s216 + $0xe30] sm:$0xff]
        %v758 = vld [vmem:[%s216 + $0xe38] sm:$0xff]
        %v759 = vld [vmem:[%s216 + $0xe40] sm:$0xff]
        %v760 = vld [vmem:[%s216 + $0xe48] sm:$0xff]
        %v761 = vld [vmem:[%s216 + $0xe50] sm:$0xff]
        %v762 = vld [vmem:[%s216 + $0xe58] sm:$0xff]
        %v763 = vld [vmem:[%s216 + $0xe60] sm:$0xff]
        %v764 = vld [vmem:[%s216 + $0xe68] sm:$0xff]
        %v765 = vld [vmem:[%s216 + $0xe70] sm:$0xff]
        %v766 = vld [vmem:[%s216 + $0xe78] sm:$0xff]
        %v767 = vld [vmem:[%s216 + $0xe80] sm:$0xff]
        %v768 = vld [vmem:[%s216 + $0xe88] sm:$0xff]
        %v769 = vld [vmem:[%s216 + $0xe90] sm:$0xff]
        %v770 = vld [vmem:[%s216 + $0xe98] sm:$0xff]
        %v771 = vld [vmem:[%s216 + $0xea0] sm:$0xff]
        %v772 = vld [vmem:[%s216 + $0xea8] sm:$0xff]
        %v773 = vld [vmem:[%s216 + $0xeb0] sm:$0xff]
        %v774 = vld [vmem:[%s216 + $0xeb8] sm:$0xff]
        %v775 = vld [vmem:[%s216 + $0xec0] sm:$0xff]
        %v776 = vld [vmem:[%s216 + $0xec8] sm:$0xff]
        %v777 = vld [vmem:[%s216 + $0xed0] sm:$0xff]
        %v778 = vld [vmem:[%s216 + $0xed8] sm:$0xff]
        %v779 = vld [vmem:[%s216 + $0xee0] sm:$0xff]
        %v780 = vld [vmem:[%s216 + $0xee8] sm:$0xff]
        %v781 = vld [vmem:[%s216 + $0xef0] sm:$0xff]
        %v782 = vld [vmem:[%s216 + $0xef8] sm:$0xff]
        %v783 = vld [vmem:[%s216 + $0xf00] sm:$0xff]
        %v784 = vld [vmem:[%s216 + $0xf08] sm:$0xff]
        %v785 = vld [vmem:[%s216 + $0xf10] sm:$0xff]
        %v786 = vld [vmem:[%s216 + $0xf18] sm:$0xff]
        %v787 = vld [vmem:[%s216 + $0xf20] sm:$0xff]
        %v788 = vld [vmem:[%s216 + $0xf28] sm:$0xff]
        %v789 = vld [vmem:[%s216 + $0xf30] sm:$0xff]
        %v790 = vld [vmem:[%s216 + $0xf38] sm:$0xff]
        %v791 = vld [vmem:[%s216 + $0xf40] sm:$0xff]
        %v792 = vld [vmem:[%s216 + $0xf48] sm:$0xff]
        %v793 = vld [vmem:[%s216 + $0xf50] sm:$0xff]
        %v794 = vld [vmem:[%s216 + $0xf58] sm:$0xff]
        %v795 = vld [vmem:[%s216 + $0xf60] sm:$0xff]
        %v796 = vld [vmem:[%s216 + $0xf68] sm:$0xff]
        %v797 = vld [vmem:[%s216 + $0xf70] sm:$0xff]
        %v798 = vld [vmem:[%s216 + $0xf78] sm:$0xff]
        %v799 = vld [vmem:[%s216 + $0xf80] sm:$0xff]
        %v800 = vld [vmem:[%s216 + $0xf88] sm:$0xff]
        %v801 = vld [vmem:[%s216 + $0xf90] sm:$0xff]
        %v802 = vld [vmem:[%s216 + $0xf98] sm:$0xff]
        %v803 = vld [vmem:[%s216 + $0xfa0] sm:$0xff]
        %v804 = vld [vmem:[%s216 + $0xfa8] sm:$0xff]
        %v805 = vld [vmem:[%s216 + $0xfb0] sm:$0xff]
        %v806 = vld [vmem:[%s216 + $0xfb8] sm:$0xff]
        %v807 = vld [vmem:[%s216 + $0xfc0] sm:$0xff]
        %v808 = vld [vmem:[%s216 + $0xfc8] sm:$0xff]
        %v809 = vld [vmem:[%s216 + $0xfd0] sm:$0xff]
        %v810 = vld [vmem:[%s216 + $0xfd8] sm:$0xff]
        %v811 = vld [vmem:[%s216 + $0xfe0] sm:$0xff]
        %v812 = vld [vmem:[%s216 + $0xfe8] sm:$0xff]
        %v813 = vld [vmem:[%s216 + $0xff0] sm:$0xff]
        %v814 = vld [vmem:[%s216 + $0xff8] sm:$0xff]
        %v815 = vld [vmem:[%s216 + $0x1000] sm:$0xff]
        %v816 = vld [vmem:[%s216 + $0x1008] sm:$0xff]
        %v817 = vld [vmem:[%s216 + $0x1010] sm:$0xff]
        %v818 = vld [vmem:[%s216 + $0x1018] sm:$0xff]
        %v819 = vld [vmem:[%s216 + $0x1020] sm:$0xff]
        %v820 = vld [vmem:[%s216 + $0x1028] sm:$0xff]
        %v821 = vld [vmem:[%s216 + $0x1030] sm:$0xff]
        %v822 = vld [vmem:[%s216 + $0x1038] sm:$0xff]
        %v823 = vld [vmem:[%s216 + $0x1040] sm:$0xff]
        %v824 = vld [vmem:[%s216 + $0x1048] sm:$0xff]
        %v825 = vld [vmem:[%s216 + $0x1050] sm:$0xff]
        %v826 = vld [vmem:[%s216 + $0x1058] sm:$0xff]
        %v827 = vld [vmem:[%s216 + $0x1060] sm:$0xff]
        %v828 = vld [vmem:[%s216 + $0x1068] sm:$0xff]
        %v829 = vld [vmem:[%s216 + $0x1070] sm:$0xff]
        %v830 = vld [vmem:[%s216 + $0x1078] sm:$0xff]
        %v831 = vld [vmem:[%s216 + $0x1080] sm:$0xff]
        %v832 = vld [vmem:[%s216 + $0x1088] sm:$0xff]
        %v833 = vld [vmem:[%s216 + $0x1090] sm:$0xff]
        %v834 = vld [vmem:[%s216 + $0x1098] sm:$0xff]
        %v835 = vld [vmem:[%s216 + $0x10a0] sm:$0xff]
        %v836 = vld [vmem:[%s216 + $0x10a8] sm:$0xff]
        %v837 = vld [vmem:[%s216 + $0x10b0] sm:$0xff]
        %v838 = vld [vmem:[%s216 + $0x10b8] sm:$0xff]
        %v839 = vld [vmem:[%s216 + $0x10c0] sm:$0xff]
        %v840 = vld [vmem:[%s216 + $0x10c8] sm:$0xff]
        %v841 = vld [vmem:[%s216 + $0x10d0] sm:$0xff]
        %v842 = vld [vmem:[%s216 + $0x10d8] sm:$0xff]
        %v843 = vld [vmem:[%s216 + $0x10e0] sm:$0xff]
        %v844 = vld [vmem:[%s216 + $0x10e8] sm:$0xff]
        %v845 = vld [vmem:[%s216 + $0x10f0] sm:$0xff]
        %v846 = vld [vmem:[%s216 + $0x10f8] sm:$0xff]
        %v847 = vld [vmem:[%s216 + $0x1100] sm:$0xff]
        %v848 = vld [vmem:[%s216 + $0x1108] sm:$0xff]
        %v849 = vld [vmem:[%s216 + $0x1110] sm:$0xff]
        %v850 = vld [vmem:[%s216 + $0x1118] sm:$0xff]
        %v851 = vld [vmem:[%s216 + $0x1120] sm:$0xff]
        %v852 = vld [vmem:[%s216 + $0x1128] sm:$0xff]
        %v853 = vld [vmem:[%s216 + $0x1130] sm:$0xff]
        %v854 = vld [vmem:[%s216 + $0x1138] sm:$0xff]
        %v855 = vld [vmem:[%s216 + $0x1140] sm:$0xff]
        %v856 = vld [vmem:[%s216 + $0x1148] sm:$0xff]
        %v857 = vld [vmem:[%s216 + $0x1150] sm:$0xff]
        %v858 = vld [vmem:[%s216 + $0x1158] sm:$0xff]
        %v859 = vld [vmem:[%s216 + $0x1160] sm:$0xff]
        %v860 = vld [vmem:[%s216 + $0x1168] sm:$0xff]
        %v861 = vld [vmem:[%s216 + $0x1170] sm:$0xff]
        %v862 = vld [vmem:[%s216 + $0x1178] sm:$0xff]
        %v863 = vld [vmem:[%s216 + $0x1180] sm:$0xff]
        %v864 = vld [vmem:[%s216 + $0x1188] sm:$0xff]
        %v865 = vld [vmem:[%s216 + $0x1190] sm:$0xff]
        %v866 = vld [vmem:[%s216 + $0x1198] sm:$0xff]
        %v867 = vld [vmem:[%s216 + $0x11a0] sm:$0xff]
        %v868 = vld [vmem:[%s216 + $0x11a8] sm:$0xff]
        %v869 = vld [vmem:[%s216 + $0x11b0] sm:$0xff]
        %v870 = vld [vmem:[%s216 + $0x11b8] sm:$0xff]
        %v871 = vld [vmem:[%s216 + $0x11c0] sm:$0xff]
        %v872 = vld [vmem:[%s216 + $0x11c8] sm:$0xff]
        %v873 = vld [vmem:[%s216 + $0x11d0] sm:$0xff]
        %v874 = vld [vmem:[%s216 + $0x11d8] sm:$0xff]
        %v875 = vld [vmem:[%s216 + $0x11e0] sm:$0xff]
        %v876 = vld [vmem:[%s216 + $0x11e8] sm:$0xff]
        %v877 = vld [vmem:[%s216 + $0x11f0] sm:$0xff]
        %v878 = vld [vmem:[%s216 + $0x11f8] sm:$0xff]
        %v879 = vld [vmem:[%s216 + $0x1200] sm:$0xff]
        %v880 = vld [vmem:[%s216 + $0x1208] sm:$0xff]
        %v881 = vld [vmem:[%s216 + $0x1210] sm:$0xff]
        %v882 = vld [vmem:[%s216 + $0x1218] sm:$0xff]
        %v883 = vld [vmem:[%s216 + $0x1220] sm:$0xff]
        %v884 = vld [vmem:[%s216 + $0x1228] sm:$0xff]
        %v885 = vld [vmem:[%s216 + $0x1230] sm:$0xff]
        %v886 = vld [vmem:[%s216 + $0x1238] sm:$0xff]
        %v887 = vld [vmem:[%s216 + $0x1240] sm:$0xff]
        %v888 = vld [vmem:[%s216 + $0x1248] sm:$0xff]
        %v889 = vld [vmem:[%s216 + $0x1250] sm:$0xff]
        %v890 = vld [vmem:[%s216 + $0x1258] sm:$0xff]
        %v891 = vld [vmem:[%s216 + $0x1260] sm:$0xff]
        %v892 = vld [vmem:[%s216 + $0x1268] sm:$0xff]
        %v893 = vld [vmem:[%s216 + $0x1270] sm:$0xff]
        %v894 = vld [vmem:[%s216 + $0x1278] sm:$0xff]
        %v895 = vld [vmem:[%s216 + $0x1280] sm:$0xff]
        %v896 = vld [vmem:[%s216 + $0x1288] sm:$0xff]
        %v897 = vld [vmem:[%s216 + $0x1290] sm:$0xff]
        %v898 = vld [vmem:[%s216 + $0x1298] sm:$0xff]
        %v899 = vld [vmem:[%s216 + $0x12a0] sm:$0xff]
        %v900 = vld [vmem:[%s216 + $0x12a8] sm:$0xff]
        %v901 = vld [vmem:[%s216 + $0x12b0] sm:$0xff]
        %v902 = vld [vmem:[%s216 + $0x12b8] sm:$0xff]
        %v903 = vld [vmem:[%s216 + $0x12c0] sm:$0xff]
        %v904 = vld [vmem:[%s216 + $0x12c8] sm:$0xff]
        %v905 = vld [vmem:[%s216 + $0x12d0] sm:$0xff]
        %v906 = vld [vmem:[%s216 + $0x12d8] sm:$0xff]
        %v907 = vld [vmem:[%s216 + $0x12e0] sm:$0xff]
        %v908 = vld [vmem:[%s216 + $0x12e8] sm:$0xff]
        %v909 = vld [vmem:[%s216 + $0x12f0] sm:$0xff]
        %v910 = vld [vmem:[%s216 + $0x12f8] sm:$0xff]
        %v911 = vld [vmem:[%s216 + $0x1300] sm:$0xff]
        %v912 = vld [vmem:[%s216 + $0x1308] sm:$0xff]
        %v913 = vld [vmem:[%s216 + $0x1310] sm:$0xff]
        %v914 = vld [vmem:[%s216 + $0x1318] sm:$0xff]
        %v915 = vld [vmem:[%s216 + $0x1320] sm:$0xff]
        %v916 = vld [vmem:[%s216 + $0x1328] sm:$0xff]
        %v917 = vld [vmem:[%s216 + $0x1330] sm:$0xff]
        %v918 = vld [vmem:[%s216 + $0x1338] sm:$0xff]
        %v919 = vld [vmem:[%s216 + $0x1340] sm:$0xff]
        %v920 = vld [vmem:[%s216 + $0x1348] sm:$0xff]
        %v921 = vld [vmem:[%s216 + $0x1350] sm:$0xff]
        %v922 = vld [vmem:[%s216 + $0x1358] sm:$0xff]
        %v923 = vld [vmem:[%s216 + $0x1360] sm:$0xff]
        %v924 = vld [vmem:[%s216 + $0x1368] sm:$0xff]
        %v925 = vld [vmem:[%s216 + $0x1370] sm:$0xff]
        %v926 = vld [vmem:[%s216 + $0x1378] sm:$0xff]
        %v927 = vld [vmem:[%s216 + $0x1380] sm:$0xff]
        %v928 = vld [vmem:[%s216 + $0x1388] sm:$0xff]
        %v929 = vld [vmem:[%s216 + $0x1390] sm:$0xff]
        %v930 = vld [vmem:[%s216 + $0x1398] sm:$0xff]
        %v931 = vld [vmem:[%s216 + $0x13a0] sm:$0xff]
        %v932 = vld [vmem:[%s216 + $0x13a8] sm:$0xff]
        %v933 = vld [vmem:[%s216 + $0x13b0] sm:$0xff]
        %v934 = vld [vmem:[%s216 + $0x13b8] sm:$0xff]
        %v935 = vld [vmem:[%s216 + $0x13c0] sm:$0xff]
        %v936 = vld [vmem:[%s216 + $0x13c8] sm:$0xff]
        %v937 = vld [vmem:[%s216 + $0x13d0] sm:$0xff]
        %v938 = vld [vmem:[%s216 + $0x13d8] sm:$0xff]
        %v939 = vld [vmem:[%s216 + $0x13e0] sm:$0xff]
        %v940 = vld [vmem:[%s216 + $0x13e8] sm:$0xff]
        %v941 = vld [vmem:[%s216 + $0x13f0] sm:$0xff]
        %v942 = vld [vmem:[%s216 + $0x13f8] sm:$0xff]
        %v943 = vld [vmem:[%s216 + $0x1400] sm:$0xff]
        %v944 = vld [vmem:[%s216 + $0x1408] sm:$0xff]
        %v945 = vld [vmem:[%s216 + $0x1410] sm:$0xff]
        %v946 = vld [vmem:[%s216 + $0x1418] sm:$0xff]
        %v947 = vld [vmem:[%s216 + $0x1420] sm:$0xff]
        %v948 = vld [vmem:[%s216 + $0x1428] sm:$0xff]
        %v949 = vld [vmem:[%s216 + $0x1430] sm:$0xff]
        %v950 = vld [vmem:[%s216 + $0x1438] sm:$0xff]
        %v951 = vld [vmem:[%s216 + $0x1440] sm:$0xff]
        %v952 = vld [vmem:[%s216 + $0x1448] sm:$0xff]
        %v953 = vld [vmem:[%s216 + $0x1450] sm:$0xff]
        %v954 = vld [vmem:[%s216 + $0x1458] sm:$0xff]
        %v955 = vld [vmem:[%s216 + $0x1460] sm:$0xff]
        %v956 = vld [vmem:[%s216 + $0x1468] sm:$0xff]
        %v957 = vld [vmem:[%s216 + $0x1470] sm:$0xff]
        %v958 = vld [vmem:[%s216 + $0x1478] sm:$0xff]
        %v959 = vld [vmem:[%s216 + $0x1480] sm:$0xff]
        %v960 = vld [vmem:[%s216 + $0x1488] sm:$0xff]
        %v961 = vld [vmem:[%s216 + $0x1490] sm:$0xff]
        %v962 = vld [vmem:[%s216 + $0x1498] sm:$0xff]
        %v963 = vld [vmem:[%s216 + $0x14a0] sm:$0xff]
        %v964 = vld [vmem:[%s216 + $0x14a8] sm:$0xff]
        %v965 = vld [vmem:[%s216 + $0x14b0] sm:$0xff]
        %v966 = vld [vmem:[%s216 + $0x14b8] sm:$0xff]
        %v967 = vld [vmem:[%s216 + $0x14c0] sm:$0xff]
        %v968 = vld [vmem:[%s216 + $0x14c8] sm:$0xff]
        %v969 = vld [vmem:[%s216 + $0x14d0] sm:$0xff]
        %v970 = vld [vmem:[%s216 + $0x14d8] sm:$0xff]
        %v971 = vld [vmem:[%s216 + $0x14e0] sm:$0xff]
        %v972 = vld [vmem:[%s216 + $0x14e8] sm:$0xff]
        %v973 = vld [vmem:[%s216 + $0x14f0] sm:$0xff]
        %v974 = vld [vmem:[%s216 + $0x14f8] sm:$0xff]
        %v975 = vld [vmem:[%s216 + $0x1500] sm:$0xff]
        %v976 = vld [vmem:[%s216 + $0x1508] sm:$0xff]
        %v977 = vld [vmem:[%s216 + $0x1510] sm:$0xff]
        %v978 = vld [vmem:[%s216 + $0x1518] sm:$0xff]
        %v979 = vld [vmem:[%s216 + $0x1520] sm:$0xff]
        %v980 = vld [vmem:[%s216 + $0x1528] sm:$0xff]
        %v981 = vld [vmem:[%s216 + $0x1530] sm:$0xff]
        %v982 = vld [vmem:[%s216 + $0x1538] sm:$0xff]
        %v983 = vld [vmem:[%s216 + $0x1540] sm:$0xff]
        %v984 = vld [vmem:[%s216 + $0x1548] sm:$0xff]
        %v985 = vld [vmem:[%s216 + $0x1550] sm:$0xff]
        %v986 = vld [vmem:[%s216 + $0x1558] sm:$0xff]
        %v987 = vld [vmem:[%s216 + $0x1560] sm:$0xff]
        %v988 = vld [vmem:[%s216 + $0x1568] sm:$0xff]
        %v989 = vld [vmem:[%s216 + $0x1570] sm:$0xff]
        %v990 = vld [vmem:[%s216 + $0x1578] sm:$0xff]
        %v991 = vld [vmem:[%s216 + $0x1580] sm:$0xff]
        %v992 = vld [vmem:[%s216 + $0x1588] sm:$0xff]
        %v993 = vld [vmem:[%s216 + $0x1590] sm:$0xff]
        %v994 = vld [vmem:[%s216 + $0x1598] sm:$0xff]
        %v995 = vld [vmem:[%s216 + $0x15a0] sm:$0xff]
        %v996 = vld [vmem:[%s216 + $0x15a8] sm:$0xff]
        %v997 = vld [vmem:[%s216 + $0x15b0] sm:$0xff]
        %v998 = vld [vmem:[%s216 + $0x15b8] sm:$0xff]
        %v999 = vld [vmem:[%s216 + $0x15c0] sm:$0xff]
        %v1000 = vld [vmem:[%s216 + $0x15c8] sm:$0xff]
        %v1001 = vld [vmem:[%s216 + $0x15d0] sm:$0xff]
        %v1002 = vld [vmem:[%s216 + $0x15d8] sm:$0xff]
        %v1003 = vld [vmem:[%s216 + $0x15e0] sm:$0xff]
        %v1004 = vld [vmem:[%s216 + $0x15e8] sm:$0xff]
        %v1005 = vld [vmem:[%s216 + $0x15f0] sm:$0xff]
        %v1006 = vld [vmem:[%s216 + $0x15f8] sm:$0xff]
        %v1007 = vld [vmem:[%s216 + $0x1600] sm:$0xff]
        %v1008 = vld [vmem:[%s216 + $0x1608] sm:$0xff]
        %v1009 = vld [vmem:[%s216 + $0x1610] sm:$0xff]
        %v1010 = vld [vmem:[%s216 + $0x1618] sm:$0xff]
        %v1011 = vld [vmem:[%s216 + $0x1620] sm:$0xff]
        %v1012 = vld [vmem:[%s216 + $0x1628] sm:$0xff]
        %v1013 = vld [vmem:[%s216 + $0x1630] sm:$0xff]
        %v1014 = vld [vmem:[%s216 + $0x1638] sm:$0xff]
        %v1015 = vld [vmem:[%s216 + $0x1640] sm:$0xff]
        %v1016 = vld [vmem:[%s216 + $0x1648] sm:$0xff]
        %v1017 = vld [vmem:[%s216 + $0x1650] sm:$0xff]
        %v1018 = vld [vmem:[%s216 + $0x1658] sm:$0xff]
        %v1019 = vld [vmem:[%s216 + $0x1660] sm:$0xff]
        %v1020 = vld [vmem:[%s216 + $0x1668] sm:$0xff]
        %v1021 = vld [vmem:[%s216 + $0x1670] sm:$0xff]
        %v1022 = vld [vmem:[%s216 + $0x1678] sm:$0xff]
        %v1023 = vld [vmem:[%s216 + $0x1680] sm:$0xff]
        %v1024 = vld [vmem:[%s216 + $0x1688] sm:$0xff]
        %v1025 = vld [vmem:[%s216 + $0x1690] sm:$0xff]
        %v1026 = vld [vmem:[%s216 + $0x1698] sm:$0xff]
        %v1027 = vld [vmem:[%s216 + $0x16a0] sm:$0xff]
        %v1028 = vld [vmem:[%s216 + $0x16a8] sm:$0xff]
        %v1029 = vld [vmem:[%s216 + $0x16b0] sm:$0xff]
        %v1030 = vld [vmem:[%s216 + $0x16b8] sm:$0xff]
        %v1031 = vld [vmem:[%s216 + $0x16c0] sm:$0xff]
        %v1032 = vld [vmem:[%s216 + $0x16c8] sm:$0xff]
        %v1033 = vld [vmem:[%s216 + $0x16d0] sm:$0xff]
        %v1034 = vld [vmem:[%s216 + $0x16d8] sm:$0xff]
        %v1035 = vld [vmem:[%s216 + $0x16e0] sm:$0xff]
        %v1036 = vld [vmem:[%s216 + $0x16e8] sm:$0xff]
        %v1037 = vld [vmem:[%s216 + $0x16f0] sm:$0xff]
        %v1038 = vld [vmem:[%s216 + $0x16f8] sm:$0xff]
        %v1039 = vld [vmem:[%s216 + $0x1700] sm:$0xff]
        %v1040 = vld [vmem:[%s216 + $0x1708] sm:$0xff]
        %v1041 = vld [vmem:[%s216 + $0x1710] sm:$0xff]
        %v1042 = vld [vmem:[%s216 + $0x1718] sm:$0xff]
        %v1043 = vld [vmem:[%s216 + $0x1720] sm:$0xff]
        %v1044 = vld [vmem:[%s216 + $0x1728] sm:$0xff]
        %v1045 = vld [vmem:[%s216 + $0x1730] sm:$0xff]
        %v1046 = vld [vmem:[%s216 + $0x1738] sm:$0xff]
        %v1047 = vld [vmem:[%s216 + $0x1740] sm:$0xff]
        %v1048 = vld [vmem:[%s216 + $0x1748] sm:$0xff]
        %v1049 = vld [vmem:[%s216 + $0x1750] sm:$0xff]
        %v1050 = vld [vmem:[%s216 + $0x1758] sm:$0xff]
        %v1051 = vld [vmem:[%s216 + $0x1760] sm:$0xff]
        %v1052 = vld [vmem:[%s216 + $0x1768] sm:$0xff]
        %v1053 = vld [vmem:[%s216 + $0x1770] sm:$0xff]
        %v1054 = vld [vmem:[%s216 + $0x1778] sm:$0xff]
        %v1055 = vld [vmem:[%s216 + $0x1780] sm:$0xff]
        %v1056 = vld [vmem:[%s216 + $0x1788] sm:$0xff]
        %v1057 = vld [vmem:[%s216 + $0x1790] sm:$0xff]
        %v1058 = vld [vmem:[%s216 + $0x1798] sm:$0xff]
        %v1059 = vld [vmem:[%s216 + $0x17a0] sm:$0xff]
        %v1060 = vld [vmem:[%s216 + $0x17a8] sm:$0xff]
        %v1061 = vld [vmem:[%s216 + $0x17b0] sm:$0xff]
        %v1062 = vld [vmem:[%s216 + $0x17b8] sm:$0xff]
        %v1063 = vld [vmem:[%s216 + $0x17c0] sm:$0xff]
        %v1064 = vld [vmem:[%s216 + $0x17c8] sm:$0xff]
        %v1065 = vld [vmem:[%s216 + $0x17d0] sm:$0xff]
        %v1066 = vld [vmem:[%s216 + $0x17d8] sm:$0xff]
        %v1067 = vld [vmem:[%s216 + $0x17e0] sm:$0xff]
        %v1068 = vld [vmem:[%s216 + $0x17e8] sm:$0xff]
        %v1069 = vld [vmem:[%s216 + $0x17f0] sm:$0xff]
        %v1070 = vld [vmem:[%s216 + $0x17f8] sm:$0xff]
        %v1071 = vld [vmem:[%s216 + $0x1800] sm:$0xff]
        %v1072 = vld [vmem:[%s216 + $0x1808] sm:$0xff]
        %v1073 = vld [vmem:[%s216 + $0x1810] sm:$0xff]
        %v1074 = vld [vmem:[%s216 + $0x1818] sm:$0xff]
        %v1075 = vld [vmem:[%s216 + $0x1820] sm:$0xff]
        %v1076 = vld [vmem:[%s216 + $0x1828] sm:$0xff]
        %v1077 = vld [vmem:[%s216 + $0x1830] sm:$0xff]
        %v1078 = vld [vmem:[%s216 + $0x1838] sm:$0xff]
        %v1079 = vld [vmem:[%s216 + $0x1840] sm:$0xff]
        %v1080 = vld [vmem:[%s216 + $0x1848] sm:$0xff]
        %v1081 = vld [vmem:[%s216 + $0x1850] sm:$0xff]
        %v1082 = vld [vmem:[%s216 + $0x1858] sm:$0xff]
        %v1083 = vld [vmem:[%s216 + $0x1860] sm:$0xff]
        %v1084 = vld [vmem:[%s216 + $0x1868] sm:$0xff]
        %v1085 = vld [vmem:[%s216 + $0x1870] sm:$0xff]
        %v1086 = vld [vmem:[%s216 + $0x1878] sm:$0xff]
        %v1087 = vld [vmem:[%s216 + $0x1880] sm:$0xff]
        %v1088 = vld [vmem:[%s216 + $0x1888] sm:$0xff]
        %v1089 = vld [vmem:[%s216 + $0x1890] sm:$0xff]
        %v1090 = vld [vmem:[%s216 + $0x1898] sm:$0xff]
        %v1091 = vld [vmem:[%s216 + $0x18a0] sm:$0xff]
        %v1092 = vld [vmem:[%s216 + $0x18a8] sm:$0xff]
        %v1093 = vld [vmem:[%s216 + $0x18b0] sm:$0xff]
        %v1094 = vld [vmem:[%s216 + $0x18b8] sm:$0xff]
        %v1095 = vld [vmem:[%s216 + $0x18c0] sm:$0xff]
        %v1096 = vld [vmem:[%s216 + $0x18c8] sm:$0xff]
        %v1097 = vld [vmem:[%s216 + $0x18d0] sm:$0xff]
        %v1098 = vld [vmem:[%s216 + $0x18d8] sm:$0xff]
        %v1099 = vld [vmem:[%s216 + $0x18e0] sm:$0xff]
        %v1100 = vld [vmem:[%s216 + $0x18e8] sm:$0xff]
        %v1101 = vld [vmem:[%s216 + $0x18f0] sm:$0xff]
        %v1102 = vld [vmem:[%s216 + $0x18f8] sm:$0xff]
        %v1103 = vld [vmem:[%s216 + $0x1900] sm:$0xff]
        %v1104 = vld [vmem:[%s216 + $0x1908] sm:$0xff]
        %v1105 = vld [vmem:[%s216 + $0x1910] sm:$0xff]
        %v1106 = vld [vmem:[%s216 + $0x1918] sm:$0xff]
        %v1107 = vld [vmem:[%s216 + $0x1920] sm:$0xff]
        %v1108 = vld [vmem:[%s216 + $0x1928] sm:$0xff]
        %v1109 = vld [vmem:[%s216 + $0x1930] sm:$0xff]
        %v1110 = vld [vmem:[%s216 + $0x1938] sm:$0xff]
        %v1111 = vld [vmem:[%s216 + $0x1940] sm:$0xff]
        %v1112 = vld [vmem:[%s216 + $0x1948] sm:$0xff]
        %v1113 = vld [vmem:[%s216 + $0x1950] sm:$0xff]
        %v1114 = vld [vmem:[%s216 + $0x1958] sm:$0xff]
        %v1115 = vld [vmem:[%s216 + $0x1960] sm:$0xff]
        %v1116 = vld [vmem:[%s216 + $0x1968] sm:$0xff]
        %v1117 = vld [vmem:[%s216 + $0x1970] sm:$0xff]
        %v1118 = vld [vmem:[%s216 + $0x1978] sm:$0xff]
        %v1119 = vld [vmem:[%s216 + $0x1980] sm:$0xff]
        %v1120 = vld [vmem:[%s216 + $0x1988] sm:$0xff]
        %v1121 = vld [vmem:[%s216 + $0x1990] sm:$0xff]
        %v1122 = vld [vmem:[%s216 + $0x1998] sm:$0xff]
        %v1123 = vld [vmem:[%s216 + $0x19a0] sm:$0xff]
        %v1124 = vld [vmem:[%s216 + $0x19a8] sm:$0xff]
        %v1125 = vld [vmem:[%s216 + $0x19b0] sm:$0xff]
        %v1126 = vld [vmem:[%s216 + $0x19b8] sm:$0xff]
        %v1127 = vld [vmem:[%s216 + $0x19c0] sm:$0xff]
        %v1128 = vld [vmem:[%s216 + $0x19c8] sm:$0xff]
        %v1129 = vld [vmem:[%s216 + $0x19d0] sm:$0xff]
        %v1130 = vld [vmem:[%s216 + $0x19d8] sm:$0xff]
        %v1131 = vld [vmem:[%s216 + $0x19e0] sm:$0xff]
        %v1132 = vld [vmem:[%s216 + $0x19e8] sm:$0xff]
        %v1133 = vld [vmem:[%s216 + $0x19f0] sm:$0xff]
        %v1134 = vld [vmem:[%s216 + $0x19f8] sm:$0xff]
        %v1135 = vld [vmem:[%s216 + $0x1a00] sm:$0xff]
        %v1136 = vld [vmem:[%s216 + $0x1a08] sm:$0xff]
        %v1137 = vld [vmem:[%s216 + $0x1a10] sm:$0xff]
        %v1138 = vld [vmem:[%s216 + $0x1a18] sm:$0xff]
        %v1139 = vld [vmem:[%s216 + $0x1a20] sm:$0xff]
        %v1140 = vld [vmem:[%s216 + $0x1a28] sm:$0xff]
        %v1141 = vld [vmem:[%s216 + $0x1a30] sm:$0xff]
        %v1142 = vld [vmem:[%s216 + $0x1a38] sm:$0xff]
        %v1143 = vld [vmem:[%s216 + $0x1a40] sm:$0xff]
        %v1144 = vld [vmem:[%s216 + $0x1a48] sm:$0xff]
        %v1145 = vld [vmem:[%s216 + $0x1a50] sm:$0xff]
        %v1146 = vld [vmem:[%s216 + $0x1a58] sm:$0xff]
        %v1147 = vld [vmem:[%s216 + $0x1a60] sm:$0xff]
        %v1148 = vld [vmem:[%s216 + $0x1a68] sm:$0xff]
        %v1149 = vld [vmem:[%s216 + $0x1a70] sm:$0xff]
        %v1150 = vld [vmem:[%s216 + $0x1a78] sm:$0xff]
        %v1151 = vld [vmem:[%s216 + $0x1a80] sm:$0xff]
        %v1152 = vld [vmem:[%s216 + $0x1a88] sm:$0xff]
        %v1153 = vld [vmem:[%s216 + $0x1a90] sm:$0xff]
        %v1154 = vld [vmem:[%s216 + $0x1a98] sm:$0xff]
        %v1155 = vld [vmem:[%s216 + $0x1aa0] sm:$0xff]
        %v1156 = vld [vmem:[%s216 + $0x1aa8] sm:$0xff]
        %v1157 = vld [vmem:[%s216 + $0x1ab0] sm:$0xff]
        %v1158 = vld [vmem:[%s216 + $0x1ab8] sm:$0xff]
        %v1159 = vld [vmem:[%s216 + $0x1ac0] sm:$0xff]
        %v1160 = vld [vmem:[%s216 + $0x1ac8] sm:$0xff]
        %v1161 = vld [vmem:[%s216 + $0x1ad0] sm:$0xff]
        %v1162 = vld [vmem:[%s216 + $0x1ad8] sm:$0xff]
        %v1163 = vld [vmem:[%s216 + $0x1ae0] sm:$0xff]
        %v1164 = vld [vmem:[%s216 + $0x1ae8] sm:$0xff]
        %v1165 = vld [vmem:[%s216 + $0x1af0] sm:$0xff]
        %v1166 = vld [vmem:[%s216 + $0x1af8] sm:$0xff]
        %v1167 = vld [vmem:[%s216 + $0x1b00] sm:$0xff]
        %v1168 = vld [vmem:[%s216 + $0x1b08] sm:$0xff]
        %v1169 = vld [vmem:[%s216 + $0x1b10] sm:$0xff]
        %v1170 = vld [vmem:[%s216 + $0x1b18] sm:$0xff]
        %v1171 = vld [vmem:[%s216 + $0x1b20] sm:$0xff]
        %v1172 = vld [vmem:[%s216 + $0x1b28] sm:$0xff]
        %v1173 = vld [vmem:[%s216 + $0x1b30] sm:$0xff]
        %v1174 = vld [vmem:[%s216 + $0x1b38] sm:$0xff]
        %v1175 = vld [vmem:[%s216 + $0x1b40] sm:$0xff]
        %v1176 = vld [vmem:[%s216 + $0x1b48] sm:$0xff]
        %v1177 = vld [vmem:[%s216 + $0x1b50] sm:$0xff]
        %v1178 = vld [vmem:[%s216 + $0x1b58] sm:$0xff]
        %v1179 = vld [vmem:[%s216 + $0x1b60] sm:$0xff]
        %v1180 = vld [vmem:[%s216 + $0x1b68] sm:$0xff]
        %v1181 = vld [vmem:[%s216 + $0x1b70] sm:$0xff]
        %v1182 = vld [vmem:[%s216 + $0x1b78] sm:$0xff]
        %v1183 = vld [vmem:[%s216 + $0x1b80] sm:$0xff]
        %v1184 = vld [vmem:[%s216 + $0x1b88] sm:$0xff]
        %v1185 = vld [vmem:[%s216 + $0x1b90] sm:$0xff]
        %v1186 = vld [vmem:[%s216 + $0x1b98] sm:$0xff]
        %v1187 = vld [vmem:[%s216 + $0x1ba0] sm:$0xff]
        %v1188 = vld [vmem:[%s216 + $0x1ba8] sm:$0xff]
        %v1189 = vld [vmem:[%s216 + $0x1bb0] sm:$0xff]
        %v1190 = vld [vmem:[%s216 + $0x1bb8] sm:$0xff]
        %v1191 = vld [vmem:[%s216 + $0x1bc0] sm:$0xff]
        %v1192 = vld [vmem:[%s216 + $0x1bc8] sm:$0xff]
        %v1193 = vld [vmem:[%s216 + $0x1bd0] sm:$0xff]
        %v1194 = vld [vmem:[%s216 + $0x1bd8] sm:$0xff]
        %v1195 = vld [vmem:[%s216 + $0x1be0] sm:$0xff]
        %v1196 = vld [vmem:[%s216 + $0x1be8] sm:$0xff]
        %v1197 = vld [vmem:[%s216 + $0x1bf0] sm:$0xff]
        %v1198 = vld [vmem:[%s216 + $0x1bf8] sm:$0xff]
        %v1199 = vld [vmem:[%s216 + $0x1c00] sm:$0xff]
        %v1200 = vld [vmem:[%s216 + $0x1c08] sm:$0xff]
        %v1201 = vld [vmem:[%s216 + $0x1c10] sm:$0xff]
        %v1202 = vld [vmem:[%s216 + $0x1c18] sm:$0xff]
        %v1203 = vld [vmem:[%s216 + $0x1c20] sm:$0xff]
        %v1204 = vld [vmem:[%s216 + $0x1c28] sm:$0xff]
        %v1205 = vld [vmem:[%s216 + $0x1c30] sm:$0xff]
        %v1206 = vld [vmem:[%s216 + $0x1c38] sm:$0xff]
        %v1207 = vld [vmem:[%s216 + $0x1c40] sm:$0xff]
        %v1208 = vld [vmem:[%s216 + $0x1c48] sm:$0xff]
        %v1209 = vld [vmem:[%s216 + $0x1c50] sm:$0xff]
        %v1210 = vld [vmem:[%s216 + $0x1c58] sm:$0xff]
        %v1211 = vld [vmem:[%s216 + $0x1c60] sm:$0xff]
        %v1212 = vld [vmem:[%s216 + $0x1c68] sm:$0xff]
        %v1213 = vld [vmem:[%s216 + $0x1c70] sm:$0xff]
        %v1214 = vld [vmem:[%s216 + $0x1c78] sm:$0xff]
        %v1215 = vld [vmem:[%s216 + $0x1c80] sm:$0xff]
        %v1216 = vld [vmem:[%s216 + $0x1c88] sm:$0xff]
        %v1217 = vld [vmem:[%s216 + $0x1c90] sm:$0xff]
        %v1218 = vld [vmem:[%s216 + $0x1c98] sm:$0xff]
        %v1219 = vld [vmem:[%s216 + $0x1ca0] sm:$0xff]
        %v1220 = vld [vmem:[%s216 + $0x1ca8] sm:$0xff]
        %v1221 = vld [vmem:[%s216 + $0x1cb0] sm:$0xff]
        %v1222 = vld [vmem:[%s216 + $0x1cb8] sm:$0xff]
        %v1223 = vld [vmem:[%s216 + $0x1cc0] sm:$0xff]
        %v1224 = vld [vmem:[%s216 + $0x1cc8] sm:$0xff]
        %v1225 = vld [vmem:[%s216 + $0x1cd0] sm:$0xff]
        %v1226 = vld [vmem:[%s216 + $0x1cd8] sm:$0xff]
        %v1227 = vld [vmem:[%s216 + $0x1ce0] sm:$0xff]
        %v1228 = vld [vmem:[%s216 + $0x1ce8] sm:$0xff]
        %v1229 = vld [vmem:[%s216 + $0x1cf0] sm:$0xff]
        %v1230 = vld [vmem:[%s216 + $0x1cf8] sm:$0xff]
        %v1231 = vld [vmem:[%s216 + $0x1d00] sm:$0xff]
        %v1232 = vld [vmem:[%s216 + $0x1d08] sm:$0xff]
        %v1233 = vld [vmem:[%s216 + $0x1d10] sm:$0xff]
        %v1234 = vld [vmem:[%s216 + $0x1d18] sm:$0xff]
        %v1235 = vld [vmem:[%s216 + $0x1d20] sm:$0xff]
        %v1236 = vld [vmem:[%s216 + $0x1d28] sm:$0xff]
        %v1237 = vld [vmem:[%s216 + $0x1d30] sm:$0xff]
        %v1238 = vld [vmem:[%s216 + $0x1d38] sm:$0xff]
        %v1239 = vld [vmem:[%s216 + $0x1d40] sm:$0xff]
        %v1240 = vld [vmem:[%s216 + $0x1d48] sm:$0xff]
        %v1241 = vld [vmem:[%s216 + $0x1d50] sm:$0xff]
        %v1242 = vld [vmem:[%s216 + $0x1d58] sm:$0xff]
        %v1243 = vld [vmem:[%s216 + $0x1d60] sm:$0xff]
        %v1244 = vld [vmem:[%s216 + $0x1d68] sm:$0xff]
        %v1245 = vld [vmem:[%s216 + $0x1d70] sm:$0xff]
        %v1246 = vld [vmem:[%s216 + $0x1d78] sm:$0xff]
        %v1247 = vld [vmem:[%s216 + $0x1d80] sm:$0xff]
        %v1248 = vld [vmem:[%s216 + $0x1d88] sm:$0xff]
        %v1249 = vld [vmem:[%s216 + $0x1d90] sm:$0xff]
        %v1250 = vld [vmem:[%s216 + $0x1d98] sm:$0xff]
        %v1251 = vld [vmem:[%s216 + $0x1da0] sm:$0xff]
        %v1252 = vld [vmem:[%s216 + $0x1da8] sm:$0xff]
        %v1253 = vld [vmem:[%s216 + $0x1db0] sm:$0xff]
        %v1254 = vld [vmem:[%s216 + $0x1db8] sm:$0xff]
        %v1255 = vld [vmem:[%s216 + $0x1dc0] sm:$0xff]
        %v1256 = vld [vmem:[%s216 + $0x1dc8] sm:$0xff]
        %v1257 = vld [vmem:[%s216 + $0x1dd0] sm:$0xff]
        %v1258 = vld [vmem:[%s216 + $0x1dd8] sm:$0xff]
        %v1259 = vld [vmem:[%s216 + $0x1de0] sm:$0xff]
        %v1260 = vld [vmem:[%s216 + $0x1de8] sm:$0xff]
        %v1261 = vld [vmem:[%s216 + $0x1df0] sm:$0xff]
        %v1262 = vld [vmem:[%s216 + $0x1df8] sm:$0xff]
        %v1263 = vld [vmem:[%s216 + $0x1e00] sm:$0xff]
        %v1264 = vld [vmem:[%s216 + $0x1e08] sm:$0xff]
        %v1265 = vld [vmem:[%s216 + $0x1e10] sm:$0xff]
        %v1266 = vld [vmem:[%s216 + $0x1e18] sm:$0xff]
        %v1267 = vld [vmem:[%s216 + $0x1e20] sm:$0xff]
        %v1268 = vld [vmem:[%s216 + $0x1e28] sm:$0xff]
        %v1269 = vld [vmem:[%s216 + $0x1e30] sm:$0xff]
        %v1270 = vld [vmem:[%s216 + $0x1e38] sm:$0xff]
        %v1271 = vld [vmem:[%s216 + $0x1e40] sm:$0xff]
        %v1272 = vld [vmem:[%s216 + $0x1e48] sm:$0xff]
        %v1273 = vld [vmem:[%s216 + $0x1e50] sm:$0xff]
        %v1274 = vld [vmem:[%s216 + $0x1e58] sm:$0xff]
        %v1275 = vld [vmem:[%s216 + $0x1e60] sm:$0xff]
        %v1276 = vld [vmem:[%s216 + $0x1e68] sm:$0xff]
        %v1277 = vld [vmem:[%s216 + $0x1e70] sm:$0xff]
        %v1278 = vld [vmem:[%s216 + $0x1e78] sm:$0xff]
        %v1279 = vld [vmem:[%s216 + $0x1e80] sm:$0xff]
        %v1280 = vld [vmem:[%s216 + $0x1e88] sm:$0xff]
        %v1281 = vld [vmem:[%s216 + $0x1e90] sm:$0xff]
        %v1282 = vld [vmem:[%s216 + $0x1e98] sm:$0xff]
        %v1283 = vld [vmem:[%s216 + $0x1ea0] sm:$0xff]
        %v1284 = vld [vmem:[%s216 + $0x1ea8] sm:$0xff]
        %v1285 = vld [vmem:[%s216 + $0x1eb0] sm:$0xff]
        %v1286 = vld [vmem:[%s216 + $0x1eb8] sm:$0xff]
        %v1287 = vld [vmem:[%s216 + $0x1ec0] sm:$0xff]
        %v1288 = vld [vmem:[%s216 + $0x1ec8] sm:$0xff]
        %v1289 = vld [vmem:[%s216 + $0x1ed0] sm:$0xff]
        %v1290 = vld [vmem:[%s216 + $0x1ed8] sm:$0xff]
        %v1291 = vld [vmem:[%s216 + $0x1ee0] sm:$0xff]
        %v1292 = vld [vmem:[%s216 + $0x1ee8] sm:$0xff]
        %v1293 = vld [vmem:[%s216 + $0x1ef0] sm:$0xff]
        %v1294 = vld [vmem:[%s216 + $0x1ef8] sm:$0xff]
        %v1295 = vld [vmem:[%s216 + $0x1f00] sm:$0xff]
        %v1296 = vld [vmem:[%s216 + $0x1f08] sm:$0xff]
        %v1297 = vld [vmem:[%s216 + $0x1f10] sm:$0xff]
        %v1298 = vld [vmem:[%s216 + $0x1f18] sm:$0xff]
        %v1299 = vld [vmem:[%s216 + $0x1f20] sm:$0xff]
        %v1300 = vld [vmem:[%s216 + $0x1f28] sm:$0xff]
        %v1301 = vld [vmem:[%s216 + $0x1f30] sm:$0xff]
        %v1302 = vld [vmem:[%s216 + $0x1f38] sm:$0xff]
        %v1303 = vld [vmem:[%s216 + $0x1f40] sm:$0xff]
        %v1304 = vld [vmem:[%s216 + $0x1f48] sm:$0xff]
        %v1305 = vld [vmem:[%s216 + $0x1f50] sm:$0xff]
        %v1306 = vld [vmem:[%s216 + $0x1f58] sm:$0xff]
        %v1307 = vld [vmem:[%s216 + $0x1f60] sm:$0xff]
        %v1308 = vld [vmem:[%s216 + $0x1f68] sm:$0xff]
        %v1309 = vld [vmem:[%s216 + $0x1f70] sm:$0xff]
        %v1310 = vld [vmem:[%s216 + $0x1f78] sm:$0xff]
        %v1311 = vld [vmem:[%s216 + $0x1f80] sm:$0xff]
        %v1312 = vld [vmem:[%s216 + $0x1f88] sm:$0xff]
        %v1313 = vld [vmem:[%s216 + $0x1f90] sm:$0xff]
        %v1314 = vld [vmem:[%s216 + $0x1f98] sm:$0xff]
        %v1315 = vld [vmem:[%s216 + $0x1fa0] sm:$0xff]
        %v1316 = vld [vmem:[%s216 + $0x1fa8] sm:$0xff]
        %v1317 = vld [vmem:[%s216 + $0x1fb0] sm:$0xff]
        %v1318 = vld [vmem:[%s216 + $0x1fb8] sm:$0xff]
        %v1319 = vld [vmem:[%s216 + $0x1fc0] sm:$0xff]
        %v1320 = vld [vmem:[%s216 + $0x1fc8] sm:$0xff]
        %v1321 = vld [vmem:[%s216 + $0x1fd0] sm:$0xff]
        %v1322 = vld [vmem:[%s216 + $0x1fd8] sm:$0xff]
        %v1323 = vld [vmem:[%s216 + $0x1fe0] sm:$0xff]
        %v1324 = vld [vmem:[%s216 + $0x1fe8] sm:$0xff]
        %v1325 = vld [vmem:[%s216 + $0x1ff0] sm:$0xff]
        %v1326 = vld [vmem:[%s216 + $0x1ff8] sm:$0xff]
        %v1335 = vunpack.c.l.b16 %v295
        %v1336 = vunpack.c.h.b16 %v295
        %v1337 = vunpack.c.l.b16 %v296
        %v1338 = vunpack.c.h.b16 %v296
        %v1339 = vunpack.c.l.b16 %v297
        %v1340 = vunpack.c.h.b16 %v297
        %v1341 = vunpack.c.l.b16 %v298
        %v1342 = vunpack.c.h.b16 %v298
        %v1343 = vunpack.c.l.b16 %v299
        %v1344 = vunpack.c.h.b16 %v299
        %v1345 = vunpack.c.l.b16 %v300
        %v1346 = vunpack.c.h.b16 %v300
        %v1347 = vunpack.c.l.b16 %v301
        %v1348 = vunpack.c.h.b16 %v301
        %v1349 = vunpack.c.l.b16 %v302
        %v1350 = vunpack.c.h.b16 %v302
        %v1351 = vpack.c.b16 %v1335, %v1335
        %v1352 = vpack.c.b16 %v1336, %v1336
        %v1353 = vpack.c.b16 %v1337, %v1337
        %v1354 = vpack.c.b16 %v1338, %v1338
        %v1355 = vpack.c.b16 %v1339, %v1339
        %v1356 = vpack.c.b16 %v1340, %v1340
        %v1357 = vpack.c.b16 %v1341, %v1341
        %v1358 = vpack.c.b16 %v1342, %v1342
        %v1359 = vpack.c.b16 %v1343, %v1343
        %v1360 = vpack.c.b16 %v1344, %v1344
        %v1361 = vpack.c.b16 %v1345, %v1345
        %v1362 = vpack.c.b16 %v1346, %v1346
        %v1363 = vpack.c.b16 %v1347, %v1347
        %v1364 = vpack.c.b16 %v1348, %v1348
        %v1365 = vpack.c.b16 %v1349, %v1349
        %v1366 = vpack.c.b16 %v1350, %v1350
        %v2407 = vunpack.c.l.b16 %v303
        %v2408 = vunpack.c.h.b16 %v303
        %v2409 = vunpack.c.l.b16 %v304
        %v2410 = vunpack.c.h.b16 %v304
        %v2411 = vunpack.c.l.b16 %v305
        %v2412 = vunpack.c.h.b16 %v305
        %v2413 = vunpack.c.l.b16 %v306
        %v2414 = vunpack.c.h.b16 %v306
        %v2415 = vunpack.c.l.b16 %v307
        %v2416 = vunpack.c.h.b16 %v307
        %v2417 = vunpack.c.l.b16 %v308
        %v2418 = vunpack.c.h.b16 %v308
        %v2419 = vunpack.c.l.b16 %v309
        %v2420 = vunpack.c.h.b16 %v309
        %v2421 = vunpack.c.l.b16 %v310
        %v2422 = vunpack.c.h.b16 %v310
        %v2423 = vunpack.c.l.b16 %v311
        %v2424 = vunpack.c.h.b16 %v311
        %v2425 = vunpack.c.l.b16 %v312
        %v2426 = vunpack.c.h.b16 %v312
        %v2427 = vunpack.c.l.b16 %v313
        %v2428 = vunpack.c.h.b16 %v313
        %v2429 = vunpack.c.l.b16 %v314
        %v2430 = vunpack.c.h.b16 %v314
        %v2431 = vunpack.c.l.b16 %v315
        %v2432 = vunpack.c.h.b16 %v315
        %v2433 = vunpack.c.l.b16 %v316
        %v2434 = vunpack.c.h.b16 %v316
        %v2435 = vunpack.c.l.b16 %v317
        %v2436 = vunpack.c.h.b16 %v317
        %v2437 = vunpack.c.l.b16 %v318
        %v2438 = vunpack.c.h.b16 %v318
        %v2439 = vunpack.c.l.b16 %v319
        %v2440 = vunpack.c.h.b16 %v319
        %v2441 = vunpack.c.l.b16 %v320
        %v2442 = vunpack.c.h.b16 %v320
        %v2443 = vunpack.c.l.b16 %v321
        %v2444 = vunpack.c.h.b16 %v321
        %v2445 = vunpack.c.l.b16 %v322
        %v2446 = vunpack.c.h.b16 %v322
        %v2447 = vunpack.c.l.b16 %v323
        %v2448 = vunpack.c.h.b16 %v323
        %v2449 = vunpack.c.l.b16 %v324
        %v2450 = vunpack.c.h.b16 %v324
        %v2451 = vunpack.c.l.b16 %v325
        %v2452 = vunpack.c.h.b16 %v325
        %v2453 = vunpack.c.l.b16 %v326
        %v2454 = vunpack.c.h.b16 %v326
        %v2455 = vunpack.c.l.b16 %v327
        %v2456 = vunpack.c.h.b16 %v327
        %v2457 = vunpack.c.l.b16 %v328
        %v2458 = vunpack.c.h.b16 %v328
        %v2459 = vunpack.c.l.b16 %v329
        %v2460 = vunpack.c.h.b16 %v329
        %v2461 = vunpack.c.l.b16 %v330
        %v2462 = vunpack.c.h.b16 %v330
        %v2463 = vunpack.c.l.b16 %v331
        %v2464 = vunpack.c.h.b16 %v331
        %v2465 = vunpack.c.l.b16 %v332
        %v2466 = vunpack.c.h.b16 %v332
        %v2467 = vunpack.c.l.b16 %v333
        %v2468 = vunpack.c.h.b16 %v333
        %v2469 = vunpack.c.l.b16 %v334
        %v2470 = vunpack.c.h.b16 %v334
        %v2471 = vunpack.c.l.b16 %v335
        %v2472 = vunpack.c.h.b16 %v335
        %v2473 = vunpack.c.l.b16 %v336
        %v2474 = vunpack.c.h.b16 %v336
        %v2475 = vunpack.c.l.b16 %v337
        %v2476 = vunpack.c.h.b16 %v337
        %v2477 = vunpack.c.l.b16 %v338
        %v2478 = vunpack.c.h.b16 %v338
        %v2479 = vunpack.c.l.b16 %v339
        %v2480 = vunpack.c.h.b16 %v339
        %v2481 = vunpack.c.l.b16 %v340
        %v2482 = vunpack.c.h.b16 %v340
        %v2483 = vunpack.c.l.b16 %v341
        %v2484 = vunpack.c.h.b16 %v341
        %v2485 = vunpack.c.l.b16 %v342
        %v2486 = vunpack.c.h.b16 %v342
        %v2487 = vunpack.c.l.b16 %v343
        %v2488 = vunpack.c.h.b16 %v343
        %v2489 = vunpack.c.l.b16 %v344
        %v2490 = vunpack.c.h.b16 %v344
        %v2491 = vunpack.c.l.b16 %v345
        %v2492 = vunpack.c.h.b16 %v345
        %v2493 = vunpack.c.l.b16 %v346
        %v2494 = vunpack.c.h.b16 %v346
        %v2495 = vunpack.c.l.b16 %v347
        %v2496 = vunpack.c.h.b16 %v347
        %v2497 = vunpack.c.l.b16 %v348
        %v2498 = vunpack.c.h.b16 %v348
        %v2499 = vunpack.c.l.b16 %v349
        %v2500 = vunpack.c.h.b16 %v349
        %v2501 = vunpack.c.l.b16 %v350
        %v2502 = vunpack.c.h.b16 %v350
        %v2503 = vunpack.c.l.b16 %v351
        %v2504 = vunpack.c.h.b16 %v351
        %v2505 = vunpack.c.l.b16 %v352
        %v2506 = vunpack.c.h.b16 %v352
        %v2507 = vunpack.c.l.b16 %v353
        %v2508 = vunpack.c.h.b16 %v353
        %v2509 = vunpack.c.l.b16 %v354
        %v2510 = vunpack.c.h.b16 %v354
        %v2511 = vunpack.c.l.b16 %v355
        %v2512 = vunpack.c.h.b16 %v355
        %v2513 = vunpack.c.l.b16 %v356
        %v2514 = vunpack.c.h.b16 %v356
        %v2515 = vunpack.c.l.b16 %v357
        %v2516 = vunpack.c.h.b16 %v357
        %v2517 = vunpack.c.l.b16 %v358
        %v2518 = vunpack.c.h.b16 %v358
        %v2519 = vunpack.c.l.b16 %v359
        %v2520 = vunpack.c.h.b16 %v359
        %v2521 = vunpack.c.l.b16 %v360
        %v2522 = vunpack.c.h.b16 %v360
        %v2523 = vunpack.c.l.b16 %v361
        %v2524 = vunpack.c.h.b16 %v361
        %v2525 = vunpack.c.l.b16 %v362
        %v2526 = vunpack.c.h.b16 %v362
        %v2527 = vunpack.c.l.b16 %v363
        %v2528 = vunpack.c.h.b16 %v363
        %v2529 = vunpack.c.l.b16 %v364
        %v2530 = vunpack.c.h.b16 %v364
        %v2531 = vunpack.c.l.b16 %v365
        %v2532 = vunpack.c.h.b16 %v365
        %v2533 = vunpack.c.l.b16 %v366
        %v2534 = vunpack.c.h.b16 %v366
        %v2535 = vunpack.c.l.b16 %v367
        %v2536 = vunpack.c.h.b16 %v367
        %v2537 = vunpack.c.l.b16 %v368
        %v2538 = vunpack.c.h.b16 %v368
        %v2539 = vunpack.c.l.b16 %v369
        %v2540 = vunpack.c.h.b16 %v369
        %v2541 = vunpack.c.l.b16 %v370
        %v2542 = vunpack.c.h.b16 %v370
        %v2543 = vunpack.c.l.b16 %v371
        %v2544 = vunpack.c.h.b16 %v371
        %v2545 = vunpack.c.l.b16 %v372
        %v2546 = vunpack.c.h.b16 %v372
        %v2547 = vunpack.c.l.b16 %v373
        %v2548 = vunpack.c.h.b16 %v373
        %v2549 = vunpack.c.l.b16 %v374
        %v2550 = vunpack.c.h.b16 %v374
        %v2551 = vunpack.c.l.b16 %v375
        %v2552 = vunpack.c.h.b16 %v375
        %v2553 = vunpack.c.l.b16 %v376
        %v2554 = vunpack.c.h.b16 %v376
        %v2555 = vunpack.c.l.b16 %v377
        %v2556 = vunpack.c.h.b16 %v377
        %v2557 = vunpack.c.l.b16 %v378
        %v2558 = vunpack.c.h.b16 %v378
        %v2559 = vunpack.c.l.b16 %v379
        %v2560 = vunpack.c.h.b16 %v379
        %v2561 = vunpack.c.l.b16 %v380
        %v2562 = vunpack.c.h.b16 %v380
        %v2563 = vunpack.c.l.b16 %v381
        %v2564 = vunpack.c.h.b16 %v381
        %v2565 = vunpack.c.l.b16 %v382
        %v2566 = vunpack.c.h.b16 %v382
        %v2567 = vunpack.c.l.b16 %v383
        %v2568 = vunpack.c.h.b16 %v383
        %v2569 = vunpack.c.l.b16 %v384
        %v2570 = vunpack.c.h.b16 %v384
        %v2571 = vunpack.c.l.b16 %v385
        %v2572 = vunpack.c.h.b16 %v385
        %v2573 = vunpack.c.l.b16 %v386
        %v2574 = vunpack.c.h.b16 %v386
        %v2575 = vunpack.c.l.b16 %v387
        %v2576 = vunpack.c.h.b16 %v387
        %v2577 = vunpack.c.l.b16 %v388
        %v2578 = vunpack.c.h.b16 %v388
        %v2579 = vunpack.c.l.b16 %v389
        %v2580 = vunpack.c.h.b16 %v389
        %v2581 = vunpack.c.l.b16 %v390
        %v2582 = vunpack.c.h.b16 %v390
        %v2583 = vunpack.c.l.b16 %v391
        %v2584 = vunpack.c.h.b16 %v391
        %v2585 = vunpack.c.l.b16 %v392
        %v2586 = vunpack.c.h.b16 %v392
        %v2587 = vunpack.c.l.b16 %v393
        %v2588 = vunpack.c.h.b16 %v393
        %v2589 = vunpack.c.l.b16 %v394
        %v2590 = vunpack.c.h.b16 %v394
        %v2591 = vunpack.c.l.b16 %v395
        %v2592 = vunpack.c.h.b16 %v395
        %v2593 = vunpack.c.l.b16 %v396
        %v2594 = vunpack.c.h.b16 %v396
        %v2595 = vunpack.c.l.b16 %v397
        %v2596 = vunpack.c.h.b16 %v397
        %v2597 = vunpack.c.l.b16 %v398
        %v2598 = vunpack.c.h.b16 %v398
        %v2599 = vunpack.c.l.b16 %v399
        %v2600 = vunpack.c.h.b16 %v399
        %v2601 = vunpack.c.l.b16 %v400
        %v2602 = vunpack.c.h.b16 %v400
        %v2603 = vunpack.c.l.b16 %v401
        %v2604 = vunpack.c.h.b16 %v401
        %v2605 = vunpack.c.l.b16 %v402
        %v2606 = vunpack.c.h.b16 %v402
        %v2607 = vunpack.c.l.b16 %v403
        %v2608 = vunpack.c.h.b16 %v403
        %v2609 = vunpack.c.l.b16 %v404
        %v2610 = vunpack.c.h.b16 %v404
        %v2611 = vunpack.c.l.b16 %v405
        %v2612 = vunpack.c.h.b16 %v405
        %v2613 = vunpack.c.l.b16 %v406
        %v2614 = vunpack.c.h.b16 %v406
        %v2615 = vunpack.c.l.b16 %v407
        %v2616 = vunpack.c.h.b16 %v407
        %v2617 = vunpack.c.l.b16 %v408
        %v2618 = vunpack.c.h.b16 %v408
        %v2619 = vunpack.c.l.b16 %v409
        %v2620 = vunpack.c.h.b16 %v409
        %v2621 = vunpack.c.l.b16 %v410
        %v2622 = vunpack.c.h.b16 %v410
        %v2623 = vunpack.c.l.b16 %v411
        %v2624 = vunpack.c.h.b16 %v411
        %v2625 = vunpack.c.l.b16 %v412
        %v2626 = vunpack.c.h.b16 %v412
        %v2627 = vunpack.c.l.b16 %v413
        %v2628 = vunpack.c.h.b16 %v413
        %v2629 = vunpack.c.l.b16 %v414
        %v2630 = vunpack.c.h.b16 %v414
        %v2631 = vunpack.c.l.b16 %v415
        %v2632 = vunpack.c.h.b16 %v415
        %v2633 = vunpack.c.l.b16 %v416
        %v2634 = vunpack.c.h.b16 %v416
        %v2635 = vunpack.c.l.b16 %v417
        %v2636 = vunpack.c.h.b16 %v417
        %v2637 = vunpack.c.l.b16 %v418
        %v2638 = vunpack.c.h.b16 %v418
        %v2639 = vunpack.c.l.b16 %v419
        %v2640 = vunpack.c.h.b16 %v419
        %v2641 = vunpack.c.l.b16 %v420
        %v2642 = vunpack.c.h.b16 %v420
        %v2643 = vunpack.c.l.b16 %v421
        %v2644 = vunpack.c.h.b16 %v421
        %v2645 = vunpack.c.l.b16 %v422
        %v2646 = vunpack.c.h.b16 %v422
        %v2647 = vunpack.c.l.b16 %v423
        %v2648 = vunpack.c.h.b16 %v423
        %v2649 = vunpack.c.l.b16 %v424
        %v2650 = vunpack.c.h.b16 %v424
        %v2651 = vunpack.c.l.b16 %v425
        %v2652 = vunpack.c.h.b16 %v425
        %v2653 = vunpack.c.l.b16 %v426
        %v2654 = vunpack.c.h.b16 %v426
        %v2655 = vunpack.c.l.b16 %v427
        %v2656 = vunpack.c.h.b16 %v427
        %v2657 = vunpack.c.l.b16 %v428
        %v2658 = vunpack.c.h.b16 %v428
        %v2659 = vunpack.c.l.b16 %v429
        %v2660 = vunpack.c.h.b16 %v429
        %v2661 = vunpack.c.l.b16 %v430
        %v2662 = vunpack.c.h.b16 %v430
        %v2663 = vunpack.c.l.b16 %v431
        %v2664 = vunpack.c.h.b16 %v431
        %v2665 = vunpack.c.l.b16 %v432
        %v2666 = vunpack.c.h.b16 %v432
        %v2667 = vunpack.c.l.b16 %v433
        %v2668 = vunpack.c.h.b16 %v433
        %v2669 = vunpack.c.l.b16 %v434
        %v2670 = vunpack.c.h.b16 %v434
        %v2671 = vunpack.c.l.b16 %v435
        %v2672 = vunpack.c.h.b16 %v435
        %v2673 = vunpack.c.l.b16 %v436
        %v2674 = vunpack.c.h.b16 %v436
        %v2675 = vunpack.c.l.b16 %v437
        %v2676 = vunpack.c.h.b16 %v437
        %v2677 = vunpack.c.l.b16 %v438
        %v2678 = vunpack.c.h.b16 %v438
        %v2679 = vunpack.c.l.b16 %v439
        %v2680 = vunpack.c.h.b16 %v439
        %v2681 = vunpack.c.l.b16 %v440
        %v2682 = vunpack.c.h.b16 %v440
        %v2683 = vunpack.c.l.b16 %v441
        %v2684 = vunpack.c.h.b16 %v441
        %v2685 = vunpack.c.l.b16 %v442
        %v2686 = vunpack.c.h.b16 %v442
        %v2687 = vunpack.c.l.b16 %v443
        %v2688 = vunpack.c.h.b16 %v443
        %v2689 = vunpack.c.l.b16 %v444
        %v2690 = vunpack.c.h.b16 %v444
        %v2691 = vunpack.c.l.b16 %v445
        %v2692 = vunpack.c.h.b16 %v445
        %v2693 = vunpack.c.l.b16 %v446
        %v2694 = vunpack.c.h.b16 %v446
        %v2695 = vunpack.c.l.b16 %v447
        %v2696 = vunpack.c.h.b16 %v447
        %v2697 = vunpack.c.l.b16 %v448
        %v2698 = vunpack.c.h.b16 %v448
        %v2699 = vunpack.c.l.b16 %v449
        %v2700 = vunpack.c.h.b16 %v449
        %v2701 = vunpack.c.l.b16 %v450
        %v2702 = vunpack.c.h.b16 %v450
        %v2703 = vunpack.c.l.b16 %v451
        %v2704 = vunpack.c.h.b16 %v451
        %v2705 = vunpack.c.l.b16 %v452
        %v2706 = vunpack.c.h.b16 %v452
        %v2707 = vunpack.c.l.b16 %v453
        %v2708 = vunpack.c.h.b16 %v453
        %v2709 = vunpack.c.l.b16 %v454
        %v2710 = vunpack.c.h.b16 %v454
        %v2711 = vunpack.c.l.b16 %v455
        %v2712 = vunpack.c.h.b16 %v455
        %v2713 = vunpack.c.l.b16 %v456
        %v2714 = vunpack.c.h.b16 %v456
        %v2715 = vunpack.c.l.b16 %v457
        %v2716 = vunpack.c.h.b16 %v457
        %v2717 = vunpack.c.l.b16 %v458
        %v2718 = vunpack.c.h.b16 %v458
        %v2719 = vunpack.c.l.b16 %v459
        %v2720 = vunpack.c.h.b16 %v459
        %v2721 = vunpack.c.l.b16 %v460
        %v2722 = vunpack.c.h.b16 %v460
        %v2723 = vunpack.c.l.b16 %v461
        %v2724 = vunpack.c.h.b16 %v461
        %v2725 = vunpack.c.l.b16 %v462
        %v2726 = vunpack.c.h.b16 %v462
        %v2727 = vunpack.c.l.b16 %v463
        %v2728 = vunpack.c.h.b16 %v463
        %v2729 = vunpack.c.l.b16 %v464
        %v2730 = vunpack.c.h.b16 %v464
        %v2731 = vunpack.c.l.b16 %v465
        %v2732 = vunpack.c.h.b16 %v465
        %v2733 = vunpack.c.l.b16 %v466
        %v2734 = vunpack.c.h.b16 %v466
        %v2735 = vunpack.c.l.b16 %v467
        %v2736 = vunpack.c.h.b16 %v467
        %v2737 = vunpack.c.l.b16 %v468
        %v2738 = vunpack.c.h.b16 %v468
        %v2739 = vunpack.c.l.b16 %v469
        %v2740 = vunpack.c.h.b16 %v469
        %v2741 = vunpack.c.l.b16 %v470
        %v2742 = vunpack.c.h.b16 %v470
        %v2743 = vunpack.c.l.b16 %v471
        %v2744 = vunpack.c.h.b16 %v471
        %v2745 = vunpack.c.l.b16 %v472
        %v2746 = vunpack.c.h.b16 %v472
        %v2747 = vunpack.c.l.b16 %v473
        %v2748 = vunpack.c.h.b16 %v473
        %v2749 = vunpack.c.l.b16 %v474
        %v2750 = vunpack.c.h.b16 %v474
        %v2751 = vunpack.c.l.b16 %v475
        %v2752 = vunpack.c.h.b16 %v475
        %v2753 = vunpack.c.l.b16 %v476
        %v2754 = vunpack.c.h.b16 %v476
        %v2755 = vunpack.c.l.b16 %v477
        %v2756 = vunpack.c.h.b16 %v477
        %v2757 = vunpack.c.l.b16 %v478
        %v2758 = vunpack.c.h.b16 %v478
        %v2759 = vunpack.c.l.b16 %v479
        %v2760 = vunpack.c.h.b16 %v479
        %v2761 = vunpack.c.l.b16 %v480
        %v2762 = vunpack.c.h.b16 %v480
        %v2763 = vunpack.c.l.b16 %v481
        %v2764 = vunpack.c.h.b16 %v481
        %v2765 = vunpack.c.l.b16 %v482
        %v2766 = vunpack.c.h.b16 %v482
        %v2767 = vunpack.c.l.b16 %v483
        %v2768 = vunpack.c.h.b16 %v483
        %v2769 = vunpack.c.l.b16 %v484
        %v2770 = vunpack.c.h.b16 %v484
        %v2771 = vunpack.c.l.b16 %v485
        %v2772 = vunpack.c.h.b16 %v485
        %v2773 = vunpack.c.l.b16 %v486
        %v2774 = vunpack.c.h.b16 %v486
        %v2775 = vunpack.c.l.b16 %v487
        %v2776 = vunpack.c.h.b16 %v487
        %v2777 = vunpack.c.l.b16 %v488
        %v2778 = vunpack.c.h.b16 %v488
        %v2779 = vunpack.c.l.b16 %v489
        %v2780 = vunpack.c.h.b16 %v489
        %v2781 = vunpack.c.l.b16 %v490
        %v2782 = vunpack.c.h.b16 %v490
        %v2783 = vunpack.c.l.b16 %v491
        %v2784 = vunpack.c.h.b16 %v491
        %v2785 = vunpack.c.l.b16 %v492
        %v2786 = vunpack.c.h.b16 %v492
        %v2787 = vunpack.c.l.b16 %v493
        %v2788 = vunpack.c.h.b16 %v493
        %v2789 = vunpack.c.l.b16 %v494
        %v2790 = vunpack.c.h.b16 %v494
        %v2791 = vunpack.c.l.b16 %v495
        %v2792 = vunpack.c.h.b16 %v495
        %v2793 = vunpack.c.l.b16 %v496
        %v2794 = vunpack.c.h.b16 %v496
        %v2795 = vunpack.c.l.b16 %v497
        %v2796 = vunpack.c.h.b16 %v497
        %v2797 = vunpack.c.l.b16 %v498
        %v2798 = vunpack.c.h.b16 %v498
        %v2799 = vunpack.c.l.b16 %v499
        %v2800 = vunpack.c.h.b16 %v499
        %v2801 = vunpack.c.l.b16 %v500
        %v2802 = vunpack.c.h.b16 %v500
        %v2803 = vunpack.c.l.b16 %v501
        %v2804 = vunpack.c.h.b16 %v501
        %v2805 = vunpack.c.l.b16 %v502
        %v2806 = vunpack.c.h.b16 %v502
        %v2807 = vunpack.c.l.b16 %v503
        %v2808 = vunpack.c.h.b16 %v503
        %v2809 = vunpack.c.l.b16 %v504
        %v2810 = vunpack.c.h.b16 %v504
        %v2811 = vunpack.c.l.b16 %v505
        %v2812 = vunpack.c.h.b16 %v505
        %v2813 = vunpack.c.l.b16 %v506
        %v2814 = vunpack.c.h.b16 %v506
        %v2815 = vunpack.c.l.b16 %v507
        %v2816 = vunpack.c.h.b16 %v507
        %v2817 = vunpack.c.l.b16 %v508
        %v2818 = vunpack.c.h.b16 %v508
        %v2819 = vunpack.c.l.b16 %v509
        %v2820 = vunpack.c.h.b16 %v509
        %v2821 = vunpack.c.l.b16 %v510
        %v2822 = vunpack.c.h.b16 %v510
        %v2823 = vunpack.c.l.b16 %v511
        %v2824 = vunpack.c.h.b16 %v511
        %v2825 = vunpack.c.l.b16 %v512
        %v2826 = vunpack.c.h.b16 %v512
        %v2827 = vunpack.c.l.b16 %v513
        %v2828 = vunpack.c.h.b16 %v513
        %v2829 = vunpack.c.l.b16 %v514
        %v2830 = vunpack.c.h.b16 %v514
        %v2831 = vunpack.c.l.b16 %v515
        %v2832 = vunpack.c.h.b16 %v515
        %v2833 = vunpack.c.l.b16 %v516
        %v2834 = vunpack.c.h.b16 %v516
        %v2835 = vunpack.c.l.b16 %v517
        %v2836 = vunpack.c.h.b16 %v517
        %v2837 = vunpack.c.l.b16 %v518
        %v2838 = vunpack.c.h.b16 %v518
        %v2839 = vunpack.c.l.b16 %v519
        %v2840 = vunpack.c.h.b16 %v519
        %v2841 = vunpack.c.l.b16 %v520
        %v2842 = vunpack.c.h.b16 %v520
        %v2843 = vunpack.c.l.b16 %v521
        %v2844 = vunpack.c.h.b16 %v521
        %v2845 = vunpack.c.l.b16 %v522
        %v2846 = vunpack.c.h.b16 %v522
        %v2847 = vunpack.c.l.b16 %v523
        %v2848 = vunpack.c.h.b16 %v523
        %v2849 = vunpack.c.l.b16 %v524
        %v2850 = vunpack.c.h.b16 %v524
        %v2851 = vunpack.c.l.b16 %v525
        %v2852 = vunpack.c.h.b16 %v525
        %v2853 = vunpack.c.l.b16 %v526
        %v2854 = vunpack.c.h.b16 %v526
        %v2855 = vunpack.c.l.b16 %v527
        %v2856 = vunpack.c.h.b16 %v527
        %v2857 = vunpack.c.l.b16 %v528
        %v2858 = vunpack.c.h.b16 %v528
        %v2859 = vunpack.c.l.b16 %v529
        %v2860 = vunpack.c.h.b16 %v529
        %v2861 = vunpack.c.l.b16 %v530
        %v2862 = vunpack.c.h.b16 %v530
        %v2863 = vunpack.c.l.b16 %v531
        %v2864 = vunpack.c.h.b16 %v531
        %v2865 = vunpack.c.l.b16 %v532
        %v2866 = vunpack.c.h.b16 %v532
        %v2867 = vunpack.c.l.b16 %v533
        %v2868 = vunpack.c.h.b16 %v533
        %v2869 = vunpack.c.l.b16 %v534
        %v2870 = vunpack.c.h.b16 %v534
        %v2871 = vunpack.c.l.b16 %v535
        %v2872 = vunpack.c.h.b16 %v535
        %v2873 = vunpack.c.l.b16 %v536
        %v2874 = vunpack.c.h.b16 %v536
        %v2875 = vunpack.c.l.b16 %v537
        %v2876 = vunpack.c.h.b16 %v537
        %v2877 = vunpack.c.l.b16 %v538
        %v2878 = vunpack.c.h.b16 %v538
        %v2879 = vunpack.c.l.b16 %v539
        %v2880 = vunpack.c.h.b16 %v539
        %v2881 = vunpack.c.l.b16 %v540
        %v2882 = vunpack.c.h.b16 %v540
        %v2883 = vunpack.c.l.b16 %v541
        %v2884 = vunpack.c.h.b16 %v541
        %v2885 = vunpack.c.l.b16 %v542
        %v2886 = vunpack.c.h.b16 %v542
        %v2887 = vunpack.c.l.b16 %v543
        %v2888 = vunpack.c.h.b16 %v543
        %v2889 = vunpack.c.l.b16 %v544
        %v2890 = vunpack.c.h.b16 %v544
        %v2891 = vunpack.c.l.b16 %v545
        %v2892 = vunpack.c.h.b16 %v545
        %v2893 = vunpack.c.l.b16 %v546
        %v2894 = vunpack.c.h.b16 %v546
        %v2895 = vunpack.c.l.b16 %v547
        %v2896 = vunpack.c.h.b16 %v547
        %v2897 = vunpack.c.l.b16 %v548
        %v2898 = vunpack.c.h.b16 %v548
        %v2899 = vunpack.c.l.b16 %v549
        %v2900 = vunpack.c.h.b16 %v549
        %v2901 = vunpack.c.l.b16 %v550
        %v2902 = vunpack.c.h.b16 %v550
        %v2903 = vunpack.c.l.b16 %v551
        %v2904 = vunpack.c.h.b16 %v551
        %v2905 = vunpack.c.l.b16 %v552
        %v2906 = vunpack.c.h.b16 %v552
        %v2907 = vunpack.c.l.b16 %v553
        %v2908 = vunpack.c.h.b16 %v553
        %v2909 = vunpack.c.l.b16 %v554
        %v2910 = vunpack.c.h.b16 %v554
        %v2911 = vunpack.c.l.b16 %v555
        %v2912 = vunpack.c.h.b16 %v555
        %v2913 = vunpack.c.l.b16 %v556
        %v2914 = vunpack.c.h.b16 %v556
        %v2915 = vunpack.c.l.b16 %v557
        %v2916 = vunpack.c.h.b16 %v557
        %v2917 = vunpack.c.l.b16 %v558
        %v2918 = vunpack.c.h.b16 %v558
        %v2919 = vunpack.c.l.b16 %v559
        %v2920 = vunpack.c.h.b16 %v559
        %v2921 = vunpack.c.l.b16 %v560
        %v2922 = vunpack.c.h.b16 %v560
        %v2923 = vunpack.c.l.b16 %v561
        %v2924 = vunpack.c.h.b16 %v561
        %v2925 = vunpack.c.l.b16 %v562
        %v2926 = vunpack.c.h.b16 %v562
        %v2927 = vunpack.c.l.b16 %v563
        %v2928 = vunpack.c.h.b16 %v563
        %v2929 = vunpack.c.l.b16 %v564
        %v2930 = vunpack.c.h.b16 %v564
        %v2931 = vunpack.c.l.b16 %v565
        %v2932 = vunpack.c.h.b16 %v565
        %v2933 = vunpack.c.l.b16 %v566
        %v2934 = vunpack.c.h.b16 %v566
        %v2935 = vunpack.c.l.b16 %v567
        %v2936 = vunpack.c.h.b16 %v567
        %v2937 = vunpack.c.l.b16 %v568
        %v2938 = vunpack.c.h.b16 %v568
        %v2939 = vunpack.c.l.b16 %v569
        %v2940 = vunpack.c.h.b16 %v569
        %v2941 = vunpack.c.l.b16 %v570
        %v2942 = vunpack.c.h.b16 %v570
        %v2943 = vunpack.c.l.b16 %v571
        %v2944 = vunpack.c.h.b16 %v571
        %v2945 = vunpack.c.l.b16 %v572
        %v2946 = vunpack.c.h.b16 %v572
        %v2947 = vunpack.c.l.b16 %v573
        %v2948 = vunpack.c.h.b16 %v573
        %v2949 = vunpack.c.l.b16 %v574
        %v2950 = vunpack.c.h.b16 %v574
        %v2951 = vunpack.c.l.b16 %v575
        %v2952 = vunpack.c.h.b16 %v575
        %v2953 = vunpack.c.l.b16 %v576
        %v2954 = vunpack.c.h.b16 %v576
        %v2955 = vunpack.c.l.b16 %v577
        %v2956 = vunpack.c.h.b16 %v577
        %v2957 = vunpack.c.l.b16 %v578
        %v2958 = vunpack.c.h.b16 %v578
        %v2959 = vunpack.c.l.b16 %v579
        %v2960 = vunpack.c.h.b16 %v579
        %v2961 = vunpack.c.l.b16 %v580
        %v2962 = vunpack.c.h.b16 %v580
        %v2963 = vunpack.c.l.b16 %v581
        %v2964 = vunpack.c.h.b16 %v581
        %v2965 = vunpack.c.l.b16 %v582
        %v2966 = vunpack.c.h.b16 %v582
        %v2967 = vunpack.c.l.b16 %v583
        %v2968 = vunpack.c.h.b16 %v583
        %v2969 = vunpack.c.l.b16 %v584
        %v2970 = vunpack.c.h.b16 %v584
        %v2971 = vunpack.c.l.b16 %v585
        %v2972 = vunpack.c.h.b16 %v585
        %v2973 = vunpack.c.l.b16 %v586
        %v2974 = vunpack.c.h.b16 %v586
        %v2975 = vunpack.c.l.b16 %v587
        %v2976 = vunpack.c.h.b16 %v587
        %v2977 = vunpack.c.l.b16 %v588
        %v2978 = vunpack.c.h.b16 %v588
        %v2979 = vunpack.c.l.b16 %v589
        %v2980 = vunpack.c.h.b16 %v589
        %v2981 = vunpack.c.l.b16 %v590
        %v2982 = vunpack.c.h.b16 %v590
        %v2983 = vunpack.c.l.b16 %v591
        %v2984 = vunpack.c.h.b16 %v591
        %v2985 = vunpack.c.l.b16 %v592
        %v2986 = vunpack.c.h.b16 %v592
        %v2987 = vunpack.c.l.b16 %v593
        %v2988 = vunpack.c.h.b16 %v593
        %v2989 = vunpack.c.l.b16 %v594
        %v2990 = vunpack.c.h.b16 %v594
        %v2991 = vunpack.c.l.b16 %v595
        %v2992 = vunpack.c.h.b16 %v595
        %v2993 = vunpack.c.l.b16 %v596
        %v2994 = vunpack.c.h.b16 %v596
        %v2995 = vunpack.c.l.b16 %v597
        %v2996 = vunpack.c.h.b16 %v597
        %v2997 = vunpack.c.l.b16 %v598
        %v2998 = vunpack.c.h.b16 %v598
        %v2999 = vunpack.c.l.b16 %v599
        %v3000 = vunpack.c.h.b16 %v599
        %v3001 = vunpack.c.l.b16 %v600
        %v3002 = vunpack.c.h.b16 %v600
        %v3003 = vunpack.c.l.b16 %v601
        %v3004 = vunpack.c.h.b16 %v601
        %v3005 = vunpack.c.l.b16 %v602
        %v3006 = vunpack.c.h.b16 %v602
        %v3007 = vunpack.c.l.b16 %v603
        %v3008 = vunpack.c.h.b16 %v603
        %v3009 = vunpack.c.l.b16 %v604
        %v3010 = vunpack.c.h.b16 %v604
        %v3011 = vunpack.c.l.b16 %v605
        %v3012 = vunpack.c.h.b16 %v605
        %v3013 = vunpack.c.l.b16 %v606
        %v3014 = vunpack.c.h.b16 %v606
        %v3015 = vunpack.c.l.b16 %v607
        %v3016 = vunpack.c.h.b16 %v607
        %v3017 = vunpack.c.l.b16 %v608
        %v3018 = vunpack.c.h.b16 %v608
        %v3019 = vunpack.c.l.b16 %v609
        %v3020 = vunpack.c.h.b16 %v609
        %v3021 = vunpack.c.l.b16 %v610
        %v3022 = vunpack.c.h.b16 %v610
        %v3023 = vunpack.c.l.b16 %v611
        %v3024 = vunpack.c.h.b16 %v611
        %v3025 = vunpack.c.l.b16 %v612
        %v3026 = vunpack.c.h.b16 %v612
        %v3027 = vunpack.c.l.b16 %v613
        %v3028 = vunpack.c.h.b16 %v613
        %v3029 = vunpack.c.l.b16 %v614
        %v3030 = vunpack.c.h.b16 %v614
        %v3031 = vunpack.c.l.b16 %v615
        %v3032 = vunpack.c.h.b16 %v615
        %v3033 = vunpack.c.l.b16 %v616
        %v3034 = vunpack.c.h.b16 %v616
        %v3035 = vunpack.c.l.b16 %v617
        %v3036 = vunpack.c.h.b16 %v617
        %v3037 = vunpack.c.l.b16 %v618
        %v3038 = vunpack.c.h.b16 %v618
        %v3039 = vunpack.c.l.b16 %v619
        %v3040 = vunpack.c.h.b16 %v619
        %v3041 = vunpack.c.l.b16 %v620
        %v3042 = vunpack.c.h.b16 %v620
        %v3043 = vunpack.c.l.b16 %v621
        %v3044 = vunpack.c.h.b16 %v621
        %v3045 = vunpack.c.l.b16 %v622
        %v3046 = vunpack.c.h.b16 %v622
        %v3047 = vunpack.c.l.b16 %v623
        %v3048 = vunpack.c.h.b16 %v623
        %v3049 = vunpack.c.l.b16 %v624
        %v3050 = vunpack.c.h.b16 %v624
        %v3051 = vunpack.c.l.b16 %v625
        %v3052 = vunpack.c.h.b16 %v625
        %v3053 = vunpack.c.l.b16 %v626
        %v3054 = vunpack.c.h.b16 %v626
        %v3055 = vunpack.c.l.b16 %v627
        %v3056 = vunpack.c.h.b16 %v627
        %v3057 = vunpack.c.l.b16 %v628
        %v3058 = vunpack.c.h.b16 %v628
        %v3059 = vunpack.c.l.b16 %v629
        %v3060 = vunpack.c.h.b16 %v629
        %v3061 = vunpack.c.l.b16 %v630
        %v3062 = vunpack.c.h.b16 %v630
        %v3063 = vunpack.c.l.b16 %v631
        %v3064 = vunpack.c.h.b16 %v631
        %v3065 = vunpack.c.l.b16 %v632
        %v3066 = vunpack.c.h.b16 %v632
        %v3067 = vunpack.c.l.b16 %v633
        %v3068 = vunpack.c.h.b16 %v633
        %v3069 = vunpack.c.l.b16 %v634
        %v3070 = vunpack.c.h.b16 %v634
        %v3071 = vunpack.c.l.b16 %v635
        %v3072 = vunpack.c.h.b16 %v635
        %v3073 = vunpack.c.l.b16 %v636
        %v3074 = vunpack.c.h.b16 %v636
        %v3075 = vunpack.c.l.b16 %v637
        %v3076 = vunpack.c.h.b16 %v637
        %v3077 = vunpack.c.l.b16 %v638
        %v3078 = vunpack.c.h.b16 %v638
        %v3079 = vunpack.c.l.b16 %v639
        %v3080 = vunpack.c.h.b16 %v639
        %v3081 = vunpack.c.l.b16 %v640
        %v3082 = vunpack.c.h.b16 %v640
        %v3083 = vunpack.c.l.b16 %v641
        %v3084 = vunpack.c.h.b16 %v641
        %v3085 = vunpack.c.l.b16 %v642
        %v3086 = vunpack.c.h.b16 %v642
        %v3087 = vunpack.c.l.b16 %v643
        %v3088 = vunpack.c.h.b16 %v643
        %v3089 = vunpack.c.l.b16 %v644
        %v3090 = vunpack.c.h.b16 %v644
        %v3091 = vunpack.c.l.b16 %v645
        %v3092 = vunpack.c.h.b16 %v645
        %v3093 = vunpack.c.l.b16 %v646
        %v3094 = vunpack.c.h.b16 %v646
        %v3095 = vunpack.c.l.b16 %v647
        %v3096 = vunpack.c.h.b16 %v647
        %v3097 = vunpack.c.l.b16 %v648
        %v3098 = vunpack.c.h.b16 %v648
        %v3099 = vunpack.c.l.b16 %v649
        %v3100 = vunpack.c.h.b16 %v649
        %v3101 = vunpack.c.l.b16 %v650
        %v3102 = vunpack.c.h.b16 %v650
        %v3103 = vunpack.c.l.b16 %v651
        %v3104 = vunpack.c.h.b16 %v651
        %v3105 = vunpack.c.l.b16 %v652
        %v3106 = vunpack.c.h.b16 %v652
        %v3107 = vunpack.c.l.b16 %v653
        %v3108 = vunpack.c.h.b16 %v653
        %v3109 = vunpack.c.l.b16 %v654
        %v3110 = vunpack.c.h.b16 %v654
        %v3111 = vunpack.c.l.b16 %v655
        %v3112 = vunpack.c.h.b16 %v655
        %v3113 = vunpack.c.l.b16 %v656
        %v3114 = vunpack.c.h.b16 %v656
        %v3115 = vunpack.c.l.b16 %v657
        %v3116 = vunpack.c.h.b16 %v657
        %v3117 = vunpack.c.l.b16 %v658
        %v3118 = vunpack.c.h.b16 %v658
        %v3119 = vunpack.c.l.b16 %v659
        %v3120 = vunpack.c.h.b16 %v659
        %v3121 = vunpack.c.l.b16 %v660
        %v3122 = vunpack.c.h.b16 %v660
        %v3123 = vunpack.c.l.b16 %v661
        %v3124 = vunpack.c.h.b16 %v661
        %v3125 = vunpack.c.l.b16 %v662
        %v3126 = vunpack.c.h.b16 %v662
        %v3127 = vunpack.c.l.b16 %v663
        %v3128 = vunpack.c.h.b16 %v663
        %v3129 = vunpack.c.l.b16 %v664
        %v3130 = vunpack.c.h.b16 %v664
        %v3131 = vunpack.c.l.b16 %v665
        %v3132 = vunpack.c.h.b16 %v665
        %v3133 = vunpack.c.l.b16 %v666
        %v3134 = vunpack.c.h.b16 %v666
        %v3135 = vunpack.c.l.b16 %v667
        %v3136 = vunpack.c.h.b16 %v667
        %v3137 = vunpack.c.l.b16 %v668
        %v3138 = vunpack.c.h.b16 %v668
        %v3139 = vunpack.c.l.b16 %v669
        %v3140 = vunpack.c.h.b16 %v669
        %v3141 = vunpack.c.l.b16 %v670
        %v3142 = vunpack.c.h.b16 %v670
        %v3143 = vunpack.c.l.b16 %v671
        %v3144 = vunpack.c.h.b16 %v671
        %v3145 = vunpack.c.l.b16 %v672
        %v3146 = vunpack.c.h.b16 %v672
        %v3147 = vunpack.c.l.b16 %v673
        %v3148 = vunpack.c.h.b16 %v673
        %v3149 = vunpack.c.l.b16 %v674
        %v3150 = vunpack.c.h.b16 %v674
        %v3151 = vunpack.c.l.b16 %v675
        %v3152 = vunpack.c.h.b16 %v675
        %v3153 = vunpack.c.l.b16 %v676
        %v3154 = vunpack.c.h.b16 %v676
        %v3155 = vunpack.c.l.b16 %v677
        %v3156 = vunpack.c.h.b16 %v677
        %v3157 = vunpack.c.l.b16 %v678
        %v3158 = vunpack.c.h.b16 %v678
        %v3159 = vunpack.c.l.b16 %v679
        %v3160 = vunpack.c.h.b16 %v679
        %v3161 = vunpack.c.l.b16 %v680
        %v3162 = vunpack.c.h.b16 %v680
        %v3163 = vunpack.c.l.b16 %v681
        %v3164 = vunpack.c.h.b16 %v681
        %v3165 = vunpack.c.l.b16 %v682
        %v3166 = vunpack.c.h.b16 %v682
        %v3167 = vunpack.c.l.b16 %v683
        %v3168 = vunpack.c.h.b16 %v683
        %v3169 = vunpack.c.l.b16 %v684
        %v3170 = vunpack.c.h.b16 %v684
        %v3171 = vunpack.c.l.b16 %v685
        %v3172 = vunpack.c.h.b16 %v685
        %v3173 = vunpack.c.l.b16 %v686
        %v3174 = vunpack.c.h.b16 %v686
        %v3175 = vunpack.c.l.b16 %v687
        %v3176 = vunpack.c.h.b16 %v687
        %v3177 = vunpack.c.l.b16 %v688
        %v3178 = vunpack.c.h.b16 %v688
        %v3179 = vunpack.c.l.b16 %v689
        %v3180 = vunpack.c.h.b16 %v689
        %v3181 = vunpack.c.l.b16 %v690
        %v3182 = vunpack.c.h.b16 %v690
        %v3183 = vunpack.c.l.b16 %v691
        %v3184 = vunpack.c.h.b16 %v691
        %v3185 = vunpack.c.l.b16 %v692
        %v3186 = vunpack.c.h.b16 %v692
        %v3187 = vunpack.c.l.b16 %v693
        %v3188 = vunpack.c.h.b16 %v693
        %v3189 = vunpack.c.l.b16 %v694
        %v3190 = vunpack.c.h.b16 %v694
        %v3191 = vunpack.c.l.b16 %v695
        %v3192 = vunpack.c.h.b16 %v695
        %v3193 = vunpack.c.l.b16 %v696
        %v3194 = vunpack.c.h.b16 %v696
        %v3195 = vunpack.c.l.b16 %v697
        %v3196 = vunpack.c.h.b16 %v697
        %v3197 = vunpack.c.l.b16 %v698
        %v3198 = vunpack.c.h.b16 %v698
        %v3199 = vunpack.c.l.b16 %v699
        %v3200 = vunpack.c.h.b16 %v699
        %v3201 = vunpack.c.l.b16 %v700
        %v3202 = vunpack.c.h.b16 %v700
        %v3203 = vunpack.c.l.b16 %v701
        %v3204 = vunpack.c.h.b16 %v701
        %v3205 = vunpack.c.l.b16 %v702
        %v3206 = vunpack.c.h.b16 %v702
        %v3207 = vunpack.c.l.b16 %v703
        %v3208 = vunpack.c.h.b16 %v703
        %v3209 = vunpack.c.l.b16 %v704
        %v3210 = vunpack.c.h.b16 %v704
        %v3211 = vunpack.c.l.b16 %v705
        %v3212 = vunpack.c.h.b16 %v705
        %v3213 = vunpack.c.l.b16 %v706
        %v3214 = vunpack.c.h.b16 %v706
        %v3215 = vunpack.c.l.b16 %v707
        %v3216 = vunpack.c.h.b16 %v707
        %v3217 = vunpack.c.l.b16 %v708
        %v3218 = vunpack.c.h.b16 %v708
        %v3219 = vunpack.c.l.b16 %v709
        %v3220 = vunpack.c.h.b16 %v709
        %v3221 = vunpack.c.l.b16 %v710
        %v3222 = vunpack.c.h.b16 %v710
        %v3223 = vunpack.c.l.b16 %v711
        %v3224 = vunpack.c.h.b16 %v711
        %v3225 = vunpack.c.l.b16 %v712
        %v3226 = vunpack.c.h.b16 %v712
        %v3227 = vunpack.c.l.b16 %v713
        %v3228 = vunpack.c.h.b16 %v713
        %v3229 = vunpack.c.l.b16 %v714
        %v3230 = vunpack.c.h.b16 %v714
        %v3231 = vunpack.c.l.b16 %v715
        %v3232 = vunpack.c.h.b16 %v715
        %v3233 = vunpack.c.l.b16 %v716
        %v3234 = vunpack.c.h.b16 %v716
        %v3235 = vunpack.c.l.b16 %v717
        %v3236 = vunpack.c.h.b16 %v717
        %v3237 = vunpack.c.l.b16 %v718
        %v3238 = vunpack.c.h.b16 %v718
        %v3239 = vunpack.c.l.b16 %v719
        %v3240 = vunpack.c.h.b16 %v719
        %v3241 = vunpack.c.l.b16 %v720
        %v3242 = vunpack.c.h.b16 %v720
        %v3243 = vunpack.c.l.b16 %v721
        %v3244 = vunpack.c.h.b16 %v721
        %v3245 = vunpack.c.l.b16 %v722
        %v3246 = vunpack.c.h.b16 %v722
        %v3247 = vunpack.c.l.b16 %v723
        %v3248 = vunpack.c.h.b16 %v723
        %v3249 = vunpack.c.l.b16 %v724
        %v3250 = vunpack.c.h.b16 %v724
        %v3251 = vunpack.c.l.b16 %v725
        %v3252 = vunpack.c.h.b16 %v725
        %v3253 = vunpack.c.l.b16 %v726
        %v3254 = vunpack.c.h.b16 %v726
        %v3255 = vunpack.c.l.b16 %v727
        %v3256 = vunpack.c.h.b16 %v727
        %v3257 = vunpack.c.l.b16 %v728
        %v3258 = vunpack.c.h.b16 %v728
        %v3259 = vunpack.c.l.b16 %v729
        %v3260 = vunpack.c.h.b16 %v729
        %v3261 = vunpack.c.l.b16 %v730
        %v3262 = vunpack.c.h.b16 %v730
        %v3263 = vunpack.c.l.b16 %v731
        %v3264 = vunpack.c.h.b16 %v731
        %v3265 = vunpack.c.l.b16 %v732
        %v3266 = vunpack.c.h.b16 %v732
        %v3267 = vunpack.c.l.b16 %v733
        %v3268 = vunpack.c.h.b16 %v733
        %v3269 = vunpack.c.l.b16 %v734
        %v3270 = vunpack.c.h.b16 %v734
        %v3271 = vunpack.c.l.b16 %v735
        %v3272 = vunpack.c.h.b16 %v735
        %v3273 = vunpack.c.l.b16 %v736
        %v3274 = vunpack.c.h.b16 %v736
        %v3275 = vunpack.c.l.b16 %v737
        %v3276 = vunpack.c.h.b16 %v737
        %v3277 = vunpack.c.l.b16 %v738
        %v3278 = vunpack.c.h.b16 %v738
        %v3279 = vunpack.c.l.b16 %v739
        %v3280 = vunpack.c.h.b16 %v739
        %v3281 = vunpack.c.l.b16 %v740
        %v3282 = vunpack.c.h.b16 %v740
        %v3283 = vunpack.c.l.b16 %v741
        %v3284 = vunpack.c.h.b16 %v741
        %v3285 = vunpack.c.l.b16 %v742
        %v3286 = vunpack.c.h.b16 %v742
        %v3287 = vunpack.c.l.b16 %v743
        %v3288 = vunpack.c.h.b16 %v743
        %v3289 = vunpack.c.l.b16 %v744
        %v3290 = vunpack.c.h.b16 %v744
        %v3291 = vunpack.c.l.b16 %v745
        %v3292 = vunpack.c.h.b16 %v745
        %v3293 = vunpack.c.l.b16 %v746
        %v3294 = vunpack.c.h.b16 %v746
        %v3295 = vunpack.c.l.b16 %v747
        %v3296 = vunpack.c.h.b16 %v747
        %v3297 = vunpack.c.l.b16 %v748
        %v3298 = vunpack.c.h.b16 %v748
        %v3299 = vunpack.c.l.b16 %v749
        %v3300 = vunpack.c.h.b16 %v749
        %v3301 = vunpack.c.l.b16 %v750
        %v3302 = vunpack.c.h.b16 %v750
        %v3303 = vunpack.c.l.b16 %v751
        %v3304 = vunpack.c.h.b16 %v751
        %v3305 = vunpack.c.l.b16 %v752
        %v3306 = vunpack.c.h.b16 %v752
        %v3307 = vunpack.c.l.b16 %v753
        %v3308 = vunpack.c.h.b16 %v753
        %v3309 = vunpack.c.l.b16 %v754
        %v3310 = vunpack.c.h.b16 %v754
        %v3311 = vunpack.c.l.b16 %v755
        %v3312 = vunpack.c.h.b16 %v755
        %v3313 = vunpack.c.l.b16 %v756
        %v3314 = vunpack.c.h.b16 %v756
        %v3315 = vunpack.c.l.b16 %v757
        %v3316 = vunpack.c.h.b16 %v757
        %v3317 = vunpack.c.l.b16 %v758
        %v3318 = vunpack.c.h.b16 %v758
        %v3319 = vunpack.c.l.b16 %v759
        %v3320 = vunpack.c.h.b16 %v759
        %v3321 = vunpack.c.l.b16 %v760
        %v3322 = vunpack.c.h.b16 %v760
        %v3323 = vunpack.c.l.b16 %v761
        %v3324 = vunpack.c.h.b16 %v761
        %v3325 = vunpack.c.l.b16 %v762
        %v3326 = vunpack.c.h.b16 %v762
        %v3327 = vunpack.c.l.b16 %v763
        %v3328 = vunpack.c.h.b16 %v763
        %v3329 = vunpack.c.l.b16 %v764
        %v3330 = vunpack.c.h.b16 %v764
        %v3331 = vunpack.c.l.b16 %v765
        %v3332 = vunpack.c.h.b16 %v765
        %v3333 = vunpack.c.l.b16 %v766
        %v3334 = vunpack.c.h.b16 %v766
        %v3335 = vunpack.c.l.b16 %v767
        %v3336 = vunpack.c.h.b16 %v767
        %v3337 = vunpack.c.l.b16 %v768
        %v3338 = vunpack.c.h.b16 %v768
        %v3339 = vunpack.c.l.b16 %v769
        %v3340 = vunpack.c.h.b16 %v769
        %v3341 = vunpack.c.l.b16 %v770
        %v3342 = vunpack.c.h.b16 %v770
        %v3343 = vunpack.c.l.b16 %v771
        %v3344 = vunpack.c.h.b16 %v771
        %v3345 = vunpack.c.l.b16 %v772
        %v3346 = vunpack.c.h.b16 %v772
        %v3347 = vunpack.c.l.b16 %v773
        %v3348 = vunpack.c.h.b16 %v773
        %v3349 = vunpack.c.l.b16 %v774
        %v3350 = vunpack.c.h.b16 %v774
        %v3351 = vunpack.c.l.b16 %v775
        %v3352 = vunpack.c.h.b16 %v775
        %v3353 = vunpack.c.l.b16 %v776
        %v3354 = vunpack.c.h.b16 %v776
        %v3355 = vunpack.c.l.b16 %v777
        %v3356 = vunpack.c.h.b16 %v777
        %v3357 = vunpack.c.l.b16 %v778
        %v3358 = vunpack.c.h.b16 %v778
        %v3359 = vunpack.c.l.b16 %v779
        %v3360 = vunpack.c.h.b16 %v779
        %v3361 = vunpack.c.l.b16 %v780
        %v3362 = vunpack.c.h.b16 %v780
        %v3363 = vunpack.c.l.b16 %v781
        %v3364 = vunpack.c.h.b16 %v781
        %v3365 = vunpack.c.l.b16 %v782
        %v3366 = vunpack.c.h.b16 %v782
        %v3367 = vunpack.c.l.b16 %v783
        %v3368 = vunpack.c.h.b16 %v783
        %v3369 = vunpack.c.l.b16 %v784
        %v3370 = vunpack.c.h.b16 %v784
        %v3371 = vunpack.c.l.b16 %v785
        %v3372 = vunpack.c.h.b16 %v785
        %v3373 = vunpack.c.l.b16 %v786
        %v3374 = vunpack.c.h.b16 %v786
        %v3375 = vunpack.c.l.b16 %v787
        %v3376 = vunpack.c.h.b16 %v787
        %v3377 = vunpack.c.l.b16 %v788
        %v3378 = vunpack.c.h.b16 %v788
        %v3379 = vunpack.c.l.b16 %v789
        %v3380 = vunpack.c.h.b16 %v789
        %v3381 = vunpack.c.l.b16 %v790
        %v3382 = vunpack.c.h.b16 %v790
        %v3383 = vunpack.c.l.b16 %v791
        %v3384 = vunpack.c.h.b16 %v791
        %v3385 = vunpack.c.l.b16 %v792
        %v3386 = vunpack.c.h.b16 %v792
        %v3387 = vunpack.c.l.b16 %v793
        %v3388 = vunpack.c.h.b16 %v793
        %v3389 = vunpack.c.l.b16 %v794
        %v3390 = vunpack.c.h.b16 %v794
        %v3391 = vunpack.c.l.b16 %v795
        %v3392 = vunpack.c.h.b16 %v795
        %v3393 = vunpack.c.l.b16 %v796
        %v3394 = vunpack.c.h.b16 %v796
        %v3395 = vunpack.c.l.b16 %v797
        %v3396 = vunpack.c.h.b16 %v797
        %v3397 = vunpack.c.l.b16 %v798
        %v3398 = vunpack.c.h.b16 %v798
        %v3399 = vunpack.c.l.b16 %v799
        %v3400 = vunpack.c.h.b16 %v799
        %v3401 = vunpack.c.l.b16 %v800
        %v3402 = vunpack.c.h.b16 %v800
        %v3403 = vunpack.c.l.b16 %v801
        %v3404 = vunpack.c.h.b16 %v801
        %v3405 = vunpack.c.l.b16 %v802
        %v3406 = vunpack.c.h.b16 %v802
        %v3407 = vunpack.c.l.b16 %v803
        %v3408 = vunpack.c.h.b16 %v803
        %v3409 = vunpack.c.l.b16 %v804
        %v3410 = vunpack.c.h.b16 %v804
        %v3411 = vunpack.c.l.b16 %v805
        %v3412 = vunpack.c.h.b16 %v805
        %v3413 = vunpack.c.l.b16 %v806
        %v3414 = vunpack.c.h.b16 %v806
        %v3415 = vunpack.c.l.b16 %v807
        %v3416 = vunpack.c.h.b16 %v807
        %v3417 = vunpack.c.l.b16 %v808
        %v3418 = vunpack.c.h.b16 %v808
        %v3419 = vunpack.c.l.b16 %v809
        %v3420 = vunpack.c.h.b16 %v809
        %v3421 = vunpack.c.l.b16 %v810
        %v3422 = vunpack.c.h.b16 %v810
        %v3423 = vunpack.c.l.b16 %v811
        %v3424 = vunpack.c.h.b16 %v811
        %v3425 = vunpack.c.l.b16 %v812
        %v3426 = vunpack.c.h.b16 %v812
        %v3427 = vunpack.c.l.b16 %v813
        %v3428 = vunpack.c.h.b16 %v813
        %v3429 = vunpack.c.l.b16 %v814
        %v3430 = vunpack.c.h.b16 %v814
        %v3431 = vunpack.c.l.b16 %v815
        %v3432 = vunpack.c.h.b16 %v815
        %v3433 = vunpack.c.l.b16 %v816
        %v3434 = vunpack.c.h.b16 %v816
        %v3435 = vunpack.c.l.b16 %v817
        %v3436 = vunpack.c.h.b16 %v817
        %v3437 = vunpack.c.l.b16 %v818
        %v3438 = vunpack.c.h.b16 %v818
        %v3439 = vunpack.c.l.b16 %v819
        %v3440 = vunpack.c.h.b16 %v819
        %v3441 = vunpack.c.l.b16 %v820
        %v3442 = vunpack.c.h.b16 %v820
        %v3443 = vunpack.c.l.b16 %v821
        %v3444 = vunpack.c.h.b16 %v821
        %v3445 = vunpack.c.l.b16 %v822
        %v3446 = vunpack.c.h.b16 %v822
        %v3447 = vunpack.c.l.b16 %v823
        %v3448 = vunpack.c.h.b16 %v823
        %v3449 = vunpack.c.l.b16 %v824
        %v3450 = vunpack.c.h.b16 %v824
        %v3451 = vunpack.c.l.b16 %v825
        %v3452 = vunpack.c.h.b16 %v825
        %v3453 = vunpack.c.l.b16 %v826
        %v3454 = vunpack.c.h.b16 %v826
        %v3455 = vunpack.c.l.b16 %v827
        %v3456 = vunpack.c.h.b16 %v827
        %v3457 = vunpack.c.l.b16 %v828
        %v3458 = vunpack.c.h.b16 %v828
        %v3459 = vunpack.c.l.b16 %v829
        %v3460 = vunpack.c.h.b16 %v829
        %v3461 = vunpack.c.l.b16 %v830
        %v3462 = vunpack.c.h.b16 %v830
        %v3463 = vunpack.c.l.b16 %v831
        %v3464 = vunpack.c.h.b16 %v831
        %v3465 = vunpack.c.l.b16 %v832
        %v3466 = vunpack.c.h.b16 %v832
        %v3467 = vunpack.c.l.b16 %v833
        %v3468 = vunpack.c.h.b16 %v833
        %v3469 = vunpack.c.l.b16 %v834
        %v3470 = vunpack.c.h.b16 %v834
        %v3471 = vunpack.c.l.b16 %v835
        %v3472 = vunpack.c.h.b16 %v835
        %v3473 = vunpack.c.l.b16 %v836
        %v3474 = vunpack.c.h.b16 %v836
        %v3475 = vunpack.c.l.b16 %v837
        %v3476 = vunpack.c.h.b16 %v837
        %v3477 = vunpack.c.l.b16 %v838
        %v3478 = vunpack.c.h.b16 %v838
        %v3479 = vunpack.c.l.b16 %v839
        %v3480 = vunpack.c.h.b16 %v839
        %v3481 = vunpack.c.l.b16 %v840
        %v3482 = vunpack.c.h.b16 %v840
        %v3483 = vunpack.c.l.b16 %v841
        %v3484 = vunpack.c.h.b16 %v841
        %v3485 = vunpack.c.l.b16 %v842
        %v3486 = vunpack.c.h.b16 %v842
        %v3487 = vunpack.c.l.b16 %v843
        %v3488 = vunpack.c.h.b16 %v843
        %v3489 = vunpack.c.l.b16 %v844
        %v3490 = vunpack.c.h.b16 %v844
        %v3491 = vunpack.c.l.b16 %v845
        %v3492 = vunpack.c.h.b16 %v845
        %v3493 = vunpack.c.l.b16 %v846
        %v3494 = vunpack.c.h.b16 %v846
        %v3495 = vunpack.c.l.b16 %v847
        %v3496 = vunpack.c.h.b16 %v847
        %v3497 = vunpack.c.l.b16 %v848
        %v3498 = vunpack.c.h.b16 %v848
        %v3499 = vunpack.c.l.b16 %v849
        %v3500 = vunpack.c.h.b16 %v849
        %v3501 = vunpack.c.l.b16 %v850
        %v3502 = vunpack.c.h.b16 %v850
        %v3503 = vunpack.c.l.b16 %v851
        %v3504 = vunpack.c.h.b16 %v851
        %v3505 = vunpack.c.l.b16 %v852
        %v3506 = vunpack.c.h.b16 %v852
        %v3507 = vunpack.c.l.b16 %v853
        %v3508 = vunpack.c.h.b16 %v853
        %v3509 = vunpack.c.l.b16 %v854
        %v3510 = vunpack.c.h.b16 %v854
        %v3511 = vunpack.c.l.b16 %v855
        %v3512 = vunpack.c.h.b16 %v855
        %v3513 = vunpack.c.l.b16 %v856
        %v3514 = vunpack.c.h.b16 %v856
        %v3515 = vunpack.c.l.b16 %v857
        %v3516 = vunpack.c.h.b16 %v857
        %v3517 = vunpack.c.l.b16 %v858
        %v3518 = vunpack.c.h.b16 %v858
        %v3519 = vunpack.c.l.b16 %v859
        %v3520 = vunpack.c.h.b16 %v859
        %v3521 = vunpack.c.l.b16 %v860
        %v3522 = vunpack.c.h.b16 %v860
        %v3523 = vunpack.c.l.b16 %v861
        %v3524 = vunpack.c.h.b16 %v861
        %v3525 = vunpack.c.l.b16 %v862
        %v3526 = vunpack.c.h.b16 %v862
        %v3527 = vunpack.c.l.b16 %v863
        %v3528 = vunpack.c.h.b16 %v863
        %v3529 = vunpack.c.l.b16 %v864
        %v3530 = vunpack.c.h.b16 %v864
        %v3531 = vunpack.c.l.b16 %v865
        %v3532 = vunpack.c.h.b16 %v865
        %v3533 = vunpack.c.l.b16 %v866
        %v3534 = vunpack.c.h.b16 %v866
        %v3535 = vunpack.c.l.b16 %v867
        %v3536 = vunpack.c.h.b16 %v867
        %v3537 = vunpack.c.l.b16 %v868
        %v3538 = vunpack.c.h.b16 %v868
        %v3539 = vunpack.c.l.b16 %v869
        %v3540 = vunpack.c.h.b16 %v869
        %v3541 = vunpack.c.l.b16 %v870
        %v3542 = vunpack.c.h.b16 %v870
        %v3543 = vunpack.c.l.b16 %v871
        %v3544 = vunpack.c.h.b16 %v871
        %v3545 = vunpack.c.l.b16 %v872
        %v3546 = vunpack.c.h.b16 %v872
        %v3547 = vunpack.c.l.b16 %v873
        %v3548 = vunpack.c.h.b16 %v873
        %v3549 = vunpack.c.l.b16 %v874
        %v3550 = vunpack.c.h.b16 %v874
        %v3551 = vunpack.c.l.b16 %v875
        %v3552 = vunpack.c.h.b16 %v875
        %v3553 = vunpack.c.l.b16 %v876
        %v3554 = vunpack.c.h.b16 %v876
        %v3555 = vunpack.c.l.b16 %v877
        %v3556 = vunpack.c.h.b16 %v877
        %v3557 = vunpack.c.l.b16 %v878
        %v3558 = vunpack.c.h.b16 %v878
        %v3559 = vunpack.c.l.b16 %v879
        %v3560 = vunpack.c.h.b16 %v879
        %v3561 = vunpack.c.l.b16 %v880
        %v3562 = vunpack.c.h.b16 %v880
        %v3563 = vunpack.c.l.b16 %v881
        %v3564 = vunpack.c.h.b16 %v881
        %v3565 = vunpack.c.l.b16 %v882
        %v3566 = vunpack.c.h.b16 %v882
        %v3567 = vunpack.c.l.b16 %v883
        %v3568 = vunpack.c.h.b16 %v883
        %v3569 = vunpack.c.l.b16 %v884
        %v3570 = vunpack.c.h.b16 %v884
        %v3571 = vunpack.c.l.b16 %v885
        %v3572 = vunpack.c.h.b16 %v885
        %v3573 = vunpack.c.l.b16 %v886
        %v3574 = vunpack.c.h.b16 %v886
        %v3575 = vunpack.c.l.b16 %v887
        %v3576 = vunpack.c.h.b16 %v887
        %v3577 = vunpack.c.l.b16 %v888
        %v3578 = vunpack.c.h.b16 %v888
        %v3579 = vunpack.c.l.b16 %v889
        %v3580 = vunpack.c.h.b16 %v889
        %v3581 = vunpack.c.l.b16 %v890
        %v3582 = vunpack.c.h.b16 %v890
        %v3583 = vunpack.c.l.b16 %v891
        %v3584 = vunpack.c.h.b16 %v891
        %v3585 = vunpack.c.l.b16 %v892
        %v3586 = vunpack.c.h.b16 %v892
        %v3587 = vunpack.c.l.b16 %v893
        %v3588 = vunpack.c.h.b16 %v893
        %v3589 = vunpack.c.l.b16 %v894
        %v3590 = vunpack.c.h.b16 %v894
        %v3591 = vunpack.c.l.b16 %v895
        %v3592 = vunpack.c.h.b16 %v895
        %v3593 = vunpack.c.l.b16 %v896
        %v3594 = vunpack.c.h.b16 %v896
        %v3595 = vunpack.c.l.b16 %v897
        %v3596 = vunpack.c.h.b16 %v897
        %v3597 = vunpack.c.l.b16 %v898
        %v3598 = vunpack.c.h.b16 %v898
        %v3599 = vunpack.c.l.b16 %v899
        %v3600 = vunpack.c.h.b16 %v899
        %v3601 = vunpack.c.l.b16 %v900
        %v3602 = vunpack.c.h.b16 %v900
        %v3603 = vunpack.c.l.b16 %v901
        %v3604 = vunpack.c.h.b16 %v901
        %v3605 = vunpack.c.l.b16 %v902
        %v3606 = vunpack.c.h.b16 %v902
        %v3607 = vunpack.c.l.b16 %v903
        %v3608 = vunpack.c.h.b16 %v903
        %v3609 = vunpack.c.l.b16 %v904
        %v3610 = vunpack.c.h.b16 %v904
        %v3611 = vunpack.c.l.b16 %v905
        %v3612 = vunpack.c.h.b16 %v905
        %v3613 = vunpack.c.l.b16 %v906
        %v3614 = vunpack.c.h.b16 %v906
        %v3615 = vunpack.c.l.b16 %v907
        %v3616 = vunpack.c.h.b16 %v907
        %v3617 = vunpack.c.l.b16 %v908
        %v3618 = vunpack.c.h.b16 %v908
        %v3619 = vunpack.c.l.b16 %v909
        %v3620 = vunpack.c.h.b16 %v909
        %v3621 = vunpack.c.l.b16 %v910
        %v3622 = vunpack.c.h.b16 %v910
        %v3623 = vunpack.c.l.b16 %v911
        %v3624 = vunpack.c.h.b16 %v911
        %v3625 = vunpack.c.l.b16 %v912
        %v3626 = vunpack.c.h.b16 %v912
        %v3627 = vunpack.c.l.b16 %v913
        %v3628 = vunpack.c.h.b16 %v913
        %v3629 = vunpack.c.l.b16 %v914
        %v3630 = vunpack.c.h.b16 %v914
        %v3631 = vunpack.c.l.b16 %v915
        %v3632 = vunpack.c.h.b16 %v915
        %v3633 = vunpack.c.l.b16 %v916
        %v3634 = vunpack.c.h.b16 %v916
        %v3635 = vunpack.c.l.b16 %v917
        %v3636 = vunpack.c.h.b16 %v917
        %v3637 = vunpack.c.l.b16 %v918
        %v3638 = vunpack.c.h.b16 %v918
        %v3639 = vunpack.c.l.b16 %v919
        %v3640 = vunpack.c.h.b16 %v919
        %v3641 = vunpack.c.l.b16 %v920
        %v3642 = vunpack.c.h.b16 %v920
        %v3643 = vunpack.c.l.b16 %v921
        %v3644 = vunpack.c.h.b16 %v921
        %v3645 = vunpack.c.l.b16 %v922
        %v3646 = vunpack.c.h.b16 %v922
        %v3647 = vunpack.c.l.b16 %v923
        %v3648 = vunpack.c.h.b16 %v923
        %v3649 = vunpack.c.l.b16 %v924
        %v3650 = vunpack.c.h.b16 %v924
        %v3651 = vunpack.c.l.b16 %v925
        %v3652 = vunpack.c.h.b16 %v925
        %v3653 = vunpack.c.l.b16 %v926
        %v3654 = vunpack.c.h.b16 %v926
        %v3655 = vunpack.c.l.b16 %v927
        %v3656 = vunpack.c.h.b16 %v927
        %v3657 = vunpack.c.l.b16 %v928
        %v3658 = vunpack.c.h.b16 %v928
        %v3659 = vunpack.c.l.b16 %v929
        %v3660 = vunpack.c.h.b16 %v929
        %v3661 = vunpack.c.l.b16 %v930
        %v3662 = vunpack.c.h.b16 %v930
        %v3663 = vunpack.c.l.b16 %v931
        %v3664 = vunpack.c.h.b16 %v931
        %v3665 = vunpack.c.l.b16 %v932
        %v3666 = vunpack.c.h.b16 %v932
        %v3667 = vunpack.c.l.b16 %v933
        %v3668 = vunpack.c.h.b16 %v933
        %v3669 = vunpack.c.l.b16 %v934
        %v3670 = vunpack.c.h.b16 %v934
        %v3671 = vunpack.c.l.b16 %v935
        %v3672 = vunpack.c.h.b16 %v935
        %v3673 = vunpack.c.l.b16 %v936
        %v3674 = vunpack.c.h.b16 %v936
        %v3675 = vunpack.c.l.b16 %v937
        %v3676 = vunpack.c.h.b16 %v937
        %v3677 = vunpack.c.l.b16 %v938
        %v3678 = vunpack.c.h.b16 %v938
        %v3679 = vunpack.c.l.b16 %v939
        %v3680 = vunpack.c.h.b16 %v939
        %v3681 = vunpack.c.l.b16 %v940
        %v3682 = vunpack.c.h.b16 %v940
        %v3683 = vunpack.c.l.b16 %v941
        %v3684 = vunpack.c.h.b16 %v941
        %v3685 = vunpack.c.l.b16 %v942
        %v3686 = vunpack.c.h.b16 %v942
        %v3687 = vunpack.c.l.b16 %v943
        %v3688 = vunpack.c.h.b16 %v943
        %v3689 = vunpack.c.l.b16 %v944
        %v3690 = vunpack.c.h.b16 %v944
        %v3691 = vunpack.c.l.b16 %v945
        %v3692 = vunpack.c.h.b16 %v945
        %v3693 = vunpack.c.l.b16 %v946
        %v3694 = vunpack.c.h.b16 %v946
        %v3695 = vunpack.c.l.b16 %v947
        %v3696 = vunpack.c.h.b16 %v947
        %v3697 = vunpack.c.l.b16 %v948
        %v3698 = vunpack.c.h.b16 %v948
        %v3699 = vunpack.c.l.b16 %v949
        %v3700 = vunpack.c.h.b16 %v949
        %v3701 = vunpack.c.l.b16 %v950
        %v3702 = vunpack.c.h.b16 %v950
        %v3703 = vunpack.c.l.b16 %v951
        %v3704 = vunpack.c.h.b16 %v951
        %v3705 = vunpack.c.l.b16 %v952
        %v3706 = vunpack.c.h.b16 %v952
        %v3707 = vunpack.c.l.b16 %v953
        %v3708 = vunpack.c.h.b16 %v953
        %v3709 = vunpack.c.l.b16 %v954
        %v3710 = vunpack.c.h.b16 %v954
        %v3711 = vunpack.c.l.b16 %v955
        %v3712 = vunpack.c.h.b16 %v955
        %v3713 = vunpack.c.l.b16 %v956
        %v3714 = vunpack.c.h.b16 %v956
        %v3715 = vunpack.c.l.b16 %v957
        %v3716 = vunpack.c.h.b16 %v957
        %v3717 = vunpack.c.l.b16 %v958
        %v3718 = vunpack.c.h.b16 %v958
        %v3719 = vunpack.c.l.b16 %v959
        %v3720 = vunpack.c.h.b16 %v959
        %v3721 = vunpack.c.l.b16 %v960
        %v3722 = vunpack.c.h.b16 %v960
        %v3723 = vunpack.c.l.b16 %v961
        %v3724 = vunpack.c.h.b16 %v961
        %v3725 = vunpack.c.l.b16 %v962
        %v3726 = vunpack.c.h.b16 %v962
        %v3727 = vunpack.c.l.b16 %v963
        %v3728 = vunpack.c.h.b16 %v963
        %v3729 = vunpack.c.l.b16 %v964
        %v3730 = vunpack.c.h.b16 %v964
        %v3731 = vunpack.c.l.b16 %v965
        %v3732 = vunpack.c.h.b16 %v965
        %v3733 = vunpack.c.l.b16 %v966
        %v3734 = vunpack.c.h.b16 %v966
        %v3735 = vunpack.c.l.b16 %v967
        %v3736 = vunpack.c.h.b16 %v967
        %v3737 = vunpack.c.l.b16 %v968
        %v3738 = vunpack.c.h.b16 %v968
        %v3739 = vunpack.c.l.b16 %v969
        %v3740 = vunpack.c.h.b16 %v969
        %v3741 = vunpack.c.l.b16 %v970
        %v3742 = vunpack.c.h.b16 %v970
        %v3743 = vunpack.c.l.b16 %v971
        %v3744 = vunpack.c.h.b16 %v971
        %v3745 = vunpack.c.l.b16 %v972
        %v3746 = vunpack.c.h.b16 %v972
        %v3747 = vunpack.c.l.b16 %v973
        %v3748 = vunpack.c.h.b16 %v973
        %v3749 = vunpack.c.l.b16 %v974
        %v3750 = vunpack.c.h.b16 %v974
        %v3751 = vunpack.c.l.b16 %v975
        %v3752 = vunpack.c.h.b16 %v975
        %v3753 = vunpack.c.l.b16 %v976
        %v3754 = vunpack.c.h.b16 %v976
        %v3755 = vunpack.c.l.b16 %v977
        %v3756 = vunpack.c.h.b16 %v977
        %v3757 = vunpack.c.l.b16 %v978
        %v3758 = vunpack.c.h.b16 %v978
        %v3759 = vunpack.c.l.b16 %v979
        %v3760 = vunpack.c.h.b16 %v979
        %v3761 = vunpack.c.l.b16 %v980
        %v3762 = vunpack.c.h.b16 %v980
        %v3763 = vunpack.c.l.b16 %v981
        %v3764 = vunpack.c.h.b16 %v981
        %v3765 = vunpack.c.l.b16 %v982
        %v3766 = vunpack.c.h.b16 %v982
        %v3767 = vunpack.c.l.b16 %v983
        %v3768 = vunpack.c.h.b16 %v983
        %v3769 = vunpack.c.l.b16 %v984
        %v3770 = vunpack.c.h.b16 %v984
        %v3771 = vunpack.c.l.b16 %v985
        %v3772 = vunpack.c.h.b16 %v985
        %v3773 = vunpack.c.l.b16 %v986
        %v3774 = vunpack.c.h.b16 %v986
        %v3775 = vunpack.c.l.b16 %v987
        %v3776 = vunpack.c.h.b16 %v987
        %v3777 = vunpack.c.l.b16 %v988
        %v3778 = vunpack.c.h.b16 %v988
        %v3779 = vunpack.c.l.b16 %v989
        %v3780 = vunpack.c.h.b16 %v989
        %v3781 = vunpack.c.l.b16 %v990
        %v3782 = vunpack.c.h.b16 %v990
        %v3783 = vunpack.c.l.b16 %v991
        %v3784 = vunpack.c.h.b16 %v991
        %v3785 = vunpack.c.l.b16 %v992
        %v3786 = vunpack.c.h.b16 %v992
        %v3787 = vunpack.c.l.b16 %v993
        %v3788 = vunpack.c.h.b16 %v993
        %v3789 = vunpack.c.l.b16 %v994
        %v3790 = vunpack.c.h.b16 %v994
        %v3791 = vunpack.c.l.b16 %v995
        %v3792 = vunpack.c.h.b16 %v995
        %v3793 = vunpack.c.l.b16 %v996
        %v3794 = vunpack.c.h.b16 %v996
        %v3795 = vunpack.c.l.b16 %v997
        %v3796 = vunpack.c.h.b16 %v997
        %v3797 = vunpack.c.l.b16 %v998
        %v3798 = vunpack.c.h.b16 %v998
        %v3799 = vunpack.c.l.b16 %v999
        %v3800 = vunpack.c.h.b16 %v999
        %v3801 = vunpack.c.l.b16 %v1000
        %v3802 = vunpack.c.h.b16 %v1000
        %v3803 = vunpack.c.l.b16 %v1001
        %v3804 = vunpack.c.h.b16 %v1001
        %v3805 = vunpack.c.l.b16 %v1002
        %v3806 = vunpack.c.h.b16 %v1002
        %v3807 = vunpack.c.l.b16 %v1003
        %v3808 = vunpack.c.h.b16 %v1003
        %v3809 = vunpack.c.l.b16 %v1004
        %v3810 = vunpack.c.h.b16 %v1004
        %v3811 = vunpack.c.l.b16 %v1005
        %v3812 = vunpack.c.h.b16 %v1005
        %v3813 = vunpack.c.l.b16 %v1006
        %v3814 = vunpack.c.h.b16 %v1006
        %v3815 = vunpack.c.l.b16 %v1007
        %v3816 = vunpack.c.h.b16 %v1007
        %v3817 = vunpack.c.l.b16 %v1008
        %v3818 = vunpack.c.h.b16 %v1008
        %v3819 = vunpack.c.l.b16 %v1009
        %v3820 = vunpack.c.h.b16 %v1009
        %v3821 = vunpack.c.l.b16 %v1010
        %v3822 = vunpack.c.h.b16 %v1010
        %v3823 = vunpack.c.l.b16 %v1011
        %v3824 = vunpack.c.h.b16 %v1011
        %v3825 = vunpack.c.l.b16 %v1012
        %v3826 = vunpack.c.h.b16 %v1012
        %v3827 = vunpack.c.l.b16 %v1013
        %v3828 = vunpack.c.h.b16 %v1013
        %v3829 = vunpack.c.l.b16 %v1014
        %v3830 = vunpack.c.h.b16 %v1014
        %v3831 = vunpack.c.l.b16 %v1015
        %v3832 = vunpack.c.h.b16 %v1015
        %v3833 = vunpack.c.l.b16 %v1016
        %v3834 = vunpack.c.h.b16 %v1016
        %v3835 = vunpack.c.l.b16 %v1017
        %v3836 = vunpack.c.h.b16 %v1017
        %v3837 = vunpack.c.l.b16 %v1018
        %v3838 = vunpack.c.h.b16 %v1018
        %v3839 = vunpack.c.l.b16 %v1019
        %v3840 = vunpack.c.h.b16 %v1019
        %v3841 = vunpack.c.l.b16 %v1020
        %v3842 = vunpack.c.h.b16 %v1020
        %v3843 = vunpack.c.l.b16 %v1021
        %v3844 = vunpack.c.h.b16 %v1021
        %v3845 = vunpack.c.l.b16 %v1022
        %v3846 = vunpack.c.h.b16 %v1022
        %v3847 = vunpack.c.l.b16 %v1023
        %v3848 = vunpack.c.h.b16 %v1023
        %v3849 = vunpack.c.l.b16 %v1024
        %v3850 = vunpack.c.h.b16 %v1024
        %v3851 = vunpack.c.l.b16 %v1025
        %v3852 = vunpack.c.h.b16 %v1025
        %v3853 = vunpack.c.l.b16 %v1026
        %v3854 = vunpack.c.h.b16 %v1026
        %v3855 = vunpack.c.l.b16 %v1027
        %v3856 = vunpack.c.h.b16 %v1027
        %v3857 = vunpack.c.l.b16 %v1028
        %v3858 = vunpack.c.h.b16 %v1028
        %v3859 = vunpack.c.l.b16 %v1029
        %v3860 = vunpack.c.h.b16 %v1029
        %v3861 = vunpack.c.l.b16 %v1030
        %v3862 = vunpack.c.h.b16 %v1030
        %v3863 = vunpack.c.l.b16 %v1031
        %v3864 = vunpack.c.h.b16 %v1031
        %v3865 = vunpack.c.l.b16 %v1032
        %v3866 = vunpack.c.h.b16 %v1032
        %v3867 = vunpack.c.l.b16 %v1033
        %v3868 = vunpack.c.h.b16 %v1033
        %v3869 = vunpack.c.l.b16 %v1034
        %v3870 = vunpack.c.h.b16 %v1034
        %v3871 = vunpack.c.l.b16 %v1035
        %v3872 = vunpack.c.h.b16 %v1035
        %v3873 = vunpack.c.l.b16 %v1036
        %v3874 = vunpack.c.h.b16 %v1036
        %v3875 = vunpack.c.l.b16 %v1037
        %v3876 = vunpack.c.h.b16 %v1037
        %v3877 = vunpack.c.l.b16 %v1038
        %v3878 = vunpack.c.h.b16 %v1038
        %v3879 = vunpack.c.l.b16 %v1039
        %v3880 = vunpack.c.h.b16 %v1039
        %v3881 = vunpack.c.l.b16 %v1040
        %v3882 = vunpack.c.h.b16 %v1040
        %v3883 = vunpack.c.l.b16 %v1041
        %v3884 = vunpack.c.h.b16 %v1041
        %v3885 = vunpack.c.l.b16 %v1042
        %v3886 = vunpack.c.h.b16 %v1042
        %v3887 = vunpack.c.l.b16 %v1043
        %v3888 = vunpack.c.h.b16 %v1043
        %v3889 = vunpack.c.l.b16 %v1044
        %v3890 = vunpack.c.h.b16 %v1044
        %v3891 = vunpack.c.l.b16 %v1045
        %v3892 = vunpack.c.h.b16 %v1045
        %v3893 = vunpack.c.l.b16 %v1046
        %v3894 = vunpack.c.h.b16 %v1046
        %v3895 = vunpack.c.l.b16 %v1047
        %v3896 = vunpack.c.h.b16 %v1047
        %v3897 = vunpack.c.l.b16 %v1048
        %v3898 = vunpack.c.h.b16 %v1048
        %v3899 = vunpack.c.l.b16 %v1049
        %v3900 = vunpack.c.h.b16 %v1049
        %v3901 = vunpack.c.l.b16 %v1050
        %v3902 = vunpack.c.h.b16 %v1050
        %v3903 = vunpack.c.l.b16 %v1051
        %v3904 = vunpack.c.h.b16 %v1051
        %v3905 = vunpack.c.l.b16 %v1052
        %v3906 = vunpack.c.h.b16 %v1052
        %v3907 = vunpack.c.l.b16 %v1053
        %v3908 = vunpack.c.h.b16 %v1053
        %v3909 = vunpack.c.l.b16 %v1054
        %v3910 = vunpack.c.h.b16 %v1054
        %v3911 = vunpack.c.l.b16 %v1055
        %v3912 = vunpack.c.h.b16 %v1055
        %v3913 = vunpack.c.l.b16 %v1056
        %v3914 = vunpack.c.h.b16 %v1056
        %v3915 = vunpack.c.l.b16 %v1057
        %v3916 = vunpack.c.h.b16 %v1057
        %v3917 = vunpack.c.l.b16 %v1058
        %v3918 = vunpack.c.h.b16 %v1058
        %v3919 = vunpack.c.l.b16 %v1059
        %v3920 = vunpack.c.h.b16 %v1059
        %v3921 = vunpack.c.l.b16 %v1060
        %v3922 = vunpack.c.h.b16 %v1060
        %v3923 = vunpack.c.l.b16 %v1061
        %v3924 = vunpack.c.h.b16 %v1061
        %v3925 = vunpack.c.l.b16 %v1062
        %v3926 = vunpack.c.h.b16 %v1062
        %v3927 = vunpack.c.l.b16 %v1063
        %v3928 = vunpack.c.h.b16 %v1063
        %v3929 = vunpack.c.l.b16 %v1064
        %v3930 = vunpack.c.h.b16 %v1064
        %v3931 = vunpack.c.l.b16 %v1065
        %v3932 = vunpack.c.h.b16 %v1065
        %v3933 = vunpack.c.l.b16 %v1066
        %v3934 = vunpack.c.h.b16 %v1066
        %v3935 = vunpack.c.l.b16 %v1067
        %v3936 = vunpack.c.h.b16 %v1067
        %v3937 = vunpack.c.l.b16 %v1068
        %v3938 = vunpack.c.h.b16 %v1068
        %v3939 = vunpack.c.l.b16 %v1069
        %v3940 = vunpack.c.h.b16 %v1069
        %v3941 = vunpack.c.l.b16 %v1070
        %v3942 = vunpack.c.h.b16 %v1070
        %v3943 = vunpack.c.l.b16 %v1071
        %v3944 = vunpack.c.h.b16 %v1071
        %v3945 = vunpack.c.l.b16 %v1072
        %v3946 = vunpack.c.h.b16 %v1072
        %v3947 = vunpack.c.l.b16 %v1073
        %v3948 = vunpack.c.h.b16 %v1073
        %v3949 = vunpack.c.l.b16 %v1074
        %v3950 = vunpack.c.h.b16 %v1074
        %v3951 = vunpack.c.l.b16 %v1075
        %v3952 = vunpack.c.h.b16 %v1075
        %v3953 = vunpack.c.l.b16 %v1076
        %v3954 = vunpack.c.h.b16 %v1076
        %v3955 = vunpack.c.l.b16 %v1077
        %v3956 = vunpack.c.h.b16 %v1077
        %v3957 = vunpack.c.l.b16 %v1078
        %v3958 = vunpack.c.h.b16 %v1078
        %v3959 = vunpack.c.l.b16 %v1079
        %v3960 = vunpack.c.h.b16 %v1079
        %v3961 = vunpack.c.l.b16 %v1080
        %v3962 = vunpack.c.h.b16 %v1080
        %v3963 = vunpack.c.l.b16 %v1081
        %v3964 = vunpack.c.h.b16 %v1081
        %v3965 = vunpack.c.l.b16 %v1082
        %v3966 = vunpack.c.h.b16 %v1082
        %v3967 = vunpack.c.l.b16 %v1083
        %v3968 = vunpack.c.h.b16 %v1083
        %v3969 = vunpack.c.l.b16 %v1084
        %v3970 = vunpack.c.h.b16 %v1084
        %v3971 = vunpack.c.l.b16 %v1085
        %v3972 = vunpack.c.h.b16 %v1085
        %v3973 = vunpack.c.l.b16 %v1086
        %v3974 = vunpack.c.h.b16 %v1086
        %v3975 = vunpack.c.l.b16 %v1087
        %v3976 = vunpack.c.h.b16 %v1087
        %v3977 = vunpack.c.l.b16 %v1088
        %v3978 = vunpack.c.h.b16 %v1088
        %v3979 = vunpack.c.l.b16 %v1089
        %v3980 = vunpack.c.h.b16 %v1089
        %v3981 = vunpack.c.l.b16 %v1090
        %v3982 = vunpack.c.h.b16 %v1090
        %v3983 = vunpack.c.l.b16 %v1091
        %v3984 = vunpack.c.h.b16 %v1091
        %v3985 = vunpack.c.l.b16 %v1092
        %v3986 = vunpack.c.h.b16 %v1092
        %v3987 = vunpack.c.l.b16 %v1093
        %v3988 = vunpack.c.h.b16 %v1093
        %v3989 = vunpack.c.l.b16 %v1094
        %v3990 = vunpack.c.h.b16 %v1094
        %v3991 = vunpack.c.l.b16 %v1095
        %v3992 = vunpack.c.h.b16 %v1095
        %v3993 = vunpack.c.l.b16 %v1096
        %v3994 = vunpack.c.h.b16 %v1096
        %v3995 = vunpack.c.l.b16 %v1097
        %v3996 = vunpack.c.h.b16 %v1097
        %v3997 = vunpack.c.l.b16 %v1098
        %v3998 = vunpack.c.h.b16 %v1098
        %v3999 = vunpack.c.l.b16 %v1099
        %v4000 = vunpack.c.h.b16 %v1099
        %v4001 = vunpack.c.l.b16 %v1100
        %v4002 = vunpack.c.h.b16 %v1100
        %v4003 = vunpack.c.l.b16 %v1101
        %v4004 = vunpack.c.h.b16 %v1101
        %v4005 = vunpack.c.l.b16 %v1102
        %v4006 = vunpack.c.h.b16 %v1102
        %v4007 = vunpack.c.l.b16 %v1103
        %v4008 = vunpack.c.h.b16 %v1103
        %v4009 = vunpack.c.l.b16 %v1104
        %v4010 = vunpack.c.h.b16 %v1104
        %v4011 = vunpack.c.l.b16 %v1105
        %v4012 = vunpack.c.h.b16 %v1105
        %v4013 = vunpack.c.l.b16 %v1106
        %v4014 = vunpack.c.h.b16 %v1106
        %v4015 = vunpack.c.l.b16 %v1107
        %v4016 = vunpack.c.h.b16 %v1107
        %v4017 = vunpack.c.l.b16 %v1108
        %v4018 = vunpack.c.h.b16 %v1108
        %v4019 = vunpack.c.l.b16 %v1109
        %v4020 = vunpack.c.h.b16 %v1109
        %v4021 = vunpack.c.l.b16 %v1110
        %v4022 = vunpack.c.h.b16 %v1110
        %v4023 = vunpack.c.l.b16 %v1111
        %v4024 = vunpack.c.h.b16 %v1111
        %v4025 = vunpack.c.l.b16 %v1112
        %v4026 = vunpack.c.h.b16 %v1112
        %v4027 = vunpack.c.l.b16 %v1113
        %v4028 = vunpack.c.h.b16 %v1113
        %v4029 = vunpack.c.l.b16 %v1114
        %v4030 = vunpack.c.h.b16 %v1114
        %v4031 = vunpack.c.l.b16 %v1115
        %v4032 = vunpack.c.h.b16 %v1115
        %v4033 = vunpack.c.l.b16 %v1116
        %v4034 = vunpack.c.h.b16 %v1116
        %v4035 = vunpack.c.l.b16 %v1117
        %v4036 = vunpack.c.h.b16 %v1117
        %v4037 = vunpack.c.l.b16 %v1118
        %v4038 = vunpack.c.h.b16 %v1118
        %v4039 = vunpack.c.l.b16 %v1119
        %v4040 = vunpack.c.h.b16 %v1119
        %v4041 = vunpack.c.l.b16 %v1120
        %v4042 = vunpack.c.h.b16 %v1120
        %v4043 = vunpack.c.l.b16 %v1121
        %v4044 = vunpack.c.h.b16 %v1121
        %v4045 = vunpack.c.l.b16 %v1122
        %v4046 = vunpack.c.h.b16 %v1122
        %v4047 = vunpack.c.l.b16 %v1123
        %v4048 = vunpack.c.h.b16 %v1123
        %v4049 = vunpack.c.l.b16 %v1124
        %v4050 = vunpack.c.h.b16 %v1124
        %v4051 = vunpack.c.l.b16 %v1125
        %v4052 = vunpack.c.h.b16 %v1125
        %v4053 = vunpack.c.l.b16 %v1126
        %v4054 = vunpack.c.h.b16 %v1126
        %v4055 = vunpack.c.l.b16 %v1127
        %v4056 = vunpack.c.h.b16 %v1127
        %v4057 = vunpack.c.l.b16 %v1128
        %v4058 = vunpack.c.h.b16 %v1128
        %v4059 = vunpack.c.l.b16 %v1129
        %v4060 = vunpack.c.h.b16 %v1129
        %v4061 = vunpack.c.l.b16 %v1130
        %v4062 = vunpack.c.h.b16 %v1130
        %v4063 = vunpack.c.l.b16 %v1131
        %v4064 = vunpack.c.h.b16 %v1131
        %v4065 = vunpack.c.l.b16 %v1132
        %v4066 = vunpack.c.h.b16 %v1132
        %v4067 = vunpack.c.l.b16 %v1133
        %v4068 = vunpack.c.h.b16 %v1133
        %v4069 = vunpack.c.l.b16 %v1134
        %v4070 = vunpack.c.h.b16 %v1134
        %v4071 = vunpack.c.l.b16 %v1135
        %v4072 = vunpack.c.h.b16 %v1135
        %v4073 = vunpack.c.l.b16 %v1136
        %v4074 = vunpack.c.h.b16 %v1136
        %v4075 = vunpack.c.l.b16 %v1137
        %v4076 = vunpack.c.h.b16 %v1137
        %v4077 = vunpack.c.l.b16 %v1138
        %v4078 = vunpack.c.h.b16 %v1138
        %v4079 = vunpack.c.l.b16 %v1139
        %v4080 = vunpack.c.h.b16 %v1139
        %v4081 = vunpack.c.l.b16 %v1140
        %v4082 = vunpack.c.h.b16 %v1140
        %v4083 = vunpack.c.l.b16 %v1141
        %v4084 = vunpack.c.h.b16 %v1141
        %v4085 = vunpack.c.l.b16 %v1142
        %v4086 = vunpack.c.h.b16 %v1142
        %v4087 = vunpack.c.l.b16 %v1143
        %v4088 = vunpack.c.h.b16 %v1143
        %v4089 = vunpack.c.l.b16 %v1144
        %v4090 = vunpack.c.h.b16 %v1144
        %v4091 = vunpack.c.l.b16 %v1145
        %v4092 = vunpack.c.h.b16 %v1145
        %v4093 = vunpack.c.l.b16 %v1146
        %v4094 = vunpack.c.h.b16 %v1146
        %v4095 = vunpack.c.l.b16 %v1147
        %v4096 = vunpack.c.h.b16 %v1147
        %v4097 = vunpack.c.l.b16 %v1148
        %v4098 = vunpack.c.h.b16 %v1148
        %v4099 = vunpack.c.l.b16 %v1149
        %v4100 = vunpack.c.h.b16 %v1149
        %v4101 = vunpack.c.l.b16 %v1150
        %v4102 = vunpack.c.h.b16 %v1150
        %v4103 = vunpack.c.l.b16 %v1151
        %v4104 = vunpack.c.h.b16 %v1151
        %v4105 = vunpack.c.l.b16 %v1152
        %v4106 = vunpack.c.h.b16 %v1152
        %v4107 = vunpack.c.l.b16 %v1153
        %v4108 = vunpack.c.h.b16 %v1153
        %v4109 = vunpack.c.l.b16 %v1154
        %v4110 = vunpack.c.h.b16 %v1154
        %v4111 = vunpack.c.l.b16 %v1155
        %v4112 = vunpack.c.h.b16 %v1155
        %v4113 = vunpack.c.l.b16 %v1156
        %v4114 = vunpack.c.h.b16 %v1156
        %v4115 = vunpack.c.l.b16 %v1157
        %v4116 = vunpack.c.h.b16 %v1157
        %v4117 = vunpack.c.l.b16 %v1158
        %v4118 = vunpack.c.h.b16 %v1158
        %v4119 = vunpack.c.l.b16 %v1159
        %v4120 = vunpack.c.h.b16 %v1159
        %v4121 = vunpack.c.l.b16 %v1160
        %v4122 = vunpack.c.h.b16 %v1160
        %v4123 = vunpack.c.l.b16 %v1161
        %v4124 = vunpack.c.h.b16 %v1161
        %v4125 = vunpack.c.l.b16 %v1162
        %v4126 = vunpack.c.h.b16 %v1162
        %v4127 = vunpack.c.l.b16 %v1163
        %v4128 = vunpack.c.h.b16 %v1163
        %v4129 = vunpack.c.l.b16 %v1164
        %v4130 = vunpack.c.h.b16 %v1164
        %v4131 = vunpack.c.l.b16 %v1165
        %v4132 = vunpack.c.h.b16 %v1165
        %v4133 = vunpack.c.l.b16 %v1166
        %v4134 = vunpack.c.h.b16 %v1166
        %v4135 = vunpack.c.l.b16 %v1167
        %v4136 = vunpack.c.h.b16 %v1167
        %v4137 = vunpack.c.l.b16 %v1168
        %v4138 = vunpack.c.h.b16 %v1168
        %v4139 = vunpack.c.l.b16 %v1169
        %v4140 = vunpack.c.h.b16 %v1169
        %v4141 = vunpack.c.l.b16 %v1170
        %v4142 = vunpack.c.h.b16 %v1170
        %v4143 = vunpack.c.l.b16 %v1171
        %v4144 = vunpack.c.h.b16 %v1171
        %v4145 = vunpack.c.l.b16 %v1172
        %v4146 = vunpack.c.h.b16 %v1172
        %v4147 = vunpack.c.l.b16 %v1173
        %v4148 = vunpack.c.h.b16 %v1173
        %v4149 = vunpack.c.l.b16 %v1174
        %v4150 = vunpack.c.h.b16 %v1174
        %v4151 = vunpack.c.l.b16 %v1175
        %v4152 = vunpack.c.h.b16 %v1175
        %v4153 = vunpack.c.l.b16 %v1176
        %v4154 = vunpack.c.h.b16 %v1176
        %v4155 = vunpack.c.l.b16 %v1177
        %v4156 = vunpack.c.h.b16 %v1177
        %v4157 = vunpack.c.l.b16 %v1178
        %v4158 = vunpack.c.h.b16 %v1178
        %v4159 = vunpack.c.l.b16 %v1179
        %v4160 = vunpack.c.h.b16 %v1179
        %v4161 = vunpack.c.l.b16 %v1180
        %v4162 = vunpack.c.h.b16 %v1180
        %v4163 = vunpack.c.l.b16 %v1181
        %v4164 = vunpack.c.h.b16 %v1181
        %v4165 = vunpack.c.l.b16 %v1182
        %v4166 = vunpack.c.h.b16 %v1182
        %v4167 = vunpack.c.l.b16 %v1183
        %v4168 = vunpack.c.h.b16 %v1183
        %v4169 = vunpack.c.l.b16 %v1184
        %v4170 = vunpack.c.h.b16 %v1184
        %v4171 = vunpack.c.l.b16 %v1185
        %v4172 = vunpack.c.h.b16 %v1185
        %v4173 = vunpack.c.l.b16 %v1186
        %v4174 = vunpack.c.h.b16 %v1186
        %v4175 = vunpack.c.l.b16 %v1187
        %v4176 = vunpack.c.h.b16 %v1187
        %v4177 = vunpack.c.l.b16 %v1188
        %v4178 = vunpack.c.h.b16 %v1188
        %v4179 = vunpack.c.l.b16 %v1189
        %v4180 = vunpack.c.h.b16 %v1189
        %v4181 = vunpack.c.l.b16 %v1190
        %v4182 = vunpack.c.h.b16 %v1190
        %v4183 = vunpack.c.l.b16 %v1191
        %v4184 = vunpack.c.h.b16 %v1191
        %v4185 = vunpack.c.l.b16 %v1192
        %v4186 = vunpack.c.h.b16 %v1192
        %v4187 = vunpack.c.l.b16 %v1193
        %v4188 = vunpack.c.h.b16 %v1193
        %v4189 = vunpack.c.l.b16 %v1194
        %v4190 = vunpack.c.h.b16 %v1194
        %v4191 = vunpack.c.l.b16 %v1195
        %v4192 = vunpack.c.h.b16 %v1195
        %v4193 = vunpack.c.l.b16 %v1196
        %v4194 = vunpack.c.h.b16 %v1196
        %v4195 = vunpack.c.l.b16 %v1197
        %v4196 = vunpack.c.h.b16 %v1197
        %v4197 = vunpack.c.l.b16 %v1198
        %v4198 = vunpack.c.h.b16 %v1198
        %v4199 = vunpack.c.l.b16 %v1199
        %v4200 = vunpack.c.h.b16 %v1199
        %v4201 = vunpack.c.l.b16 %v1200
        %v4202 = vunpack.c.h.b16 %v1200
        %v4203 = vunpack.c.l.b16 %v1201
        %v4204 = vunpack.c.h.b16 %v1201
        %v4205 = vunpack.c.l.b16 %v1202
        %v4206 = vunpack.c.h.b16 %v1202
        %v4207 = vunpack.c.l.b16 %v1203
        %v4208 = vunpack.c.h.b16 %v1203
        %v4209 = vunpack.c.l.b16 %v1204
        %v4210 = vunpack.c.h.b16 %v1204
        %v4211 = vunpack.c.l.b16 %v1205
        %v4212 = vunpack.c.h.b16 %v1205
        %v4213 = vunpack.c.l.b16 %v1206
        %v4214 = vunpack.c.h.b16 %v1206
        %v4215 = vunpack.c.l.b16 %v1207
        %v4216 = vunpack.c.h.b16 %v1207
        %v4217 = vunpack.c.l.b16 %v1208
        %v4218 = vunpack.c.h.b16 %v1208
        %v4219 = vunpack.c.l.b16 %v1209
        %v4220 = vunpack.c.h.b16 %v1209
        %v4221 = vunpack.c.l.b16 %v1210
        %v4222 = vunpack.c.h.b16 %v1210
        %v4223 = vunpack.c.l.b16 %v1211
        %v4224 = vunpack.c.h.b16 %v1211
        %v4225 = vunpack.c.l.b16 %v1212
        %v4226 = vunpack.c.h.b16 %v1212
        %v4227 = vunpack.c.l.b16 %v1213
        %v4228 = vunpack.c.h.b16 %v1213
        %v4229 = vunpack.c.l.b16 %v1214
        %v4230 = vunpack.c.h.b16 %v1214
        %v4231 = vunpack.c.l.b16 %v1215
        %v4232 = vunpack.c.h.b16 %v1215
        %v4233 = vunpack.c.l.b16 %v1216
        %v4234 = vunpack.c.h.b16 %v1216
        %v4235 = vunpack.c.l.b16 %v1217
        %v4236 = vunpack.c.h.b16 %v1217
        %v4237 = vunpack.c.l.b16 %v1218
        %v4238 = vunpack.c.h.b16 %v1218
        %v4239 = vunpack.c.l.b16 %v1219
        %v4240 = vunpack.c.h.b16 %v1219
        %v4241 = vunpack.c.l.b16 %v1220
        %v4242 = vunpack.c.h.b16 %v1220
        %v4243 = vunpack.c.l.b16 %v1221
        %v4244 = vunpack.c.h.b16 %v1221
        %v4245 = vunpack.c.l.b16 %v1222
        %v4246 = vunpack.c.h.b16 %v1222
        %v4247 = vunpack.c.l.b16 %v1223
        %v4248 = vunpack.c.h.b16 %v1223
        %v4249 = vunpack.c.l.b16 %v1224
        %v4250 = vunpack.c.h.b16 %v1224
        %v4251 = vunpack.c.l.b16 %v1225
        %v4252 = vunpack.c.h.b16 %v1225
        %v4253 = vunpack.c.l.b16 %v1226
        %v4254 = vunpack.c.h.b16 %v1226
        %v4255 = vunpack.c.l.b16 %v1227
        %v4256 = vunpack.c.h.b16 %v1227
        %v4257 = vunpack.c.l.b16 %v1228
        %v4258 = vunpack.c.h.b16 %v1228
        %v4259 = vunpack.c.l.b16 %v1229
        %v4260 = vunpack.c.h.b16 %v1229
        %v4261 = vunpack.c.l.b16 %v1230
        %v4262 = vunpack.c.h.b16 %v1230
        %v4263 = vunpack.c.l.b16 %v1231
        %v4264 = vunpack.c.h.b16 %v1231
        %v4265 = vunpack.c.l.b16 %v1232
        %v4266 = vunpack.c.h.b16 %v1232
        %v4267 = vunpack.c.l.b16 %v1233
        %v4268 = vunpack.c.h.b16 %v1233
        %v4269 = vunpack.c.l.b16 %v1234
        %v4270 = vunpack.c.h.b16 %v1234
        %v4271 = vunpack.c.l.b16 %v1235
        %v4272 = vunpack.c.h.b16 %v1235
        %v4273 = vunpack.c.l.b16 %v1236
        %v4274 = vunpack.c.h.b16 %v1236
        %v4275 = vunpack.c.l.b16 %v1237
        %v4276 = vunpack.c.h.b16 %v1237
        %v4277 = vunpack.c.l.b16 %v1238
        %v4278 = vunpack.c.h.b16 %v1238
        %v4279 = vunpack.c.l.b16 %v1239
        %v4280 = vunpack.c.h.b16 %v1239
        %v4281 = vunpack.c.l.b16 %v1240
        %v4282 = vunpack.c.h.b16 %v1240
        %v4283 = vunpack.c.l.b16 %v1241
        %v4284 = vunpack.c.h.b16 %v1241
        %v4285 = vunpack.c.l.b16 %v1242
        %v4286 = vunpack.c.h.b16 %v1242
        %v4287 = vunpack.c.l.b16 %v1243
        %v4288 = vunpack.c.h.b16 %v1243
        %v4289 = vunpack.c.l.b16 %v1244
        %v4290 = vunpack.c.h.b16 %v1244
        %v4291 = vunpack.c.l.b16 %v1245
        %v4292 = vunpack.c.h.b16 %v1245
        %v4293 = vunpack.c.l.b16 %v1246
        %v4294 = vunpack.c.h.b16 %v1246
        %v4295 = vunpack.c.l.b16 %v1247
        %v4296 = vunpack.c.h.b16 %v1247
        %v4297 = vunpack.c.l.b16 %v1248
        %v4298 = vunpack.c.h.b16 %v1248
        %v4299 = vunpack.c.l.b16 %v1249
        %v4300 = vunpack.c.h.b16 %v1249
        %v4301 = vunpack.c.l.b16 %v1250
        %v4302 = vunpack.c.h.b16 %v1250
        %v4303 = vunpack.c.l.b16 %v1251
        %v4304 = vunpack.c.h.b16 %v1251
        %v4305 = vunpack.c.l.b16 %v1252
        %v4306 = vunpack.c.h.b16 %v1252
        %v4307 = vunpack.c.l.b16 %v1253
        %v4308 = vunpack.c.h.b16 %v1253
        %v4309 = vunpack.c.l.b16 %v1254
        %v4310 = vunpack.c.h.b16 %v1254
        %v4311 = vunpack.c.l.b16 %v1255
        %v4312 = vunpack.c.h.b16 %v1255
        %v4313 = vunpack.c.l.b16 %v1256
        %v4314 = vunpack.c.h.b16 %v1256
        %v4315 = vunpack.c.l.b16 %v1257
        %v4316 = vunpack.c.h.b16 %v1257
        %v4317 = vunpack.c.l.b16 %v1258
        %v4318 = vunpack.c.h.b16 %v1258
        %v4319 = vunpack.c.l.b16 %v1259
        %v4320 = vunpack.c.h.b16 %v1259
        %v4321 = vunpack.c.l.b16 %v1260
        %v4322 = vunpack.c.h.b16 %v1260
        %v4323 = vunpack.c.l.b16 %v1261
        %v4324 = vunpack.c.h.b16 %v1261
        %v4325 = vunpack.c.l.b16 %v1262
        %v4326 = vunpack.c.h.b16 %v1262
        %v4327 = vunpack.c.l.b16 %v1263
        %v4328 = vunpack.c.h.b16 %v1263
        %v4329 = vunpack.c.l.b16 %v1264
        %v4330 = vunpack.c.h.b16 %v1264
        %v4331 = vunpack.c.l.b16 %v1265
        %v4332 = vunpack.c.h.b16 %v1265
        %v4333 = vunpack.c.l.b16 %v1266
        %v4334 = vunpack.c.h.b16 %v1266
        %v4335 = vunpack.c.l.b16 %v1267
        %v4336 = vunpack.c.h.b16 %v1267
        %v4337 = vunpack.c.l.b16 %v1268
        %v4338 = vunpack.c.h.b16 %v1268
        %v4339 = vunpack.c.l.b16 %v1269
        %v4340 = vunpack.c.h.b16 %v1269
        %v4341 = vunpack.c.l.b16 %v1270
        %v4342 = vunpack.c.h.b16 %v1270
        %v4343 = vunpack.c.l.b16 %v1271
        %v4344 = vunpack.c.h.b16 %v1271
        %v4345 = vunpack.c.l.b16 %v1272
        %v4346 = vunpack.c.h.b16 %v1272
        %v4347 = vunpack.c.l.b16 %v1273
        %v4348 = vunpack.c.h.b16 %v1273
        %v4349 = vunpack.c.l.b16 %v1274
        %v4350 = vunpack.c.h.b16 %v1274
        %v4351 = vunpack.c.l.b16 %v1275
        %v4352 = vunpack.c.h.b16 %v1275
        %v4353 = vunpack.c.l.b16 %v1276
        %v4354 = vunpack.c.h.b16 %v1276
        %v4355 = vunpack.c.l.b16 %v1277
        %v4356 = vunpack.c.h.b16 %v1277
        %v4357 = vunpack.c.l.b16 %v1278
        %v4358 = vunpack.c.h.b16 %v1278
        %v4359 = vunpack.c.l.b16 %v1279
        %v4360 = vunpack.c.h.b16 %v1279
        %v4361 = vunpack.c.l.b16 %v1280
        %v4362 = vunpack.c.h.b16 %v1280
        %v4363 = vunpack.c.l.b16 %v1281
        %v4364 = vunpack.c.h.b16 %v1281
        %v4365 = vunpack.c.l.b16 %v1282
        %v4366 = vunpack.c.h.b16 %v1282
        %v4367 = vunpack.c.l.b16 %v1283
        %v4368 = vunpack.c.h.b16 %v1283
        %v4369 = vunpack.c.l.b16 %v1284
        %v4370 = vunpack.c.h.b16 %v1284
        %v4371 = vunpack.c.l.b16 %v1285
        %v4372 = vunpack.c.h.b16 %v1285
        %v4373 = vunpack.c.l.b16 %v1286
        %v4374 = vunpack.c.h.b16 %v1286
        %v4375 = vunpack.c.l.b16 %v1287
        %v4376 = vunpack.c.h.b16 %v1287
        %v4377 = vunpack.c.l.b16 %v1288
        %v4378 = vunpack.c.h.b16 %v1288
        %v4379 = vunpack.c.l.b16 %v1289
        %v4380 = vunpack.c.h.b16 %v1289
        %v4381 = vunpack.c.l.b16 %v1290
        %v4382 = vunpack.c.h.b16 %v1290
        %v4383 = vunpack.c.l.b16 %v1291
        %v4384 = vunpack.c.h.b16 %v1291
        %v4385 = vunpack.c.l.b16 %v1292
        %v4386 = vunpack.c.h.b16 %v1292
        %v4387 = vunpack.c.l.b16 %v1293
        %v4388 = vunpack.c.h.b16 %v1293
        %v4389 = vunpack.c.l.b16 %v1294
        %v4390 = vunpack.c.h.b16 %v1294
        %v4391 = vunpack.c.l.b16 %v1295
        %v4392 = vunpack.c.h.b16 %v1295
        %v4393 = vunpack.c.l.b16 %v1296
        %v4394 = vunpack.c.h.b16 %v1296
        %v4395 = vunpack.c.l.b16 %v1297
        %v4396 = vunpack.c.h.b16 %v1297
        %v4397 = vunpack.c.l.b16 %v1298
        %v4398 = vunpack.c.h.b16 %v1298
        %v4399 = vunpack.c.l.b16 %v1299
        %v4400 = vunpack.c.h.b16 %v1299
        %v4401 = vunpack.c.l.b16 %v1300
        %v4402 = vunpack.c.h.b16 %v1300
        %v4403 = vunpack.c.l.b16 %v1301
        %v4404 = vunpack.c.h.b16 %v1301
        %v4405 = vunpack.c.l.b16 %v1302
        %v4406 = vunpack.c.h.b16 %v1302
        %v4407 = vunpack.c.l.b16 %v1303
        %v4408 = vunpack.c.h.b16 %v1303
        %v4409 = vunpack.c.l.b16 %v1304
        %v4410 = vunpack.c.h.b16 %v1304
        %v4411 = vunpack.c.l.b16 %v1305
        %v4412 = vunpack.c.h.b16 %v1305
        %v4413 = vunpack.c.l.b16 %v1306
        %v4414 = vunpack.c.h.b16 %v1306
        %v4415 = vunpack.c.l.b16 %v1307
        %v4416 = vunpack.c.h.b16 %v1307
        %v4417 = vunpack.c.l.b16 %v1308
        %v4418 = vunpack.c.h.b16 %v1308
        %v4419 = vunpack.c.l.b16 %v1309
        %v4420 = vunpack.c.h.b16 %v1309
        %v4421 = vunpack.c.l.b16 %v1310
        %v4422 = vunpack.c.h.b16 %v1310
        %v4423 = vunpack.c.l.b16 %v1311
        %v4424 = vunpack.c.h.b16 %v1311
        %v4425 = vunpack.c.l.b16 %v1312
        %v4426 = vunpack.c.h.b16 %v1312
        %v4427 = vunpack.c.l.b16 %v1313
        %v4428 = vunpack.c.h.b16 %v1313
        %v4429 = vunpack.c.l.b16 %v1314
        %v4430 = vunpack.c.h.b16 %v1314
        %v4431 = vunpack.c.l.b16 %v1315
        %v4432 = vunpack.c.h.b16 %v1315
        %v4433 = vunpack.c.l.b16 %v1316
        %v4434 = vunpack.c.h.b16 %v1316
        %v4435 = vunpack.c.l.b16 %v1317
        %v4436 = vunpack.c.h.b16 %v1317
        %v4437 = vunpack.c.l.b16 %v1318
        %v4438 = vunpack.c.h.b16 %v1318
        %v4439 = vunpack.c.l.b16 %v1319
        %v4440 = vunpack.c.h.b16 %v1319
        %v4441 = vunpack.c.l.b16 %v1320
        %v4442 = vunpack.c.h.b16 %v1320
        %v4443 = vunpack.c.l.b16 %v1321
        %v4444 = vunpack.c.h.b16 %v1321
        %v4445 = vunpack.c.l.b16 %v1322
        %v4446 = vunpack.c.h.b16 %v1322
        %v4447 = vunpack.c.l.b16 %v1323
        %v4448 = vunpack.c.h.b16 %v1323
        %v4449 = vunpack.c.l.b16 %v1324
        %v4450 = vunpack.c.h.b16 %v1324
        %v4451 = vunpack.c.l.b16 %v1325
        %v4452 = vunpack.c.h.b16 %v1325
        %v4453 = vunpack.c.l.b16 %v1326
        %v4454 = vunpack.c.h.b16 %v1326
        %v4455 = vpack.c.b16 %v2415, %v2407
        %v4456 = vpack.c.b16 %v2416, %v2408
        %v4457 = vpack.c.b16 %v2417, %v2409
        %v4458 = vpack.c.b16 %v2418, %v2410
        %v4459 = vpack.c.b16 %v2419, %v2411
        %v4460 = vpack.c.b16 %v2420, %v2412
        %v4461 = vpack.c.b16 %v2421, %v2413
        %v4462 = vpack.c.b16 %v2422, %v2414
        %v4463 = vpack.c.b16 %v2431, %v2423
        %v4464 = vpack.c.b16 %v2432, %v2424
        %v4465 = vpack.c.b16 %v2433, %v2425
        %v4466 = vpack.c.b16 %v2434, %v2426
        %v4467 = vpack.c.b16 %v2435, %v2427
        %v4468 = vpack.c.b16 %v2436, %v2428
        %v4469 = vpack.c.b16 %v2437, %v2429
        %v4470 = vpack.c.b16 %v2438, %v2430
        %v4471 = vpack.c.b16 %v2447, %v2439
        %v4472 = vpack.c.b16 %v2448, %v2440
        %v4473 = vpack.c.b16 %v2449, %v2441
        %v4474 = vpack.c.b16 %v2450, %v2442
        %v4475 = vpack.c.b16 %v2451, %v2443
        %v4476 = vpack.c.b16 %v2452, %v2444
        %v4477 = vpack.c.b16 %v2453, %v2445
        %v4478 = vpack.c.b16 %v2454, %v2446
        %v4479 = vpack.c.b16 %v2463, %v2455
        %v4480 = vpack.c.b16 %v2464, %v2456
        %v4481 = vpack.c.b16 %v2465, %v2457
        %v4482 = vpack.c.b16 %v2466, %v2458
        %v4483 = vpack.c.b16 %v2467, %v2459
        %v4484 = vpack.c.b16 %v2468, %v2460
        %v4485 = vpack.c.b16 %v2469, %v2461
        %v4486 = vpack.c.b16 %v2470, %v2462
        %v4487 = vpack.c.b16 %v2479, %v2471
        %v4488 = vpack.c.b16 %v2480, %v2472
        %v4489 = vpack.c.b16 %v2481, %v2473
        %v4490 = vpack.c.b16 %v2482, %v2474
        %v4491 = vpack.c.b16 %v2483, %v2475
        %v4492 = vpack.c.b16 %v2484, %v2476
        %v4493 = vpack.c.b16 %v2485, %v2477
        %v4494 = vpack.c.b16 %v2486, %v2478
        %v4495 = vpack.c.b16 %v2495, %v2487
        %v4496 = vpack.c.b16 %v2496, %v2488
        %v4497 = vpack.c.b16 %v2497, %v2489
        %v4498 = vpack.c.b16 %v2498, %v2490
        %v4499 = vpack.c.b16 %v2499, %v2491
        %v4500 = vpack.c.b16 %v2500, %v2492
        %v4501 = vpack.c.b16 %v2501, %v2493
        %v4502 = vpack.c.b16 %v2502, %v2494
        %v4503 = vpack.c.b16 %v2511, %v2503
        %v4504 = vpack.c.b16 %v2512, %v2504
        %v4505 = vpack.c.b16 %v2513, %v2505
        %v4506 = vpack.c.b16 %v2514, %v2506
        %v4507 = vpack.c.b16 %v2515, %v2507
        %v4508 = vpack.c.b16 %v2516, %v2508
        %v4509 = vpack.c.b16 %v2517, %v2509
        %v4510 = vpack.c.b16 %v2518, %v2510
        %v4511 = vpack.c.b16 %v2527, %v2519
        %v4512 = vpack.c.b16 %v2528, %v2520
        %v4513 = vpack.c.b16 %v2529, %v2521
        %v4514 = vpack.c.b16 %v2530, %v2522
        %v4515 = vpack.c.b16 %v2531, %v2523
        %v4516 = vpack.c.b16 %v2532, %v2524
        %v4517 = vpack.c.b16 %v2533, %v2525
        %v4518 = vpack.c.b16 %v2534, %v2526
        %v4519 = vpack.c.b16 %v2543, %v2535
        %v4520 = vpack.c.b16 %v2544, %v2536
        %v4521 = vpack.c.b16 %v2545, %v2537
        %v4522 = vpack.c.b16 %v2546, %v2538
        %v4523 = vpack.c.b16 %v2547, %v2539
        %v4524 = vpack.c.b16 %v2548, %v2540
        %v4525 = vpack.c.b16 %v2549, %v2541
        %v4526 = vpack.c.b16 %v2550, %v2542
        %v4527 = vpack.c.b16 %v2559, %v2551
        %v4528 = vpack.c.b16 %v2560, %v2552
        %v4529 = vpack.c.b16 %v2561, %v2553
        %v4530 = vpack.c.b16 %v2562, %v2554
        %v4531 = vpack.c.b16 %v2563, %v2555
        %v4532 = vpack.c.b16 %v2564, %v2556
        %v4533 = vpack.c.b16 %v2565, %v2557
        %v4534 = vpack.c.b16 %v2566, %v2558
        %v4535 = vpack.c.b16 %v2575, %v2567
        %v4536 = vpack.c.b16 %v2576, %v2568
        %v4537 = vpack.c.b16 %v2577, %v2569
        %v4538 = vpack.c.b16 %v2578, %v2570
        %v4539 = vpack.c.b16 %v2579, %v2571
        %v4540 = vpack.c.b16 %v2580, %v2572
        %v4541 = vpack.c.b16 %v2581, %v2573
        %v4542 = vpack.c.b16 %v2582, %v2574
        %v4543 = vpack.c.b16 %v2591, %v2583
        %v4544 = vpack.c.b16 %v2592, %v2584
        %v4545 = vpack.c.b16 %v2593, %v2585
        %v4546 = vpack.c.b16 %v2594, %v2586
        %v4547 = vpack.c.b16 %v2595, %v2587
        %v4548 = vpack.c.b16 %v2596, %v2588
        %v4549 = vpack.c.b16 %v2597, %v2589
        %v4550 = vpack.c.b16 %v2598, %v2590
        %v4551 = vpack.c.b16 %v2607, %v2599
        %v4552 = vpack.c.b16 %v2608, %v2600
        %v4553 = vpack.c.b16 %v2609, %v2601
        %v4554 = vpack.c.b16 %v2610, %v2602
        %v4555 = vpack.c.b16 %v2611, %v2603
        %v4556 = vpack.c.b16 %v2612, %v2604
        %v4557 = vpack.c.b16 %v2613, %v2605
        %v4558 = vpack.c.b16 %v2614, %v2606
        %v4559 = vpack.c.b16 %v2623, %v2615
        %v4560 = vpack.c.b16 %v2624, %v2616
        %v4561 = vpack.c.b16 %v2625, %v2617
        %v4562 = vpack.c.b16 %v2626, %v2618
        %v4563 = vpack.c.b16 %v2627, %v2619
        %v4564 = vpack.c.b16 %v2628, %v2620
        %v4565 = vpack.c.b16 %v2629, %v2621
        %v4566 = vpack.c.b16 %v2630, %v2622
        %v4567 = vpack.c.b16 %v2639, %v2631
        %v4568 = vpack.c.b16 %v2640, %v2632
        %v4569 = vpack.c.b16 %v2641, %v2633
        %v4570 = vpack.c.b16 %v2642, %v2634
        %v4571 = vpack.c.b16 %v2643, %v2635
        %v4572 = vpack.c.b16 %v2644, %v2636
        %v4573 = vpack.c.b16 %v2645, %v2637
        %v4574 = vpack.c.b16 %v2646, %v2638
        %v4575 = vpack.c.b16 %v2655, %v2647
        %v4576 = vpack.c.b16 %v2656, %v2648
        %v4577 = vpack.c.b16 %v2657, %v2649
        %v4578 = vpack.c.b16 %v2658, %v2650
        %v4579 = vpack.c.b16 %v2659, %v2651
        %v4580 = vpack.c.b16 %v2660, %v2652
        %v4581 = vpack.c.b16 %v2661, %v2653
        %v4582 = vpack.c.b16 %v2662, %v2654
        %v4583 = vpack.c.b16 %v2671, %v2663
        %v4584 = vpack.c.b16 %v2672, %v2664
        %v4585 = vpack.c.b16 %v2673, %v2665
        %v4586 = vpack.c.b16 %v2674, %v2666
        %v4587 = vpack.c.b16 %v2675, %v2667
        %v4588 = vpack.c.b16 %v2676, %v2668
        %v4589 = vpack.c.b16 %v2677, %v2669
        %v4590 = vpack.c.b16 %v2678, %v2670
        %v4591 = vpack.c.b16 %v2687, %v2679
        %v4592 = vpack.c.b16 %v2688, %v2680
        %v4593 = vpack.c.b16 %v2689, %v2681
        %v4594 = vpack.c.b16 %v2690, %v2682
        %v4595 = vpack.c.b16 %v2691, %v2683
        %v4596 = vpack.c.b16 %v2692, %v2684
        %v4597 = vpack.c.b16 %v2693, %v2685
        %v4598 = vpack.c.b16 %v2694, %v2686
        %v4599 = vpack.c.b16 %v2703, %v2695
        %v4600 = vpack.c.b16 %v2704, %v2696
        %v4601 = vpack.c.b16 %v2705, %v2697
        %v4602 = vpack.c.b16 %v2706, %v2698
        %v4603 = vpack.c.b16 %v2707, %v2699
        %v4604 = vpack.c.b16 %v2708, %v2700
        %v4605 = vpack.c.b16 %v2709, %v2701
        %v4606 = vpack.c.b16 %v2710, %v2702
        %v4607 = vpack.c.b16 %v2719, %v2711
        %v4608 = vpack.c.b16 %v2720, %v2712
        %v4609 = vpack.c.b16 %v2721, %v2713
        %v4610 = vpack.c.b16 %v2722, %v2714
        %v4611 = vpack.c.b16 %v2723, %v2715
        %v4612 = vpack.c.b16 %v2724, %v2716
        %v4613 = vpack.c.b16 %v2725, %v2717
        %v4614 = vpack.c.b16 %v2726, %v2718
        %v4615 = vpack.c.b16 %v2735, %v2727
        %v4616 = vpack.c.b16 %v2736, %v2728
        %v4617 = vpack.c.b16 %v2737, %v2729
        %v4618 = vpack.c.b16 %v2738, %v2730
        %v4619 = vpack.c.b16 %v2739, %v2731
        %v4620 = vpack.c.b16 %v2740, %v2732
        %v4621 = vpack.c.b16 %v2741, %v2733
        %v4622 = vpack.c.b16 %v2742, %v2734
        %v4623 = vpack.c.b16 %v2751, %v2743
        %v4624 = vpack.c.b16 %v2752, %v2744
        %v4625 = vpack.c.b16 %v2753, %v2745
        %v4626 = vpack.c.b16 %v2754, %v2746
        %v4627 = vpack.c.b16 %v2755, %v2747
        %v4628 = vpack.c.b16 %v2756, %v2748
        %v4629 = vpack.c.b16 %v2757, %v2749
        %v4630 = vpack.c.b16 %v2758, %v2750
        %v4631 = vpack.c.b16 %v2767, %v2759
        %v4632 = vpack.c.b16 %v2768, %v2760
        %v4633 = vpack.c.b16 %v2769, %v2761
        %v4634 = vpack.c.b16 %v2770, %v2762
        %v4635 = vpack.c.b16 %v2771, %v2763
        %v4636 = vpack.c.b16 %v2772, %v2764
        %v4637 = vpack.c.b16 %v2773, %v2765
        %v4638 = vpack.c.b16 %v2774, %v2766
        %v4639 = vpack.c.b16 %v2783, %v2775
        %v4640 = vpack.c.b16 %v2784, %v2776
        %v4641 = vpack.c.b16 %v2785, %v2777
        %v4642 = vpack.c.b16 %v2786, %v2778
        %v4643 = vpack.c.b16 %v2787, %v2779
        %v4644 = vpack.c.b16 %v2788, %v2780
        %v4645 = vpack.c.b16 %v2789, %v2781
        %v4646 = vpack.c.b16 %v2790, %v2782
        %v4647 = vpack.c.b16 %v2799, %v2791
        %v4648 = vpack.c.b16 %v2800, %v2792
        %v4649 = vpack.c.b16 %v2801, %v2793
        %v4650 = vpack.c.b16 %v2802, %v2794
        %v4651 = vpack.c.b16 %v2803, %v2795
        %v4652 = vpack.c.b16 %v2804, %v2796
        %v4653 = vpack.c.b16 %v2805, %v2797
        %v4654 = vpack.c.b16 %v2806, %v2798
        %v4655 = vpack.c.b16 %v2815, %v2807
        %v4656 = vpack.c.b16 %v2816, %v2808
        %v4657 = vpack.c.b16 %v2817, %v2809
        %v4658 = vpack.c.b16 %v2818, %v2810
        %v4659 = vpack.c.b16 %v2819, %v2811
        %v4660 = vpack.c.b16 %v2820, %v2812
        %v4661 = vpack.c.b16 %v2821, %v2813
        %v4662 = vpack.c.b16 %v2822, %v2814
        %v4663 = vpack.c.b16 %v2831, %v2823
        %v4664 = vpack.c.b16 %v2832, %v2824
        %v4665 = vpack.c.b16 %v2833, %v2825
        %v4666 = vpack.c.b16 %v2834, %v2826
        %v4667 = vpack.c.b16 %v2835, %v2827
        %v4668 = vpack.c.b16 %v2836, %v2828
        %v4669 = vpack.c.b16 %v2837, %v2829
        %v4670 = vpack.c.b16 %v2838, %v2830
        %v4671 = vpack.c.b16 %v2847, %v2839
        %v4672 = vpack.c.b16 %v2848, %v2840
        %v4673 = vpack.c.b16 %v2849, %v2841
        %v4674 = vpack.c.b16 %v2850, %v2842
        %v4675 = vpack.c.b16 %v2851, %v2843
        %v4676 = vpack.c.b16 %v2852, %v2844
        %v4677 = vpack.c.b16 %v2853, %v2845
        %v4678 = vpack.c.b16 %v2854, %v2846
        %v4679 = vpack.c.b16 %v2863, %v2855
        %v4680 = vpack.c.b16 %v2864, %v2856
        %v4681 = vpack.c.b16 %v2865, %v2857
        %v4682 = vpack.c.b16 %v2866, %v2858
        %v4683 = vpack.c.b16 %v2867, %v2859
        %v4684 = vpack.c.b16 %v2868, %v2860
        %v4685 = vpack.c.b16 %v2869, %v2861
        %v4686 = vpack.c.b16 %v2870, %v2862
        %v4687 = vpack.c.b16 %v2879, %v2871
        %v4688 = vpack.c.b16 %v2880, %v2872
        %v4689 = vpack.c.b16 %v2881, %v2873
        %v4690 = vpack.c.b16 %v2882, %v2874
        %v4691 = vpack.c.b16 %v2883, %v2875
        %v4692 = vpack.c.b16 %v2884, %v2876
        %v4693 = vpack.c.b16 %v2885, %v2877
        %v4694 = vpack.c.b16 %v2886, %v2878
        %v4695 = vpack.c.b16 %v2895, %v2887
        %v4696 = vpack.c.b16 %v2896, %v2888
        %v4697 = vpack.c.b16 %v2897, %v2889
        %v4698 = vpack.c.b16 %v2898, %v2890
        %v4699 = vpack.c.b16 %v2899, %v2891
        %v4700 = vpack.c.b16 %v2900, %v2892
        %v4701 = vpack.c.b16 %v2901, %v2893
        %v4702 = vpack.c.b16 %v2902, %v2894
        %v4703 = vpack.c.b16 %v2911, %v2903
        %v4704 = vpack.c.b16 %v2912, %v2904
        %v4705 = vpack.c.b16 %v2913, %v2905
        %v4706 = vpack.c.b16 %v2914, %v2906
        %v4707 = vpack.c.b16 %v2915, %v2907
        %v4708 = vpack.c.b16 %v2916, %v2908
        %v4709 = vpack.c.b16 %v2917, %v2909
        %v4710 = vpack.c.b16 %v2918, %v2910
        %v4711 = vpack.c.b16 %v2927, %v2919
        %v4712 = vpack.c.b16 %v2928, %v2920
        %v4713 = vpack.c.b16 %v2929, %v2921
        %v4714 = vpack.c.b16 %v2930, %v2922
        %v4715 = vpack.c.b16 %v2931, %v2923
        %v4716 = vpack.c.b16 %v2932, %v2924
        %v4717 = vpack.c.b16 %v2933, %v2925
        %v4718 = vpack.c.b16 %v2934, %v2926
        %v4719 = vpack.c.b16 %v2943, %v2935
        %v4720 = vpack.c.b16 %v2944, %v2936
        %v4721 = vpack.c.b16 %v2945, %v2937
        %v4722 = vpack.c.b16 %v2946, %v2938
        %v4723 = vpack.c.b16 %v2947, %v2939
        %v4724 = vpack.c.b16 %v2948, %v2940
        %v4725 = vpack.c.b16 %v2949, %v2941
        %v4726 = vpack.c.b16 %v2950, %v2942
        %v4727 = vpack.c.b16 %v2959, %v2951
        %v4728 = vpack.c.b16 %v2960, %v2952
        %v4729 = vpack.c.b16 %v2961, %v2953
        %v4730 = vpack.c.b16 %v2962, %v2954
        %v4731 = vpack.c.b16 %v2963, %v2955
        %v4732 = vpack.c.b16 %v2964, %v2956
        %v4733 = vpack.c.b16 %v2965, %v2957
        %v4734 = vpack.c.b16 %v2966, %v2958
        %v4735 = vpack.c.b16 %v2975, %v2967
        %v4736 = vpack.c.b16 %v2976, %v2968
        %v4737 = vpack.c.b16 %v2977, %v2969
        %v4738 = vpack.c.b16 %v2978, %v2970
        %v4739 = vpack.c.b16 %v2979, %v2971
        %v4740 = vpack.c.b16 %v2980, %v2972
        %v4741 = vpack.c.b16 %v2981, %v2973
        %v4742 = vpack.c.b16 %v2982, %v2974
        %v4743 = vpack.c.b16 %v2991, %v2983
        %v4744 = vpack.c.b16 %v2992, %v2984
        %v4745 = vpack.c.b16 %v2993, %v2985
        %v4746 = vpack.c.b16 %v2994, %v2986
        %v4747 = vpack.c.b16 %v2995, %v2987
        %v4748 = vpack.c.b16 %v2996, %v2988
        %v4749 = vpack.c.b16 %v2997, %v2989
        %v4750 = vpack.c.b16 %v2998, %v2990
        %v4751 = vpack.c.b16 %v3007, %v2999
        %v4752 = vpack.c.b16 %v3008, %v3000
        %v4753 = vpack.c.b16 %v3009, %v3001
        %v4754 = vpack.c.b16 %v3010, %v3002
        %v4755 = vpack.c.b16 %v3011, %v3003
        %v4756 = vpack.c.b16 %v3012, %v3004
        %v4757 = vpack.c.b16 %v3013, %v3005
        %v4758 = vpack.c.b16 %v3014, %v3006
        %v4759 = vpack.c.b16 %v3023, %v3015
        %v4760 = vpack.c.b16 %v3024, %v3016
        %v4761 = vpack.c.b16 %v3025, %v3017
        %v4762 = vpack.c.b16 %v3026, %v3018
        %v4763 = vpack.c.b16 %v3027, %v3019
        %v4764 = vpack.c.b16 %v3028, %v3020
        %v4765 = vpack.c.b16 %v3029, %v3021
        %v4766 = vpack.c.b16 %v3030, %v3022
        %v4767 = vpack.c.b16 %v3039, %v3031
        %v4768 = vpack.c.b16 %v3040, %v3032
        %v4769 = vpack.c.b16 %v3041, %v3033
        %v4770 = vpack.c.b16 %v3042, %v3034
        %v4771 = vpack.c.b16 %v3043, %v3035
        %v4772 = vpack.c.b16 %v3044, %v3036
        %v4773 = vpack.c.b16 %v3045, %v3037
        %v4774 = vpack.c.b16 %v3046, %v3038
        %v4775 = vpack.c.b16 %v3055, %v3047
        %v4776 = vpack.c.b16 %v3056, %v3048
        %v4777 = vpack.c.b16 %v3057, %v3049
        %v4778 = vpack.c.b16 %v3058, %v3050
        %v4779 = vpack.c.b16 %v3059, %v3051
        %v4780 = vpack.c.b16 %v3060, %v3052
        %v4781 = vpack.c.b16 %v3061, %v3053
        %v4782 = vpack.c.b16 %v3062, %v3054
        %v4783 = vpack.c.b16 %v3071, %v3063
        %v4784 = vpack.c.b16 %v3072, %v3064
        %v4785 = vpack.c.b16 %v3073, %v3065
        %v4786 = vpack.c.b16 %v3074, %v3066
        %v4787 = vpack.c.b16 %v3075, %v3067
        %v4788 = vpack.c.b16 %v3076, %v3068
        %v4789 = vpack.c.b16 %v3077, %v3069
        %v4790 = vpack.c.b16 %v3078, %v3070
        %v4791 = vpack.c.b16 %v3087, %v3079
        %v4792 = vpack.c.b16 %v3088, %v3080
        %v4793 = vpack.c.b16 %v3089, %v3081
        %v4794 = vpack.c.b16 %v3090, %v3082
        %v4795 = vpack.c.b16 %v3091, %v3083
        %v4796 = vpack.c.b16 %v3092, %v3084
        %v4797 = vpack.c.b16 %v3093, %v3085
        %v4798 = vpack.c.b16 %v3094, %v3086
        %v4799 = vpack.c.b16 %v3103, %v3095
        %v4800 = vpack.c.b16 %v3104, %v3096
        %v4801 = vpack.c.b16 %v3105, %v3097
        %v4802 = vpack.c.b16 %v3106, %v3098
        %v4803 = vpack.c.b16 %v3107, %v3099
        %v4804 = vpack.c.b16 %v3108, %v3100
        %v4805 = vpack.c.b16 %v3109, %v3101
        %v4806 = vpack.c.b16 %v3110, %v3102
        %v4807 = vpack.c.b16 %v3119, %v3111
        %v4808 = vpack.c.b16 %v3120, %v3112
        %v4809 = vpack.c.b16 %v3121, %v3113
        %v4810 = vpack.c.b16 %v3122, %v3114
        %v4811 = vpack.c.b16 %v3123, %v3115
        %v4812 = vpack.c.b16 %v3124, %v3116
        %v4813 = vpack.c.b16 %v3125, %v3117
        %v4814 = vpack.c.b16 %v3126, %v3118
        %v4815 = vpack.c.b16 %v3135, %v3127
        %v4816 = vpack.c.b16 %v3136, %v3128
        %v4817 = vpack.c.b16 %v3137, %v3129
        %v4818 = vpack.c.b16 %v3138, %v3130
        %v4819 = vpack.c.b16 %v3139, %v3131
        %v4820 = vpack.c.b16 %v3140, %v3132
        %v4821 = vpack.c.b16 %v3141, %v3133
        %v4822 = vpack.c.b16 %v3142, %v3134
        %v4823 = vpack.c.b16 %v3151, %v3143
        %v4824 = vpack.c.b16 %v3152, %v3144
        %v4825 = vpack.c.b16 %v3153, %v3145
        %v4826 = vpack.c.b16 %v3154, %v3146
        %v4827 = vpack.c.b16 %v3155, %v3147
        %v4828 = vpack.c.b16 %v3156, %v3148
        %v4829 = vpack.c.b16 %v3157, %v3149
        %v4830 = vpack.c.b16 %v3158, %v3150
        %v4831 = vpack.c.b16 %v3167, %v3159
        %v4832 = vpack.c.b16 %v3168, %v3160
        %v4833 = vpack.c.b16 %v3169, %v3161
        %v4834 = vpack.c.b16 %v3170, %v3162
        %v4835 = vpack.c.b16 %v3171, %v3163
        %v4836 = vpack.c.b16 %v3172, %v3164
        %v4837 = vpack.c.b16 %v3173, %v3165
        %v4838 = vpack.c.b16 %v3174, %v3166
        %v4839 = vpack.c.b16 %v3183, %v3175
        %v4840 = vpack.c.b16 %v3184, %v3176
        %v4841 = vpack.c.b16 %v3185, %v3177
        %v4842 = vpack.c.b16 %v3186, %v3178
        %v4843 = vpack.c.b16 %v3187, %v3179
        %v4844 = vpack.c.b16 %v3188, %v3180
        %v4845 = vpack.c.b16 %v3189, %v3181
        %v4846 = vpack.c.b16 %v3190, %v3182
        %v4847 = vpack.c.b16 %v3199, %v3191
        %v4848 = vpack.c.b16 %v3200, %v3192
        %v4849 = vpack.c.b16 %v3201, %v3193
        %v4850 = vpack.c.b16 %v3202, %v3194
        %v4851 = vpack.c.b16 %v3203, %v3195
        %v4852 = vpack.c.b16 %v3204, %v3196
        %v4853 = vpack.c.b16 %v3205, %v3197
        %v4854 = vpack.c.b16 %v3206, %v3198
        %v4855 = vpack.c.b16 %v3215, %v3207
        %v4856 = vpack.c.b16 %v3216, %v3208
        %v4857 = vpack.c.b16 %v3217, %v3209
        %v4858 = vpack.c.b16 %v3218, %v3210
        %v4859 = vpack.c.b16 %v3219, %v3211
        %v4860 = vpack.c.b16 %v3220, %v3212
        %v4861 = vpack.c.b16 %v3221, %v3213
        %v4862 = vpack.c.b16 %v3222, %v3214
        %v4863 = vpack.c.b16 %v3231, %v3223
        %v4864 = vpack.c.b16 %v3232, %v3224
        %v4865 = vpack.c.b16 %v3233, %v3225
        %v4866 = vpack.c.b16 %v3234, %v3226
        %v4867 = vpack.c.b16 %v3235, %v3227
        %v4868 = vpack.c.b16 %v3236, %v3228
        %v4869 = vpack.c.b16 %v3237, %v3229
        %v4870 = vpack.c.b16 %v3238, %v3230
        %v4871 = vpack.c.b16 %v3247, %v3239
        %v4872 = vpack.c.b16 %v3248, %v3240
        %v4873 = vpack.c.b16 %v3249, %v3241
        %v4874 = vpack.c.b16 %v3250, %v3242
        %v4875 = vpack.c.b16 %v3251, %v3243
        %v4876 = vpack.c.b16 %v3252, %v3244
        %v4877 = vpack.c.b16 %v3253, %v3245
        %v4878 = vpack.c.b16 %v3254, %v3246
        %v4879 = vpack.c.b16 %v3263, %v3255
        %v4880 = vpack.c.b16 %v3264, %v3256
        %v4881 = vpack.c.b16 %v3265, %v3257
        %v4882 = vpack.c.b16 %v3266, %v3258
        %v4883 = vpack.c.b16 %v3267, %v3259
        %v4884 = vpack.c.b16 %v3268, %v3260
        %v4885 = vpack.c.b16 %v3269, %v3261
        %v4886 = vpack.c.b16 %v3270, %v3262
        %v4887 = vpack.c.b16 %v3279, %v3271
        %v4888 = vpack.c.b16 %v3280, %v3272
        %v4889 = vpack.c.b16 %v3281, %v3273
        %v4890 = vpack.c.b16 %v3282, %v3274
        %v4891 = vpack.c.b16 %v3283, %v3275
        %v4892 = vpack.c.b16 %v3284, %v3276
        %v4893 = vpack.c.b16 %v3285, %v3277
        %v4894 = vpack.c.b16 %v3286, %v3278
        %v4895 = vpack.c.b16 %v3295, %v3287
        %v4896 = vpack.c.b16 %v3296, %v3288
        %v4897 = vpack.c.b16 %v3297, %v3289
        %v4898 = vpack.c.b16 %v3298, %v3290
        %v4899 = vpack.c.b16 %v3299, %v3291
        %v4900 = vpack.c.b16 %v3300, %v3292
        %v4901 = vpack.c.b16 %v3301, %v3293
        %v4902 = vpack.c.b16 %v3302, %v3294
        %v4903 = vpack.c.b16 %v3311, %v3303
        %v4904 = vpack.c.b16 %v3312, %v3304
        %v4905 = vpack.c.b16 %v3313, %v3305
        %v4906 = vpack.c.b16 %v3314, %v3306
        %v4907 = vpack.c.b16 %v3315, %v3307
        %v4908 = vpack.c.b16 %v3316, %v3308
        %v4909 = vpack.c.b16 %v3317, %v3309
        %v4910 = vpack.c.b16 %v3318, %v3310
        %v4911 = vpack.c.b16 %v3327, %v3319
        %v4912 = vpack.c.b16 %v3328, %v3320
        %v4913 = vpack.c.b16 %v3329, %v3321
        %v4914 = vpack.c.b16 %v3330, %v3322
        %v4915 = vpack.c.b16 %v3331, %v3323
        %v4916 = vpack.c.b16 %v3332, %v3324
        %v4917 = vpack.c.b16 %v3333, %v3325
        %v4918 = vpack.c.b16 %v3334, %v3326
        %v4919 = vpack.c.b16 %v3343, %v3335
        %v4920 = vpack.c.b16 %v3344, %v3336
        %v4921 = vpack.c.b16 %v3345, %v3337
        %v4922 = vpack.c.b16 %v3346, %v3338
        %v4923 = vpack.c.b16 %v3347, %v3339
        %v4924 = vpack.c.b16 %v3348, %v3340
        %v4925 = vpack.c.b16 %v3349, %v3341
        %v4926 = vpack.c.b16 %v3350, %v3342
        %v4927 = vpack.c.b16 %v3359, %v3351
        %v4928 = vpack.c.b16 %v3360, %v3352
        %v4929 = vpack.c.b16 %v3361, %v3353
        %v4930 = vpack.c.b16 %v3362, %v3354
        %v4931 = vpack.c.b16 %v3363, %v3355
        %v4932 = vpack.c.b16 %v3364, %v3356
        %v4933 = vpack.c.b16 %v3365, %v3357
        %v4934 = vpack.c.b16 %v3366, %v3358
        %v4935 = vpack.c.b16 %v3375, %v3367
        %v4936 = vpack.c.b16 %v3376, %v3368
        %v4937 = vpack.c.b16 %v3377, %v3369
        %v4938 = vpack.c.b16 %v3378, %v3370
        %v4939 = vpack.c.b16 %v3379, %v3371
        %v4940 = vpack.c.b16 %v3380, %v3372
        %v4941 = vpack.c.b16 %v3381, %v3373
        %v4942 = vpack.c.b16 %v3382, %v3374
        %v4943 = vpack.c.b16 %v3391, %v3383
        %v4944 = vpack.c.b16 %v3392, %v3384
        %v4945 = vpack.c.b16 %v3393, %v3385
        %v4946 = vpack.c.b16 %v3394, %v3386
        %v4947 = vpack.c.b16 %v3395, %v3387
        %v4948 = vpack.c.b16 %v3396, %v3388
        %v4949 = vpack.c.b16 %v3397, %v3389
        %v4950 = vpack.c.b16 %v3398, %v3390
        %v4951 = vpack.c.b16 %v3407, %v3399
        %v4952 = vpack.c.b16 %v3408, %v3400
        %v4953 = vpack.c.b16 %v3409, %v3401
        %v4954 = vpack.c.b16 %v3410, %v3402
        %v4955 = vpack.c.b16 %v3411, %v3403
        %v4956 = vpack.c.b16 %v3412, %v3404
        %v4957 = vpack.c.b16 %v3413, %v3405
        %v4958 = vpack.c.b16 %v3414, %v3406
        %v4959 = vpack.c.b16 %v3423, %v3415
        %v4960 = vpack.c.b16 %v3424, %v3416
        %v4961 = vpack.c.b16 %v3425, %v3417
        %v4962 = vpack.c.b16 %v3426, %v3418
        %v4963 = vpack.c.b16 %v3427, %v3419
        %v4964 = vpack.c.b16 %v3428, %v3420
        %v4965 = vpack.c.b16 %v3429, %v3421
        %v4966 = vpack.c.b16 %v3430, %v3422
        %v4967 = vpack.c.b16 %v3439, %v3431
        %v4968 = vpack.c.b16 %v3440, %v3432
        %v4969 = vpack.c.b16 %v3441, %v3433
        %v4970 = vpack.c.b16 %v3442, %v3434
        %v4971 = vpack.c.b16 %v3443, %v3435
        %v4972 = vpack.c.b16 %v3444, %v3436
        %v4973 = vpack.c.b16 %v3445, %v3437
        %v4974 = vpack.c.b16 %v3446, %v3438
        %v4975 = vpack.c.b16 %v3455, %v3447
        %v4976 = vpack.c.b16 %v3456, %v3448
        %v4977 = vpack.c.b16 %v3457, %v3449
        %v4978 = vpack.c.b16 %v3458, %v3450
        %v4979 = vpack.c.b16 %v3459, %v3451
        %v4980 = vpack.c.b16 %v3460, %v3452
        %v4981 = vpack.c.b16 %v3461, %v3453
        %v4982 = vpack.c.b16 %v3462, %v3454
        %v4983 = vpack.c.b16 %v3471, %v3463
        %v4984 = vpack.c.b16 %v3472, %v3464
        %v4985 = vpack.c.b16 %v3473, %v3465
        %v4986 = vpack.c.b16 %v3474, %v3466
        %v4987 = vpack.c.b16 %v3475, %v3467
        %v4988 = vpack.c.b16 %v3476, %v3468
        %v4989 = vpack.c.b16 %v3477, %v3469
        %v4990 = vpack.c.b16 %v3478, %v3470
        %v4991 = vpack.c.b16 %v3487, %v3479
        %v4992 = vpack.c.b16 %v3488, %v3480
        %v4993 = vpack.c.b16 %v3489, %v3481
        %v4994 = vpack.c.b16 %v3490, %v3482
        %v4995 = vpack.c.b16 %v3491, %v3483
        %v4996 = vpack.c.b16 %v3492, %v3484
        %v4997 = vpack.c.b16 %v3493, %v3485
        %v4998 = vpack.c.b16 %v3494, %v3486
        %v4999 = vpack.c.b16 %v3503, %v3495
        %v5000 = vpack.c.b16 %v3504, %v3496
        %v5001 = vpack.c.b16 %v3505, %v3497
        %v5002 = vpack.c.b16 %v3506, %v3498
        %v5003 = vpack.c.b16 %v3507, %v3499
        %v5004 = vpack.c.b16 %v3508, %v3500
        %v5005 = vpack.c.b16 %v3509, %v3501
        %v5006 = vpack.c.b16 %v3510, %v3502
        %v5007 = vpack.c.b16 %v3519, %v3511
        %v5008 = vpack.c.b16 %v3520, %v3512
        %v5009 = vpack.c.b16 %v3521, %v3513
        %v5010 = vpack.c.b16 %v3522, %v3514
        %v5011 = vpack.c.b16 %v3523, %v3515
        %v5012 = vpack.c.b16 %v3524, %v3516
        %v5013 = vpack.c.b16 %v3525, %v3517
        %v5014 = vpack.c.b16 %v3526, %v3518
        %v5015 = vpack.c.b16 %v3535, %v3527
        %v5016 = vpack.c.b16 %v3536, %v3528
        %v5017 = vpack.c.b16 %v3537, %v3529
        %v5018 = vpack.c.b16 %v3538, %v3530
        %v5019 = vpack.c.b16 %v3539, %v3531
        %v5020 = vpack.c.b16 %v3540, %v3532
        %v5021 = vpack.c.b16 %v3541, %v3533
        %v5022 = vpack.c.b16 %v3542, %v3534
        %v5023 = vpack.c.b16 %v3551, %v3543
        %v5024 = vpack.c.b16 %v3552, %v3544
        %v5025 = vpack.c.b16 %v3553, %v3545
        %v5026 = vpack.c.b16 %v3554, %v3546
        %v5027 = vpack.c.b16 %v3555, %v3547
        %v5028 = vpack.c.b16 %v3556, %v3548
        %v5029 = vpack.c.b16 %v3557, %v3549
        %v5030 = vpack.c.b16 %v3558, %v3550
        %v5031 = vpack.c.b16 %v3567, %v3559
        %v5032 = vpack.c.b16 %v3568, %v3560
        %v5033 = vpack.c.b16 %v3569, %v3561
        %v5034 = vpack.c.b16 %v3570, %v3562
        %v5035 = vpack.c.b16 %v3571, %v3563
        %v5036 = vpack.c.b16 %v3572, %v3564
        %v5037 = vpack.c.b16 %v3573, %v3565
        %v5038 = vpack.c.b16 %v3574, %v3566
        %v5039 = vpack.c.b16 %v3583, %v3575
        %v5040 = vpack.c.b16 %v3584, %v3576
        %v5041 = vpack.c.b16 %v3585, %v3577
        %v5042 = vpack.c.b16 %v3586, %v3578
        %v5043 = vpack.c.b16 %v3587, %v3579
        %v5044 = vpack.c.b16 %v3588, %v3580
        %v5045 = vpack.c.b16 %v3589, %v3581
        %v5046 = vpack.c.b16 %v3590, %v3582
        %v5047 = vpack.c.b16 %v3599, %v3591
        %v5048 = vpack.c.b16 %v3600, %v3592
        %v5049 = vpack.c.b16 %v3601, %v3593
        %v5050 = vpack.c.b16 %v3602, %v3594
        %v5051 = vpack.c.b16 %v3603, %v3595
        %v5052 = vpack.c.b16 %v3604, %v3596
        %v5053 = vpack.c.b16 %v3605, %v3597
        %v5054 = vpack.c.b16 %v3606, %v3598
        %v5055 = vpack.c.b16 %v3615, %v3607
        %v5056 = vpack.c.b16 %v3616, %v3608
        %v5057 = vpack.c.b16 %v3617, %v3609
        %v5058 = vpack.c.b16 %v3618, %v3610
        %v5059 = vpack.c.b16 %v3619, %v3611
        %v5060 = vpack.c.b16 %v3620, %v3612
        %v5061 = vpack.c.b16 %v3621, %v3613
        %v5062 = vpack.c.b16 %v3622, %v3614
        %v5063 = vpack.c.b16 %v3631, %v3623
        %v5064 = vpack.c.b16 %v3632, %v3624
        %v5065 = vpack.c.b16 %v3633, %v3625
        %v5066 = vpack.c.b16 %v3634, %v3626
        %v5067 = vpack.c.b16 %v3635, %v3627
        %v5068 = vpack.c.b16 %v3636, %v3628
        %v5069 = vpack.c.b16 %v3637, %v3629
        %v5070 = vpack.c.b16 %v3638, %v3630
        %v5071 = vpack.c.b16 %v3647, %v3639
        %v5072 = vpack.c.b16 %v3648, %v3640
        %v5073 = vpack.c.b16 %v3649, %v3641
        %v5074 = vpack.c.b16 %v3650, %v3642
        %v5075 = vpack.c.b16 %v3651, %v3643
        %v5076 = vpack.c.b16 %v3652, %v3644
        %v5077 = vpack.c.b16 %v3653, %v3645
        %v5078 = vpack.c.b16 %v3654, %v3646
        %v5079 = vpack.c.b16 %v3663, %v3655
        %v5080 = vpack.c.b16 %v3664, %v3656
        %v5081 = vpack.c.b16 %v3665, %v3657
        %v5082 = vpack.c.b16 %v3666, %v3658
        %v5083 = vpack.c.b16 %v3667, %v3659
        %v5084 = vpack.c.b16 %v3668, %v3660
        %v5085 = vpack.c.b16 %v3669, %v3661
        %v5086 = vpack.c.b16 %v3670, %v3662
        %v5087 = vpack.c.b16 %v3679, %v3671
        %v5088 = vpack.c.b16 %v3680, %v3672
        %v5089 = vpack.c.b16 %v3681, %v3673
        %v5090 = vpack.c.b16 %v3682, %v3674
        %v5091 = vpack.c.b16 %v3683, %v3675
        %v5092 = vpack.c.b16 %v3684, %v3676
        %v5093 = vpack.c.b16 %v3685, %v3677
        %v5094 = vpack.c.b16 %v3686, %v3678
        %v5095 = vpack.c.b16 %v3695, %v3687
        %v5096 = vpack.c.b16 %v3696, %v3688
        %v5097 = vpack.c.b16 %v3697, %v3689
        %v5098 = vpack.c.b16 %v3698, %v3690
        %v5099 = vpack.c.b16 %v3699, %v3691
        %v5100 = vpack.c.b16 %v3700, %v3692
        %v5101 = vpack.c.b16 %v3701, %v3693
        %v5102 = vpack.c.b16 %v3702, %v3694
        %v5103 = vpack.c.b16 %v3711, %v3703
        %v5104 = vpack.c.b16 %v3712, %v3704
        %v5105 = vpack.c.b16 %v3713, %v3705
        %v5106 = vpack.c.b16 %v3714, %v3706
        %v5107 = vpack.c.b16 %v3715, %v3707
        %v5108 = vpack.c.b16 %v3716, %v3708
        %v5109 = vpack.c.b16 %v3717, %v3709
        %v5110 = vpack.c.b16 %v3718, %v3710
        %v5111 = vpack.c.b16 %v3727, %v3719
        %v5112 = vpack.c.b16 %v3728, %v3720
        %v5113 = vpack.c.b16 %v3729, %v3721
        %v5114 = vpack.c.b16 %v3730, %v3722
        %v5115 = vpack.c.b16 %v3731, %v3723
        %v5116 = vpack.c.b16 %v3732, %v3724
        %v5117 = vpack.c.b16 %v3733, %v3725
        %v5118 = vpack.c.b16 %v3734, %v3726
        %v5119 = vpack.c.b16 %v3743, %v3735
        %v5120 = vpack.c.b16 %v3744, %v3736
        %v5121 = vpack.c.b16 %v3745, %v3737
        %v5122 = vpack.c.b16 %v3746, %v3738
        %v5123 = vpack.c.b16 %v3747, %v3739
        %v5124 = vpack.c.b16 %v3748, %v3740
        %v5125 = vpack.c.b16 %v3749, %v3741
        %v5126 = vpack.c.b16 %v3750, %v3742
        %v5127 = vpack.c.b16 %v3759, %v3751
        %v5128 = vpack.c.b16 %v3760, %v3752
        %v5129 = vpack.c.b16 %v3761, %v3753
        %v5130 = vpack.c.b16 %v3762, %v3754
        %v5131 = vpack.c.b16 %v3763, %v3755
        %v5132 = vpack.c.b16 %v3764, %v3756
        %v5133 = vpack.c.b16 %v3765, %v3757
        %v5134 = vpack.c.b16 %v3766, %v3758
        %v5135 = vpack.c.b16 %v3775, %v3767
        %v5136 = vpack.c.b16 %v3776, %v3768
        %v5137 = vpack.c.b16 %v3777, %v3769
        %v5138 = vpack.c.b16 %v3778, %v3770
        %v5139 = vpack.c.b16 %v3779, %v3771
        %v5140 = vpack.c.b16 %v3780, %v3772
        %v5141 = vpack.c.b16 %v3781, %v3773
        %v5142 = vpack.c.b16 %v3782, %v3774
        %v5143 = vpack.c.b16 %v3791, %v3783
        %v5144 = vpack.c.b16 %v3792, %v3784
        %v5145 = vpack.c.b16 %v3793, %v3785
        %v5146 = vpack.c.b16 %v3794, %v3786
        %v5147 = vpack.c.b16 %v3795, %v3787
        %v5148 = vpack.c.b16 %v3796, %v3788
        %v5149 = vpack.c.b16 %v3797, %v3789
        %v5150 = vpack.c.b16 %v3798, %v3790
        %v5151 = vpack.c.b16 %v3807, %v3799
        %v5152 = vpack.c.b16 %v3808, %v3800
        %v5153 = vpack.c.b16 %v3809, %v3801
        %v5154 = vpack.c.b16 %v3810, %v3802
        %v5155 = vpack.c.b16 %v3811, %v3803
        %v5156 = vpack.c.b16 %v3812, %v3804
        %v5157 = vpack.c.b16 %v3813, %v3805
        %v5158 = vpack.c.b16 %v3814, %v3806
        %v5159 = vpack.c.b16 %v3823, %v3815
        %v5160 = vpack.c.b16 %v3824, %v3816
        %v5161 = vpack.c.b16 %v3825, %v3817
        %v5162 = vpack.c.b16 %v3826, %v3818
        %v5163 = vpack.c.b16 %v3827, %v3819
        %v5164 = vpack.c.b16 %v3828, %v3820
        %v5165 = vpack.c.b16 %v3829, %v3821
        %v5166 = vpack.c.b16 %v3830, %v3822
        %v5167 = vpack.c.b16 %v3839, %v3831
        %v5168 = vpack.c.b16 %v3840, %v3832
        %v5169 = vpack.c.b16 %v3841, %v3833
        %v5170 = vpack.c.b16 %v3842, %v3834
        %v5171 = vpack.c.b16 %v3843, %v3835
        %v5172 = vpack.c.b16 %v3844, %v3836
        %v5173 = vpack.c.b16 %v3845, %v3837
        %v5174 = vpack.c.b16 %v3846, %v3838
        %v5175 = vpack.c.b16 %v3855, %v3847
        %v5176 = vpack.c.b16 %v3856, %v3848
        %v5177 = vpack.c.b16 %v3857, %v3849
        %v5178 = vpack.c.b16 %v3858, %v3850
        %v5179 = vpack.c.b16 %v3859, %v3851
        %v5180 = vpack.c.b16 %v3860, %v3852
        %v5181 = vpack.c.b16 %v3861, %v3853
        %v5182 = vpack.c.b16 %v3862, %v3854
        %v5183 = vpack.c.b16 %v3871, %v3863
        %v5184 = vpack.c.b16 %v3872, %v3864
        %v5185 = vpack.c.b16 %v3873, %v3865
        %v5186 = vpack.c.b16 %v3874, %v3866
        %v5187 = vpack.c.b16 %v3875, %v3867
        %v5188 = vpack.c.b16 %v3876, %v3868
        %v5189 = vpack.c.b16 %v3877, %v3869
        %v5190 = vpack.c.b16 %v3878, %v3870
        %v5191 = vpack.c.b16 %v3887, %v3879
        %v5192 = vpack.c.b16 %v3888, %v3880
        %v5193 = vpack.c.b16 %v3889, %v3881
        %v5194 = vpack.c.b16 %v3890, %v3882
        %v5195 = vpack.c.b16 %v3891, %v3883
        %v5196 = vpack.c.b16 %v3892, %v3884
        %v5197 = vpack.c.b16 %v3893, %v3885
        %v5198 = vpack.c.b16 %v3894, %v3886
        %v5199 = vpack.c.b16 %v3903, %v3895
        %v5200 = vpack.c.b16 %v3904, %v3896
        %v5201 = vpack.c.b16 %v3905, %v3897
        %v5202 = vpack.c.b16 %v3906, %v3898
        %v5203 = vpack.c.b16 %v3907, %v3899
        %v5204 = vpack.c.b16 %v3908, %v3900
        %v5205 = vpack.c.b16 %v3909, %v3901
        %v5206 = vpack.c.b16 %v3910, %v3902
        %v5207 = vpack.c.b16 %v3919, %v3911
        %v5208 = vpack.c.b16 %v3920, %v3912
        %v5209 = vpack.c.b16 %v3921, %v3913
        %v5210 = vpack.c.b16 %v3922, %v3914
        %v5211 = vpack.c.b16 %v3923, %v3915
        %v5212 = vpack.c.b16 %v3924, %v3916
        %v5213 = vpack.c.b16 %v3925, %v3917
        %v5214 = vpack.c.b16 %v3926, %v3918
        %v5215 = vpack.c.b16 %v3935, %v3927
        %v5216 = vpack.c.b16 %v3936, %v3928
        %v5217 = vpack.c.b16 %v3937, %v3929
        %v5218 = vpack.c.b16 %v3938, %v3930
        %v5219 = vpack.c.b16 %v3939, %v3931
        %v5220 = vpack.c.b16 %v3940, %v3932
        %v5221 = vpack.c.b16 %v3941, %v3933
        %v5222 = vpack.c.b16 %v3942, %v3934
        %v5223 = vpack.c.b16 %v3951, %v3943
        %v5224 = vpack.c.b16 %v3952, %v3944
        %v5225 = vpack.c.b16 %v3953, %v3945
        %v5226 = vpack.c.b16 %v3954, %v3946
        %v5227 = vpack.c.b16 %v3955, %v3947
        %v5228 = vpack.c.b16 %v3956, %v3948
        %v5229 = vpack.c.b16 %v3957, %v3949
        %v5230 = vpack.c.b16 %v3958, %v3950
        %v5231 = vpack.c.b16 %v3967, %v3959
        %v5232 = vpack.c.b16 %v3968, %v3960
        %v5233 = vpack.c.b16 %v3969, %v3961
        %v5234 = vpack.c.b16 %v3970, %v3962
        %v5235 = vpack.c.b16 %v3971, %v3963
        %v5236 = vpack.c.b16 %v3972, %v3964
        %v5237 = vpack.c.b16 %v3973, %v3965
        %v5238 = vpack.c.b16 %v3974, %v3966
        %v5239 = vpack.c.b16 %v3983, %v3975
        %v5240 = vpack.c.b16 %v3984, %v3976
        %v5241 = vpack.c.b16 %v3985, %v3977
        %v5242 = vpack.c.b16 %v3986, %v3978
        %v5243 = vpack.c.b16 %v3987, %v3979
        %v5244 = vpack.c.b16 %v3988, %v3980
        %v5245 = vpack.c.b16 %v3989, %v3981
        %v5246 = vpack.c.b16 %v3990, %v3982
        %v5247 = vpack.c.b16 %v3999, %v3991
        %v5248 = vpack.c.b16 %v4000, %v3992
        %v5249 = vpack.c.b16 %v4001, %v3993
        %v5250 = vpack.c.b16 %v4002, %v3994
        %v5251 = vpack.c.b16 %v4003, %v3995
        %v5252 = vpack.c.b16 %v4004, %v3996
        %v5253 = vpack.c.b16 %v4005, %v3997
        %v5254 = vpack.c.b16 %v4006, %v3998
        %v5255 = vpack.c.b16 %v4015, %v4007
        %v5256 = vpack.c.b16 %v4016, %v4008
        %v5257 = vpack.c.b16 %v4017, %v4009
        %v5258 = vpack.c.b16 %v4018, %v4010
        %v5259 = vpack.c.b16 %v4019, %v4011
        %v5260 = vpack.c.b16 %v4020, %v4012
        %v5261 = vpack.c.b16 %v4021, %v4013
        %v5262 = vpack.c.b16 %v4022, %v4014
        %v5263 = vpack.c.b16 %v4031, %v4023
        %v5264 = vpack.c.b16 %v4032, %v4024
        %v5265 = vpack.c.b16 %v4033, %v4025
        %v5266 = vpack.c.b16 %v4034, %v4026
        %v5267 = vpack.c.b16 %v4035, %v4027
        %v5268 = vpack.c.b16 %v4036, %v4028
        %v5269 = vpack.c.b16 %v4037, %v4029
        %v5270 = vpack.c.b16 %v4038, %v4030
        %v5271 = vpack.c.b16 %v4047, %v4039
        %v5272 = vpack.c.b16 %v4048, %v4040
        %v5273 = vpack.c.b16 %v4049, %v4041
        %v5274 = vpack.c.b16 %v4050, %v4042
        %v5275 = vpack.c.b16 %v4051, %v4043
        %v5276 = vpack.c.b16 %v4052, %v4044
        %v5277 = vpack.c.b16 %v4053, %v4045
        %v5278 = vpack.c.b16 %v4054, %v4046
        %v5279 = vpack.c.b16 %v4063, %v4055
        %v5280 = vpack.c.b16 %v4064, %v4056
        %v5281 = vpack.c.b16 %v4065, %v4057
        %v5282 = vpack.c.b16 %v4066, %v4058
        %v5283 = vpack.c.b16 %v4067, %v4059
        %v5284 = vpack.c.b16 %v4068, %v4060
        %v5285 = vpack.c.b16 %v4069, %v4061
        %v5286 = vpack.c.b16 %v4070, %v4062
        %v5287 = vpack.c.b16 %v4079, %v4071
        %v5288 = vpack.c.b16 %v4080, %v4072
        %v5289 = vpack.c.b16 %v4081, %v4073
        %v5290 = vpack.c.b16 %v4082, %v4074
        %v5291 = vpack.c.b16 %v4083, %v4075
        %v5292 = vpack.c.b16 %v4084, %v4076
        %v5293 = vpack.c.b16 %v4085, %v4077
        %v5294 = vpack.c.b16 %v4086, %v4078
        %v5295 = vpack.c.b16 %v4095, %v4087
        %v5296 = vpack.c.b16 %v4096, %v4088
        %v5297 = vpack.c.b16 %v4097, %v4089
        %v5298 = vpack.c.b16 %v4098, %v4090
        %v5299 = vpack.c.b16 %v4099, %v4091
        %v5300 = vpack.c.b16 %v4100, %v4092
        %v5301 = vpack.c.b16 %v4101, %v4093
        %v5302 = vpack.c.b16 %v4102, %v4094
        %v5303 = vpack.c.b16 %v4111, %v4103
        %v5304 = vpack.c.b16 %v4112, %v4104
        %v5305 = vpack.c.b16 %v4113, %v4105
        %v5306 = vpack.c.b16 %v4114, %v4106
        %v5307 = vpack.c.b16 %v4115, %v4107
        %v5308 = vpack.c.b16 %v4116, %v4108
        %v5309 = vpack.c.b16 %v4117, %v4109
        %v5310 = vpack.c.b16 %v4118, %v4110
        %v5311 = vpack.c.b16 %v4127, %v4119
        %v5312 = vpack.c.b16 %v4128, %v4120
        %v5313 = vpack.c.b16 %v4129, %v4121
        %v5314 = vpack.c.b16 %v4130, %v4122
        %v5315 = vpack.c.b16 %v4131, %v4123
        %v5316 = vpack.c.b16 %v4132, %v4124
        %v5317 = vpack.c.b16 %v4133, %v4125
        %v5318 = vpack.c.b16 %v4134, %v4126
        %v5319 = vpack.c.b16 %v4143, %v4135
        %v5320 = vpack.c.b16 %v4144, %v4136
        %v5321 = vpack.c.b16 %v4145, %v4137
        %v5322 = vpack.c.b16 %v4146, %v4138
        %v5323 = vpack.c.b16 %v4147, %v4139
        %v5324 = vpack.c.b16 %v4148, %v4140
        %v5325 = vpack.c.b16 %v4149, %v4141
        %v5326 = vpack.c.b16 %v4150, %v4142
        %v5327 = vpack.c.b16 %v4159, %v4151
        %v5328 = vpack.c.b16 %v4160, %v4152
        %v5329 = vpack.c.b16 %v4161, %v4153
        %v5330 = vpack.c.b16 %v4162, %v4154
        %v5331 = vpack.c.b16 %v4163, %v4155
        %v5332 = vpack.c.b16 %v4164, %v4156
        %v5333 = vpack.c.b16 %v4165, %v4157
        %v5334 = vpack.c.b16 %v4166, %v4158
        %v5335 = vpack.c.b16 %v4175, %v4167
        %v5336 = vpack.c.b16 %v4176, %v4168
        %v5337 = vpack.c.b16 %v4177, %v4169
        %v5338 = vpack.c.b16 %v4178, %v4170
        %v5339 = vpack.c.b16 %v4179, %v4171
        %v5340 = vpack.c.b16 %v4180, %v4172
        %v5341 = vpack.c.b16 %v4181, %v4173
        %v5342 = vpack.c.b16 %v4182, %v4174
        %v5343 = vpack.c.b16 %v4191, %v4183
        %v5344 = vpack.c.b16 %v4192, %v4184
        %v5345 = vpack.c.b16 %v4193, %v4185
        %v5346 = vpack.c.b16 %v4194, %v4186
        %v5347 = vpack.c.b16 %v4195, %v4187
        %v5348 = vpack.c.b16 %v4196, %v4188
        %v5349 = vpack.c.b16 %v4197, %v4189
        %v5350 = vpack.c.b16 %v4198, %v4190
        %v5351 = vpack.c.b16 %v4207, %v4199
        %v5352 = vpack.c.b16 %v4208, %v4200
        %v5353 = vpack.c.b16 %v4209, %v4201
        %v5354 = vpack.c.b16 %v4210, %v4202
        %v5355 = vpack.c.b16 %v4211, %v4203
        %v5356 = vpack.c.b16 %v4212, %v4204
        %v5357 = vpack.c.b16 %v4213, %v4205
        %v5358 = vpack.c.b16 %v4214, %v4206
        %v5359 = vpack.c.b16 %v4223, %v4215
        %v5360 = vpack.c.b16 %v4224, %v4216
        %v5361 = vpack.c.b16 %v4225, %v4217
        %v5362 = vpack.c.b16 %v4226, %v4218
        %v5363 = vpack.c.b16 %v4227, %v4219
        %v5364 = vpack.c.b16 %v4228, %v4220
        %v5365 = vpack.c.b16 %v4229, %v4221
        %v5366 = vpack.c.b16 %v4230, %v4222
        %v5367 = vpack.c.b16 %v4239, %v4231
        %v5368 = vpack.c.b16 %v4240, %v4232
        %v5369 = vpack.c.b16 %v4241, %v4233
        %v5370 = vpack.c.b16 %v4242, %v4234
        %v5371 = vpack.c.b16 %v4243, %v4235
        %v5372 = vpack.c.b16 %v4244, %v4236
        %v5373 = vpack.c.b16 %v4245, %v4237
        %v5374 = vpack.c.b16 %v4246, %v4238
        %v5375 = vpack.c.b16 %v4255, %v4247
        %v5376 = vpack.c.b16 %v4256, %v4248
        %v5377 = vpack.c.b16 %v4257, %v4249
        %v5378 = vpack.c.b16 %v4258, %v4250
        %v5379 = vpack.c.b16 %v4259, %v4251
        %v5380 = vpack.c.b16 %v4260, %v4252
        %v5381 = vpack.c.b16 %v4261, %v4253
        %v5382 = vpack.c.b16 %v4262, %v4254
        %v5383 = vpack.c.b16 %v4271, %v4263
        %v5384 = vpack.c.b16 %v4272, %v4264
        %v5385 = vpack.c.b16 %v4273, %v4265
        %v5386 = vpack.c.b16 %v4274, %v4266
        %v5387 = vpack.c.b16 %v4275, %v4267
        %v5388 = vpack.c.b16 %v4276, %v4268
        %v5389 = vpack.c.b16 %v4277, %v4269
        %v5390 = vpack.c.b16 %v4278, %v4270
        %v5391 = vpack.c.b16 %v4287, %v4279
        %v5392 = vpack.c.b16 %v4288, %v4280
        %v5393 = vpack.c.b16 %v4289, %v4281
        %v5394 = vpack.c.b16 %v4290, %v4282
        %v5395 = vpack.c.b16 %v4291, %v4283
        %v5396 = vpack.c.b16 %v4292, %v4284
        %v5397 = vpack.c.b16 %v4293, %v4285
        %v5398 = vpack.c.b16 %v4294, %v4286
        %v5399 = vpack.c.b16 %v4303, %v4295
        %v5400 = vpack.c.b16 %v4304, %v4296
        %v5401 = vpack.c.b16 %v4305, %v4297
        %v5402 = vpack.c.b16 %v4306, %v4298
        %v5403 = vpack.c.b16 %v4307, %v4299
        %v5404 = vpack.c.b16 %v4308, %v4300
        %v5405 = vpack.c.b16 %v4309, %v4301
        %v5406 = vpack.c.b16 %v4310, %v4302
        %v5407 = vpack.c.b16 %v4319, %v4311
        %v5408 = vpack.c.b16 %v4320, %v4312
        %v5409 = vpack.c.b16 %v4321, %v4313
        %v5410 = vpack.c.b16 %v4322, %v4314
        %v5411 = vpack.c.b16 %v4323, %v4315
        %v5412 = vpack.c.b16 %v4324, %v4316
        %v5413 = vpack.c.b16 %v4325, %v4317
        %v5414 = vpack.c.b16 %v4326, %v4318
        %v5415 = vpack.c.b16 %v4335, %v4327
        %v5416 = vpack.c.b16 %v4336, %v4328
        %v5417 = vpack.c.b16 %v4337, %v4329
        %v5418 = vpack.c.b16 %v4338, %v4330
        %v5419 = vpack.c.b16 %v4339, %v4331
        %v5420 = vpack.c.b16 %v4340, %v4332
        %v5421 = vpack.c.b16 %v4341, %v4333
        %v5422 = vpack.c.b16 %v4342, %v4334
        %v5423 = vpack.c.b16 %v4351, %v4343
        %v5424 = vpack.c.b16 %v4352, %v4344
        %v5425 = vpack.c.b16 %v4353, %v4345
        %v5426 = vpack.c.b16 %v4354, %v4346
        %v5427 = vpack.c.b16 %v4355, %v4347
        %v5428 = vpack.c.b16 %v4356, %v4348
        %v5429 = vpack.c.b16 %v4357, %v4349
        %v5430 = vpack.c.b16 %v4358, %v4350
        %v5431 = vpack.c.b16 %v4367, %v4359
        %v5432 = vpack.c.b16 %v4368, %v4360
        %v5433 = vpack.c.b16 %v4369, %v4361
        %v5434 = vpack.c.b16 %v4370, %v4362
        %v5435 = vpack.c.b16 %v4371, %v4363
        %v5436 = vpack.c.b16 %v4372, %v4364
        %v5437 = vpack.c.b16 %v4373, %v4365
        %v5438 = vpack.c.b16 %v4374, %v4366
        %v5439 = vpack.c.b16 %v4383, %v4375
        %v5440 = vpack.c.b16 %v4384, %v4376
        %v5441 = vpack.c.b16 %v4385, %v4377
        %v5442 = vpack.c.b16 %v4386, %v4378
        %v5443 = vpack.c.b16 %v4387, %v4379
        %v5444 = vpack.c.b16 %v4388, %v4380
        %v5445 = vpack.c.b16 %v4389, %v4381
        %v5446 = vpack.c.b16 %v4390, %v4382
        %v5447 = vpack.c.b16 %v4399, %v4391
        %v5448 = vpack.c.b16 %v4400, %v4392
        %v5449 = vpack.c.b16 %v4401, %v4393
        %v5450 = vpack.c.b16 %v4402, %v4394
        %v5451 = vpack.c.b16 %v4403, %v4395
        %v5452 = vpack.c.b16 %v4404, %v4396
        %v5453 = vpack.c.b16 %v4405, %v4397
        %v5454 = vpack.c.b16 %v4406, %v4398
        %v5455 = vpack.c.b16 %v4415, %v4407
        %v5456 = vpack.c.b16 %v4416, %v4408
        %v5457 = vpack.c.b16 %v4417, %v4409
        %v5458 = vpack.c.b16 %v4418, %v4410
        %v5459 = vpack.c.b16 %v4419, %v4411
        %v5460 = vpack.c.b16 %v4420, %v4412
        %v5461 = vpack.c.b16 %v4421, %v4413
        %v5462 = vpack.c.b16 %v4422, %v4414
        %v5463 = vpack.c.b16 %v4431, %v4423
        %v5464 = vpack.c.b16 %v4432, %v4424
        %v5465 = vpack.c.b16 %v4433, %v4425
        %v5466 = vpack.c.b16 %v4434, %v4426
        %v5467 = vpack.c.b16 %v4435, %v4427
        %v5468 = vpack.c.b16 %v4436, %v4428
        %v5469 = vpack.c.b16 %v4437, %v4429
        %v5470 = vpack.c.b16 %v4438, %v4430
        %v5471 = vpack.c.b16 %v4447, %v4439
        %v5472 = vpack.c.b16 %v4448, %v4440
        %v5473 = vpack.c.b16 %v4449, %v4441
        %v5474 = vpack.c.b16 %v4450, %v4442
        %v5475 = vpack.c.b16 %v4451, %v4443
        %v5476 = vpack.c.b16 %v4452, %v4444
        %v5477 = vpack.c.b16 %v4453, %v4445
        %v5478 = vpack.c.b16 %v4454, %v4446
        %6503 = vmatpush.bf16.msra.mxu0 %v4511
        %6504 = vmatpush.bf16.msra.mxu0 %v4503
        %6505 = vmatpush.bf16.msra.mxu0 %v4495
        %6506 = vmatpush.bf16.msra.mxu0 %v4487
        %6507 = vmatpush.bf16.msra.mxu0 %v4479
        %6508 = vmatpush.bf16.msra.mxu0 %v4471
        %6509 = vmatpush.bf16.msra.mxu0 %v4463
        %6510 = vmatpush.bf16.msra.mxu0 %v4455
        %6511 = vmatmul.bf16.gmra.mxu0 %v1351
        %v6512 = vpop.f32.mrf.mxu0
        %v6513 = vadd.f32 0.0, %v6512
        %v6514 = vpop.f32.mrf.mxu0
        %6515 = vdwg.mxu0
        %6516 = vmatpush.bf16.msra.mxu0 %v4575
        %6517 = vmatpush.bf16.msra.mxu0 %v4567
        %6518 = vmatpush.bf16.msra.mxu0 %v4559
        %6519 = vmatpush.bf16.msra.mxu0 %v4551
        %6520 = vmatpush.bf16.msra.mxu0 %v4543
        %6521 = vmatpush.bf16.msra.mxu0 %v4535
        %6522 = vmatpush.bf16.msra.mxu0 %v4527
        %6523 = vmatpush.bf16.msra.mxu0 %v4519
        %6524 = vmatmul.bf16.gmra.mxu0 %v1352
        %v6525 = vpop.f32.mrf.mxu0
        %v6526 = vadd.f32 %v6513, %v6525
        %v6527 = vpop.f32.mrf.mxu0
        %6528 = vdwg.mxu0
        %6529 = vmatpush.bf16.msra.mxu0 %v4639
        %6530 = vmatpush.bf16.msra.mxu0 %v4631
        %6531 = vmatpush.bf16.msra.mxu0 %v4623
        %6532 = vmatpush.bf16.msra.mxu0 %v4615
        %6533 = vmatpush.bf16.msra.mxu0 %v4607
        %6534 = vmatpush.bf16.msra.mxu0 %v4599
        %6535 = vmatpush.bf16.msra.mxu0 %v4591
        %6536 = vmatpush.bf16.msra.mxu0 %v4583
        %6537 = vmatmul.bf16.gmra.mxu0 %v1353
        %v6538 = vpop.f32.mrf.mxu0
        %v6539 = vadd.f32 %v6526, %v6538
        %v6540 = vpop.f32.mrf.mxu0
        %6541 = vdwg.mxu0
        %6542 = vmatpush.bf16.msra.mxu0 %v4703
        %6543 = vmatpush.bf16.msra.mxu0 %v4695
        %6544 = vmatpush.bf16.msra.mxu0 %v4687
        %6545 = vmatpush.bf16.msra.mxu0 %v4679
        %6546 = vmatpush.bf16.msra.mxu0 %v4671
        %6547 = vmatpush.bf16.msra.mxu0 %v4663
        %6548 = vmatpush.bf16.msra.mxu0 %v4655
        %6549 = vmatpush.bf16.msra.mxu0 %v4647
        %6550 = vmatmul.bf16.gmra.mxu0 %v1354
        %v6551 = vpop.f32.mrf.mxu0
        %v6552 = vadd.f32 %v6539, %v6551
        %v6553 = vpop.f32.mrf.mxu0
        %6554 = vdwg.mxu0
        %6555 = vmatpush.bf16.msra.mxu0 %v4767
        %6556 = vmatpush.bf16.msra.mxu0 %v4759
        %6557 = vmatpush.bf16.msra.mxu0 %v4751
        %6558 = vmatpush.bf16.msra.mxu0 %v4743
        %6559 = vmatpush.bf16.msra.mxu0 %v4735
        %6560 = vmatpush.bf16.msra.mxu0 %v4727
        %6561 = vmatpush.bf16.msra.mxu0 %v4719
        %6562 = vmatpush.bf16.msra.mxu0 %v4711
        %6563 = vmatmul.bf16.gmra.mxu0 %v1355
        %v6564 = vpop.f32.mrf.mxu0
        %v6565 = vadd.f32 %v6552, %v6564
        %v6566 = vpop.f32.mrf.mxu0
        %6567 = vdwg.mxu0
        %6568 = vmatpush.bf16.msra.mxu0 %v4831
        %6569 = vmatpush.bf16.msra.mxu0 %v4823
        %6570 = vmatpush.bf16.msra.mxu0 %v4815
        %6571 = vmatpush.bf16.msra.mxu0 %v4807
        %6572 = vmatpush.bf16.msra.mxu0 %v4799
        %6573 = vmatpush.bf16.msra.mxu0 %v4791
        %6574 = vmatpush.bf16.msra.mxu0 %v4783
        %6575 = vmatpush.bf16.msra.mxu0 %v4775
        %6576 = vmatmul.bf16.gmra.mxu0 %v1356
        %v6577 = vpop.f32.mrf.mxu0
        %v6578 = vadd.f32 %v6565, %v6577
        %v6579 = vpop.f32.mrf.mxu0
        %6580 = vdwg.mxu0
        %6581 = vmatpush.bf16.msra.mxu0 %v4895
        %6582 = vmatpush.bf16.msra.mxu0 %v4887
        %6583 = vmatpush.bf16.msra.mxu0 %v4879
        %6584 = vmatpush.bf16.msra.mxu0 %v4871
        %6585 = vmatpush.bf16.msra.mxu0 %v4863
        %6586 = vmatpush.bf16.msra.mxu0 %v4855
        %6587 = vmatpush.bf16.msra.mxu0 %v4847
        %6588 = vmatpush.bf16.msra.mxu0 %v4839
        %6589 = vmatmul.bf16.gmra.mxu0 %v1357
        %v6590 = vpop.f32.mrf.mxu0
        %v6591 = vadd.f32 %v6578, %v6590
        %v6592 = vpop.f32.mrf.mxu0
        %6593 = vdwg.mxu0
        %6594 = vmatpush.bf16.msra.mxu0 %v4959
        %6595 = vmatpush.bf16.msra.mxu0 %v4951
        %6596 = vmatpush.bf16.msra.mxu0 %v4943
        %6597 = vmatpush.bf16.msra.mxu0 %v4935
        %6598 = vmatpush.bf16.msra.mxu0 %v4927
        %6599 = vmatpush.bf16.msra.mxu0 %v4919
        %6600 = vmatpush.bf16.msra.mxu0 %v4911
        %6601 = vmatpush.bf16.msra.mxu0 %v4903
        %6602 = vmatmul.bf16.gmra.mxu0 %v1358
        %v6603 = vpop.f32.mrf.mxu0
        %v6604 = vadd.f32 %v6591, %v6603
        %v6605 = vpop.f32.mrf.mxu0
        %6606 = vdwg.mxu0
        %6607 = vmatpush.bf16.msra.mxu0 %v5023
        %6608 = vmatpush.bf16.msra.mxu0 %v5015
        %6609 = vmatpush.bf16.msra.mxu0 %v5007
        %6610 = vmatpush.bf16.msra.mxu0 %v4999
        %6611 = vmatpush.bf16.msra.mxu0 %v4991
        %6612 = vmatpush.bf16.msra.mxu0 %v4983
        %6613 = vmatpush.bf16.msra.mxu0 %v4975
        %6614 = vmatpush.bf16.msra.mxu0 %v4967
        %6615 = vmatmul.bf16.gmra.mxu0 %v1359
        %v6616 = vpop.f32.mrf.mxu0
        %v6617 = vadd.f32 %v6604, %v6616
        %v6618 = vpop.f32.mrf.mxu0
        %6619 = vdwg.mxu0
        %6620 = vmatpush.bf16.msra.mxu0 %v5087
        %6621 = vmatpush.bf16.msra.mxu0 %v5079
        %6622 = vmatpush.bf16.msra.mxu0 %v5071
        %6623 = vmatpush.bf16.msra.mxu0 %v5063
        %6624 = vmatpush.bf16.msra.mxu0 %v5055
        %6625 = vmatpush.bf16.msra.mxu0 %v5047
        %6626 = vmatpush.bf16.msra.mxu0 %v5039
        %6627 = vmatpush.bf16.msra.mxu0 %v5031
        %6628 = vmatmul.bf16.gmra.mxu0 %v1360
        %v6629 = vpop.f32.mrf.mxu0
        %v6630 = vadd.f32 %v6617, %v6629
        %v6631 = vpop.f32.mrf.mxu0
        %6632 = vdwg.mxu0
        %6633 = vmatpush.bf16.msra.mxu0 %v5151
        %6634 = vmatpush.bf16.msra.mxu0 %v5143
        %6635 = vmatpush.bf16.msra.mxu0 %v5135
        %6636 = vmatpush.bf16.msra.mxu0 %v5127
        %6637 = vmatpush.bf16.msra.mxu0 %v5119
        %6638 = vmatpush.bf16.msra.mxu0 %v5111
        %6639 = vmatpush.bf16.msra.mxu0 %v5103
        %6640 = vmatpush.bf16.msra.mxu0 %v5095
        %6641 = vmatmul.bf16.gmra.mxu0 %v1361
        %v6642 = vpop.f32.mrf.mxu0
        %v6643 = vadd.f32 %v6630, %v6642
        %v6644 = vpop.f32.mrf.mxu0
        %6645 = vdwg.mxu0
        %6646 = vmatpush.bf16.msra.mxu0 %v5215
        %6647 = vmatpush.bf16.msra.mxu0 %v5207
        %6648 = vmatpush.bf16.msra.mxu0 %v5199
        %6649 = vmatpush.bf16.msra.mxu0 %v5191
        %6650 = vmatpush.bf16.msra.mxu0 %v5183
        %6651 = vmatpush.bf16.msra.mxu0 %v5175
        %6652 = vmatpush.bf16.msra.mxu0 %v5167
        %6653 = vmatpush.bf16.msra.mxu0 %v5159
        %6654 = vmatmul.bf16.gmra.mxu0 %v1362
        %v6655 = vpop.f32.mrf.mxu0
        %v6656 = vadd.f32 %v6643, %v6655
        %v6657 = vpop.f32.mrf.mxu0
        %6658 = vdwg.mxu0
        %6659 = vmatpush.bf16.msra.mxu0 %v5279
        %6660 = vmatpush.bf16.msra.mxu0 %v5271
        %6661 = vmatpush.bf16.msra.mxu0 %v5263
        %6662 = vmatpush.bf16.msra.mxu0 %v5255
        %6663 = vmatpush.bf16.msra.mxu0 %v5247
        %6664 = vmatpush.bf16.msra.mxu0 %v5239
        %6665 = vmatpush.bf16.msra.mxu0 %v5231
        %6666 = vmatpush.bf16.msra.mxu0 %v5223
        %6667 = vmatmul.bf16.gmra.mxu0 %v1363
        %v6668 = vpop.f32.mrf.mxu0
        %v6669 = vadd.f32 %v6656, %v6668
        %v6670 = vpop.f32.mrf.mxu0
        %6671 = vdwg.mxu0
        %6672 = vmatpush.bf16.msra.mxu0 %v5343
        %6673 = vmatpush.bf16.msra.mxu0 %v5335
        %6674 = vmatpush.bf16.msra.mxu0 %v5327
        %6675 = vmatpush.bf16.msra.mxu0 %v5319
        %6676 = vmatpush.bf16.msra.mxu0 %v5311
        %6677 = vmatpush.bf16.msra.mxu0 %v5303
        %6678 = vmatpush.bf16.msra.mxu0 %v5295
        %6679 = vmatpush.bf16.msra.mxu0 %v5287
        %6680 = vmatmul.bf16.gmra.mxu0 %v1364
        %v6681 = vpop.f32.mrf.mxu0
        %v6682 = vadd.f32 %v6669, %v6681
        %v6683 = vpop.f32.mrf.mxu0
        %6684 = vdwg.mxu0
        %6685 = vmatpush.bf16.msra.mxu0 %v5407
        %6686 = vmatpush.bf16.msra.mxu0 %v5399
        %6687 = vmatpush.bf16.msra.mxu0 %v5391
        %6688 = vmatpush.bf16.msra.mxu0 %v5383
        %6689 = vmatpush.bf16.msra.mxu0 %v5375
        %6690 = vmatpush.bf16.msra.mxu0 %v5367
        %6691 = vmatpush.bf16.msra.mxu0 %v5359
        %6692 = vmatpush.bf16.msra.mxu0 %v5351
        %6693 = vmatmul.bf16.gmra.mxu0 %v1365
        %v6694 = vpop.f32.mrf.mxu0
        %v6695 = vadd.f32 %v6682, %v6694
        %v6696 = vpop.f32.mrf.mxu0
        %6697 = vdwg.mxu0
        %6698 = vmatpush.bf16.msra.mxu0 %v5471
        %6699 = vmatpush.bf16.msra.mxu0 %v5463
        %6700 = vmatpush.bf16.msra.mxu0 %v5455
        %6701 = vmatpush.bf16.msra.mxu0 %v5447
        %6702 = vmatpush.bf16.msra.mxu0 %v5439
        %6703 = vmatpush.bf16.msra.mxu0 %v5431
        %6704 = vmatpush.bf16.msra.mxu0 %v5423
        %6705 = vmatpush.bf16.msra.mxu0 %v5415
        %6706 = vmatmul.bf16.gmra.mxu0 %v1366
        %v6707 = vpop.f32.mrf.mxu0
        %v6708 = vadd.f32 %v6695, %v6707
        %v6709 = vpop.f32.mrf.mxu0
        %6710 = vdwg.mxu0
        %6711 = vmatpush.bf16.msra.mxu0 %v4512
        %6712 = vmatpush.bf16.msra.mxu0 %v4504
        %6713 = vmatpush.bf16.msra.mxu0 %v4496
        %6714 = vmatpush.bf16.msra.mxu0 %v4488
        %6715 = vmatpush.bf16.msra.mxu0 %v4480
        %6716 = vmatpush.bf16.msra.mxu0 %v4472
        %6717 = vmatpush.bf16.msra.mxu0 %v4464
        %6718 = vmatpush.bf16.msra.mxu0 %v4456
        %6719 = vmatmul.bf16.gmra.mxu0 %v1351
        %v6720 = vpop.f32.mrf.mxu0
        %v6721 = vadd.f32 0.0, %v6720
        %v6722 = vpop.f32.mrf.mxu0
        %6723 = vdwg.mxu0
        %6724 = vmatpush.bf16.msra.mxu0 %v4576
        %6725 = vmatpush.bf16.msra.mxu0 %v4568
        %6726 = vmatpush.bf16.msra.mxu0 %v4560
        %6727 = vmatpush.bf16.msra.mxu0 %v4552
        %6728 = vmatpush.bf16.msra.mxu0 %v4544
        %6729 = vmatpush.bf16.msra.mxu0 %v4536
        %6730 = vmatpush.bf16.msra.mxu0 %v4528
        %6731 = vmatpush.bf16.msra.mxu0 %v4520
        %6732 = vmatmul.bf16.gmra.mxu0 %v1352
        %v6733 = vpop.f32.mrf.mxu0
        %v6734 = vadd.f32 %v6721, %v6733
        %v6735 = vpop.f32.mrf.mxu0
        %6736 = vdwg.mxu0
        %6737 = vmatpush.bf16.msra.mxu0 %v4640
        %6738 = vmatpush.bf16.msra.mxu0 %v4632
        %6739 = vmatpush.bf16.msra.mxu0 %v4624
        %6740 = vmatpush.bf16.msra.mxu0 %v4616
        %6741 = vmatpush.bf16.msra.mxu0 %v4608
        %6742 = vmatpush.bf16.msra.mxu0 %v4600
        %6743 = vmatpush.bf16.msra.mxu0 %v4592
        %6744 = vmatpush.bf16.msra.mxu0 %v4584
        %6745 = vmatmul.bf16.gmra.mxu0 %v1353
        %v6746 = vpop.f32.mrf.mxu0
        %v6747 = vadd.f32 %v6734, %v6746
        %v6748 = vpop.f32.mrf.mxu0
        %6749 = vdwg.mxu0
        %6750 = vmatpush.bf16.msra.mxu0 %v4704
        %6751 = vmatpush.bf16.msra.mxu0 %v4696
        %6752 = vmatpush.bf16.msra.mxu0 %v4688
        %6753 = vmatpush.bf16.msra.mxu0 %v4680
        %6754 = vmatpush.bf16.msra.mxu0 %v4672
        %6755 = vmatpush.bf16.msra.mxu0 %v4664
        %6756 = vmatpush.bf16.msra.mxu0 %v4656
        %6757 = vmatpush.bf16.msra.mxu0 %v4648
        %6758 = vmatmul.bf16.gmra.mxu0 %v1354
        %v6759 = vpop.f32.mrf.mxu0
        %v6760 = vadd.f32 %v6747, %v6759
        %v6761 = vpop.f32.mrf.mxu0
        %6762 = vdwg.mxu0
        %6763 = vmatpush.bf16.msra.mxu0 %v4768
        %6764 = vmatpush.bf16.msra.mxu0 %v4760
        %6765 = vmatpush.bf16.msra.mxu0 %v4752
        %6766 = vmatpush.bf16.msra.mxu0 %v4744
        %6767 = vmatpush.bf16.msra.mxu0 %v4736
        %6768 = vmatpush.bf16.msra.mxu0 %v4728
        %6769 = vmatpush.bf16.msra.mxu0 %v4720
        %6770 = vmatpush.bf16.msra.mxu0 %v4712
        %6771 = vmatmul.bf16.gmra.mxu0 %v1355
        %v6772 = vpop.f32.mrf.mxu0
        %v6773 = vadd.f32 %v6760, %v6772
        %v6774 = vpop.f32.mrf.mxu0
        %6775 = vdwg.mxu0
        %6776 = vmatpush.bf16.msra.mxu0 %v4832
        %6777 = vmatpush.bf16.msra.mxu0 %v4824
        %6778 = vmatpush.bf16.msra.mxu0 %v4816
        %6779 = vmatpush.bf16.msra.mxu0 %v4808
        %6780 = vmatpush.bf16.msra.mxu0 %v4800
        %6781 = vmatpush.bf16.msra.mxu0 %v4792
        %6782 = vmatpush.bf16.msra.mxu0 %v4784
        %6783 = vmatpush.bf16.msra.mxu0 %v4776
        %6784 = vmatmul.bf16.gmra.mxu0 %v1356
        %v6785 = vpop.f32.mrf.mxu0
        %v6786 = vadd.f32 %v6773, %v6785
        %v6787 = vpop.f32.mrf.mxu0
        %6788 = vdwg.mxu0
        %6789 = vmatpush.bf16.msra.mxu0 %v4896
        %6790 = vmatpush.bf16.msra.mxu0 %v4888
        %6791 = vmatpush.bf16.msra.mxu0 %v4880
        %6792 = vmatpush.bf16.msra.mxu0 %v4872
        %6793 = vmatpush.bf16.msra.mxu0 %v4864
        %6794 = vmatpush.bf16.msra.mxu0 %v4856
        %6795 = vmatpush.bf16.msra.mxu0 %v4848
        %6796 = vmatpush.bf16.msra.mxu0 %v4840
        %6797 = vmatmul.bf16.gmra.mxu0 %v1357
        %v6798 = vpop.f32.mrf.mxu0
        %v6799 = vadd.f32 %v6786, %v6798
        %v6800 = vpop.f32.mrf.mxu0
        %6801 = vdwg.mxu0
        %6802 = vmatpush.bf16.msra.mxu0 %v4960
        %6803 = vmatpush.bf16.msra.mxu0 %v4952
        %6804 = vmatpush.bf16.msra.mxu0 %v4944
        %6805 = vmatpush.bf16.msra.mxu0 %v4936
        %6806 = vmatpush.bf16.msra.mxu0 %v4928
        %6807 = vmatpush.bf16.msra.mxu0 %v4920
        %6808 = vmatpush.bf16.msra.mxu0 %v4912
        %6809 = vmatpush.bf16.msra.mxu0 %v4904
        %6810 = vmatmul.bf16.gmra.mxu0 %v1358
        %v6811 = vpop.f32.mrf.mxu0
        %v6812 = vadd.f32 %v6799, %v6811
        %v6813 = vpop.f32.mrf.mxu0
        %6814 = vdwg.mxu0
        %6815 = vmatpush.bf16.msra.mxu0 %v5024
        %6816 = vmatpush.bf16.msra.mxu0 %v5016
        %6817 = vmatpush.bf16.msra.mxu0 %v5008
        %6818 = vmatpush.bf16.msra.mxu0 %v5000
        %6819 = vmatpush.bf16.msra.mxu0 %v4992
        %6820 = vmatpush.bf16.msra.mxu0 %v4984
        %6821 = vmatpush.bf16.msra.mxu0 %v4976
        %6822 = vmatpush.bf16.msra.mxu0 %v4968
        %6823 = vmatmul.bf16.gmra.mxu0 %v1359
        %v6824 = vpop.f32.mrf.mxu0
        %v6825 = vadd.f32 %v6812, %v6824
        %v6826 = vpop.f32.mrf.mxu0
        %6827 = vdwg.mxu0
        %6828 = vmatpush.bf16.msra.mxu0 %v5088
        %6829 = vmatpush.bf16.msra.mxu0 %v5080
        %6830 = vmatpush.bf16.msra.mxu0 %v5072
        %6831 = vmatpush.bf16.msra.mxu0 %v5064
        %6832 = vmatpush.bf16.msra.mxu0 %v5056
        %6833 = vmatpush.bf16.msra.mxu0 %v5048
        %6834 = vmatpush.bf16.msra.mxu0 %v5040
        %6835 = vmatpush.bf16.msra.mxu0 %v5032
        %6836 = vmatmul.bf16.gmra.mxu0 %v1360
        %v6837 = vpop.f32.mrf.mxu0
        %v6838 = vadd.f32 %v6825, %v6837
        %v6839 = vpop.f32.mrf.mxu0
        %6840 = vdwg.mxu0
        %6841 = vmatpush.bf16.msra.mxu0 %v5152
        %6842 = vmatpush.bf16.msra.mxu0 %v5144
        %6843 = vmatpush.bf16.msra.mxu0 %v5136
        %6844 = vmatpush.bf16.msra.mxu0 %v5128
        %6845 = vmatpush.bf16.msra.mxu0 %v5120
        %6846 = vmatpush.bf16.msra.mxu0 %v5112
        %6847 = vmatpush.bf16.msra.mxu0 %v5104
        %6848 = vmatpush.bf16.msra.mxu0 %v5096
        %6849 = vmatmul.bf16.gmra.mxu0 %v1361
        %v6850 = vpop.f32.mrf.mxu0
        %v6851 = vadd.f32 %v6838, %v6850
        %v6852 = vpop.f32.mrf.mxu0
        %6853 = vdwg.mxu0
        %6854 = vmatpush.bf16.msra.mxu0 %v5216
        %6855 = vmatpush.bf16.msra.mxu0 %v5208
        %6856 = vmatpush.bf16.msra.mxu0 %v5200
        %6857 = vmatpush.bf16.msra.mxu0 %v5192
        %6858 = vmatpush.bf16.msra.mxu0 %v5184
        %6859 = vmatpush.bf16.msra.mxu0 %v5176
        %6860 = vmatpush.bf16.msra.mxu0 %v5168
        %6861 = vmatpush.bf16.msra.mxu0 %v5160
        %6862 = vmatmul.bf16.gmra.mxu0 %v1362
        %v6863 = vpop.f32.mrf.mxu0
        %v6864 = vadd.f32 %v6851, %v6863
        %v6865 = vpop.f32.mrf.mxu0
        %6866 = vdwg.mxu0
        %6867 = vmatpush.bf16.msra.mxu0 %v5280
        %6868 = vmatpush.bf16.msra.mxu0 %v5272
        %6869 = vmatpush.bf16.msra.mxu0 %v5264
        %6870 = vmatpush.bf16.msra.mxu0 %v5256
        %6871 = vmatpush.bf16.msra.mxu0 %v5248
        %6872 = vmatpush.bf16.msra.mxu0 %v5240
        %6873 = vmatpush.bf16.msra.mxu0 %v5232
        %6874 = vmatpush.bf16.msra.mxu0 %v5224
        %6875 = vmatmul.bf16.gmra.mxu0 %v1363
        %v6876 = vpop.f32.mrf.mxu0
        %v6877 = vadd.f32 %v6864, %v6876
        %v6878 = vpop.f32.mrf.mxu0
        %6879 = vdwg.mxu0
        %6880 = vmatpush.bf16.msra.mxu0 %v5344
        %6881 = vmatpush.bf16.msra.mxu0 %v5336
        %6882 = vmatpush.bf16.msra.mxu0 %v5328
        %6883 = vmatpush.bf16.msra.mxu0 %v5320
        %6884 = vmatpush.bf16.msra.mxu0 %v5312
        %6885 = vmatpush.bf16.msra.mxu0 %v5304
        %6886 = vmatpush.bf16.msra.mxu0 %v5296
        %6887 = vmatpush.bf16.msra.mxu0 %v5288
        %6888 = vmatmul.bf16.gmra.mxu0 %v1364
        %v6889 = vpop.f32.mrf.mxu0
        %v6890 = vadd.f32 %v6877, %v6889
        %v6891 = vpop.f32.mrf.mxu0
        %6892 = vdwg.mxu0
        %6893 = vmatpush.bf16.msra.mxu0 %v5408
        %6894 = vmatpush.bf16.msra.mxu0 %v5400
        %6895 = vmatpush.bf16.msra.mxu0 %v5392
        %6896 = vmatpush.bf16.msra.mxu0 %v5384
        %6897 = vmatpush.bf16.msra.mxu0 %v5376
        %6898 = vmatpush.bf16.msra.mxu0 %v5368
        %6899 = vmatpush.bf16.msra.mxu0 %v5360
        %6900 = vmatpush.bf16.msra.mxu0 %v5352
        %6901 = vmatmul.bf16.gmra.mxu0 %v1365
        %v6902 = vpop.f32.mrf.mxu0
        %v6903 = vadd.f32 %v6890, %v6902
        %v6904 = vpop.f32.mrf.mxu0
        %6905 = vdwg.mxu0
        %6906 = vmatpush.bf16.msra.mxu0 %v5472
        %6907 = vmatpush.bf16.msra.mxu0 %v5464
        %6908 = vmatpush.bf16.msra.mxu0 %v5456
        %6909 = vmatpush.bf16.msra.mxu0 %v5448
        %6910 = vmatpush.bf16.msra.mxu0 %v5440
        %6911 = vmatpush.bf16.msra.mxu0 %v5432
        %6912 = vmatpush.bf16.msra.mxu0 %v5424
        %6913 = vmatpush.bf16.msra.mxu0 %v5416
        %6914 = vmatmul.bf16.gmra.mxu0 %v1366
        %v6915 = vpop.f32.mrf.mxu0
        %v6916 = vadd.f32 %v6903, %v6915
        %v6917 = vpop.f32.mrf.mxu0
        %6918 = vdwg.mxu0
        %6919 = vmatpush.bf16.msra.mxu0 %v4513
        %6920 = vmatpush.bf16.msra.mxu0 %v4505
        %6921 = vmatpush.bf16.msra.mxu0 %v4497
        %6922 = vmatpush.bf16.msra.mxu0 %v4489
        %6923 = vmatpush.bf16.msra.mxu0 %v4481
        %6924 = vmatpush.bf16.msra.mxu0 %v4473
        %6925 = vmatpush.bf16.msra.mxu0 %v4465
        %6926 = vmatpush.bf16.msra.mxu0 %v4457
        %6927 = vmatmul.bf16.gmra.mxu0 %v1351
        %v6928 = vpop.f32.mrf.mxu0
        %v6929 = vadd.f32 0.0, %v6928
        %v6930 = vpop.f32.mrf.mxu0
        %6931 = vdwg.mxu0
        %6932 = vmatpush.bf16.msra.mxu0 %v4577
        %6933 = vmatpush.bf16.msra.mxu0 %v4569
        %6934 = vmatpush.bf16.msra.mxu0 %v4561
        %6935 = vmatpush.bf16.msra.mxu0 %v4553
        %6936 = vmatpush.bf16.msra.mxu0 %v4545
        %6937 = vmatpush.bf16.msra.mxu0 %v4537
        %6938 = vmatpush.bf16.msra.mxu0 %v4529
        %6939 = vmatpush.bf16.msra.mxu0 %v4521
        %6940 = vmatmul.bf16.gmra.mxu0 %v1352
        %v6941 = vpop.f32.mrf.mxu0
        %v6942 = vadd.f32 %v6929, %v6941
        %v6943 = vpop.f32.mrf.mxu0
        %6944 = vdwg.mxu0
        %6945 = vmatpush.bf16.msra.mxu0 %v4641
        %6946 = vmatpush.bf16.msra.mxu0 %v4633
        %6947 = vmatpush.bf16.msra.mxu0 %v4625
        %6948 = vmatpush.bf16.msra.mxu0 %v4617
        %6949 = vmatpush.bf16.msra.mxu0 %v4609
        %6950 = vmatpush.bf16.msra.mxu0 %v4601
        %6951 = vmatpush.bf16.msra.mxu0 %v4593
        %6952 = vmatpush.bf16.msra.mxu0 %v4585
        %6953 = vmatmul.bf16.gmra.mxu0 %v1353
        %v6954 = vpop.f32.mrf.mxu0
        %v6955 = vadd.f32 %v6942, %v6954
        %v6956 = vpop.f32.mrf.mxu0
        %6957 = vdwg.mxu0
        %6958 = vmatpush.bf16.msra.mxu0 %v4705
        %6959 = vmatpush.bf16.msra.mxu0 %v4697
        %6960 = vmatpush.bf16.msra.mxu0 %v4689
        %6961 = vmatpush.bf16.msra.mxu0 %v4681
        %6962 = vmatpush.bf16.msra.mxu0 %v4673
        %6963 = vmatpush.bf16.msra.mxu0 %v4665
        %6964 = vmatpush.bf16.msra.mxu0 %v4657
        %6965 = vmatpush.bf16.msra.mxu0 %v4649
        %6966 = vmatmul.bf16.gmra.mxu0 %v1354
        %v6967 = vpop.f32.mrf.mxu0
        %v6968 = vadd.f32 %v6955, %v6967
        %v6969 = vpop.f32.mrf.mxu0
        %6970 = vdwg.mxu0
        %6971 = vmatpush.bf16.msra.mxu0 %v4769
        %6972 = vmatpush.bf16.msra.mxu0 %v4761
        %6973 = vmatpush.bf16.msra.mxu0 %v4753
        %6974 = vmatpush.bf16.msra.mxu0 %v4745
        %6975 = vmatpush.bf16.msra.mxu0 %v4737
        %6976 = vmatpush.bf16.msra.mxu0 %v4729
        %6977 = vmatpush.bf16.msra.mxu0 %v4721
        %6978 = vmatpush.bf16.msra.mxu0 %v4713
        %6979 = vmatmul.bf16.gmra.mxu0 %v1355
        %v6980 = vpop.f32.mrf.mxu0
        %v6981 = vadd.f32 %v6968, %v6980
        %v6982 = vpop.f32.mrf.mxu0
        %6983 = vdwg.mxu0
        %6984 = vmatpush.bf16.msra.mxu0 %v4833
        %6985 = vmatpush.bf16.msra.mxu0 %v4825
        %6986 = vmatpush.bf16.msra.mxu0 %v4817
        %6987 = vmatpush.bf16.msra.mxu0 %v4809
        %6988 = vmatpush.bf16.msra.mxu0 %v4801
        %6989 = vmatpush.bf16.msra.mxu0 %v4793
        %6990 = vmatpush.bf16.msra.mxu0 %v4785
        %6991 = vmatpush.bf16.msra.mxu0 %v4777
        %6992 = vmatmul.bf16.gmra.mxu0 %v1356
        %v6993 = vpop.f32.mrf.mxu0
        %v6994 = vadd.f32 %v6981, %v6993
        %v6995 = vpop.f32.mrf.mxu0
        %6996 = vdwg.mxu0
        %6997 = vmatpush.bf16.msra.mxu0 %v4897
        %6998 = vmatpush.bf16.msra.mxu0 %v4889
        %6999 = vmatpush.bf16.msra.mxu0 %v4881
        %7000 = vmatpush.bf16.msra.mxu0 %v4873
        %7001 = vmatpush.bf16.msra.mxu0 %v4865
        %7002 = vmatpush.bf16.msra.mxu0 %v4857
        %7003 = vmatpush.bf16.msra.mxu0 %v4849
        %7004 = vmatpush.bf16.msra.mxu0 %v4841
        %7005 = vmatmul.bf16.gmra.mxu0 %v1357
        %v7006 = vpop.f32.mrf.mxu0
        %v7007 = vadd.f32 %v6994, %v7006
        %v7008 = vpop.f32.mrf.mxu0
        %7009 = vdwg.mxu0
        %7010 = vmatpush.bf16.msra.mxu0 %v4961
        %7011 = vmatpush.bf16.msra.mxu0 %v4953
        %7012 = vmatpush.bf16.msra.mxu0 %v4945
        %7013 = vmatpush.bf16.msra.mxu0 %v4937
        %7014 = vmatpush.bf16.msra.mxu0 %v4929
        %7015 = vmatpush.bf16.msra.mxu0 %v4921
        %7016 = vmatpush.bf16.msra.mxu0 %v4913
        %7017 = vmatpush.bf16.msra.mxu0 %v4905
        %7018 = vmatmul.bf16.gmra.mxu0 %v1358
        %v7019 = vpop.f32.mrf.mxu0
        %v7020 = vadd.f32 %v7007, %v7019
        %v7021 = vpop.f32.mrf.mxu0
        %7022 = vdwg.mxu0
        %7023 = vmatpush.bf16.msra.mxu0 %v5025
        %7024 = vmatpush.bf16.msra.mxu0 %v5017
        %7025 = vmatpush.bf16.msra.mxu0 %v5009
        %7026 = vmatpush.bf16.msra.mxu0 %v5001
        %7027 = vmatpush.bf16.msra.mxu0 %v4993
        %7028 = vmatpush.bf16.msra.mxu0 %v4985
        %7029 = vmatpush.bf16.msra.mxu0 %v4977
        %7030 = vmatpush.bf16.msra.mxu0 %v4969
        %7031 = vmatmul.bf16.gmra.mxu0 %v1359
        %v7032 = vpop.f32.mrf.mxu0
        %v7033 = vadd.f32 %v7020, %v7032
        %v7034 = vpop.f32.mrf.mxu0
        %7035 = vdwg.mxu0
        %7036 = vmatpush.bf16.msra.mxu0 %v5089
        %7037 = vmatpush.bf16.msra.mxu0 %v5081
        %7038 = vmatpush.bf16.msra.mxu0 %v5073
        %7039 = vmatpush.bf16.msra.mxu0 %v5065
        %7040 = vmatpush.bf16.msra.mxu0 %v5057
        %7041 = vmatpush.bf16.msra.mxu0 %v5049
        %7042 = vmatpush.bf16.msra.mxu0 %v5041
        %7043 = vmatpush.bf16.msra.mxu0 %v5033
        %7044 = vmatmul.bf16.gmra.mxu0 %v1360
        %v7045 = vpop.f32.mrf.mxu0
        %v7046 = vadd.f32 %v7033, %v7045
        %v7047 = vpop.f32.mrf.mxu0
        %7048 = vdwg.mxu0
        %7049 = vmatpush.bf16.msra.mxu0 %v5153
        %7050 = vmatpush.bf16.msra.mxu0 %v5145
        %7051 = vmatpush.bf16.msra.mxu0 %v5137
        %7052 = vmatpush.bf16.msra.mxu0 %v5129
        %7053 = vmatpush.bf16.msra.mxu0 %v5121
        %7054 = vmatpush.bf16.msra.mxu0 %v5113
        %7055 = vmatpush.bf16.msra.mxu0 %v5105
        %7056 = vmatpush.bf16.msra.mxu0 %v5097
        %7057 = vmatmul.bf16.gmra.mxu0 %v1361
        %v7058 = vpop.f32.mrf.mxu0
        %v7059 = vadd.f32 %v7046, %v7058
        %v7060 = vpop.f32.mrf.mxu0
        %7061 = vdwg.mxu0
        %7062 = vmatpush.bf16.msra.mxu0 %v5217
        %7063 = vmatpush.bf16.msra.mxu0 %v5209
        %7064 = vmatpush.bf16.msra.mxu0 %v5201
        %7065 = vmatpush.bf16.msra.mxu0 %v5193
        %7066 = vmatpush.bf16.msra.mxu0 %v5185
        %7067 = vmatpush.bf16.msra.mxu0 %v5177
        %7068 = vmatpush.bf16.msra.mxu0 %v5169
        %7069 = vmatpush.bf16.msra.mxu0 %v5161
        %7070 = vmatmul.bf16.gmra.mxu0 %v1362
        %v7071 = vpop.f32.mrf.mxu0
        %v7072 = vadd.f32 %v7059, %v7071
        %v7073 = vpop.f32.mrf.mxu0
        %7074 = vdwg.mxu0
        %7075 = vmatpush.bf16.msra.mxu0 %v5281
        %7076 = vmatpush.bf16.msra.mxu0 %v5273
        %7077 = vmatpush.bf16.msra.mxu0 %v5265
        %7078 = vmatpush.bf16.msra.mxu0 %v5257
        %7079 = vmatpush.bf16.msra.mxu0 %v5249
        %7080 = vmatpush.bf16.msra.mxu0 %v5241
        %7081 = vmatpush.bf16.msra.mxu0 %v5233
        %7082 = vmatpush.bf16.msra.mxu0 %v5225
        %7083 = vmatmul.bf16.gmra.mxu0 %v1363
        %v7084 = vpop.f32.mrf.mxu0
        %v7085 = vadd.f32 %v7072, %v7084
        %v7086 = vpop.f32.mrf.mxu0
        %7087 = vdwg.mxu0
        %7088 = vmatpush.bf16.msra.mxu0 %v5345
        %7089 = vmatpush.bf16.msra.mxu0 %v5337
        %7090 = vmatpush.bf16.msra.mxu0 %v5329
        %7091 = vmatpush.bf16.msra.mxu0 %v5321
        %7092 = vmatpush.bf16.msra.mxu0 %v5313
        %7093 = vmatpush.bf16.msra.mxu0 %v5305
        %7094 = vmatpush.bf16.msra.mxu0 %v5297
        %7095 = vmatpush.bf16.msra.mxu0 %v5289
        %7096 = vmatmul.bf16.gmra.mxu0 %v1364
        %v7097 = vpop.f32.mrf.mxu0
        %v7098 = vadd.f32 %v7085, %v7097
        %v7099 = vpop.f32.mrf.mxu0
        %7100 = vdwg.mxu0
        %7101 = vmatpush.bf16.msra.mxu0 %v5409
        %7102 = vmatpush.bf16.msra.mxu0 %v5401
        %7103 = vmatpush.bf16.msra.mxu0 %v5393
        %7104 = vmatpush.bf16.msra.mxu0 %v5385
        %7105 = vmatpush.bf16.msra.mxu0 %v5377
        %7106 = vmatpush.bf16.msra.mxu0 %v5369
        %7107 = vmatpush.bf16.msra.mxu0 %v5361
        %7108 = vmatpush.bf16.msra.mxu0 %v5353
        %7109 = vmatmul.bf16.gmra.mxu0 %v1365
        %v7110 = vpop.f32.mrf.mxu0
        %v7111 = vadd.f32 %v7098, %v7110
        %v7112 = vpop.f32.mrf.mxu0
        %7113 = vdwg.mxu0
        %7114 = vmatpush.bf16.msra.mxu0 %v5473
        %7115 = vmatpush.bf16.msra.mxu0 %v5465
        %7116 = vmatpush.bf16.msra.mxu0 %v5457
        %7117 = vmatpush.bf16.msra.mxu0 %v5449
        %7118 = vmatpush.bf16.msra.mxu0 %v5441
        %7119 = vmatpush.bf16.msra.mxu0 %v5433
        %7120 = vmatpush.bf16.msra.mxu0 %v5425
        %7121 = vmatpush.bf16.msra.mxu0 %v5417
        %7122 = vmatmul.bf16.gmra.mxu0 %v1366
        %v7123 = vpop.f32.mrf.mxu0
        %v7124 = vadd.f32 %v7111, %v7123
        %v7125 = vpop.f32.mrf.mxu0
        %7126 = vdwg.mxu0
        %7127 = vmatpush.bf16.msra.mxu0 %v4514
        %7128 = vmatpush.bf16.msra.mxu0 %v4506
        %7129 = vmatpush.bf16.msra.mxu0 %v4498
        %7130 = vmatpush.bf16.msra.mxu0 %v4490
        %7131 = vmatpush.bf16.msra.mxu0 %v4482
        %7132 = vmatpush.bf16.msra.mxu0 %v4474
        %7133 = vmatpush.bf16.msra.mxu0 %v4466
        %7134 = vmatpush.bf16.msra.mxu0 %v4458
        %7135 = vmatmul.bf16.gmra.mxu0 %v1351
        %v7136 = vpop.f32.mrf.mxu0
        %v7137 = vadd.f32 0.0, %v7136
        %v7138 = vpop.f32.mrf.mxu0
        %7139 = vdwg.mxu0
        %7140 = vmatpush.bf16.msra.mxu0 %v4578
        %7141 = vmatpush.bf16.msra.mxu0 %v4570
        %7142 = vmatpush.bf16.msra.mxu0 %v4562
        %7143 = vmatpush.bf16.msra.mxu0 %v4554
        %7144 = vmatpush.bf16.msra.mxu0 %v4546
        %7145 = vmatpush.bf16.msra.mxu0 %v4538
        %7146 = vmatpush.bf16.msra.mxu0 %v4530
        %7147 = vmatpush.bf16.msra.mxu0 %v4522
        %7148 = vmatmul.bf16.gmra.mxu0 %v1352
        %v7149 = vpop.f32.mrf.mxu0
        %v7150 = vadd.f32 %v7137, %v7149
        %v7151 = vpop.f32.mrf.mxu0
        %7152 = vdwg.mxu0
        %7153 = vmatpush.bf16.msra.mxu0 %v4642
        %7154 = vmatpush.bf16.msra.mxu0 %v4634
        %7155 = vmatpush.bf16.msra.mxu0 %v4626
        %7156 = vmatpush.bf16.msra.mxu0 %v4618
        %7157 = vmatpush.bf16.msra.mxu0 %v4610
        %7158 = vmatpush.bf16.msra.mxu0 %v4602
        %7159 = vmatpush.bf16.msra.mxu0 %v4594
        %7160 = vmatpush.bf16.msra.mxu0 %v4586
        %7161 = vmatmul.bf16.gmra.mxu0 %v1353
        %v7162 = vpop.f32.mrf.mxu0
        %v7163 = vadd.f32 %v7150, %v7162
        %v7164 = vpop.f32.mrf.mxu0
        %7165 = vdwg.mxu0
        %7166 = vmatpush.bf16.msra.mxu0 %v4706
        %7167 = vmatpush.bf16.msra.mxu0 %v4698
        %7168 = vmatpush.bf16.msra.mxu0 %v4690
        %7169 = vmatpush.bf16.msra.mxu0 %v4682
        %7170 = vmatpush.bf16.msra.mxu0 %v4674
        %7171 = vmatpush.bf16.msra.mxu0 %v4666
        %7172 = vmatpush.bf16.msra.mxu0 %v4658
        %7173 = vmatpush.bf16.msra.mxu0 %v4650
        %7174 = vmatmul.bf16.gmra.mxu0 %v1354
        %v7175 = vpop.f32.mrf.mxu0
        %v7176 = vadd.f32 %v7163, %v7175
        %v7177 = vpop.f32.mrf.mxu0
        %7178 = vdwg.mxu0
        %7179 = vmatpush.bf16.msra.mxu0 %v4770
        %7180 = vmatpush.bf16.msra.mxu0 %v4762
        %7181 = vmatpush.bf16.msra.mxu0 %v4754
        %7182 = vmatpush.bf16.msra.mxu0 %v4746
        %7183 = vmatpush.bf16.msra.mxu0 %v4738
        %7184 = vmatpush.bf16.msra.mxu0 %v4730
        %7185 = vmatpush.bf16.msra.mxu0 %v4722
        %7186 = vmatpush.bf16.msra.mxu0 %v4714
        %7187 = vmatmul.bf16.gmra.mxu0 %v1355
        %v7188 = vpop.f32.mrf.mxu0
        %v7189 = vadd.f32 %v7176, %v7188
        %v7190 = vpop.f32.mrf.mxu0
        %7191 = vdwg.mxu0
        %7192 = vmatpush.bf16.msra.mxu0 %v4834
        %7193 = vmatpush.bf16.msra.mxu0 %v4826
        %7194 = vmatpush.bf16.msra.mxu0 %v4818
        %7195 = vmatpush.bf16.msra.mxu0 %v4810
        %7196 = vmatpush.bf16.msra.mxu0 %v4802
        %7197 = vmatpush.bf16.msra.mxu0 %v4794
        %7198 = vmatpush.bf16.msra.mxu0 %v4786
        %7199 = vmatpush.bf16.msra.mxu0 %v4778
        %7200 = vmatmul.bf16.gmra.mxu0 %v1356
        %v7201 = vpop.f32.mrf.mxu0
        %v7202 = vadd.f32 %v7189, %v7201
        %v7203 = vpop.f32.mrf.mxu0
        %7204 = vdwg.mxu0
        %7205 = vmatpush.bf16.msra.mxu0 %v4898
        %7206 = vmatpush.bf16.msra.mxu0 %v4890
        %7207 = vmatpush.bf16.msra.mxu0 %v4882
        %7208 = vmatpush.bf16.msra.mxu0 %v4874
        %7209 = vmatpush.bf16.msra.mxu0 %v4866
        %7210 = vmatpush.bf16.msra.mxu0 %v4858
        %7211 = vmatpush.bf16.msra.mxu0 %v4850
        %7212 = vmatpush.bf16.msra.mxu0 %v4842
        %7213 = vmatmul.bf16.gmra.mxu0 %v1357
        %v7214 = vpop.f32.mrf.mxu0
        %v7215 = vadd.f32 %v7202, %v7214
        %v7216 = vpop.f32.mrf.mxu0
        %7217 = vdwg.mxu0
        %7218 = vmatpush.bf16.msra.mxu0 %v4962
        %7219 = vmatpush.bf16.msra.mxu0 %v4954
        %7220 = vmatpush.bf16.msra.mxu0 %v4946
        %7221 = vmatpush.bf16.msra.mxu0 %v4938
        %7222 = vmatpush.bf16.msra.mxu0 %v4930
        %7223 = vmatpush.bf16.msra.mxu0 %v4922
        %7224 = vmatpush.bf16.msra.mxu0 %v4914
        %7225 = vmatpush.bf16.msra.mxu0 %v4906
        %7226 = vmatmul.bf16.gmra.mxu0 %v1358
        %v7227 = vpop.f32.mrf.mxu0
        %v7228 = vadd.f32 %v7215, %v7227
        %v7229 = vpop.f32.mrf.mxu0
        %7230 = vdwg.mxu0
        %7231 = vmatpush.bf16.msra.mxu0 %v5026
        %7232 = vmatpush.bf16.msra.mxu0 %v5018
        %7233 = vmatpush.bf16.msra.mxu0 %v5010
        %7234 = vmatpush.bf16.msra.mxu0 %v5002
        %7235 = vmatpush.bf16.msra.mxu0 %v4994
        %7236 = vmatpush.bf16.msra.mxu0 %v4986
        %7237 = vmatpush.bf16.msra.mxu0 %v4978
        %7238 = vmatpush.bf16.msra.mxu0 %v4970
        %7239 = vmatmul.bf16.gmra.mxu0 %v1359
        %v7240 = vpop.f32.mrf.mxu0
        %v7241 = vadd.f32 %v7228, %v7240
        %v7242 = vpop.f32.mrf.mxu0
        %7243 = vdwg.mxu0
        %7244 = vmatpush.bf16.msra.mxu0 %v5090
        %7245 = vmatpush.bf16.msra.mxu0 %v5082
        %7246 = vmatpush.bf16.msra.mxu0 %v5074
        %7247 = vmatpush.bf16.msra.mxu0 %v5066
        %7248 = vmatpush.bf16.msra.mxu0 %v5058
        %7249 = vmatpush.bf16.msra.mxu0 %v5050
        %7250 = vmatpush.bf16.msra.mxu0 %v5042
        %7251 = vmatpush.bf16.msra.mxu0 %v5034
        %7252 = vmatmul.bf16.gmra.mxu0 %v1360
        %v7253 = vpop.f32.mrf.mxu0
        %v7254 = vadd.f32 %v7241, %v7253
        %v7255 = vpop.f32.mrf.mxu0
        %7256 = vdwg.mxu0
        %7257 = vmatpush.bf16.msra.mxu0 %v5154
        %7258 = vmatpush.bf16.msra.mxu0 %v5146
        %7259 = vmatpush.bf16.msra.mxu0 %v5138
        %7260 = vmatpush.bf16.msra.mxu0 %v5130
        %7261 = vmatpush.bf16.msra.mxu0 %v5122
        %7262 = vmatpush.bf16.msra.mxu0 %v5114
        %7263 = vmatpush.bf16.msra.mxu0 %v5106
        %7264 = vmatpush.bf16.msra.mxu0 %v5098
        %7265 = vmatmul.bf16.gmra.mxu0 %v1361
        %v7266 = vpop.f32.mrf.mxu0
        %v7267 = vadd.f32 %v7254, %v7266
        %v7268 = vpop.f32.mrf.mxu0
        %7269 = vdwg.mxu0
        %7270 = vmatpush.bf16.msra.mxu0 %v5218
        %7271 = vmatpush.bf16.msra.mxu0 %v5210
        %7272 = vmatpush.bf16.msra.mxu0 %v5202
        %7273 = vmatpush.bf16.msra.mxu0 %v5194
        %7274 = vmatpush.bf16.msra.mxu0 %v5186
        %7275 = vmatpush.bf16.msra.mxu0 %v5178
        %7276 = vmatpush.bf16.msra.mxu0 %v5170
        %7277 = vmatpush.bf16.msra.mxu0 %v5162
        %7278 = vmatmul.bf16.gmra.mxu0 %v1362
        %v7279 = vpop.f32.mrf.mxu0
        %v7280 = vadd.f32 %v7267, %v7279
        %v7281 = vpop.f32.mrf.mxu0
        %7282 = vdwg.mxu0
        %7283 = vmatpush.bf16.msra.mxu0 %v5282
        %7284 = vmatpush.bf16.msra.mxu0 %v5274
        %7285 = vmatpush.bf16.msra.mxu0 %v5266
        %7286 = vmatpush.bf16.msra.mxu0 %v5258
        %7287 = vmatpush.bf16.msra.mxu0 %v5250
        %7288 = vmatpush.bf16.msra.mxu0 %v5242
        %7289 = vmatpush.bf16.msra.mxu0 %v5234
        %7290 = vmatpush.bf16.msra.mxu0 %v5226
        %7291 = vmatmul.bf16.gmra.mxu0 %v1363
        %v7292 = vpop.f32.mrf.mxu0
        %v7293 = vadd.f32 %v7280, %v7292
        %v7294 = vpop.f32.mrf.mxu0
        %7295 = vdwg.mxu0
        %7296 = vmatpush.bf16.msra.mxu0 %v5346
        %7297 = vmatpush.bf16.msra.mxu0 %v5338
        %7298 = vmatpush.bf16.msra.mxu0 %v5330
        %7299 = vmatpush.bf16.msra.mxu0 %v5322
        %7300 = vmatpush.bf16.msra.mxu0 %v5314
        %7301 = vmatpush.bf16.msra.mxu0 %v5306
        %7302 = vmatpush.bf16.msra.mxu0 %v5298
        %7303 = vmatpush.bf16.msra.mxu0 %v5290
        %7304 = vmatmul.bf16.gmra.mxu0 %v1364
        %v7305 = vpop.f32.mrf.mxu0
        %v7306 = vadd.f32 %v7293, %v7305
        %v7307 = vpop.f32.mrf.mxu0
        %7308 = vdwg.mxu0
        %7309 = vmatpush.bf16.msra.mxu0 %v5410
        %7310 = vmatpush.bf16.msra.mxu0 %v5402
        %7311 = vmatpush.bf16.msra.mxu0 %v5394
        %7312 = vmatpush.bf16.msra.mxu0 %v5386
        %7313 = vmatpush.bf16.msra.mxu0 %v5378
        %7314 = vmatpush.bf16.msra.mxu0 %v5370
        %7315 = vmatpush.bf16.msra.mxu0 %v5362
        %7316 = vmatpush.bf16.msra.mxu0 %v5354
        %7317 = vmatmul.bf16.gmra.mxu0 %v1365
        %v7318 = vpop.f32.mrf.mxu0
        %v7319 = vadd.f32 %v7306, %v7318
        %v7320 = vpop.f32.mrf.mxu0
        %7321 = vdwg.mxu0
        %7322 = vmatpush.bf16.msra.mxu0 %v5474
        %7323 = vmatpush.bf16.msra.mxu0 %v5466
        %7324 = vmatpush.bf16.msra.mxu0 %v5458
        %7325 = vmatpush.bf16.msra.mxu0 %v5450
        %7326 = vmatpush.bf16.msra.mxu0 %v5442
        %7327 = vmatpush.bf16.msra.mxu0 %v5434
        %7328 = vmatpush.bf16.msra.mxu0 %v5426
        %7329 = vmatpush.bf16.msra.mxu0 %v5418
        %7330 = vmatmul.bf16.gmra.mxu0 %v1366
        %v7331 = vpop.f32.mrf.mxu0
        %v7332 = vadd.f32 %v7319, %v7331
        %v7333 = vpop.f32.mrf.mxu0
        %7334 = vdwg.mxu0
        %7335 = vmatpush.bf16.msra.mxu0 %v4515
        %7336 = vmatpush.bf16.msra.mxu0 %v4507
        %7337 = vmatpush.bf16.msra.mxu0 %v4499
        %7338 = vmatpush.bf16.msra.mxu0 %v4491
        %7339 = vmatpush.bf16.msra.mxu0 %v4483
        %7340 = vmatpush.bf16.msra.mxu0 %v4475
        %7341 = vmatpush.bf16.msra.mxu0 %v4467
        %7342 = vmatpush.bf16.msra.mxu0 %v4459
        %7343 = vmatmul.bf16.gmra.mxu0 %v1351
        %v7344 = vpop.f32.mrf.mxu0
        %v7345 = vadd.f32 0.0, %v7344
        %v7346 = vpop.f32.mrf.mxu0
        %7347 = vdwg.mxu0
        %7348 = vmatpush.bf16.msra.mxu0 %v4579
        %7349 = vmatpush.bf16.msra.mxu0 %v4571
        %7350 = vmatpush.bf16.msra.mxu0 %v4563
        %7351 = vmatpush.bf16.msra.mxu0 %v4555
        %7352 = vmatpush.bf16.msra.mxu0 %v4547
        %7353 = vmatpush.bf16.msra.mxu0 %v4539
        %7354 = vmatpush.bf16.msra.mxu0 %v4531
        %7355 = vmatpush.bf16.msra.mxu0 %v4523
        %7356 = vmatmul.bf16.gmra.mxu0 %v1352
        %v7357 = vpop.f32.mrf.mxu0
        %v7358 = vadd.f32 %v7345, %v7357
        %v7359 = vpop.f32.mrf.mxu0
        %7360 = vdwg.mxu0
        %7361 = vmatpush.bf16.msra.mxu0 %v4643
        %7362 = vmatpush.bf16.msra.mxu0 %v4635
        %7363 = vmatpush.bf16.msra.mxu0 %v4627
        %7364 = vmatpush.bf16.msra.mxu0 %v4619
        %7365 = vmatpush.bf16.msra.mxu0 %v4611
        %7366 = vmatpush.bf16.msra.mxu0 %v4603
        %7367 = vmatpush.bf16.msra.mxu0 %v4595
        %7368 = vmatpush.bf16.msra.mxu0 %v4587
        %7369 = vmatmul.bf16.gmra.mxu0 %v1353
        %v7370 = vpop.f32.mrf.mxu0
        %v7371 = vadd.f32 %v7358, %v7370
        %v7372 = vpop.f32.mrf.mxu0
        %7373 = vdwg.mxu0
        %7374 = vmatpush.bf16.msra.mxu0 %v4707
        %7375 = vmatpush.bf16.msra.mxu0 %v4699
        %7376 = vmatpush.bf16.msra.mxu0 %v4691
        %7377 = vmatpush.bf16.msra.mxu0 %v4683
        %7378 = vmatpush.bf16.msra.mxu0 %v4675
        %7379 = vmatpush.bf16.msra.mxu0 %v4667
        %7380 = vmatpush.bf16.msra.mxu0 %v4659
        %7381 = vmatpush.bf16.msra.mxu0 %v4651
        %7382 = vmatmul.bf16.gmra.mxu0 %v1354
        %v7383 = vpop.f32.mrf.mxu0
        %v7384 = vadd.f32 %v7371, %v7383
        %v7385 = vpop.f32.mrf.mxu0
        %7386 = vdwg.mxu0
        %7387 = vmatpush.bf16.msra.mxu0 %v4771
        %7388 = vmatpush.bf16.msra.mxu0 %v4763
        %7389 = vmatpush.bf16.msra.mxu0 %v4755
        %7390 = vmatpush.bf16.msra.mxu0 %v4747
        %7391 = vmatpush.bf16.msra.mxu0 %v4739
        %7392 = vmatpush.bf16.msra.mxu0 %v4731
        %7393 = vmatpush.bf16.msra.mxu0 %v4723
        %7394 = vmatpush.bf16.msra.mxu0 %v4715
        %7395 = vmatmul.bf16.gmra.mxu0 %v1355
        %v7396 = vpop.f32.mrf.mxu0
        %v7397 = vadd.f32 %v7384, %v7396
        %v7398 = vpop.f32.mrf.mxu0
        %7399 = vdwg.mxu0
        %7400 = vmatpush.bf16.msra.mxu0 %v4835
        %7401 = vmatpush.bf16.msra.mxu0 %v4827
        %7402 = vmatpush.bf16.msra.mxu0 %v4819
        %7403 = vmatpush.bf16.msra.mxu0 %v4811
        %7404 = vmatpush.bf16.msra.mxu0 %v4803
        %7405 = vmatpush.bf16.msra.mxu0 %v4795
        %7406 = vmatpush.bf16.msra.mxu0 %v4787
        %7407 = vmatpush.bf16.msra.mxu0 %v4779
        %7408 = vmatmul.bf16.gmra.mxu0 %v1356
        %v7409 = vpop.f32.mrf.mxu0
        %v7410 = vadd.f32 %v7397, %v7409
        %v7411 = vpop.f32.mrf.mxu0
        %7412 = vdwg.mxu0
        %7413 = vmatpush.bf16.msra.mxu0 %v4899
        %7414 = vmatpush.bf16.msra.mxu0 %v4891
        %7415 = vmatpush.bf16.msra.mxu0 %v4883
        %7416 = vmatpush.bf16.msra.mxu0 %v4875
        %7417 = vmatpush.bf16.msra.mxu0 %v4867
        %7418 = vmatpush.bf16.msra.mxu0 %v4859
        %7419 = vmatpush.bf16.msra.mxu0 %v4851
        %7420 = vmatpush.bf16.msra.mxu0 %v4843
        %7421 = vmatmul.bf16.gmra.mxu0 %v1357
        %v7422 = vpop.f32.mrf.mxu0
        %v7423 = vadd.f32 %v7410, %v7422
        %v7424 = vpop.f32.mrf.mxu0
        %7425 = vdwg.mxu0
        %7426 = vmatpush.bf16.msra.mxu0 %v4963
        %7427 = vmatpush.bf16.msra.mxu0 %v4955
        %7428 = vmatpush.bf16.msra.mxu0 %v4947
        %7429 = vmatpush.bf16.msra.mxu0 %v4939
        %7430 = vmatpush.bf16.msra.mxu0 %v4931
        %7431 = vmatpush.bf16.msra.mxu0 %v4923
        %7432 = vmatpush.bf16.msra.mxu0 %v4915
        %7433 = vmatpush.bf16.msra.mxu0 %v4907
        %7434 = vmatmul.bf16.gmra.mxu0 %v1358
        %v7435 = vpop.f32.mrf.mxu0
        %v7436 = vadd.f32 %v7423, %v7435
        %v7437 = vpop.f32.mrf.mxu0
        %7438 = vdwg.mxu0
        %7439 = vmatpush.bf16.msra.mxu0 %v5027
        %7440 = vmatpush.bf16.msra.mxu0 %v5019
        %7441 = vmatpush.bf16.msra.mxu0 %v5011
        %7442 = vmatpush.bf16.msra.mxu0 %v5003
        %7443 = vmatpush.bf16.msra.mxu0 %v4995
        %7444 = vmatpush.bf16.msra.mxu0 %v4987
        %7445 = vmatpush.bf16.msra.mxu0 %v4979
        %7446 = vmatpush.bf16.msra.mxu0 %v4971
        %7447 = vmatmul.bf16.gmra.mxu0 %v1359
        %v7448 = vpop.f32.mrf.mxu0
        %v7449 = vadd.f32 %v7436, %v7448
        %v7450 = vpop.f32.mrf.mxu0
        %7451 = vdwg.mxu0
        %7452 = vmatpush.bf16.msra.mxu0 %v5091
        %7453 = vmatpush.bf16.msra.mxu0 %v5083
        %7454 = vmatpush.bf16.msra.mxu0 %v5075
        %7455 = vmatpush.bf16.msra.mxu0 %v5067
        %7456 = vmatpush.bf16.msra.mxu0 %v5059
        %7457 = vmatpush.bf16.msra.mxu0 %v5051
        %7458 = vmatpush.bf16.msra.mxu0 %v5043
        %7459 = vmatpush.bf16.msra.mxu0 %v5035
        %7460 = vmatmul.bf16.gmra.mxu0 %v1360
        %v7461 = vpop.f32.mrf.mxu0
        %v7462 = vadd.f32 %v7449, %v7461
        %v7463 = vpop.f32.mrf.mxu0
        %7464 = vdwg.mxu0
        %7465 = vmatpush.bf16.msra.mxu0 %v5155
        %7466 = vmatpush.bf16.msra.mxu0 %v5147
        %7467 = vmatpush.bf16.msra.mxu0 %v5139
        %7468 = vmatpush.bf16.msra.mxu0 %v5131
        %7469 = vmatpush.bf16.msra.mxu0 %v5123
        %7470 = vmatpush.bf16.msra.mxu0 %v5115
        %7471 = vmatpush.bf16.msra.mxu0 %v5107
        %7472 = vmatpush.bf16.msra.mxu0 %v5099
        %7473 = vmatmul.bf16.gmra.mxu0 %v1361
        %v7474 = vpop.f32.mrf.mxu0
        %v7475 = vadd.f32 %v7462, %v7474
        %v7476 = vpop.f32.mrf.mxu0
        %7477 = vdwg.mxu0
        %7478 = vmatpush.bf16.msra.mxu0 %v5219
        %7479 = vmatpush.bf16.msra.mxu0 %v5211
        %7480 = vmatpush.bf16.msra.mxu0 %v5203
        %7481 = vmatpush.bf16.msra.mxu0 %v5195
        %7482 = vmatpush.bf16.msra.mxu0 %v5187
        %7483 = vmatpush.bf16.msra.mxu0 %v5179
        %7484 = vmatpush.bf16.msra.mxu0 %v5171
        %7485 = vmatpush.bf16.msra.mxu0 %v5163
        %7486 = vmatmul.bf16.gmra.mxu0 %v1362
        %v7487 = vpop.f32.mrf.mxu0
        %v7488 = vadd.f32 %v7475, %v7487
        %v7489 = vpop.f32.mrf.mxu0
        %7490 = vdwg.mxu0
        %7491 = vmatpush.bf16.msra.mxu0 %v5283
        %7492 = vmatpush.bf16.msra.mxu0 %v5275
        %7493 = vmatpush.bf16.msra.mxu0 %v5267
        %7494 = vmatpush.bf16.msra.mxu0 %v5259
        %7495 = vmatpush.bf16.msra.mxu0 %v5251
        %7496 = vmatpush.bf16.msra.mxu0 %v5243
        %7497 = vmatpush.bf16.msra.mxu0 %v5235
        %7498 = vmatpush.bf16.msra.mxu0 %v5227
        %7499 = vmatmul.bf16.gmra.mxu0 %v1363
        %v7500 = vpop.f32.mrf.mxu0
        %v7501 = vadd.f32 %v7488, %v7500
        %v7502 = vpop.f32.mrf.mxu0
        %7503 = vdwg.mxu0
        %7504 = vmatpush.bf16.msra.mxu0 %v5347
        %7505 = vmatpush.bf16.msra.mxu0 %v5339
        %7506 = vmatpush.bf16.msra.mxu0 %v5331
        %7507 = vmatpush.bf16.msra.mxu0 %v5323
        %7508 = vmatpush.bf16.msra.mxu0 %v5315
        %7509 = vmatpush.bf16.msra.mxu0 %v5307
        %7510 = vmatpush.bf16.msra.mxu0 %v5299
        %7511 = vmatpush.bf16.msra.mxu0 %v5291
        %7512 = vmatmul.bf16.gmra.mxu0 %v1364
        %v7513 = vpop.f32.mrf.mxu0
        %v7514 = vadd.f32 %v7501, %v7513
        %v7515 = vpop.f32.mrf.mxu0
        %7516 = vdwg.mxu0
        %7517 = vmatpush.bf16.msra.mxu0 %v5411
        %7518 = vmatpush.bf16.msra.mxu0 %v5403
        %7519 = vmatpush.bf16.msra.mxu0 %v5395
        %7520 = vmatpush.bf16.msra.mxu0 %v5387
        %7521 = vmatpush.bf16.msra.mxu0 %v5379
        %7522 = vmatpush.bf16.msra.mxu0 %v5371
        %7523 = vmatpush.bf16.msra.mxu0 %v5363
        %7524 = vmatpush.bf16.msra.mxu0 %v5355
        %7525 = vmatmul.bf16.gmra.mxu0 %v1365
        %v7526 = vpop.f32.mrf.mxu0
        %v7527 = vadd.f32 %v7514, %v7526
        %v7528 = vpop.f32.mrf.mxu0
        %7529 = vdwg.mxu0
        %7530 = vmatpush.bf16.msra.mxu0 %v5475
        %7531 = vmatpush.bf16.msra.mxu0 %v5467
        %7532 = vmatpush.bf16.msra.mxu0 %v5459
        %7533 = vmatpush.bf16.msra.mxu0 %v5451
        %7534 = vmatpush.bf16.msra.mxu0 %v5443
        %7535 = vmatpush.bf16.msra.mxu0 %v5435
        %7536 = vmatpush.bf16.msra.mxu0 %v5427
        %7537 = vmatpush.bf16.msra.mxu0 %v5419
        %7538 = vmatmul.bf16.gmra.mxu0 %v1366
        %v7539 = vpop.f32.mrf.mxu0
        %v7540 = vadd.f32 %v7527, %v7539
        %v7541 = vpop.f32.mrf.mxu0
        %7542 = vdwg.mxu0
        %7543 = vmatpush.bf16.msra.mxu0 %v4516
        %7544 = vmatpush.bf16.msra.mxu0 %v4508
        %7545 = vmatpush.bf16.msra.mxu0 %v4500
        %7546 = vmatpush.bf16.msra.mxu0 %v4492
        %7547 = vmatpush.bf16.msra.mxu0 %v4484
        %7548 = vmatpush.bf16.msra.mxu0 %v4476
        %7549 = vmatpush.bf16.msra.mxu0 %v4468
        %7550 = vmatpush.bf16.msra.mxu0 %v4460
        %7551 = vmatmul.bf16.gmra.mxu0 %v1351
        %v7552 = vpop.f32.mrf.mxu0
        %v7553 = vadd.f32 0.0, %v7552
        %v7554 = vpop.f32.mrf.mxu0
        %7555 = vdwg.mxu0
        %7556 = vmatpush.bf16.msra.mxu0 %v4580
        %7557 = vmatpush.bf16.msra.mxu0 %v4572
        %7558 = vmatpush.bf16.msra.mxu0 %v4564
        %7559 = vmatpush.bf16.msra.mxu0 %v4556
        %7560 = vmatpush.bf16.msra.mxu0 %v4548
        %7561 = vmatpush.bf16.msra.mxu0 %v4540
        %7562 = vmatpush.bf16.msra.mxu0 %v4532
        %7563 = vmatpush.bf16.msra.mxu0 %v4524
        %7564 = vmatmul.bf16.gmra.mxu0 %v1352
        %v7565 = vpop.f32.mrf.mxu0
        %v7566 = vadd.f32 %v7553, %v7565
        %v7567 = vpop.f32.mrf.mxu0
        %7568 = vdwg.mxu0
        %7569 = vmatpush.bf16.msra.mxu0 %v4644
        %7570 = vmatpush.bf16.msra.mxu0 %v4636
        %7571 = vmatpush.bf16.msra.mxu0 %v4628
        %7572 = vmatpush.bf16.msra.mxu0 %v4620
        %7573 = vmatpush.bf16.msra.mxu0 %v4612
        %7574 = vmatpush.bf16.msra.mxu0 %v4604
        %7575 = vmatpush.bf16.msra.mxu0 %v4596
        %7576 = vmatpush.bf16.msra.mxu0 %v4588
        %7577 = vmatmul.bf16.gmra.mxu0 %v1353
        %v7578 = vpop.f32.mrf.mxu0
        %v7579 = vadd.f32 %v7566, %v7578
        %v7580 = vpop.f32.mrf.mxu0
        %7581 = vdwg.mxu0
        %7582 = vmatpush.bf16.msra.mxu0 %v4708
        %7583 = vmatpush.bf16.msra.mxu0 %v4700
        %7584 = vmatpush.bf16.msra.mxu0 %v4692
        %7585 = vmatpush.bf16.msra.mxu0 %v4684
        %7586 = vmatpush.bf16.msra.mxu0 %v4676
        %7587 = vmatpush.bf16.msra.mxu0 %v4668
        %7588 = vmatpush.bf16.msra.mxu0 %v4660
        %7589 = vmatpush.bf16.msra.mxu0 %v4652
        %7590 = vmatmul.bf16.gmra.mxu0 %v1354
        %v7591 = vpop.f32.mrf.mxu0
        %v7592 = vadd.f32 %v7579, %v7591
        %v7593 = vpop.f32.mrf.mxu0
        %7594 = vdwg.mxu0
        %7595 = vmatpush.bf16.msra.mxu0 %v4772
        %7596 = vmatpush.bf16.msra.mxu0 %v4764
        %7597 = vmatpush.bf16.msra.mxu0 %v4756
        %7598 = vmatpush.bf16.msra.mxu0 %v4748
        %7599 = vmatpush.bf16.msra.mxu0 %v4740
        %7600 = vmatpush.bf16.msra.mxu0 %v4732
        %7601 = vmatpush.bf16.msra.mxu0 %v4724
        %7602 = vmatpush.bf16.msra.mxu0 %v4716
        %7603 = vmatmul.bf16.gmra.mxu0 %v1355
        %v7604 = vpop.f32.mrf.mxu0
        %v7605 = vadd.f32 %v7592, %v7604
        %v7606 = vpop.f32.mrf.mxu0
        %7607 = vdwg.mxu0
        %7608 = vmatpush.bf16.msra.mxu0 %v4836
        %7609 = vmatpush.bf16.msra.mxu0 %v4828
        %7610 = vmatpush.bf16.msra.mxu0 %v4820
        %7611 = vmatpush.bf16.msra.mxu0 %v4812
        %7612 = vmatpush.bf16.msra.mxu0 %v4804
        %7613 = vmatpush.bf16.msra.mxu0 %v4796
        %7614 = vmatpush.bf16.msra.mxu0 %v4788
        %7615 = vmatpush.bf16.msra.mxu0 %v4780
        %7616 = vmatmul.bf16.gmra.mxu0 %v1356
        %v7617 = vpop.f32.mrf.mxu0
        %v7618 = vadd.f32 %v7605, %v7617
        %v7619 = vpop.f32.mrf.mxu0
        %7620 = vdwg.mxu0
        %7621 = vmatpush.bf16.msra.mxu0 %v4900
        %7622 = vmatpush.bf16.msra.mxu0 %v4892
        %7623 = vmatpush.bf16.msra.mxu0 %v4884
        %7624 = vmatpush.bf16.msra.mxu0 %v4876
        %7625 = vmatpush.bf16.msra.mxu0 %v4868
        %7626 = vmatpush.bf16.msra.mxu0 %v4860
        %7627 = vmatpush.bf16.msra.mxu0 %v4852
        %7628 = vmatpush.bf16.msra.mxu0 %v4844
        %7629 = vmatmul.bf16.gmra.mxu0 %v1357
        %v7630 = vpop.f32.mrf.mxu0
        %v7631 = vadd.f32 %v7618, %v7630
        %v7632 = vpop.f32.mrf.mxu0
        %7633 = vdwg.mxu0
        %7634 = vmatpush.bf16.msra.mxu0 %v4964
        %7635 = vmatpush.bf16.msra.mxu0 %v4956
        %7636 = vmatpush.bf16.msra.mxu0 %v4948
        %7637 = vmatpush.bf16.msra.mxu0 %v4940
        %7638 = vmatpush.bf16.msra.mxu0 %v4932
        %7639 = vmatpush.bf16.msra.mxu0 %v4924
        %7640 = vmatpush.bf16.msra.mxu0 %v4916
        %7641 = vmatpush.bf16.msra.mxu0 %v4908
        %7642 = vmatmul.bf16.gmra.mxu0 %v1358
        %v7643 = vpop.f32.mrf.mxu0
        %v7644 = vadd.f32 %v7631, %v7643
        %v7645 = vpop.f32.mrf.mxu0
        %7646 = vdwg.mxu0
        %7647 = vmatpush.bf16.msra.mxu0 %v5028
        %7648 = vmatpush.bf16.msra.mxu0 %v5020
        %7649 = vmatpush.bf16.msra.mxu0 %v5012
        %7650 = vmatpush.bf16.msra.mxu0 %v5004
        %7651 = vmatpush.bf16.msra.mxu0 %v4996
        %7652 = vmatpush.bf16.msra.mxu0 %v4988
        %7653 = vmatpush.bf16.msra.mxu0 %v4980
        %7654 = vmatpush.bf16.msra.mxu0 %v4972
        %7655 = vmatmul.bf16.gmra.mxu0 %v1359
        %v7656 = vpop.f32.mrf.mxu0
        %v7657 = vadd.f32 %v7644, %v7656
        %v7658 = vpop.f32.mrf.mxu0
        %7659 = vdwg.mxu0
        %7660 = vmatpush.bf16.msra.mxu0 %v5092
        %7661 = vmatpush.bf16.msra.mxu0 %v5084
        %7662 = vmatpush.bf16.msra.mxu0 %v5076
        %7663 = vmatpush.bf16.msra.mxu0 %v5068
        %7664 = vmatpush.bf16.msra.mxu0 %v5060
        %7665 = vmatpush.bf16.msra.mxu0 %v5052
        %7666 = vmatpush.bf16.msra.mxu0 %v5044
        %7667 = vmatpush.bf16.msra.mxu0 %v5036
        %7668 = vmatmul.bf16.gmra.mxu0 %v1360
        %v7669 = vpop.f32.mrf.mxu0
        %v7670 = vadd.f32 %v7657, %v7669
        %v7671 = vpop.f32.mrf.mxu0
        %7672 = vdwg.mxu0
        %7673 = vmatpush.bf16.msra.mxu0 %v5156
        %7674 = vmatpush.bf16.msra.mxu0 %v5148
        %7675 = vmatpush.bf16.msra.mxu0 %v5140
        %7676 = vmatpush.bf16.msra.mxu0 %v5132
        %7677 = vmatpush.bf16.msra.mxu0 %v5124
        %7678 = vmatpush.bf16.msra.mxu0 %v5116
        %7679 = vmatpush.bf16.msra.mxu0 %v5108
        %7680 = vmatpush.bf16.msra.mxu0 %v5100
        %7681 = vmatmul.bf16.gmra.mxu0 %v1361
        %v7682 = vpop.f32.mrf.mxu0
        %v7683 = vadd.f32 %v7670, %v7682
        %v7684 = vpop.f32.mrf.mxu0
        %7685 = vdwg.mxu0
        %7686 = vmatpush.bf16.msra.mxu0 %v5220
        %7687 = vmatpush.bf16.msra.mxu0 %v5212
        %7688 = vmatpush.bf16.msra.mxu0 %v5204
        %7689 = vmatpush.bf16.msra.mxu0 %v5196
        %7690 = vmatpush.bf16.msra.mxu0 %v5188
        %7691 = vmatpush.bf16.msra.mxu0 %v5180
        %7692 = vmatpush.bf16.msra.mxu0 %v5172
        %7693 = vmatpush.bf16.msra.mxu0 %v5164
        %7694 = vmatmul.bf16.gmra.mxu0 %v1362
        %v7695 = vpop.f32.mrf.mxu0
        %v7696 = vadd.f32 %v7683, %v7695
        %v7697 = vpop.f32.mrf.mxu0
        %7698 = vdwg.mxu0
        %7699 = vmatpush.bf16.msra.mxu0 %v5284
        %7700 = vmatpush.bf16.msra.mxu0 %v5276
        %7701 = vmatpush.bf16.msra.mxu0 %v5268
        %7702 = vmatpush.bf16.msra.mxu0 %v5260
        %7703 = vmatpush.bf16.msra.mxu0 %v5252
        %7704 = vmatpush.bf16.msra.mxu0 %v5244
        %7705 = vmatpush.bf16.msra.mxu0 %v5236
        %7706 = vmatpush.bf16.msra.mxu0 %v5228
        %7707 = vmatmul.bf16.gmra.mxu0 %v1363
        %v7708 = vpop.f32.mrf.mxu0
        %v7709 = vadd.f32 %v7696, %v7708
        %v7710 = vpop.f32.mrf.mxu0
        %7711 = vdwg.mxu0
        %7712 = vmatpush.bf16.msra.mxu0 %v5348
        %7713 = vmatpush.bf16.msra.mxu0 %v5340
        %7714 = vmatpush.bf16.msra.mxu0 %v5332
        %7715 = vmatpush.bf16.msra.mxu0 %v5324
        %7716 = vmatpush.bf16.msra.mxu0 %v5316
        %7717 = vmatpush.bf16.msra.mxu0 %v5308
        %7718 = vmatpush.bf16.msra.mxu0 %v5300
        %7719 = vmatpush.bf16.msra.mxu0 %v5292
        %7720 = vmatmul.bf16.gmra.mxu0 %v1364
        %v7721 = vpop.f32.mrf.mxu0
        %v7722 = vadd.f32 %v7709, %v7721
        %v7723 = vpop.f32.mrf.mxu0
        %7724 = vdwg.mxu0
        %7725 = vmatpush.bf16.msra.mxu0 %v5412
        %7726 = vmatpush.bf16.msra.mxu0 %v5404
        %7727 = vmatpush.bf16.msra.mxu0 %v5396
        %7728 = vmatpush.bf16.msra.mxu0 %v5388
        %7729 = vmatpush.bf16.msra.mxu0 %v5380
        %7730 = vmatpush.bf16.msra.mxu0 %v5372
        %7731 = vmatpush.bf16.msra.mxu0 %v5364
        %7732 = vmatpush.bf16.msra.mxu0 %v5356
        %7733 = vmatmul.bf16.gmra.mxu0 %v1365
        %v7734 = vpop.f32.mrf.mxu0
        %v7735 = vadd.f32 %v7722, %v7734
        %v7736 = vpop.f32.mrf.mxu0
        %7737 = vdwg.mxu0
        %7738 = vmatpush.bf16.msra.mxu0 %v5476
        %7739 = vmatpush.bf16.msra.mxu0 %v5468
        %7740 = vmatpush.bf16.msra.mxu0 %v5460
        %7741 = vmatpush.bf16.msra.mxu0 %v5452
        %7742 = vmatpush.bf16.msra.mxu0 %v5444
        %7743 = vmatpush.bf16.msra.mxu0 %v5436
        %7744 = vmatpush.bf16.msra.mxu0 %v5428
        %7745 = vmatpush.bf16.msra.mxu0 %v5420
        %7746 = vmatmul.bf16.gmra.mxu0 %v1366
        %v7747 = vpop.f32.mrf.mxu0
        %v7748 = vadd.f32 %v7735, %v7747
        %v7749 = vpop.f32.mrf.mxu0
        %7750 = vdwg.mxu0
        %7751 = vmatpush.bf16.msra.mxu0 %v4517
        %7752 = vmatpush.bf16.msra.mxu0 %v4509
        %7753 = vmatpush.bf16.msra.mxu0 %v4501
        %7754 = vmatpush.bf16.msra.mxu0 %v4493
        %7755 = vmatpush.bf16.msra.mxu0 %v4485
        %7756 = vmatpush.bf16.msra.mxu0 %v4477
        %7757 = vmatpush.bf16.msra.mxu0 %v4469
        %7758 = vmatpush.bf16.msra.mxu0 %v4461
        %7759 = vmatmul.bf16.gmra.mxu0 %v1351
        %v7760 = vpop.f32.mrf.mxu0
        %v7761 = vadd.f32 0.0, %v7760
        %v7762 = vpop.f32.mrf.mxu0
        %7763 = vdwg.mxu0
        %7764 = vmatpush.bf16.msra.mxu0 %v4581
        %7765 = vmatpush.bf16.msra.mxu0 %v4573
        %7766 = vmatpush.bf16.msra.mxu0 %v4565
        %7767 = vmatpush.bf16.msra.mxu0 %v4557
        %7768 = vmatpush.bf16.msra.mxu0 %v4549
        %7769 = vmatpush.bf16.msra.mxu0 %v4541
        %7770 = vmatpush.bf16.msra.mxu0 %v4533
        %7771 = vmatpush.bf16.msra.mxu0 %v4525
        %7772 = vmatmul.bf16.gmra.mxu0 %v1352
        %v7773 = vpop.f32.mrf.mxu0
        %v7774 = vadd.f32 %v7761, %v7773
        %v7775 = vpop.f32.mrf.mxu0
        %7776 = vdwg.mxu0
        %7777 = vmatpush.bf16.msra.mxu0 %v4645
        %7778 = vmatpush.bf16.msra.mxu0 %v4637
        %7779 = vmatpush.bf16.msra.mxu0 %v4629
        %7780 = vmatpush.bf16.msra.mxu0 %v4621
        %7781 = vmatpush.bf16.msra.mxu0 %v4613
        %7782 = vmatpush.bf16.msra.mxu0 %v4605
        %7783 = vmatpush.bf16.msra.mxu0 %v4597
        %7784 = vmatpush.bf16.msra.mxu0 %v4589
        %7785 = vmatmul.bf16.gmra.mxu0 %v1353
        %v7786 = vpop.f32.mrf.mxu0
        %v7787 = vadd.f32 %v7774, %v7786
        %v7788 = vpop.f32.mrf.mxu0
        %7789 = vdwg.mxu0
        %7790 = vmatpush.bf16.msra.mxu0 %v4709
        %7791 = vmatpush.bf16.msra.mxu0 %v4701
        %7792 = vmatpush.bf16.msra.mxu0 %v4693
        %7793 = vmatpush.bf16.msra.mxu0 %v4685
        %7794 = vmatpush.bf16.msra.mxu0 %v4677
        %7795 = vmatpush.bf16.msra.mxu0 %v4669
        %7796 = vmatpush.bf16.msra.mxu0 %v4661
        %7797 = vmatpush.bf16.msra.mxu0 %v4653
        %7798 = vmatmul.bf16.gmra.mxu0 %v1354
        %v7799 = vpop.f32.mrf.mxu0
        %v7800 = vadd.f32 %v7787, %v7799
        %v7801 = vpop.f32.mrf.mxu0
        %7802 = vdwg.mxu0
        %7803 = vmatpush.bf16.msra.mxu0 %v4773
        %7804 = vmatpush.bf16.msra.mxu0 %v4765
        %7805 = vmatpush.bf16.msra.mxu0 %v4757
        %7806 = vmatpush.bf16.msra.mxu0 %v4749
        %7807 = vmatpush.bf16.msra.mxu0 %v4741
        %7808 = vmatpush.bf16.msra.mxu0 %v4733
        %7809 = vmatpush.bf16.msra.mxu0 %v4725
        %7810 = vmatpush.bf16.msra.mxu0 %v4717
        %7811 = vmatmul.bf16.gmra.mxu0 %v1355
        %v7812 = vpop.f32.mrf.mxu0
        %v7813 = vadd.f32 %v7800, %v7812
        %v7814 = vpop.f32.mrf.mxu0
        %7815 = vdwg.mxu0
        %7816 = vmatpush.bf16.msra.mxu0 %v4837
        %7817 = vmatpush.bf16.msra.mxu0 %v4829
        %7818 = vmatpush.bf16.msra.mxu0 %v4821
        %7819 = vmatpush.bf16.msra.mxu0 %v4813
        %7820 = vmatpush.bf16.msra.mxu0 %v4805
        %7821 = vmatpush.bf16.msra.mxu0 %v4797
        %7822 = vmatpush.bf16.msra.mxu0 %v4789
        %7823 = vmatpush.bf16.msra.mxu0 %v4781
        %7824 = vmatmul.bf16.gmra.mxu0 %v1356
        %v7825 = vpop.f32.mrf.mxu0
        %v7826 = vadd.f32 %v7813, %v7825
        %v7827 = vpop.f32.mrf.mxu0
        %7828 = vdwg.mxu0
        %7829 = vmatpush.bf16.msra.mxu0 %v4901
        %7830 = vmatpush.bf16.msra.mxu0 %v4893
        %7831 = vmatpush.bf16.msra.mxu0 %v4885
        %7832 = vmatpush.bf16.msra.mxu0 %v4877
        %7833 = vmatpush.bf16.msra.mxu0 %v4869
        %7834 = vmatpush.bf16.msra.mxu0 %v4861
        %7835 = vmatpush.bf16.msra.mxu0 %v4853
        %7836 = vmatpush.bf16.msra.mxu0 %v4845
        %7837 = vmatmul.bf16.gmra.mxu0 %v1357
        %v7838 = vpop.f32.mrf.mxu0
        %v7839 = vadd.f32 %v7826, %v7838
        %v7840 = vpop.f32.mrf.mxu0
        %7841 = vdwg.mxu0
        %7842 = vmatpush.bf16.msra.mxu0 %v4965
        %7843 = vmatpush.bf16.msra.mxu0 %v4957
        %7844 = vmatpush.bf16.msra.mxu0 %v4949
        %7845 = vmatpush.bf16.msra.mxu0 %v4941
        %7846 = vmatpush.bf16.msra.mxu0 %v4933
        %7847 = vmatpush.bf16.msra.mxu0 %v4925
        %7848 = vmatpush.bf16.msra.mxu0 %v4917
        %7849 = vmatpush.bf16.msra.mxu0 %v4909
        %7850 = vmatmul.bf16.gmra.mxu0 %v1358
        %v7851 = vpop.f32.mrf.mxu0
        %v7852 = vadd.f32 %v7839, %v7851
        %v7853 = vpop.f32.mrf.mxu0
        %7854 = vdwg.mxu0
        %7855 = vmatpush.bf16.msra.mxu0 %v5029
        %7856 = vmatpush.bf16.msra.mxu0 %v5021
        %7857 = vmatpush.bf16.msra.mxu0 %v5013
        %7858 = vmatpush.bf16.msra.mxu0 %v5005
        %7859 = vmatpush.bf16.msra.mxu0 %v4997
        %7860 = vmatpush.bf16.msra.mxu0 %v4989
        %7861 = vmatpush.bf16.msra.mxu0 %v4981
        %7862 = vmatpush.bf16.msra.mxu0 %v4973
        %7863 = vmatmul.bf16.gmra.mxu0 %v1359
        %v7864 = vpop.f32.mrf.mxu0
        %v7865 = vadd.f32 %v7852, %v7864
        %v7866 = vpop.f32.mrf.mxu0
        %7867 = vdwg.mxu0
        %7868 = vmatpush.bf16.msra.mxu0 %v5093
        %7869 = vmatpush.bf16.msra.mxu0 %v5085
        %7870 = vmatpush.bf16.msra.mxu0 %v5077
        %7871 = vmatpush.bf16.msra.mxu0 %v5069
        %7872 = vmatpush.bf16.msra.mxu0 %v5061
        %7873 = vmatpush.bf16.msra.mxu0 %v5053
        %7874 = vmatpush.bf16.msra.mxu0 %v5045
        %7875 = vmatpush.bf16.msra.mxu0 %v5037
        %7876 = vmatmul.bf16.gmra.mxu0 %v1360
        %v7877 = vpop.f32.mrf.mxu0
        %v7878 = vadd.f32 %v7865, %v7877
        %v7879 = vpop.f32.mrf.mxu0
        %7880 = vdwg.mxu0
        %7881 = vmatpush.bf16.msra.mxu0 %v5157
        %7882 = vmatpush.bf16.msra.mxu0 %v5149
        %7883 = vmatpush.bf16.msra.mxu0 %v5141
        %7884 = vmatpush.bf16.msra.mxu0 %v5133
        %7885 = vmatpush.bf16.msra.mxu0 %v5125
        %7886 = vmatpush.bf16.msra.mxu0 %v5117
        %7887 = vmatpush.bf16.msra.mxu0 %v5109
        %7888 = vmatpush.bf16.msra.mxu0 %v5101
        %7889 = vmatmul.bf16.gmra.mxu0 %v1361
        %v7890 = vpop.f32.mrf.mxu0
        %v7891 = vadd.f32 %v7878, %v7890
        %v7892 = vpop.f32.mrf.mxu0
        %7893 = vdwg.mxu0
        %7894 = vmatpush.bf16.msra.mxu0 %v5221
        %7895 = vmatpush.bf16.msra.mxu0 %v5213
        %7896 = vmatpush.bf16.msra.mxu0 %v5205
        %7897 = vmatpush.bf16.msra.mxu0 %v5197
        %7898 = vmatpush.bf16.msra.mxu0 %v5189
        %7899 = vmatpush.bf16.msra.mxu0 %v5181
        %7900 = vmatpush.bf16.msra.mxu0 %v5173
        %7901 = vmatpush.bf16.msra.mxu0 %v5165
        %7902 = vmatmul.bf16.gmra.mxu0 %v1362
        %v7903 = vpop.f32.mrf.mxu0
        %v7904 = vadd.f32 %v7891, %v7903
        %v7905 = vpop.f32.mrf.mxu0
        %7906 = vdwg.mxu0
        %7907 = vmatpush.bf16.msra.mxu0 %v5285
        %7908 = vmatpush.bf16.msra.mxu0 %v5277
        %7909 = vmatpush.bf16.msra.mxu0 %v5269
        %7910 = vmatpush.bf16.msra.mxu0 %v5261
        %7911 = vmatpush.bf16.msra.mxu0 %v5253
        %7912 = vmatpush.bf16.msra.mxu0 %v5245
        %7913 = vmatpush.bf16.msra.mxu0 %v5237
        %7914 = vmatpush.bf16.msra.mxu0 %v5229
        %7915 = vmatmul.bf16.gmra.mxu0 %v1363
        %v7916 = vpop.f32.mrf.mxu0
        %v7917 = vadd.f32 %v7904, %v7916
        %v7918 = vpop.f32.mrf.mxu0
        %7919 = vdwg.mxu0
        %7920 = vmatpush.bf16.msra.mxu0 %v5349
        %7921 = vmatpush.bf16.msra.mxu0 %v5341
        %7922 = vmatpush.bf16.msra.mxu0 %v5333
        %7923 = vmatpush.bf16.msra.mxu0 %v5325
        %7924 = vmatpush.bf16.msra.mxu0 %v5317
        %7925 = vmatpush.bf16.msra.mxu0 %v5309
        %7926 = vmatpush.bf16.msra.mxu0 %v5301
        %7927 = vmatpush.bf16.msra.mxu0 %v5293
        %7928 = vmatmul.bf16.gmra.mxu0 %v1364
        %v7929 = vpop.f32.mrf.mxu0
        %v7930 = vadd.f32 %v7917, %v7929
        %v7931 = vpop.f32.mrf.mxu0
        %7932 = vdwg.mxu0
        %7933 = vmatpush.bf16.msra.mxu0 %v5413
        %7934 = vmatpush.bf16.msra.mxu0 %v5405
        %7935 = vmatpush.bf16.msra.mxu0 %v5397
        %7936 = vmatpush.bf16.msra.mxu0 %v5389
        %7937 = vmatpush.bf16.msra.mxu0 %v5381
        %7938 = vmatpush.bf16.msra.mxu0 %v5373
        %7939 = vmatpush.bf16.msra.mxu0 %v5365
        %7940 = vmatpush.bf16.msra.mxu0 %v5357
        %7941 = vmatmul.bf16.gmra.mxu0 %v1365
        %v7942 = vpop.f32.mrf.mxu0
        %v7943 = vadd.f32 %v7930, %v7942
        %v7944 = vpop.f32.mrf.mxu0
        %7945 = vdwg.mxu0
        %7946 = vmatpush.bf16.msra.mxu0 %v5477
        %7947 = vmatpush.bf16.msra.mxu0 %v5469
        %7948 = vmatpush.bf16.msra.mxu0 %v5461
        %7949 = vmatpush.bf16.msra.mxu0 %v5453
        %7950 = vmatpush.bf16.msra.mxu0 %v5445
        %7951 = vmatpush.bf16.msra.mxu0 %v5437
        %7952 = vmatpush.bf16.msra.mxu0 %v5429
        %7953 = vmatpush.bf16.msra.mxu0 %v5421
        %7954 = vmatmul.bf16.gmra.mxu0 %v1366
        %v7955 = vpop.f32.mrf.mxu0
        %v7956 = vadd.f32 %v7943, %v7955
        %v7957 = vpop.f32.mrf.mxu0
        %7958 = vdwg.mxu0
        %7959 = vmatpush.bf16.msra.mxu0 %v4518
        %7960 = vmatpush.bf16.msra.mxu0 %v4510
        %7961 = vmatpush.bf16.msra.mxu0 %v4502
        %7962 = vmatpush.bf16.msra.mxu0 %v4494
        %7963 = vmatpush.bf16.msra.mxu0 %v4486
        %7964 = vmatpush.bf16.msra.mxu0 %v4478
        %7965 = vmatpush.bf16.msra.mxu0 %v4470
        %7966 = vmatpush.bf16.msra.mxu0 %v4462
        %7967 = vmatmul.bf16.gmra.mxu0 %v1351
        %v7968 = vpop.f32.mrf.mxu0
        %v7969 = vadd.f32 0.0, %v7968
        %v7970 = vpop.f32.mrf.mxu0
        %7971 = vdwg.mxu0
        %7972 = vmatpush.bf16.msra.mxu0 %v4582
        %7973 = vmatpush.bf16.msra.mxu0 %v4574
        %7974 = vmatpush.bf16.msra.mxu0 %v4566
        %7975 = vmatpush.bf16.msra.mxu0 %v4558
        %7976 = vmatpush.bf16.msra.mxu0 %v4550
        %7977 = vmatpush.bf16.msra.mxu0 %v4542
        %7978 = vmatpush.bf16.msra.mxu0 %v4534
        %7979 = vmatpush.bf16.msra.mxu0 %v4526
        %7980 = vmatmul.bf16.gmra.mxu0 %v1352
        %v7981 = vpop.f32.mrf.mxu0
        %v7982 = vadd.f32 %v7969, %v7981
        %v7983 = vpop.f32.mrf.mxu0
        %7984 = vdwg.mxu0
        %7985 = vmatpush.bf16.msra.mxu0 %v4646
        %7986 = vmatpush.bf16.msra.mxu0 %v4638
        %7987 = vmatpush.bf16.msra.mxu0 %v4630
        %7988 = vmatpush.bf16.msra.mxu0 %v4622
        %7989 = vmatpush.bf16.msra.mxu0 %v4614
        %7990 = vmatpush.bf16.msra.mxu0 %v4606
        %7991 = vmatpush.bf16.msra.mxu0 %v4598
        %7992 = vmatpush.bf16.msra.mxu0 %v4590
        %7993 = vmatmul.bf16.gmra.mxu0 %v1353
        %v7994 = vpop.f32.mrf.mxu0
        %v7995 = vadd.f32 %v7982, %v7994
        %v7996 = vpop.f32.mrf.mxu0
        %7997 = vdwg.mxu0
        %7998 = vmatpush.bf16.msra.mxu0 %v4710
        %7999 = vmatpush.bf16.msra.mxu0 %v4702
        %8000 = vmatpush.bf16.msra.mxu0 %v4694
        %8001 = vmatpush.bf16.msra.mxu0 %v4686
        %8002 = vmatpush.bf16.msra.mxu0 %v4678
        %8003 = vmatpush.bf16.msra.mxu0 %v4670
        %8004 = vmatpush.bf16.msra.mxu0 %v4662
        %8005 = vmatpush.bf16.msra.mxu0 %v4654
        %8006 = vmatmul.bf16.gmra.mxu0 %v1354
        %v8007 = vpop.f32.mrf.mxu0
        %v8008 = vadd.f32 %v7995, %v8007
        %v8009 = vpop.f32.mrf.mxu0
        %8010 = vdwg.mxu0
        %8011 = vmatpush.bf16.msra.mxu0 %v4774
        %8012 = vmatpush.bf16.msra.mxu0 %v4766
        %8013 = vmatpush.bf16.msra.mxu0 %v4758
        %8014 = vmatpush.bf16.msra.mxu0 %v4750
        %8015 = vmatpush.bf16.msra.mxu0 %v4742
        %8016 = vmatpush.bf16.msra.mxu0 %v4734
        %8017 = vmatpush.bf16.msra.mxu0 %v4726
        %8018 = vmatpush.bf16.msra.mxu0 %v4718
        %8019 = vmatmul.bf16.gmra.mxu0 %v1355
        %v8020 = vpop.f32.mrf.mxu0
        %v8021 = vadd.f32 %v8008, %v8020
        %v8022 = vpop.f32.mrf.mxu0
        %8023 = vdwg.mxu0
        %8024 = vmatpush.bf16.msra.mxu0 %v4838
        %8025 = vmatpush.bf16.msra.mxu0 %v4830
        %8026 = vmatpush.bf16.msra.mxu0 %v4822
        %8027 = vmatpush.bf16.msra.mxu0 %v4814
        %8028 = vmatpush.bf16.msra.mxu0 %v4806
        %8029 = vmatpush.bf16.msra.mxu0 %v4798
        %8030 = vmatpush.bf16.msra.mxu0 %v4790
        %8031 = vmatpush.bf16.msra.mxu0 %v4782
        %8032 = vmatmul.bf16.gmra.mxu0 %v1356
        %v8033 = vpop.f32.mrf.mxu0
        %v8034 = vadd.f32 %v8021, %v8033
        %v8035 = vpop.f32.mrf.mxu0
        %8036 = vdwg.mxu0
        %8037 = vmatpush.bf16.msra.mxu0 %v4902
        %8038 = vmatpush.bf16.msra.mxu0 %v4894
        %8039 = vmatpush.bf16.msra.mxu0 %v4886
        %8040 = vmatpush.bf16.msra.mxu0 %v4878
        %8041 = vmatpush.bf16.msra.mxu0 %v4870
        %8042 = vmatpush.bf16.msra.mxu0 %v4862
        %8043 = vmatpush.bf16.msra.mxu0 %v4854
        %8044 = vmatpush.bf16.msra.mxu0 %v4846
        %8045 = vmatmul.bf16.gmra.mxu0 %v1357
        %v8046 = vpop.f32.mrf.mxu0
        %v8047 = vadd.f32 %v8034, %v8046
        %v8048 = vpop.f32.mrf.mxu0
        %8049 = vdwg.mxu0
        %8050 = vmatpush.bf16.msra.mxu0 %v4966
        %8051 = vmatpush.bf16.msra.mxu0 %v4958
        %8052 = vmatpush.bf16.msra.mxu0 %v4950
        %8053 = vmatpush.bf16.msra.mxu0 %v4942
        %8054 = vmatpush.bf16.msra.mxu0 %v4934
        %8055 = vmatpush.bf16.msra.mxu0 %v4926
        %8056 = vmatpush.bf16.msra.mxu0 %v4918
        %8057 = vmatpush.bf16.msra.mxu0 %v4910
        %8058 = vmatmul.bf16.gmra.mxu0 %v1358
        %v8059 = vpop.f32.mrf.mxu0
        %v8060 = vadd.f32 %v8047, %v8059
        %v8061 = vpop.f32.mrf.mxu0
        %8062 = vdwg.mxu0
        %8063 = vmatpush.bf16.msra.mxu0 %v5030
        %8064 = vmatpush.bf16.msra.mxu0 %v5022
        %8065 = vmatpush.bf16.msra.mxu0 %v5014
        %8066 = vmatpush.bf16.msra.mxu0 %v5006
        %8067 = vmatpush.bf16.msra.mxu0 %v4998
        %8068 = vmatpush.bf16.msra.mxu0 %v4990
        %8069 = vmatpush.bf16.msra.mxu0 %v4982
        %8070 = vmatpush.bf16.msra.mxu0 %v4974
        %8071 = vmatmul.bf16.gmra.mxu0 %v1359
        %v8072 = vpop.f32.mrf.mxu0
        %v8073 = vadd.f32 %v8060, %v8072
        %v8074 = vpop.f32.mrf.mxu0
        %8075 = vdwg.mxu0
        %8076 = vmatpush.bf16.msra.mxu0 %v5094
        %8077 = vmatpush.bf16.msra.mxu0 %v5086
        %8078 = vmatpush.bf16.msra.mxu0 %v5078
        %8079 = vmatpush.bf16.msra.mxu0 %v5070
        %8080 = vmatpush.bf16.msra.mxu0 %v5062
        %8081 = vmatpush.bf16.msra.mxu0 %v5054
        %8082 = vmatpush.bf16.msra.mxu0 %v5046
        %8083 = vmatpush.bf16.msra.mxu0 %v5038
        %8084 = vmatmul.bf16.gmra.mxu0 %v1360
        %v8085 = vpop.f32.mrf.mxu0
        %v8086 = vadd.f32 %v8073, %v8085
        %v8087 = vpop.f32.mrf.mxu0
        %8088 = vdwg.mxu0
        %8089 = vmatpush.bf16.msra.mxu0 %v5158
        %8090 = vmatpush.bf16.msra.mxu0 %v5150
        %8091 = vmatpush.bf16.msra.mxu0 %v5142
        %8092 = vmatpush.bf16.msra.mxu0 %v5134
        %8093 = vmatpush.bf16.msra.mxu0 %v5126
        %8094 = vmatpush.bf16.msra.mxu0 %v5118
        %8095 = vmatpush.bf16.msra.mxu0 %v5110
        %8096 = vmatpush.bf16.msra.mxu0 %v5102
        %8097 = vmatmul.bf16.gmra.mxu0 %v1361
        %v8098 = vpop.f32.mrf.mxu0
        %v8099 = vadd.f32 %v8086, %v8098
        %v8100 = vpop.f32.mrf.mxu0
        %8101 = vdwg.mxu0
        %8102 = vmatpush.bf16.msra.mxu0 %v5222
        %8103 = vmatpush.bf16.msra.mxu0 %v5214
        %8104 = vmatpush.bf16.msra.mxu0 %v5206
        %8105 = vmatpush.bf16.msra.mxu0 %v5198
        %8106 = vmatpush.bf16.msra.mxu0 %v5190
        %8107 = vmatpush.bf16.msra.mxu0 %v5182
        %8108 = vmatpush.bf16.msra.mxu0 %v5174
        %8109 = vmatpush.bf16.msra.mxu0 %v5166
        %8110 = vmatmul.bf16.gmra.mxu0 %v1362
        %v8111 = vpop.f32.mrf.mxu0
        %v8112 = vadd.f32 %v8099, %v8111
        %v8113 = vpop.f32.mrf.mxu0
        %8114 = vdwg.mxu0
        %8115 = vmatpush.bf16.msra.mxu0 %v5286
        %8116 = vmatpush.bf16.msra.mxu0 %v5278
        %8117 = vmatpush.bf16.msra.mxu0 %v5270
        %8118 = vmatpush.bf16.msra.mxu0 %v5262
        %8119 = vmatpush.bf16.msra.mxu0 %v5254
        %8120 = vmatpush.bf16.msra.mxu0 %v5246
        %8121 = vmatpush.bf16.msra.mxu0 %v5238
        %8122 = vmatpush.bf16.msra.mxu0 %v5230
        %8123 = vmatmul.bf16.gmra.mxu0 %v1363
        %v8124 = vpop.f32.mrf.mxu0
        %v8125 = vadd.f32 %v8112, %v8124
        %v8126 = vpop.f32.mrf.mxu0
        %8127 = vdwg.mxu0
        %8128 = vmatpush.bf16.msra.mxu0 %v5350
        %8129 = vmatpush.bf16.msra.mxu0 %v5342
        %8130 = vmatpush.bf16.msra.mxu0 %v5334
        %8131 = vmatpush.bf16.msra.mxu0 %v5326
        %8132 = vmatpush.bf16.msra.mxu0 %v5318
        %8133 = vmatpush.bf16.msra.mxu0 %v5310
        %8134 = vmatpush.bf16.msra.mxu0 %v5302
        %8135 = vmatpush.bf16.msra.mxu0 %v5294
        %8136 = vmatmul.bf16.gmra.mxu0 %v1364
        %v8137 = vpop.f32.mrf.mxu0
        %v8138 = vadd.f32 %v8125, %v8137
        %v8139 = vpop.f32.mrf.mxu0
        %8140 = vdwg.mxu0
        %8141 = vmatpush.bf16.msra.mxu0 %v5414
        %8142 = vmatpush.bf16.msra.mxu0 %v5406
        %8143 = vmatpush.bf16.msra.mxu0 %v5398
        %8144 = vmatpush.bf16.msra.mxu0 %v5390
        %8145 = vmatpush.bf16.msra.mxu0 %v5382
        %8146 = vmatpush.bf16.msra.mxu0 %v5374
        %8147 = vmatpush.bf16.msra.mxu0 %v5366
        %8148 = vmatpush.bf16.msra.mxu0 %v5358
        %8149 = vmatmul.bf16.gmra.mxu0 %v1365
        %v8150 = vpop.f32.mrf.mxu0
        %v8151 = vadd.f32 %v8138, %v8150
        %v8152 = vpop.f32.mrf.mxu0
        %8153 = vdwg.mxu0
        %8154 = vmatpush.bf16.msra.mxu0 %v5478
        %8155 = vmatpush.bf16.msra.mxu0 %v5470
        %8156 = vmatpush.bf16.msra.mxu0 %v5462
        %8157 = vmatpush.bf16.msra.mxu0 %v5454
        %8158 = vmatpush.bf16.msra.mxu0 %v5446
        %8159 = vmatpush.bf16.msra.mxu0 %v5438
        %8160 = vmatpush.bf16.msra.mxu0 %v5430
        %8161 = vmatpush.bf16.msra.mxu0 %v5422
        %8162 = vmatmul.bf16.gmra.mxu0 %v1366
        %v8163 = vpop.f32.mrf.mxu0
        %v8164 = vadd.f32 %v8151, %v8163
        %v8165 = vpop.f32.mrf.mxu0
        %8166 = vdwg.mxu0
        %v8167 = vadd.f32 %v287, %v6708
        %v8168 = vadd.f32 %v288, %v6916
        %v8169 = vadd.f32 %v289, %v7124
        %v8170 = vadd.f32 %v290, %v7332
        %v8171 = vadd.f32 %v291, %v7540
        %v8172 = vadd.f32 %v292, %v7748
        %v8173 = vadd.f32 %v293, %v7956
        %v8174 = vadd.f32 %v294, %v8164
        %8175 = vst [vmem:[#allocation2] sm:$0xff] %v8167
        %8176 = vst [vmem:[#allocation2 + $0x8] sm:$0xff] %v8168
        %8177 = vst [vmem:[#allocation2 + $0x10] sm:$0xff] %v8169
        %8178 = vst [vmem:[#allocation2 + $0x18] sm:$0xff] %v8170
        %8179 = vst [vmem:[#allocation2 + $0x20] sm:$0xff] %v8171
        %8180 = vst [vmem:[#allocation2 + $0x28] sm:$0xff] %v8172
        %8181 = vst [vmem:[#allocation2 + $0x30] sm:$0xff] %v8173
        %8182 = vst [vmem:[#allocation2 + $0x38] sm:$0xff] %v8174
        %p8183 = scmp.eq.s32.totalorder %s25, 1
        // Predicated region
        $region45: #{mlp_forward.2} parent=31 // pred_check
          %p8184 = pneg %p8183
        $region46: #{mlp_forward.2} parent=31 // pred_check_branch
          %8186 = sbr.rel (%p8184) target = $region48
        $region47: #{mlp_forward.2} parent=31 // pred_region
          %v8187 = vld [vmem:[#allocation2] sm:$0xff]
          %v8188 = vld [vmem:[#allocation2 + $0x8] sm:$0xff]
          %v8189 = vld [vmem:[#allocation2 + $0x10] sm:$0xff]
          %v8190 = vld [vmem:[#allocation2 + $0x18] sm:$0xff]
          %v8191 = vld [vmem:[#allocation2 + $0x20] sm:$0xff]
          %v8192 = vld [vmem:[#allocation2 + $0x28] sm:$0xff]
          %v8193 = vld [vmem:[#allocation2 + $0x30] sm:$0xff]
          %v8194 = vld [vmem:[#allocation2 + $0x38] sm:$0xff]
          %v8195 = vld [vmem:[%s226] sm:$0xff]
          %v8197 = vperm.slane %v8195, 0
          %v8198 = vperm.slane %v8195, 1
          %v8199 = vperm.slane %v8195, 2
          %v8200 = vperm.slane %v8195, 3
          %v8201 = vperm.slane %v8195, 4
          %v8202 = vperm.slane %v8195, 5
          %v8203 = vperm.slane %v8195, 6
          %v8204 = vperm.slane %v8195, 7
          %v8213 = vadd.f32 %v8187, %v8197
          %v8214 = vadd.f32 %v8188, %v8198
          %v8215 = vadd.f32 %v8189, %v8199
          %v8216 = vadd.f32 %v8190, %v8200
          %v8217 = vadd.f32 %v8191, %v8201
          %v8218 = vadd.f32 %v8192, %v8202
          %v8219 = vadd.f32 %v8193, %v8203
          %v8220 = vadd.f32 %v8194, %v8204
          %v8221 = vmax.f32 %v8213, 0.0
          %v8222 = vmax.f32 %v8214, 0.0
          %v8223 = vmax.f32 %v8215, 0.0
          %v8224 = vmax.f32 %v8216, 0.0
          %v8225 = vmax.f32 %v8217, 0.0
          %v8226 = vmax.f32 %v8218, 0.0
          %v8227 = vmax.f32 %v8219, 0.0
          %v8228 = vmax.f32 %v8220, 0.0
          %v8229 = vpack.c.bf16 %v8222, %v8221
          %v8230 = vpack.c.bf16 %v8224, %v8223
          %v8231 = vpack.c.bf16 %v8226, %v8225
          %v8232 = vpack.c.bf16 %v8228, %v8227
          %8233 = vst [vmem:[%s273] sm:$0xff] %v8229
          %8234 = vst [vmem:[%s273 + $0x8] sm:$0xff] %v8230
          %8235 = vst [vmem:[%s273 + $0x10] sm:$0xff] %v8231
          %8236 = vst [vmem:[%s273 + $0x18] sm:$0xff] %v8232
        $region48: #{mlp_forward.2} parent=31 // pred_fallthru
          _
        %s8237 = smul.u32 8, %s24
        %p8238 = scmp.lt.s32.totalorder %s8237, 15
        %s8239 = scalar_select %p8238, %s8237, 15
        %s8240 = smul.addr %s8239, 4
        %s8241 = scalar_lea.vmem %s3, %s8240
        // Predicated region
        $region49: #{mlp_forward.2} parent=31 // pred_check
          %p8242 = pneg %p130
        $region50: #{mlp_forward.2} parent=31 // pred_check_branch
          %8244 = sbr.rel (%p8242) target = $region52
        $region51: #{mlp_forward.2} parent=31 // pred_region
          %s8245 = smul.u32 8, %s24
        $region52: #{mlp_forward.2} parent=31 // pred_fallthru
          _
      $region32: #{mlp_forward.2} parent=5 // pred_fallthru
        _
      %p8246 = scmp.le.s32.totalorder 2, %s15
      // Predicated region
      $region53: #{mlp_forward.2} parent=5 // pred_check
        %p8247 = pneg %p8246
      $region54: #{mlp_forward.2} parent=5 // pred_check_branch
        %8249 = sbr.rel (%p8247) target = $region56
      $region55: #{mlp_forward.2} parent=5 // pred_region
        %s8250 = ssub.s32 %s15, 2
        // Predicated region
        $region57: #{mlp_forward.2} parent=55 // pred_check
          %p8251 = pneg %p136
        $region58: #{mlp_forward.2} parent=55 // pred_check_branch
          %8253 = sbr.rel (%p8251) target = $region60
        $region59: #{mlp_forward.2} parent=55 // pred_region
          %s8254 = smul.u32 8, %s26
          %p8255 = scmp.lt.s32.totalorder %s8254, 15
          %s8256 = scalar_select %p8255, %s8254, 15
          %s8257 = smul.addr %s8256, 4
          %s8258 = scalar_lea.vmem %s3, %s8257
        $region60: #{mlp_forward.2} parent=55 // pred_fallthru
          _
      $region56: #{mlp_forward.2} parent=5 // pred_fallthru
        _
    $region6: #{mlp_forward.2} parent=1 // loop_footer
      %s19 = sadd.s32 1, %s15
    $region7: #{mlp_forward.2} parent=1 // loop_footer_branch
      %14 = sbr.rel target = $region3
    $region8: #{mlp_forward.2} parent=1 // loop_exit
      _
    %8259 = vsyncpa [#allocation4], 1
    %s8260 = scalar_lea.sflag [#allocation4], 1
    %8261 = vsyncpa %s8260, 1
    %8262 = vsyncpa [#allocation6], 1
    %s8263 = scalar_lea.sflag [#allocation6], 1
    %8264 = vsyncpa %s8263, 1

</llo_original>
